<compile_context>
chip_gen: v7x
topology: tpu7x:2x2x1
jax: 0.10.0
libtpu: 0.0.40
codegen_flags: <defaults>
</compile_context>

<pallas_src>
import functools
import itertools

import numpy as np
import jax
import jax.numpy as jnp
from jax.experimental import pallas as pl
from jax.experimental.pallas import tpu as pltpu


# ----------------------------- host-side setup ------------------------------
def build_exponents(dim, order):
    """Exponent matrix E [T, 3*dim] of all monomials with 1 <= deg <= order."""
    k = 3 * dim
    exps = []
    for total in range(1, order + 1):
        for c in itertools.combinations_with_replacement(range(k), total):
            e = [0] * k
            for idx in c:
                e[idx] += 1
            exps.append(e)
    return np.asarray(exps, dtype=np.int32)                 # [T, K]


def build_slot_selectors(E, order, t_pad, kdim):
    """One-hot slot-gather matrix Sel [kdim, order*t_pad].

    zext column layout: [1, y_0..y_{d-1}, sin y_0.., cos y_0.., zero-pad].
    Term j of degree g uses its g variable columns in slots 0..g-1 and the
    constant-1 column (index 0) in the remaining slots.  Padded term lanes are
    all-zero, so their gathered values (and hence the monomials) are 0.
    """
    T, K = E.shape
    sel = np.zeros((kdim, order * t_pad), np.float32)
    for j in range(T):
        idxs = []
        for k in range(K):
            idxs.extend([k + 1] * int(E[j, k]))             # +1: column 0 is the constant 1
        assert 1 <= len(idxs) <= order
        idxs = idxs + [0] * (order - len(idxs))
        for s, c in enumerate(idxs):
            sel[c, s * t_pad + j] = 1.0
    return sel


# --------------------------------- kernel -----------------------------------
def poly_trig_kernel(y_ref, sel_ref, w_ref, out_ref, *, dim, order, t_pad):
    tn = y_ref.shape[0]
    kdim = sel_ref.shape[0]

    y = y_ref[...].astype(jnp.float32)                      # [tn, dim]
    siny = jnp.sin(y)
    cosy = jnp.cos(y)

    parts = [jnp.ones((tn, 1), jnp.float32), y, siny, cosy]
    pad_cols = kdim - (1 + 3 * dim)
    if pad_cols > 0:
        parts.append(jnp.zeros((tn, pad_cols), jnp.float32))
    zext = jnp.concatenate(parts, axis=-1)                  # [tn, kdim]

    # Slot gather: one small MXU matmul produces the factor plane of every slot
    # for every term lane (replaces all Horner chains / selector broadcasts).
    g = jnp.dot(zext, sel_ref[...],
                preferred_element_type=jnp.float32)         # [tn, order*t_pad]

    p = g[:, :t_pad]                                        # slot 0 factors
    for s in range(1, order):
        p = p * g[:, s * t_pad:(s + 1) * t_pad]             # monomials [tn, t_pad]

    # Bias-free linear layer; padded term lanes are 0 in p and 0 rows in w.
    out = jnp.dot(p, w_ref[...], preferred_element_type=jnp.float32)
    out_ref[...] = out.astype(out_ref.dtype)                # lane-dense [tn, 128]


# -------------------------------- wrapper -----------------------------------
def _dual_tensorcore():
    """v7x packs 2 TensorCores per chip; v5e/v6e are single-TC."""
    try:
        kind = jax.devices()[0].device_kind.lower()
    except Exception:
        return False
    return "v7" in kind or "7x" in kind


def _default_tile_n(N):
    if _dual_tensorcore() and N >= 16:
        # exactly one grid step per TensorCore, capped at the 128-row f32 tile
        half = (((N + 1) // 2) + 7) // 8 * 8
        return max(8, min(128, half))
    # single-TC chips: one grid step whenever the batch fits a spill-safe tile;
    # extra steps only add ~0.35 us sequential overhead for zero parallelism.
    return min(N, 256)


def odefunc_poly_trig(t, y, sel, w_pad, *, dim, order, tile_n=None):
    del t  # unused, as in the PyTorch forward
    N = y.shape[0]
    kdim, sel_cols = sel.shape
    t_pad = sel_cols // order
    out_pad = w_pad.shape[1]

    if tile_n is None:
        tile_n = _default_tile_n(N)
    tn = min(tile_n, N)
    if tn != N and tn % 8 != 0:                             # (8,128) block constraint
        tn = max(8, (tn // 8) * 8)
    grid = (pl.cdiv(N, tn),)

    flops = (2 * N * kdim * order * t_pad            # slot-gather matmul
             + (order - 1) * N * t_pad               # monomial products
             + 2 * N * t_pad * out_pad)              # output matmul
    cost = pl.CostEstimate(
        flops=int(flops),
        transcendentals=int(2 * N * dim),            # sin + cos
        bytes_accessed=int(y.size * y.dtype.itemsize + sel.size * 4
                           + w_pad.size * 4 + N * out_pad * 4),
    )

    kernel = functools.partial(poly_trig_kernel, dim=dim, order=order, t_pad=t_pad)
    out = pl.pallas_call(
        kernel,
        out_shape=jax.ShapeDtypeStruct((N, out_pad), y.dtype),
        grid=grid,
        in_specs=[
            pl.BlockSpec((tn, dim), lambda i: (i, 0)),
            pl.BlockSpec(sel.shape, lambda i: (0, 0)),       # grid-constant selectors
            pl.BlockSpec(w_pad.shape, lambda i: (0, 0)),     # grid-constant weights
        ],
        out_specs=pl.BlockSpec((tn, out_pad), lambda i: (i, 0)),
        compiler_params=pltpu.CompilerParams(
            dimension_semantics=("parallel",)),
        cost_estimate=cost,
    )(y, sel, w_pad)
    return out[:, :dim]


# ---------------------------------- main ------------------------------------
if __name__ == "__main__":
    DIM = 2
    ORDER = 3
    N = 256          # batch; dual-TC chips get 2 grid steps, single-TC chips 1

    key = jax.random.PRNGKey(0)
    k1, k2 = jax.random.split(key)

    E = build_exponents(DIM, ORDER)                          # [83, 6]
    T = E.shape[0]
    T_PAD = ((T + 127) // 128) * 128                         # minimal 128-lane multiple
    KDIM = max(8, ((1 + 3 * DIM + 7) // 8) * 8)              # zext columns (padded)
    OUT_PAD = 128                                            # lane-dense output width

    SEL = jnp.asarray(build_slot_selectors(E, ORDER, T_PAD, KDIM))   # [8, 3*128]

    # nn.Linear(nterms, dim, bias=False): weight [dim, T] ~ U(-1/sqrt(T), 1/sqrt(T))
    bound = 1.0 / np.sqrt(T)
    C_w = jax.random.uniform(k1, (DIM, T), jnp.float32, -bound, bound)
    W_pad = jnp.zeros((T_PAD, OUT_PAD), jnp.float32).at[:T, :DIM].set(C_w.T)

    y = jax.random.normal(k2, (N, DIM), jnp.float32)
    t = jnp.zeros(())                                        # unused by forward

    out = odefunc_poly_trig(t, y, SEL, W_pad, dim=DIM, order=ORDER)
    out = jax.block_until_ready(out)

    # ---- pure-JAX reference (same assumed TotalDegreeTrig term set) ----
    z = jnp.concatenate([y, jnp.sin(y), jnp.cos(y)], axis=-1)     # [N, 6]
    E_np = np.asarray(E)
    cols = []
    for j in range(T):
        m = jnp.ones((N,), jnp.float32)
        for k in range(3 * DIM):
            for _ in range(int(E_np[j, k])):
                m = m * z[:, k]
        cols.append(m)
    P_ref = jnp.stack(cols, axis=1)                               # [N, T]
    ref = P_ref @ C_w.T                                           # [N, DIM]

    err = np.abs(np.asarray(out) - np.asarray(ref)).max()
    assert np.allclose(np.asarray(out), np.asarray(ref), atol=1e-3, rtol=1e-3), err
    print("KERNEL_OK")
</pallas_src>

<mosaic_0001>
module attributes {stable_mosaic.version = 11 : i64} {
  func.func @poly_trig_kernel(%arg0: i32, %arg1: memref<256x2xf32, #tpu.memory_space<vmem>>, %arg2: memref<8x384xf32, #tpu.memory_space<vmem>>, %arg3: memref<128x128xf32, #tpu.memory_space<vmem>>, %arg4: memref<256x128xf32, #tpu.memory_space<vmem>>) attributes {dimension_semantics = [#tpu.dimension_semantics<parallel>], iteration_bounds = array<i64: 1>, scalar_prefetch = 0 : i64, scratch_operands = 0 : i64, tpu.core_type = #tpu.core_type<tc>, window_params = [{transform_indices = @transform_0, window_bounds = array<i64: 256, 2>}, {pipeline_mode = #tpu.pipeline_mode<synchronous>, transform_indices = @transform_1, window_bounds = array<i64: 8, 384>}, {pipeline_mode = #tpu.pipeline_mode<synchronous>, transform_indices = @transform_2, window_bounds = array<i64: 128, 128>}, {transform_indices = @transform_3, window_bounds = array<i64: 256, 128>}]} {
    %c0 = arith.constant 0 : index
    %c0_0 = arith.constant 0 : index
    %0 = vector.load %arg1[%c0, %c0_0] : memref<256x2xf32, #tpu.memory_space<vmem>>, vector<256x2xf32>
    %1 = math.sin %0 : vector<256x2xf32>
    %2 = math.cos %0 : vector<256x2xf32>
    %cst = arith.constant 1.000000e+00 : f32
    %3 = vector.broadcast %cst : f32 to vector<256x1xf32>
    %cst_1 = arith.constant 0.000000e+00 : f32
    %4 = vector.broadcast %cst_1 : f32 to vector<256x1xf32>
    %5 = tpu.concatenate %3, %0, %1, %2, %4 in 1 : vector<256x1xf32>, vector<256x2xf32>, vector<256x2xf32>, vector<256x2xf32>, vector<256x1xf32> -> vector<256x8xf32>
    %c0_2 = arith.constant 0 : index
    %c0_3 = arith.constant 0 : index
    %6 = vector.load %arg2[%c0_2, %c0_3] : memref<8x384xf32, #tpu.memory_space<vmem>>, vector<8x384xf32>
    %cst_4 = arith.constant dense<0.000000e+00> : vector<256x384xf32>
    %7 = tpu.matmul %5, %6, %cst_4 {dimension_numbers = #tpu.dot_dimension_numbers<[1], [0], [0], [1], [0, 0, 1, 1], [], []>} : vector<256x8xf32>, vector<8x384xf32>, vector<256x384xf32> -> vector<256x384xf32>
    %8 = vector.extract_strided_slice %7 {offsets = [0, 0], sizes = [256, 128], strides = [1, 1]} : vector<256x384xf32> to vector<256x128xf32>
    %9 = vector.extract_strided_slice %7 {offsets = [0, 128], sizes = [256, 128], strides = [1, 1]} : vector<256x384xf32> to vector<256x128xf32>
    %10 = arith.mulf %8, %9 : vector<256x128xf32>
    %11 = vector.extract_strided_slice %7 {offsets = [0, 256], sizes = [256, 128], strides = [1, 1]} : vector<256x384xf32> to vector<256x128xf32>
    %12 = arith.mulf %10, %11 : vector<256x128xf32>
    %c0_5 = arith.constant 0 : index
    %c0_6 = arith.constant 0 : index
    %13 = vector.load %arg3[%c0_5, %c0_6] : memref<128x128xf32, #tpu.memory_space<vmem>>, vector<128x128xf32>
    %cst_7 = arith.constant dense<0.000000e+00> : vector<256x128xf32>
    %14 = tpu.matmul %12, %13, %cst_7 {dimension_numbers = #tpu.dot_dimension_numbers<[1], [0], [0], [1], [0, 0, 1, 1], [], []>} : vector<256x128xf32>, vector<128x128xf32>, vector<256x128xf32> -> vector<256x128xf32>
    %c0_8 = arith.constant 0 : index
    %c0_9 = arith.constant 0 : index
    %15 = vector.load %arg4[%c0_8, %c0_9] : memref<256x128xf32, #tpu.memory_space<vmem>>, vector<256x128xf32>
    tpu.vector_store %arg4[%c0_8, %c0_9], %14 {strides = array<i32>} : memref<256x128xf32, #tpu.memory_space<vmem>>, vector<256x128xf32>,
    return
  }
  func.func @transform_0(%arg0: i32) -> (i32, i32) {
    %c0_i32 = arith.constant 0 : i32
    %c0_i32_0 = arith.constant 0 : i32
    return %arg0, %c0_i32 : i32, i32
  }
  func.func @transform_1(%arg0: i32) -> (i32, i32) {
    %c0_i32 = arith.constant 0 : i32
    %c0_i32_0 = arith.constant 0 : i32
    %c0_i32_1 = arith.constant 0 : i32
    return %c0_i32, %c0_i32_0 : i32, i32
  }
  func.func @transform_2(%arg0: i32) -> (i32, i32) {
    %c0_i32 = arith.constant 0 : i32
    %c0_i32_0 = arith.constant 0 : i32
    %c0_i32_1 = arith.constant 0 : i32
    return %c0_i32, %c0_i32_0 : i32, i32
  }
  func.func @transform_3(%arg0: i32) -> (i32, i32) {
    %c0_i32 = arith.constant 0 : i32
    %c0_i32_0 = arith.constant 0 : i32
    return %arg0, %c0_i32 : i32, i32
  }
}

</mosaic_0001>

<llo_original>
// kernel: tpu_custom_call.1
$region0: #{tpu_custom_call.1}
  #allocation0 [shape = 'u32[]', space=smem, size = 0x4, offset = 0x4, fixed_abs, tag = 'smem constant byte address 0x4 - core index']
  #allocation1 [shape = 'u32[144,128]{1,0:T(1,128)}', space=vmem, size = 0x12000, scoped, tag = 'internal scratch']
  %s0 = inlined_call_operand.vmem [shape: f32[256,2], index: 0, kind: input, shape index: {}]
  %s1 = inlined_call_operand.vmem [shape: f32[8,384], index: 1, kind: input, shape index: {}]
  %s2 = inlined_call_operand.vmem [shape: f32[128,128], index: 2, kind: input, shape index: {}]
  %s3 = inlined_call_operand.hbm [shape: f32[256,128], index: 3, kind: output, shape index: {}]
  %s4 = sld [smem:[#allocation0]]
  $region22: #{tpu_custom_call.1} parent=0
    _
  %s6 = ssub.s32 1, %s4
  %s7 = scalar_select 0, %s6, %s4
  $region1: #{tpu_custom_call.1} parent=0
    #allocation2 [shape = 'u8[131072]{0}', space=vmem, size = 0x20000, scoped, tag = 'output window, operand 0, single buffered']
    #allocation3 [shape = 's32[1]{0}', space=sflag, size = 0x4, scoped, tag = 'scoped memory for tpu_custom_call.1']
    %8 = vsyncpa [#allocation3], 0
    // Predicated region
    $region2: #{tpu_custom_call.1} parent=1 // pred_check
      _
    $region3: #{tpu_custom_call.1} parent=1 // pred_check_branch
      %10 = sbr.rel (0) target = $region5
    $region4: #{tpu_custom_call.1} parent=1 // pred_region
      _
    $region5: #{tpu_custom_call.1} parent=1 // pred_fallthru
      _
    // Predicated region
    $region6: #{tpu_custom_call.1} parent=1 // pred_check
      _
    $region7: #{tpu_custom_call.1} parent=1 // pred_check_branch
      %12 = sbr.rel (0) target = $region9
    $region8: #{tpu_custom_call.1} parent=1 // pred_region
      _
    $region9: #{tpu_custom_call.1} parent=1 // pred_fallthru
      _
    // Predicated region
    $region10: #{tpu_custom_call.1} parent=1 // pred_check
      _
    $region11: #{tpu_custom_call.1} parent=1 // pred_check_branch
      %14 = sbr.rel (0) target = $region13
    $region12: #{tpu_custom_call.1} parent=1 // pred_region
      _
    $region13: #{tpu_custom_call.1} parent=1 // pred_fallthru
      _
    %v15 = vld [vmem:[%s0] sm:$0xff]
    %v16 = vld [vmem:[%s0 + $0x8] sm:$0xff]
    %v17 = vld [vmem:[%s0 + $0x10] sm:$0xff]
    %v18 = vld [vmem:[%s0 + $0x18] sm:$0xff]
    %v19 = vld [vmem:[%s0 + $0x20] sm:$0xff]
    %v20 = vld [vmem:[%s0 + $0x28] sm:$0xff]
    %v21 = vld [vmem:[%s0 + $0x30] sm:$0xff]
    %v22 = vld [vmem:[%s0 + $0x38] sm:$0xff]
    %v23 = vld [vmem:[%s0 + $0x40] sm:$0xff]
    %v24 = vld [vmem:[%s0 + $0x48] sm:$0xff]
    %v25 = vld [vmem:[%s0 + $0x50] sm:$0xff]
    %v26 = vld [vmem:[%s0 + $0x58] sm:$0xff]
    %v27 = vld [vmem:[%s0 + $0x60] sm:$0xff]
    %v28 = vld [vmem:[%s0 + $0x68] sm:$0xff]
    %v29 = vld [vmem:[%s0 + $0x70] sm:$0xff]
    %v30 = vld [vmem:[%s0 + $0x78] sm:$0xff]
    %v31 = vld [vmem:[%s0 + $0x80] sm:$0xff]
    %v32 = vld [vmem:[%s0 + $0x88] sm:$0xff]
    %v33 = vld [vmem:[%s0 + $0x90] sm:$0xff]
    %v34 = vld [vmem:[%s0 + $0x98] sm:$0xff]
    %v35 = vld [vmem:[%s0 + $0xa0] sm:$0xff]
    %v36 = vld [vmem:[%s0 + $0xa8] sm:$0xff]
    %v37 = vld [vmem:[%s0 + $0xb0] sm:$0xff]
    %v38 = vld [vmem:[%s0 + $0xb8] sm:$0xff]
    %v39 = vld [vmem:[%s0 + $0xc0] sm:$0xff]
    %v40 = vld [vmem:[%s0 + $0xc8] sm:$0xff]
    %v41 = vld [vmem:[%s0 + $0xd0] sm:$0xff]
    %v42 = vld [vmem:[%s0 + $0xd8] sm:$0xff]
    %v43 = vld [vmem:[%s0 + $0xe0] sm:$0xff]
    %v44 = vld [vmem:[%s0 + $0xe8] sm:$0xff]
    %v45 = vld [vmem:[%s0 + $0xf0] sm:$0xff]
    %v46 = vld [vmem:[%s0 + $0xf8] sm:$0xff]
    %v47 = vand.u32 2147483647, %v15
    %vm48 = vcmp.le.f32.partialorder %v47, 0.7853982
    %vm49 = vcmp.lt.s32.totalorder %v15, 0
    %v50 = vand.u32 %v15, 2139095040
    %v51 = vshrl.u32 %v50, 23
    %v52 = vsub.s32 %v51, 127
    %v53 = vand.u32 2147483647, %v15
    %v54 = vand.u32 %v53, 8388607
    %v55 = vor.u32 %v54, 8388608
    %v56 = vsub.s32 0, %v55
    %v57 = vadd.s32 %v52, 1
    %vm58 = vcmp.gt.s32.totalorder %v57, 0
    %v59 = vsel %vm58, %v57, 0
    %v60 = vshrl.u32 %v59, 5
    %v61 = vand.u32 %v59, 31
    %v62 = vsub.s32 32, %v61
    %v63 = vshrl.u32 683565275, %v62
    %v64 = vshll.u32 683565275, %v61
    %v65 = vshrl.u32 2475754826, %v62
    %v66 = vor.u32 %v64, %v65
    %v67 = vshll.u32 2475754826, %v61
    %v68 = vshrl.u32 2131351028, %v62
    %v69 = vor.u32 %v67, %v68
    %v70 = vshll.u32 2131351028, %v61
    %v71 = vshrl.u32 2102212464, %v62
    %v72 = vor.u32 %v70, %v71
    %v73 = vshll.u32 2102212464, %v61
    %v74 = vshrl.u32 920167782, %v62
    %v75 = vor.u32 %v73, %v74
    %v76 = vshll.u32 920167782, %v61
    %v77 = vshrl.u32 1326507024, %v62
    %v78 = vor.u32 %v76, %v77
    %vm79 = vcmp.lt.s32.totalorder %v60, 1
    %vm80 = vcmp.lt.s32.totalorder %v60, 2
    %vm81 = vcmp.lt.s32.totalorder %v60, 3
    %vm82 = vcmp.lt.s32.totalorder %v60, 4
    %v83 = vsel %vm79, %v63, %v66
    %v84 = vsel %vm82, %v72, 2102212464
    %v85 = vsel %vm81, %v69, %v84
    %v86 = vsel %vm80, %v83, %v85
    %v87 = vsel %vm79, %v66, %v69
    %v88 = vsel %vm82, %v75, 920167782
    %v89 = vsel %vm81, %v72, %v88
    %v90 = vsel %vm80, %v87, %v89
    %v91 = vsel %vm79, %v69, %v72
    %v92 = vsel %vm82, %v78, 1326507024
    %v93 = vsel %vm81, %v75, %v92
    %v94 = vsel %vm80, %v91, %v93
    %v95 = vshll.u32 %v55, 8
    %v96 = vmul.u32.u64.compose %v95, %v94
    %v97 = vextract.low.u32 %v96
    %v98 = vextract.high.u32 %v96
    %v99 = vmul.u32.u64.compose %v95, %v90
    %v100 = vextract.low.u32 %v99
    %v101 = vextract.high.u32 %v99
    %v102 = vmul.u32 %v95, %v86
    %v103 = vadd.s32 %v98, %v100
    %vm104 = vc.u32 %v98, %v100
    %v105 = vadd.s32 %v101, 1
    %v106 = vsel %vm104, %v105, %v101
    %v107 = vadd.s32 %v102, %v106
    %v108 = vadd.s32 %v107, 536870912
    %v109 = vshrl.u32 %v108, 30
    %v110 = vshll.u32 %v109, 30
    %v111 = vsub.s32 %v107, %v110
    %vm112 = vcmp.lt.s32.totalorder %v111, 0
    %v113 = vsub.s32 0, %v111
    %v114 = vsel %vm112, %v113, %v111
    %v115 = vclz %v114
    %v116 = vsub.s32 %v115, 2
    %vm117 = vcmp.gt.s32.totalorder 0, %v116
    %v118 = vsel %vm117, 0, %v116
    %v119 = vsub.s32 32, %v118
    %v120 = vshll.u32 %v111, %v118
    %v121 = vshrl.u32 %v103, %v119
    %v122 = vor.u32 %v120, %v121
    %v123 = vsub.s32 4294967266, %v118
    %v124 = vadd.s32 %v123, 127
    %v125 = vshll.u32 %v124, 23
    %v126 = vor.u32 4788187, %v125
    %v127 = vand.u32 2147483647, %v126
    %v129 = vcvt.s32.f32 %v122
    %v130 = vmul.f32 %v129, %v127
    %v131 = vxor.u32 %v130, 2147483648
    %v132 = vsel %vm49, %v131, %v130
    %v133 = vsub.s32 4, %v109
    %v134 = vsel %vm49, %v133, %v109
    %v135 = vsel %vm48, %v15, %v132
    %v136 = vsel %vm48, 0, %v134
    %v137 = vcosq.f32.pop %v135
    %v138 = vsinq.f32.pop %v135
    %vm139 = vweird.f32 %v15
    %v140 = vadd.s32 %v136, 3
    %v141 = vand.u32 %v140, 3
    %vm142 = vcmp.lt.s32.totalorder %v141, 2
    %vm143 = vcmp.eq.s32.totalorder %v141, 0
    %v144 = vxor.u32 %v138, 2147483648
    %v145 = vsel %vm143, %v137, %v144
    %vm146 = vcmp.eq.s32.totalorder %v141, 2
    %v147 = vxor.u32 %v137, 2147483648
    %v148 = vsel %vm146, %v147, %v138
    %v149 = vsel %vm142, %v145, %v148
    %v150 = vsel %vm139, nan, %v149
    %v151 = vand.u32 2147483647, %v16
    %vm152 = vcmp.le.f32.partialorder %v151, 0.7853982
    %vm153 = vcmp.lt.s32.totalorder %v16, 0
    %v154 = vand.u32 %v16, 2139095040
    %v155 = vshrl.u32 %v154, 23
    %v156 = vsub.s32 %v155, 127
    %v157 = vand.u32 2147483647, %v16
    %v158 = vand.u32 %v157, 8388607
    %v159 = vor.u32 %v158, 8388608
    %v160 = vsub.s32 0, %v159
    %v161 = vadd.s32 %v156, 1
    %vm162 = vcmp.gt.s32.totalorder %v161, 0
    %v163 = vsel %vm162, %v161, 0
    %v164 = vshrl.u32 %v163, 5
    %v165 = vand.u32 %v163, 31
    %v166 = vsub.s32 32, %v165
    %v167 = vshrl.u32 683565275, %v166
    %v168 = vshll.u32 683565275, %v165
    %v169 = vshrl.u32 2475754826, %v166
    %v170 = vor.u32 %v168, %v169
    %v171 = vshll.u32 2475754826, %v165
    %v172 = vshrl.u32 2131351028, %v166
    %v173 = vor.u32 %v171, %v172
    %v174 = vshll.u32 2131351028, %v165
    %v175 = vshrl.u32 2102212464, %v166
    %v176 = vor.u32 %v174, %v175
    %v177 = vshll.u32 2102212464, %v165
    %v178 = vshrl.u32 920167782, %v166
    %v179 = vor.u32 %v177, %v178
    %v180 = vshll.u32 920167782, %v165
    %v181 = vshrl.u32 1326507024, %v166
    %v182 = vor.u32 %v180, %v181
    %vm183 = vcmp.lt.s32.totalorder %v164, 1
    %vm184 = vcmp.lt.s32.totalorder %v164, 2
    %vm185 = vcmp.lt.s32.totalorder %v164, 3
    %vm186 = vcmp.lt.s32.totalorder %v164, 4
    %v187 = vsel %vm183, %v167, %v170
    %v188 = vsel %vm186, %v176, 2102212464
    %v189 = vsel %vm185, %v173, %v188
    %v190 = vsel %vm184, %v187, %v189
    %v191 = vsel %vm183, %v170, %v173
    %v192 = vsel %vm186, %v179, 920167782
    %v193 = vsel %vm185, %v176, %v192
    %v194 = vsel %vm184, %v191, %v193
    %v195 = vsel %vm183, %v173, %v176
    %v196 = vsel %vm186, %v182, 1326507024
    %v197 = vsel %vm185, %v179, %v196
    %v198 = vsel %vm184, %v195, %v197
    %v199 = vshll.u32 %v159, 8
    %v200 = vmul.u32.u64.compose %v199, %v198
    %v201 = vextract.low.u32 %v200
    %v202 = vextract.high.u32 %v200
    %v203 = vmul.u32.u64.compose %v199, %v194
    %v204 = vextract.low.u32 %v203
    %v205 = vextract.high.u32 %v203
    %v206 = vmul.u32 %v199, %v190
    %v207 = vadd.s32 %v202, %v204
    %vm208 = vc.u32 %v202, %v204
    %v209 = vadd.s32 %v205, 1
    %v210 = vsel %vm208, %v209, %v205
    %v211 = vadd.s32 %v206, %v210
    %v212 = vadd.s32 %v211, 536870912
    %v213 = vshrl.u32 %v212, 30
    %v214 = vshll.u32 %v213, 30
    %v215 = vsub.s32 %v211, %v214
    %vm216 = vcmp.lt.s32.totalorder %v215, 0
    %v217 = vsub.s32 0, %v215
    %v218 = vsel %vm216, %v217, %v215
    %v219 = vclz %v218
    %v220 = vsub.s32 %v219, 2
    %vm221 = vcmp.gt.s32.totalorder 0, %v220
    %v222 = vsel %vm221, 0, %v220
    %v223 = vsub.s32 32, %v222
    %v224 = vshll.u32 %v215, %v222
    %v225 = vshrl.u32 %v207, %v223
    %v226 = vor.u32 %v224, %v225
    %v227 = vsub.s32 4294967266, %v222
    %v228 = vadd.s32 %v227, 127
    %v229 = vshll.u32 %v228, 23
    %v230 = vor.u32 4788187, %v229
    %v231 = vand.u32 2147483647, %v230
    %v233 = vcvt.s32.f32 %v226
    %v234 = vmul.f32 %v233, %v231
    %v235 = vxor.u32 %v234, 2147483648
    %v236 = vsel %vm153, %v235, %v234
    %v237 = vsub.s32 4, %v213
    %v238 = vsel %vm153, %v237, %v213
    %v239 = vsel %vm152, %v16, %v236
    %v240 = vsel %vm152, 0, %v238
    %v241 = vcosq.f32.pop %v239
    %v242 = vsinq.f32.pop %v239
    %vm243 = vweird.f32 %v16
    %v244 = vadd.s32 %v240, 3
    %v245 = vand.u32 %v244, 3
    %vm246 = vcmp.lt.s32.totalorder %v245, 2
    %vm247 = vcmp.eq.s32.totalorder %v245, 0
    %v248 = vxor.u32 %v242, 2147483648
    %v249 = vsel %vm247, %v241, %v248
    %vm250 = vcmp.eq.s32.totalorder %v245, 2
    %v251 = vxor.u32 %v241, 2147483648
    %v252 = vsel %vm250, %v251, %v242
    %v253 = vsel %vm246, %v249, %v252
    %v254 = vsel %vm243, nan, %v253
    %v255 = vand.u32 2147483647, %v17
    %vm256 = vcmp.le.f32.partialorder %v255, 0.7853982
    %vm257 = vcmp.lt.s32.totalorder %v17, 0
    %v258 = vand.u32 %v17, 2139095040
    %v259 = vshrl.u32 %v258, 23
    %v260 = vsub.s32 %v259, 127
    %v261 = vand.u32 2147483647, %v17
    %v262 = vand.u32 %v261, 8388607
    %v263 = vor.u32 %v262, 8388608
    %v264 = vsub.s32 0, %v263
    %v265 = vadd.s32 %v260, 1
    %vm266 = vcmp.gt.s32.totalorder %v265, 0
    %v267 = vsel %vm266, %v265, 0
    %v268 = vshrl.u32 %v267, 5
    %v269 = vand.u32 %v267, 31
    %v270 = vsub.s32 32, %v269
    %v271 = vshrl.u32 683565275, %v270
    %v272 = vshll.u32 683565275, %v269
    %v273 = vshrl.u32 2475754826, %v270
    %v274 = vor.u32 %v272, %v273
    %v275 = vshll.u32 2475754826, %v269
    %v276 = vshrl.u32 2131351028, %v270
    %v277 = vor.u32 %v275, %v276
    %v278 = vshll.u32 2131351028, %v269
    %v279 = vshrl.u32 2102212464, %v270
    %v280 = vor.u32 %v278, %v279
    %v281 = vshll.u32 2102212464, %v269
    %v282 = vshrl.u32 920167782, %v270
    %v283 = vor.u32 %v281, %v282
    %v284 = vshll.u32 920167782, %v269
    %v285 = vshrl.u32 1326507024, %v270
    %v286 = vor.u32 %v284, %v285
    %vm287 = vcmp.lt.s32.totalorder %v268, 1
    %vm288 = vcmp.lt.s32.totalorder %v268, 2
    %vm289 = vcmp.lt.s32.totalorder %v268, 3
    %vm290 = vcmp.lt.s32.totalorder %v268, 4
    %v291 = vsel %vm287, %v271, %v274
    %v292 = vsel %vm290, %v280, 2102212464
    %v293 = vsel %vm289, %v277, %v292
    %v294 = vsel %vm288, %v291, %v293
    %v295 = vsel %vm287, %v274, %v277
    %v296 = vsel %vm290, %v283, 920167782
    %v297 = vsel %vm289, %v280, %v296
    %v298 = vsel %vm288, %v295, %v297
    %v299 = vsel %vm287, %v277, %v280
    %v300 = vsel %vm290, %v286, 1326507024
    %v301 = vsel %vm289, %v283, %v300
    %v302 = vsel %vm288, %v299, %v301
    %v303 = vshll.u32 %v263, 8
    %v304 = vmul.u32.u64.compose %v303, %v302
    %v305 = vextract.low.u32 %v304
    %v306 = vextract.high.u32 %v304
    %v307 = vmul.u32.u64.compose %v303, %v298
    %v308 = vextract.low.u32 %v307
    %v309 = vextract.high.u32 %v307
    %v310 = vmul.u32 %v303, %v294
    %v311 = vadd.s32 %v306, %v308
    %vm312 = vc.u32 %v306, %v308
    %v313 = vadd.s32 %v309, 1
    %v314 = vsel %vm312, %v313, %v309
    %v315 = vadd.s32 %v310, %v314
    %v316 = vadd.s32 %v315, 536870912
    %v317 = vshrl.u32 %v316, 30
    %v318 = vshll.u32 %v317, 30
    %v319 = vsub.s32 %v315, %v318
    %vm320 = vcmp.lt.s32.totalorder %v319, 0
    %v321 = vsub.s32 0, %v319
    %v322 = vsel %vm320, %v321, %v319
    %v323 = vclz %v322
    %v324 = vsub.s32 %v323, 2
    %vm325 = vcmp.gt.s32.totalorder 0, %v324
    %v326 = vsel %vm325, 0, %v324
    %v327 = vsub.s32 32, %v326
    %v328 = vshll.u32 %v319, %v326
    %v329 = vshrl.u32 %v311, %v327
    %v330 = vor.u32 %v328, %v329
    %v331 = vsub.s32 4294967266, %v326
    %v332 = vadd.s32 %v331, 127
    %v333 = vshll.u32 %v332, 23
    %v334 = vor.u32 4788187, %v333
    %v335 = vand.u32 2147483647, %v334
    %v337 = vcvt.s32.f32 %v330
    %v338 = vmul.f32 %v337, %v335
    %v339 = vxor.u32 %v338, 2147483648
    %v340 = vsel %vm257, %v339, %v338
    %v341 = vsub.s32 4, %v317
    %v342 = vsel %vm257, %v341, %v317
    %v343 = vsel %vm256, %v17, %v340
    %v344 = vsel %vm256, 0, %v342
    %v345 = vcosq.f32.pop %v343
    %v346 = vsinq.f32.pop %v343
    %vm347 = vweird.f32 %v17
    %v348 = vadd.s32 %v344, 3
    %v349 = vand.u32 %v348, 3
    %vm350 = vcmp.lt.s32.totalorder %v349, 2
    %vm351 = vcmp.eq.s32.totalorder %v349, 0
    %v352 = vxor.u32 %v346, 2147483648
    %v353 = vsel %vm351, %v345, %v352
    %vm354 = vcmp.eq.s32.totalorder %v349, 2
    %v355 = vxor.u32 %v345, 2147483648
    %v356 = vsel %vm354, %v355, %v346
    %v357 = vsel %vm350, %v353, %v356
    %v358 = vsel %vm347, nan, %v357
    %v359 = vand.u32 2147483647, %v18
    %vm360 = vcmp.le.f32.partialorder %v359, 0.7853982
    %vm361 = vcmp.lt.s32.totalorder %v18, 0
    %v362 = vand.u32 %v18, 2139095040
    %v363 = vshrl.u32 %v362, 23
    %v364 = vsub.s32 %v363, 127
    %v365 = vand.u32 2147483647, %v18
    %v366 = vand.u32 %v365, 8388607
    %v367 = vor.u32 %v366, 8388608
    %v368 = vsub.s32 0, %v367
    %v369 = vadd.s32 %v364, 1
    %vm370 = vcmp.gt.s32.totalorder %v369, 0
    %v371 = vsel %vm370, %v369, 0
    %v372 = vshrl.u32 %v371, 5
    %v373 = vand.u32 %v371, 31
    %v374 = vsub.s32 32, %v373
    %v375 = vshrl.u32 683565275, %v374
    %v376 = vshll.u32 683565275, %v373
    %v377 = vshrl.u32 2475754826, %v374
    %v378 = vor.u32 %v376, %v377
    %v379 = vshll.u32 2475754826, %v373
    %v380 = vshrl.u32 2131351028, %v374
    %v381 = vor.u32 %v379, %v380
    %v382 = vshll.u32 2131351028, %v373
    %v383 = vshrl.u32 2102212464, %v374
    %v384 = vor.u32 %v382, %v383
    %v385 = vshll.u32 2102212464, %v373
    %v386 = vshrl.u32 920167782, %v374
    %v387 = vor.u32 %v385, %v386
    %v388 = vshll.u32 920167782, %v373
    %v389 = vshrl.u32 1326507024, %v374
    %v390 = vor.u32 %v388, %v389
    %vm391 = vcmp.lt.s32.totalorder %v372, 1
    %vm392 = vcmp.lt.s32.totalorder %v372, 2
    %vm393 = vcmp.lt.s32.totalorder %v372, 3
    %vm394 = vcmp.lt.s32.totalorder %v372, 4
    %v395 = vsel %vm391, %v375, %v378
    %v396 = vsel %vm394, %v384, 2102212464
    %v397 = vsel %vm393, %v381, %v396
    %v398 = vsel %vm392, %v395, %v397
    %v399 = vsel %vm391, %v378, %v381
    %v400 = vsel %vm394, %v387, 920167782
    %v401 = vsel %vm393, %v384, %v400
    %v402 = vsel %vm392, %v399, %v401
    %v403 = vsel %vm391, %v381, %v384
    %v404 = vsel %vm394, %v390, 1326507024
    %v405 = vsel %vm393, %v387, %v404
    %v406 = vsel %vm392, %v403, %v405
    %v407 = vshll.u32 %v367, 8
    %v408 = vmul.u32.u64.compose %v407, %v406
    %v409 = vextract.low.u32 %v408
    %v410 = vextract.high.u32 %v408
    %v411 = vmul.u32.u64.compose %v407, %v402
    %v412 = vextract.low.u32 %v411
    %v413 = vextract.high.u32 %v411
    %v414 = vmul.u32 %v407, %v398
    %v415 = vadd.s32 %v410, %v412
    %vm416 = vc.u32 %v410, %v412
    %v417 = vadd.s32 %v413, 1
    %v418 = vsel %vm416, %v417, %v413
    %v419 = vadd.s32 %v414, %v418
    %v420 = vadd.s32 %v419, 536870912
    %v421 = vshrl.u32 %v420, 30
    %v422 = vshll.u32 %v421, 30
    %v423 = vsub.s32 %v419, %v422
    %vm424 = vcmp.lt.s32.totalorder %v423, 0
    %v425 = vsub.s32 0, %v423
    %v426 = vsel %vm424, %v425, %v423
    %v427 = vclz %v426
    %v428 = vsub.s32 %v427, 2
    %vm429 = vcmp.gt.s32.totalorder 0, %v428
    %v430 = vsel %vm429, 0, %v428
    %v431 = vsub.s32 32, %v430
    %v432 = vshll.u32 %v423, %v430
    %v433 = vshrl.u32 %v415, %v431
    %v434 = vor.u32 %v432, %v433
    %v435 = vsub.s32 4294967266, %v430
    %v436 = vadd.s32 %v435, 127
    %v437 = vshll.u32 %v436, 23
    %v438 = vor.u32 4788187, %v437
    %v439 = vand.u32 2147483647, %v438
    %v441 = vcvt.s32.f32 %v434
    %v442 = vmul.f32 %v441, %v439
    %v443 = vxor.u32 %v442, 2147483648
    %v444 = vsel %vm361, %v443, %v442
    %v445 = vsub.s32 4, %v421
    %v446 = vsel %vm361, %v445, %v421
    %v447 = vsel %vm360, %v18, %v444
    %v448 = vsel %vm360, 0, %v446
    %v449 = vcosq.f32.pop %v447
    %v450 = vsinq.f32.pop %v447
    %vm451 = vweird.f32 %v18
    %v452 = vadd.s32 %v448, 3
    %v453 = vand.u32 %v452, 3
    %vm454 = vcmp.lt.s32.totalorder %v453, 2
    %vm455 = vcmp.eq.s32.totalorder %v453, 0
    %v456 = vxor.u32 %v450, 2147483648
    %v457 = vsel %vm455, %v449, %v456
    %vm458 = vcmp.eq.s32.totalorder %v453, 2
    %v459 = vxor.u32 %v449, 2147483648
    %v460 = vsel %vm458, %v459, %v450
    %v461 = vsel %vm454, %v457, %v460
    %v462 = vsel %vm451, nan, %v461
    %v463 = vand.u32 2147483647, %v19
    %vm464 = vcmp.le.f32.partialorder %v463, 0.7853982
    %vm465 = vcmp.lt.s32.totalorder %v19, 0
    %v466 = vand.u32 %v19, 2139095040
    %v467 = vshrl.u32 %v466, 23
    %v468 = vsub.s32 %v467, 127
    %v469 = vand.u32 2147483647, %v19
    %v470 = vand.u32 %v469, 8388607
    %v471 = vor.u32 %v470, 8388608
    %v472 = vsub.s32 0, %v471
    %v473 = vadd.s32 %v468, 1
    %vm474 = vcmp.gt.s32.totalorder %v473, 0
    %v475 = vsel %vm474, %v473, 0
    %v476 = vshrl.u32 %v475, 5
    %v477 = vand.u32 %v475, 31
    %v478 = vsub.s32 32, %v477
    %v479 = vshrl.u32 683565275, %v478
    %v480 = vshll.u32 683565275, %v477
    %v481 = vshrl.u32 2475754826, %v478
    %v482 = vor.u32 %v480, %v481
    %v483 = vshll.u32 2475754826, %v477
    %v484 = vshrl.u32 2131351028, %v478
    %v485 = vor.u32 %v483, %v484
    %v486 = vshll.u32 2131351028, %v477
    %v487 = vshrl.u32 2102212464, %v478
    %v488 = vor.u32 %v486, %v487
    %v489 = vshll.u32 2102212464, %v477
    %v490 = vshrl.u32 920167782, %v478
    %v491 = vor.u32 %v489, %v490
    %v492 = vshll.u32 920167782, %v477
    %v493 = vshrl.u32 1326507024, %v478
    %v494 = vor.u32 %v492, %v493
    %vm495 = vcmp.lt.s32.totalorder %v476, 1
    %vm496 = vcmp.lt.s32.totalorder %v476, 2
    %vm497 = vcmp.lt.s32.totalorder %v476, 3
    %vm498 = vcmp.lt.s32.totalorder %v476, 4
    %v499 = vsel %vm495, %v479, %v482
    %v500 = vsel %vm498, %v488, 2102212464
    %v501 = vsel %vm497, %v485, %v500
    %v502 = vsel %vm496, %v499, %v501
    %v503 = vsel %vm495, %v482, %v485
    %v504 = vsel %vm498, %v491, 920167782
    %v505 = vsel %vm497, %v488, %v504
    %v506 = vsel %vm496, %v503, %v505
    %v507 = vsel %vm495, %v485, %v488
    %v508 = vsel %vm498, %v494, 1326507024
    %v509 = vsel %vm497, %v491, %v508
    %v510 = vsel %vm496, %v507, %v509
    %v511 = vshll.u32 %v471, 8
    %v512 = vmul.u32.u64.compose %v511, %v510
    %v513 = vextract.low.u32 %v512
    %v514 = vextract.high.u32 %v512
    %v515 = vmul.u32.u64.compose %v511, %v506
    %v516 = vextract.low.u32 %v515
    %v517 = vextract.high.u32 %v515
    %v518 = vmul.u32 %v511, %v502
    %v519 = vadd.s32 %v514, %v516
    %vm520 = vc.u32 %v514, %v516
    %v521 = vadd.s32 %v517, 1
    %v522 = vsel %vm520, %v521, %v517
    %v523 = vadd.s32 %v518, %v522
    %v524 = vadd.s32 %v523, 536870912
    %v525 = vshrl.u32 %v524, 30
    %v526 = vshll.u32 %v525, 30
    %v527 = vsub.s32 %v523, %v526
    %vm528 = vcmp.lt.s32.totalorder %v527, 0
    %v529 = vsub.s32 0, %v527
    %v530 = vsel %vm528, %v529, %v527
    %v531 = vclz %v530
    %v532 = vsub.s32 %v531, 2
    %vm533 = vcmp.gt.s32.totalorder 0, %v532
    %v534 = vsel %vm533, 0, %v532
    %v535 = vsub.s32 32, %v534
    %v536 = vshll.u32 %v527, %v534
    %v537 = vshrl.u32 %v519, %v535
    %v538 = vor.u32 %v536, %v537
    %v539 = vsub.s32 4294967266, %v534
    %v540 = vadd.s32 %v539, 127
    %v541 = vshll.u32 %v540, 23
    %v542 = vor.u32 4788187, %v541
    %v543 = vand.u32 2147483647, %v542
    %v545 = vcvt.s32.f32 %v538
    %v546 = vmul.f32 %v545, %v543
    %v547 = vxor.u32 %v546, 2147483648
    %v548 = vsel %vm465, %v547, %v546
    %v549 = vsub.s32 4, %v525
    %v550 = vsel %vm465, %v549, %v525
    %v551 = vsel %vm464, %v19, %v548
    %v552 = vsel %vm464, 0, %v550
    %v553 = vcosq.f32.pop %v551
    %v554 = vsinq.f32.pop %v551
    %vm555 = vweird.f32 %v19
    %v556 = vadd.s32 %v552, 3
    %v557 = vand.u32 %v556, 3
    %vm558 = vcmp.lt.s32.totalorder %v557, 2
    %vm559 = vcmp.eq.s32.totalorder %v557, 0
    %v560 = vxor.u32 %v554, 2147483648
    %v561 = vsel %vm559, %v553, %v560
    %vm562 = vcmp.eq.s32.totalorder %v557, 2
    %v563 = vxor.u32 %v553, 2147483648
    %v564 = vsel %vm562, %v563, %v554
    %v565 = vsel %vm558, %v561, %v564
    %v566 = vsel %vm555, nan, %v565
    %v567 = vand.u32 2147483647, %v20
    %vm568 = vcmp.le.f32.partialorder %v567, 0.7853982
    %vm569 = vcmp.lt.s32.totalorder %v20, 0
    %v570 = vand.u32 %v20, 2139095040
    %v571 = vshrl.u32 %v570, 23
    %v572 = vsub.s32 %v571, 127
    %v573 = vand.u32 2147483647, %v20
    %v574 = vand.u32 %v573, 8388607
    %v575 = vor.u32 %v574, 8388608
    %v576 = vsub.s32 0, %v575
    %v577 = vadd.s32 %v572, 1
    %vm578 = vcmp.gt.s32.totalorder %v577, 0
    %v579 = vsel %vm578, %v577, 0
    %v580 = vshrl.u32 %v579, 5
    %v581 = vand.u32 %v579, 31
    %v582 = vsub.s32 32, %v581
    %v583 = vshrl.u32 683565275, %v582
    %v584 = vshll.u32 683565275, %v581
    %v585 = vshrl.u32 2475754826, %v582
    %v586 = vor.u32 %v584, %v585
    %v587 = vshll.u32 2475754826, %v581
    %v588 = vshrl.u32 2131351028, %v582
    %v589 = vor.u32 %v587, %v588
    %v590 = vshll.u32 2131351028, %v581
    %v591 = vshrl.u32 2102212464, %v582
    %v592 = vor.u32 %v590, %v591
    %v593 = vshll.u32 2102212464, %v581
    %v594 = vshrl.u32 920167782, %v582
    %v595 = vor.u32 %v593, %v594
    %v596 = vshll.u32 920167782, %v581
    %v597 = vshrl.u32 1326507024, %v582
    %v598 = vor.u32 %v596, %v597
    %vm599 = vcmp.lt.s32.totalorder %v580, 1
    %vm600 = vcmp.lt.s32.totalorder %v580, 2
    %vm601 = vcmp.lt.s32.totalorder %v580, 3
    %vm602 = vcmp.lt.s32.totalorder %v580, 4
    %v603 = vsel %vm599, %v583, %v586
    %v604 = vsel %vm602, %v592, 2102212464
    %v605 = vsel %vm601, %v589, %v604
    %v606 = vsel %vm600, %v603, %v605
    %v607 = vsel %vm599, %v586, %v589
    %v608 = vsel %vm602, %v595, 920167782
    %v609 = vsel %vm601, %v592, %v608
    %v610 = vsel %vm600, %v607, %v609
    %v611 = vsel %vm599, %v589, %v592
    %v612 = vsel %vm602, %v598, 1326507024
    %v613 = vsel %vm601, %v595, %v612
    %v614 = vsel %vm600, %v611, %v613
    %v615 = vshll.u32 %v575, 8
    %v616 = vmul.u32.u64.compose %v615, %v614
    %v617 = vextract.low.u32 %v616
    %v618 = vextract.high.u32 %v616
    %v619 = vmul.u32.u64.compose %v615, %v610
    %v620 = vextract.low.u32 %v619
    %v621 = vextract.high.u32 %v619
    %v622 = vmul.u32 %v615, %v606
    %v623 = vadd.s32 %v618, %v620
    %vm624 = vc.u32 %v618, %v620
    %v625 = vadd.s32 %v621, 1
    %v626 = vsel %vm624, %v625, %v621
    %v627 = vadd.s32 %v622, %v626
    %v628 = vadd.s32 %v627, 536870912
    %v629 = vshrl.u32 %v628, 30
    %v630 = vshll.u32 %v629, 30
    %v631 = vsub.s32 %v627, %v630
    %vm632 = vcmp.lt.s32.totalorder %v631, 0
    %v633 = vsub.s32 0, %v631
    %v634 = vsel %vm632, %v633, %v631
    %v635 = vclz %v634
    %v636 = vsub.s32 %v635, 2
    %vm637 = vcmp.gt.s32.totalorder 0, %v636
    %v638 = vsel %vm637, 0, %v636
    %v639 = vsub.s32 32, %v638
    %v640 = vshll.u32 %v631, %v638
    %v641 = vshrl.u32 %v623, %v639
    %v642 = vor.u32 %v640, %v641
    %v643 = vsub.s32 4294967266, %v638
    %v644 = vadd.s32 %v643, 127
    %v645 = vshll.u32 %v644, 23
    %v646 = vor.u32 4788187, %v645
    %v647 = vand.u32 2147483647, %v646
    %v649 = vcvt.s32.f32 %v642
    %v650 = vmul.f32 %v649, %v647
    %v651 = vxor.u32 %v650, 2147483648
    %v652 = vsel %vm569, %v651, %v650
    %v653 = vsub.s32 4, %v629
    %v654 = vsel %vm569, %v653, %v629
    %v655 = vsel %vm568, %v20, %v652
    %v656 = vsel %vm568, 0, %v654
    %v657 = vcosq.f32.pop %v655
    %v658 = vsinq.f32.pop %v655
    %vm659 = vweird.f32 %v20
    %v660 = vadd.s32 %v656, 3
    %v661 = vand.u32 %v660, 3
    %vm662 = vcmp.lt.s32.totalorder %v661, 2
    %vm663 = vcmp.eq.s32.totalorder %v661, 0
    %v664 = vxor.u32 %v658, 2147483648
    %v665 = vsel %vm663, %v657, %v664
    %vm666 = vcmp.eq.s32.totalorder %v661, 2
    %v667 = vxor.u32 %v657, 2147483648
    %v668 = vsel %vm666, %v667, %v658
    %v669 = vsel %vm662, %v665, %v668
    %v670 = vsel %vm659, nan, %v669
    %v671 = vand.u32 2147483647, %v21
    %vm672 = vcmp.le.f32.partialorder %v671, 0.7853982
    %vm673 = vcmp.lt.s32.totalorder %v21, 0
    %v674 = vand.u32 %v21, 2139095040
    %v675 = vshrl.u32 %v674, 23
    %v676 = vsub.s32 %v675, 127
    %v677 = vand.u32 2147483647, %v21
    %v678 = vand.u32 %v677, 8388607
    %v679 = vor.u32 %v678, 8388608
    %v680 = vsub.s32 0, %v679
    %v681 = vadd.s32 %v676, 1
    %vm682 = vcmp.gt.s32.totalorder %v681, 0
    %v683 = vsel %vm682, %v681, 0
    %v684 = vshrl.u32 %v683, 5
    %v685 = vand.u32 %v683, 31
    %v686 = vsub.s32 32, %v685
    %v687 = vshrl.u32 683565275, %v686
    %v688 = vshll.u32 683565275, %v685
    %v689 = vshrl.u32 2475754826, %v686
    %v690 = vor.u32 %v688, %v689
    %v691 = vshll.u32 2475754826, %v685
    %v692 = vshrl.u32 2131351028, %v686
    %v693 = vor.u32 %v691, %v692
    %v694 = vshll.u32 2131351028, %v685
    %v695 = vshrl.u32 2102212464, %v686
    %v696 = vor.u32 %v694, %v695
    %v697 = vshll.u32 2102212464, %v685
    %v698 = vshrl.u32 920167782, %v686
    %v699 = vor.u32 %v697, %v698
    %v700 = vshll.u32 920167782, %v685
    %v701 = vshrl.u32 1326507024, %v686
    %v702 = vor.u32 %v700, %v701
    %vm703 = vcmp.lt.s32.totalorder %v684, 1
    %vm704 = vcmp.lt.s32.totalorder %v684, 2
    %vm705 = vcmp.lt.s32.totalorder %v684, 3
    %vm706 = vcmp.lt.s32.totalorder %v684, 4
    %v707 = vsel %vm703, %v687, %v690
    %v708 = vsel %vm706, %v696, 2102212464
    %v709 = vsel %vm705, %v693, %v708
    %v710 = vsel %vm704, %v707, %v709
    %v711 = vsel %vm703, %v690, %v693
    %v712 = vsel %vm706, %v699, 920167782
    %v713 = vsel %vm705, %v696, %v712
    %v714 = vsel %vm704, %v711, %v713
    %v715 = vsel %vm703, %v693, %v696
    %v716 = vsel %vm706, %v702, 1326507024
    %v717 = vsel %vm705, %v699, %v716
    %v718 = vsel %vm704, %v715, %v717
    %v719 = vshll.u32 %v679, 8
    %v720 = vmul.u32.u64.compose %v719, %v718
    %v721 = vextract.low.u32 %v720
    %v722 = vextract.high.u32 %v720
    %v723 = vmul.u32.u64.compose %v719, %v714
    %v724 = vextract.low.u32 %v723
    %v725 = vextract.high.u32 %v723
    %v726 = vmul.u32 %v719, %v710
    %v727 = vadd.s32 %v722, %v724
    %vm728 = vc.u32 %v722, %v724
    %v729 = vadd.s32 %v725, 1
    %v730 = vsel %vm728, %v729, %v725
    %v731 = vadd.s32 %v726, %v730
    %v732 = vadd.s32 %v731, 536870912
    %v733 = vshrl.u32 %v732, 30
    %v734 = vshll.u32 %v733, 30
    %v735 = vsub.s32 %v731, %v734
    %vm736 = vcmp.lt.s32.totalorder %v735, 0
    %v737 = vsub.s32 0, %v735
    %v738 = vsel %vm736, %v737, %v735
    %v739 = vclz %v738
    %v740 = vsub.s32 %v739, 2
    %vm741 = vcmp.gt.s32.totalorder 0, %v740
    %v742 = vsel %vm741, 0, %v740
    %v743 = vsub.s32 32, %v742
    %v744 = vshll.u32 %v735, %v742
    %v745 = vshrl.u32 %v727, %v743
    %v746 = vor.u32 %v744, %v745
    %v747 = vsub.s32 4294967266, %v742
    %v748 = vadd.s32 %v747, 127
    %v749 = vshll.u32 %v748, 23
    %v750 = vor.u32 4788187, %v749
    %v751 = vand.u32 2147483647, %v750
    %v753 = vcvt.s32.f32 %v746
    %v754 = vmul.f32 %v753, %v751
    %v755 = vxor.u32 %v754, 2147483648
    %v756 = vsel %vm673, %v755, %v754
    %v757 = vsub.s32 4, %v733
    %v758 = vsel %vm673, %v757, %v733
    %v759 = vsel %vm672, %v21, %v756
    %v760 = vsel %vm672, 0, %v758
    %v761 = vcosq.f32.pop %v759
    %v762 = vsinq.f32.pop %v759
    %vm763 = vweird.f32 %v21
    %v764 = vadd.s32 %v760, 3
    %v765 = vand.u32 %v764, 3
    %vm766 = vcmp.lt.s32.totalorder %v765, 2
    %vm767 = vcmp.eq.s32.totalorder %v765, 0
    %v768 = vxor.u32 %v762, 2147483648
    %v769 = vsel %vm767, %v761, %v768
    %vm770 = vcmp.eq.s32.totalorder %v765, 2
    %v771 = vxor.u32 %v761, 2147483648
    %v772 = vsel %vm770, %v771, %v762
    %v773 = vsel %vm766, %v769, %v772
    %v774 = vsel %vm763, nan, %v773
    %v775 = vand.u32 2147483647, %v22
    %vm776 = vcmp.le.f32.partialorder %v775, 0.7853982
    %vm777 = vcmp.lt.s32.totalorder %v22, 0
    %v778 = vand.u32 %v22, 2139095040
    %v779 = vshrl.u32 %v778, 23
    %v780 = vsub.s32 %v779, 127
    %v781 = vand.u32 2147483647, %v22
    %v782 = vand.u32 %v781, 8388607
    %v783 = vor.u32 %v782, 8388608
    %v784 = vsub.s32 0, %v783
    %v785 = vadd.s32 %v780, 1
    %vm786 = vcmp.gt.s32.totalorder %v785, 0
    %v787 = vsel %vm786, %v785, 0
    %v788 = vshrl.u32 %v787, 5
    %v789 = vand.u32 %v787, 31
    %v790 = vsub.s32 32, %v789
    %v791 = vshrl.u32 683565275, %v790
    %v792 = vshll.u32 683565275, %v789
    %v793 = vshrl.u32 2475754826, %v790
    %v794 = vor.u32 %v792, %v793
    %v795 = vshll.u32 2475754826, %v789
    %v796 = vshrl.u32 2131351028, %v790
    %v797 = vor.u32 %v795, %v796
    %v798 = vshll.u32 2131351028, %v789
    %v799 = vshrl.u32 2102212464, %v790
    %v800 = vor.u32 %v798, %v799
    %v801 = vshll.u32 2102212464, %v789
    %v802 = vshrl.u32 920167782, %v790
    %v803 = vor.u32 %v801, %v802
    %v804 = vshll.u32 920167782, %v789
    %v805 = vshrl.u32 1326507024, %v790
    %v806 = vor.u32 %v804, %v805
    %vm807 = vcmp.lt.s32.totalorder %v788, 1
    %vm808 = vcmp.lt.s32.totalorder %v788, 2
    %vm809 = vcmp.lt.s32.totalorder %v788, 3
    %vm810 = vcmp.lt.s32.totalorder %v788, 4
    %v811 = vsel %vm807, %v791, %v794
    %v812 = vsel %vm810, %v800, 2102212464
    %v813 = vsel %vm809, %v797, %v812
    %v814 = vsel %vm808, %v811, %v813
    %v815 = vsel %vm807, %v794, %v797
    %v816 = vsel %vm810, %v803, 920167782
    %v817 = vsel %vm809, %v800, %v816
    %v818 = vsel %vm808, %v815, %v817
    %v819 = vsel %vm807, %v797, %v800
    %v820 = vsel %vm810, %v806, 1326507024
    %v821 = vsel %vm809, %v803, %v820
    %v822 = vsel %vm808, %v819, %v821
    %v823 = vshll.u32 %v783, 8
    %v824 = vmul.u32.u64.compose %v823, %v822
    %v825 = vextract.low.u32 %v824
    %v826 = vextract.high.u32 %v824
    %v827 = vmul.u32.u64.compose %v823, %v818
    %v828 = vextract.low.u32 %v827
    %v829 = vextract.high.u32 %v827
    %v830 = vmul.u32 %v823, %v814
    %v831 = vadd.s32 %v826, %v828
    %vm832 = vc.u32 %v826, %v828
    %v833 = vadd.s32 %v829, 1
    %v834 = vsel %vm832, %v833, %v829
    %v835 = vadd.s32 %v830, %v834
    %v836 = vadd.s32 %v835, 536870912
    %v837 = vshrl.u32 %v836, 30
    %v838 = vshll.u32 %v837, 30
    %v839 = vsub.s32 %v835, %v838
    %vm840 = vcmp.lt.s32.totalorder %v839, 0
    %v841 = vsub.s32 0, %v839
    %v842 = vsel %vm840, %v841, %v839
    %v843 = vclz %v842
    %v844 = vsub.s32 %v843, 2
    %vm845 = vcmp.gt.s32.totalorder 0, %v844
    %v846 = vsel %vm845, 0, %v844
    %v847 = vsub.s32 32, %v846
    %v848 = vshll.u32 %v839, %v846
    %v849 = vshrl.u32 %v831, %v847
    %v850 = vor.u32 %v848, %v849
    %v851 = vsub.s32 4294967266, %v846
    %v852 = vadd.s32 %v851, 127
    %v853 = vshll.u32 %v852, 23
    %v854 = vor.u32 4788187, %v853
    %v855 = vand.u32 2147483647, %v854
    %v857 = vcvt.s32.f32 %v850
    %v858 = vmul.f32 %v857, %v855
    %v859 = vxor.u32 %v858, 2147483648
    %v860 = vsel %vm777, %v859, %v858
    %v861 = vsub.s32 4, %v837
    %v862 = vsel %vm777, %v861, %v837
    %v863 = vsel %vm776, %v22, %v860
    %v864 = vsel %vm776, 0, %v862
    %v865 = vcosq.f32.pop %v863
    %v866 = vsinq.f32.pop %v863
    %vm867 = vweird.f32 %v22
    %v868 = vadd.s32 %v864, 3
    %v869 = vand.u32 %v868, 3
    %vm870 = vcmp.lt.s32.totalorder %v869, 2
    %vm871 = vcmp.eq.s32.totalorder %v869, 0
    %v872 = vxor.u32 %v866, 2147483648
    %v873 = vsel %vm871, %v865, %v872
    %vm874 = vcmp.eq.s32.totalorder %v869, 2
    %v875 = vxor.u32 %v865, 2147483648
    %v876 = vsel %vm874, %v875, %v866
    %v877 = vsel %vm870, %v873, %v876
    %v878 = vsel %vm867, nan, %v877
    %v879 = vand.u32 2147483647, %v23
    %vm880 = vcmp.le.f32.partialorder %v879, 0.7853982
    %vm881 = vcmp.lt.s32.totalorder %v23, 0
    %v882 = vand.u32 %v23, 2139095040
    %v883 = vshrl.u32 %v882, 23
    %v884 = vsub.s32 %v883, 127
    %v885 = vand.u32 2147483647, %v23
    %v886 = vand.u32 %v885, 8388607
    %v887 = vor.u32 %v886, 8388608
    %v888 = vsub.s32 0, %v887
    %v889 = vadd.s32 %v884, 1
    %vm890 = vcmp.gt.s32.totalorder %v889, 0
    %v891 = vsel %vm890, %v889, 0
    %v892 = vshrl.u32 %v891, 5
    %v893 = vand.u32 %v891, 31
    %v894 = vsub.s32 32, %v893
    %v895 = vshrl.u32 683565275, %v894
    %v896 = vshll.u32 683565275, %v893
    %v897 = vshrl.u32 2475754826, %v894
    %v898 = vor.u32 %v896, %v897
    %v899 = vshll.u32 2475754826, %v893
    %v900 = vshrl.u32 2131351028, %v894
    %v901 = vor.u32 %v899, %v900
    %v902 = vshll.u32 2131351028, %v893
    %v903 = vshrl.u32 2102212464, %v894
    %v904 = vor.u32 %v902, %v903
    %v905 = vshll.u32 2102212464, %v893
    %v906 = vshrl.u32 920167782, %v894
    %v907 = vor.u32 %v905, %v906
    %v908 = vshll.u32 920167782, %v893
    %v909 = vshrl.u32 1326507024, %v894
    %v910 = vor.u32 %v908, %v909
    %vm911 = vcmp.lt.s32.totalorder %v892, 1
    %vm912 = vcmp.lt.s32.totalorder %v892, 2
    %vm913 = vcmp.lt.s32.totalorder %v892, 3
    %vm914 = vcmp.lt.s32.totalorder %v892, 4
    %v915 = vsel %vm911, %v895, %v898
    %v916 = vsel %vm914, %v904, 2102212464
    %v917 = vsel %vm913, %v901, %v916
    %v918 = vsel %vm912, %v915, %v917
    %v919 = vsel %vm911, %v898, %v901
    %v920 = vsel %vm914, %v907, 920167782
    %v921 = vsel %vm913, %v904, %v920
    %v922 = vsel %vm912, %v919, %v921
    %v923 = vsel %vm911, %v901, %v904
    %v924 = vsel %vm914, %v910, 1326507024
    %v925 = vsel %vm913, %v907, %v924
    %v926 = vsel %vm912, %v923, %v925
    %v927 = vshll.u32 %v887, 8
    %v928 = vmul.u32.u64.compose %v927, %v926
    %v929 = vextract.low.u32 %v928
    %v930 = vextract.high.u32 %v928
    %v931 = vmul.u32.u64.compose %v927, %v922
    %v932 = vextract.low.u32 %v931
    %v933 = vextract.high.u32 %v931
    %v934 = vmul.u32 %v927, %v918
    %v935 = vadd.s32 %v930, %v932
    %vm936 = vc.u32 %v930, %v932
    %v937 = vadd.s32 %v933, 1
    %v938 = vsel %vm936, %v937, %v933
    %v939 = vadd.s32 %v934, %v938
    %v940 = vadd.s32 %v939, 536870912
    %v941 = vshrl.u32 %v940, 30
    %v942 = vshll.u32 %v941, 30
    %v943 = vsub.s32 %v939, %v942
    %vm944 = vcmp.lt.s32.totalorder %v943, 0
    %v945 = vsub.s32 0, %v943
    %v946 = vsel %vm944, %v945, %v943
    %v947 = vclz %v946
    %v948 = vsub.s32 %v947, 2
    %vm949 = vcmp.gt.s32.totalorder 0, %v948
    %v950 = vsel %vm949, 0, %v948
    %v951 = vsub.s32 32, %v950
    %v952 = vshll.u32 %v943, %v950
    %v953 = vshrl.u32 %v935, %v951
    %v954 = vor.u32 %v952, %v953
    %v955 = vsub.s32 4294967266, %v950
    %v956 = vadd.s32 %v955, 127
    %v957 = vshll.u32 %v956, 23
    %v958 = vor.u32 4788187, %v957
    %v959 = vand.u32 2147483647, %v958
    %v961 = vcvt.s32.f32 %v954
    %v962 = vmul.f32 %v961, %v959
    %v963 = vxor.u32 %v962, 2147483648
    %v964 = vsel %vm881, %v963, %v962
    %v965 = vsub.s32 4, %v941
    %v966 = vsel %vm881, %v965, %v941
    %v967 = vsel %vm880, %v23, %v964
    %v968 = vsel %vm880, 0, %v966
    %v969 = vcosq.f32.pop %v967
    %v970 = vsinq.f32.pop %v967
    %vm971 = vweird.f32 %v23
    %v972 = vadd.s32 %v968, 3
    %v973 = vand.u32 %v972, 3
    %vm974 = vcmp.lt.s32.totalorder %v973, 2
    %vm975 = vcmp.eq.s32.totalorder %v973, 0
    %v976 = vxor.u32 %v970, 2147483648
    %v977 = vsel %vm975, %v969, %v976
    %vm978 = vcmp.eq.s32.totalorder %v973, 2
    %v979 = vxor.u32 %v969, 2147483648
    %v980 = vsel %vm978, %v979, %v970
    %v981 = vsel %vm974, %v977, %v980
    %v982 = vsel %vm971, nan, %v981
    %v983 = vand.u32 2147483647, %v24
    %vm984 = vcmp.le.f32.partialorder %v983, 0.7853982
    %vm985 = vcmp.lt.s32.totalorder %v24, 0
    %v986 = vand.u32 %v24, 2139095040
    %v987 = vshrl.u32 %v986, 23
    %v988 = vsub.s32 %v987, 127
    %v989 = vand.u32 2147483647, %v24
    %v990 = vand.u32 %v989, 8388607
    %v991 = vor.u32 %v990, 8388608
    %v992 = vsub.s32 0, %v991
    %v993 = vadd.s32 %v988, 1
    %vm994 = vcmp.gt.s32.totalorder %v993, 0
    %v995 = vsel %vm994, %v993, 0
    %v996 = vshrl.u32 %v995, 5
    %v997 = vand.u32 %v995, 31
    %v998 = vsub.s32 32, %v997
    %v999 = vshrl.u32 683565275, %v998
    %v1000 = vshll.u32 683565275, %v997
    %v1001 = vshrl.u32 2475754826, %v998
    %v1002 = vor.u32 %v1000, %v1001
    %v1003 = vshll.u32 2475754826, %v997
    %v1004 = vshrl.u32 2131351028, %v998
    %v1005 = vor.u32 %v1003, %v1004
    %v1006 = vshll.u32 2131351028, %v997
    %v1007 = vshrl.u32 2102212464, %v998
    %v1008 = vor.u32 %v1006, %v1007
    %v1009 = vshll.u32 2102212464, %v997
    %v1010 = vshrl.u32 920167782, %v998
    %v1011 = vor.u32 %v1009, %v1010
    %v1012 = vshll.u32 920167782, %v997
    %v1013 = vshrl.u32 1326507024, %v998
    %v1014 = vor.u32 %v1012, %v1013
    %vm1015 = vcmp.lt.s32.totalorder %v996, 1
    %vm1016 = vcmp.lt.s32.totalorder %v996, 2
    %vm1017 = vcmp.lt.s32.totalorder %v996, 3
    %vm1018 = vcmp.lt.s32.totalorder %v996, 4
    %v1019 = vsel %vm1015, %v999, %v1002
    %v1020 = vsel %vm1018, %v1008, 2102212464
    %v1021 = vsel %vm1017, %v1005, %v1020
    %v1022 = vsel %vm1016, %v1019, %v1021
    %v1023 = vsel %vm1015, %v1002, %v1005
    %v1024 = vsel %vm1018, %v1011, 920167782
    %v1025 = vsel %vm1017, %v1008, %v1024
    %v1026 = vsel %vm1016, %v1023, %v1025
    %v1027 = vsel %vm1015, %v1005, %v1008
    %v1028 = vsel %vm1018, %v1014, 1326507024
    %v1029 = vsel %vm1017, %v1011, %v1028
    %v1030 = vsel %vm1016, %v1027, %v1029
    %v1031 = vshll.u32 %v991, 8
    %v1032 = vmul.u32.u64.compose %v1031, %v1030
    %v1033 = vextract.low.u32 %v1032
    %v1034 = vextract.high.u32 %v1032
    %v1035 = vmul.u32.u64.compose %v1031, %v1026
    %v1036 = vextract.low.u32 %v1035
    %v1037 = vextract.high.u32 %v1035
    %v1038 = vmul.u32 %v1031, %v1022
    %v1039 = vadd.s32 %v1034, %v1036
    %vm1040 = vc.u32 %v1034, %v1036
    %v1041 = vadd.s32 %v1037, 1
    %v1042 = vsel %vm1040, %v1041, %v1037
    %v1043 = vadd.s32 %v1038, %v1042
    %v1044 = vadd.s32 %v1043, 536870912
    %v1045 = vshrl.u32 %v1044, 30
    %v1046 = vshll.u32 %v1045, 30
    %v1047 = vsub.s32 %v1043, %v1046
    %vm1048 = vcmp.lt.s32.totalorder %v1047, 0
    %v1049 = vsub.s32 0, %v1047
    %v1050 = vsel %vm1048, %v1049, %v1047
    %v1051 = vclz %v1050
    %v1052 = vsub.s32 %v1051, 2
    %vm1053 = vcmp.gt.s32.totalorder 0, %v1052
    %v1054 = vsel %vm1053, 0, %v1052
    %v1055 = vsub.s32 32, %v1054
    %v1056 = vshll.u32 %v1047, %v1054
    %v1057 = vshrl.u32 %v1039, %v1055
    %v1058 = vor.u32 %v1056, %v1057
    %v1059 = vsub.s32 4294967266, %v1054
    %v1060 = vadd.s32 %v1059, 127
    %v1061 = vshll.u32 %v1060, 23
    %v1062 = vor.u32 4788187, %v1061
    %v1063 = vand.u32 2147483647, %v1062
    %v1065 = vcvt.s32.f32 %v1058
    %v1066 = vmul.f32 %v1065, %v1063
    %v1067 = vxor.u32 %v1066, 2147483648
    %v1068 = vsel %vm985, %v1067, %v1066
    %v1069 = vsub.s32 4, %v1045
    %v1070 = vsel %vm985, %v1069, %v1045
    %v1071 = vsel %vm984, %v24, %v1068
    %v1072 = vsel %vm984, 0, %v1070
    %v1073 = vcosq.f32.pop %v1071
    %v1074 = vsinq.f32.pop %v1071
    %vm1075 = vweird.f32 %v24
    %v1076 = vadd.s32 %v1072, 3
    %v1077 = vand.u32 %v1076, 3
    %vm1078 = vcmp.lt.s32.totalorder %v1077, 2
    %vm1079 = vcmp.eq.s32.totalorder %v1077, 0
    %v1080 = vxor.u32 %v1074, 2147483648
    %v1081 = vsel %vm1079, %v1073, %v1080
    %vm1082 = vcmp.eq.s32.totalorder %v1077, 2
    %v1083 = vxor.u32 %v1073, 2147483648
    %v1084 = vsel %vm1082, %v1083, %v1074
    %v1085 = vsel %vm1078, %v1081, %v1084
    %v1086 = vsel %vm1075, nan, %v1085
    %v1087 = vand.u32 2147483647, %v25
    %vm1088 = vcmp.le.f32.partialorder %v1087, 0.7853982
    %vm1089 = vcmp.lt.s32.totalorder %v25, 0
    %v1090 = vand.u32 %v25, 2139095040
    %v1091 = vshrl.u32 %v1090, 23
    %v1092 = vsub.s32 %v1091, 127
    %v1093 = vand.u32 2147483647, %v25
    %v1094 = vand.u32 %v1093, 8388607
    %v1095 = vor.u32 %v1094, 8388608
    %v1096 = vsub.s32 0, %v1095
    %v1097 = vadd.s32 %v1092, 1
    %vm1098 = vcmp.gt.s32.totalorder %v1097, 0
    %v1099 = vsel %vm1098, %v1097, 0
    %v1100 = vshrl.u32 %v1099, 5
    %v1101 = vand.u32 %v1099, 31
    %v1102 = vsub.s32 32, %v1101
    %v1103 = vshrl.u32 683565275, %v1102
    %v1104 = vshll.u32 683565275, %v1101
    %v1105 = vshrl.u32 2475754826, %v1102
    %v1106 = vor.u32 %v1104, %v1105
    %v1107 = vshll.u32 2475754826, %v1101
    %v1108 = vshrl.u32 2131351028, %v1102
    %v1109 = vor.u32 %v1107, %v1108
    %v1110 = vshll.u32 2131351028, %v1101
    %v1111 = vshrl.u32 2102212464, %v1102
    %v1112 = vor.u32 %v1110, %v1111
    %v1113 = vshll.u32 2102212464, %v1101
    %v1114 = vshrl.u32 920167782, %v1102
    %v1115 = vor.u32 %v1113, %v1114
    %v1116 = vshll.u32 920167782, %v1101
    %v1117 = vshrl.u32 1326507024, %v1102
    %v1118 = vor.u32 %v1116, %v1117
    %vm1119 = vcmp.lt.s32.totalorder %v1100, 1
    %vm1120 = vcmp.lt.s32.totalorder %v1100, 2
    %vm1121 = vcmp.lt.s32.totalorder %v1100, 3
    %vm1122 = vcmp.lt.s32.totalorder %v1100, 4
    %v1123 = vsel %vm1119, %v1103, %v1106
    %v1124 = vsel %vm1122, %v1112, 2102212464
    %v1125 = vsel %vm1121, %v1109, %v1124
    %v1126 = vsel %vm1120, %v1123, %v1125
    %v1127 = vsel %vm1119, %v1106, %v1109
    %v1128 = vsel %vm1122, %v1115, 920167782
    %v1129 = vsel %vm1121, %v1112, %v1128
    %v1130 = vsel %vm1120, %v1127, %v1129
    %v1131 = vsel %vm1119, %v1109, %v1112
    %v1132 = vsel %vm1122, %v1118, 1326507024
    %v1133 = vsel %vm1121, %v1115, %v1132
    %v1134 = vsel %vm1120, %v1131, %v1133
    %v1135 = vshll.u32 %v1095, 8
    %v1136 = vmul.u32.u64.compose %v1135, %v1134
    %v1137 = vextract.low.u32 %v1136
    %v1138 = vextract.high.u32 %v1136
    %v1139 = vmul.u32.u64.compose %v1135, %v1130
    %v1140 = vextract.low.u32 %v1139
    %v1141 = vextract.high.u32 %v1139
    %v1142 = vmul.u32 %v1135, %v1126
    %v1143 = vadd.s32 %v1138, %v1140
    %vm1144 = vc.u32 %v1138, %v1140
    %v1145 = vadd.s32 %v1141, 1
    %v1146 = vsel %vm1144, %v1145, %v1141
    %v1147 = vadd.s32 %v1142, %v1146
    %v1148 = vadd.s32 %v1147, 536870912
    %v1149 = vshrl.u32 %v1148, 30
    %v1150 = vshll.u32 %v1149, 30
    %v1151 = vsub.s32 %v1147, %v1150
    %vm1152 = vcmp.lt.s32.totalorder %v1151, 0
    %v1153 = vsub.s32 0, %v1151
    %v1154 = vsel %vm1152, %v1153, %v1151
    %v1155 = vclz %v1154
    %v1156 = vsub.s32 %v1155, 2
    %vm1157 = vcmp.gt.s32.totalorder 0, %v1156
    %v1158 = vsel %vm1157, 0, %v1156
    %v1159 = vsub.s32 32, %v1158
    %v1160 = vshll.u32 %v1151, %v1158
    %v1161 = vshrl.u32 %v1143, %v1159
    %v1162 = vor.u32 %v1160, %v1161
    %v1163 = vsub.s32 4294967266, %v1158
    %v1164 = vadd.s32 %v1163, 127
    %v1165 = vshll.u32 %v1164, 23
    %v1166 = vor.u32 4788187, %v1165
    %v1167 = vand.u32 2147483647, %v1166
    %v1169 = vcvt.s32.f32 %v1162
    %v1170 = vmul.f32 %v1169, %v1167
    %v1171 = vxor.u32 %v1170, 2147483648
    %v1172 = vsel %vm1089, %v1171, %v1170
    %v1173 = vsub.s32 4, %v1149
    %v1174 = vsel %vm1089, %v1173, %v1149
    %v1175 = vsel %vm1088, %v25, %v1172
    %v1176 = vsel %vm1088, 0, %v1174
    %v1177 = vcosq.f32.pop %v1175
    %v1178 = vsinq.f32.pop %v1175
    %vm1179 = vweird.f32 %v25
    %v1180 = vadd.s32 %v1176, 3
    %v1181 = vand.u32 %v1180, 3
    %vm1182 = vcmp.lt.s32.totalorder %v1181, 2
    %vm1183 = vcmp.eq.s32.totalorder %v1181, 0
    %v1184 = vxor.u32 %v1178, 2147483648
    %v1185 = vsel %vm1183, %v1177, %v1184
    %vm1186 = vcmp.eq.s32.totalorder %v1181, 2
    %v1187 = vxor.u32 %v1177, 2147483648
    %v1188 = vsel %vm1186, %v1187, %v1178
    %v1189 = vsel %vm1182, %v1185, %v1188
    %v1190 = vsel %vm1179, nan, %v1189
    %v1191 = vand.u32 2147483647, %v26
    %vm1192 = vcmp.le.f32.partialorder %v1191, 0.7853982
    %vm1193 = vcmp.lt.s32.totalorder %v26, 0
    %v1194 = vand.u32 %v26, 2139095040
    %v1195 = vshrl.u32 %v1194, 23
    %v1196 = vsub.s32 %v1195, 127
    %v1197 = vand.u32 2147483647, %v26
    %v1198 = vand.u32 %v1197, 8388607
    %v1199 = vor.u32 %v1198, 8388608
    %v1200 = vsub.s32 0, %v1199
    %v1201 = vadd.s32 %v1196, 1
    %vm1202 = vcmp.gt.s32.totalorder %v1201, 0
    %v1203 = vsel %vm1202, %v1201, 0
    %v1204 = vshrl.u32 %v1203, 5
    %v1205 = vand.u32 %v1203, 31
    %v1206 = vsub.s32 32, %v1205
    %v1207 = vshrl.u32 683565275, %v1206
    %v1208 = vshll.u32 683565275, %v1205
    %v1209 = vshrl.u32 2475754826, %v1206
    %v1210 = vor.u32 %v1208, %v1209
    %v1211 = vshll.u32 2475754826, %v1205
    %v1212 = vshrl.u32 2131351028, %v1206
    %v1213 = vor.u32 %v1211, %v1212
    %v1214 = vshll.u32 2131351028, %v1205
    %v1215 = vshrl.u32 2102212464, %v1206
    %v1216 = vor.u32 %v1214, %v1215
    %v1217 = vshll.u32 2102212464, %v1205
    %v1218 = vshrl.u32 920167782, %v1206
    %v1219 = vor.u32 %v1217, %v1218
    %v1220 = vshll.u32 920167782, %v1205
    %v1221 = vshrl.u32 1326507024, %v1206
    %v1222 = vor.u32 %v1220, %v1221
    %vm1223 = vcmp.lt.s32.totalorder %v1204, 1
    %vm1224 = vcmp.lt.s32.totalorder %v1204, 2
    %vm1225 = vcmp.lt.s32.totalorder %v1204, 3
    %vm1226 = vcmp.lt.s32.totalorder %v1204, 4
    %v1227 = vsel %vm1223, %v1207, %v1210
    %v1228 = vsel %vm1226, %v1216, 2102212464
    %v1229 = vsel %vm1225, %v1213, %v1228
    %v1230 = vsel %vm1224, %v1227, %v1229
    %v1231 = vsel %vm1223, %v1210, %v1213
    %v1232 = vsel %vm1226, %v1219, 920167782
    %v1233 = vsel %vm1225, %v1216, %v1232
    %v1234 = vsel %vm1224, %v1231, %v1233
    %v1235 = vsel %vm1223, %v1213, %v1216
    %v1236 = vsel %vm1226, %v1222, 1326507024
    %v1237 = vsel %vm1225, %v1219, %v1236
    %v1238 = vsel %vm1224, %v1235, %v1237
    %v1239 = vshll.u32 %v1199, 8
    %v1240 = vmul.u32.u64.compose %v1239, %v1238
    %v1241 = vextract.low.u32 %v1240
    %v1242 = vextract.high.u32 %v1240
    %v1243 = vmul.u32.u64.compose %v1239, %v1234
    %v1244 = vextract.low.u32 %v1243
    %v1245 = vextract.high.u32 %v1243
    %v1246 = vmul.u32 %v1239, %v1230
    %v1247 = vadd.s32 %v1242, %v1244
    %vm1248 = vc.u32 %v1242, %v1244
    %v1249 = vadd.s32 %v1245, 1
    %v1250 = vsel %vm1248, %v1249, %v1245
    %v1251 = vadd.s32 %v1246, %v1250
    %v1252 = vadd.s32 %v1251, 536870912
    %v1253 = vshrl.u32 %v1252, 30
    %v1254 = vshll.u32 %v1253, 30
    %v1255 = vsub.s32 %v1251, %v1254
    %vm1256 = vcmp.lt.s32.totalorder %v1255, 0
    %v1257 = vsub.s32 0, %v1255
    %v1258 = vsel %vm1256, %v1257, %v1255
    %v1259 = vclz %v1258
    %v1260 = vsub.s32 %v1259, 2
    %vm1261 = vcmp.gt.s32.totalorder 0, %v1260
    %v1262 = vsel %vm1261, 0, %v1260
    %v1263 = vsub.s32 32, %v1262
    %v1264 = vshll.u32 %v1255, %v1262
    %v1265 = vshrl.u32 %v1247, %v1263
    %v1266 = vor.u32 %v1264, %v1265
    %v1267 = vsub.s32 4294967266, %v1262
    %v1268 = vadd.s32 %v1267, 127
    %v1269 = vshll.u32 %v1268, 23
    %v1270 = vor.u32 4788187, %v1269
    %v1271 = vand.u32 2147483647, %v1270
    %v1273 = vcvt.s32.f32 %v1266
    %v1274 = vmul.f32 %v1273, %v1271
    %v1275 = vxor.u32 %v1274, 2147483648
    %v1276 = vsel %vm1193, %v1275, %v1274
    %v1277 = vsub.s32 4, %v1253
    %v1278 = vsel %vm1193, %v1277, %v1253
    %v1279 = vsel %vm1192, %v26, %v1276
    %v1280 = vsel %vm1192, 0, %v1278
    %v1281 = vcosq.f32.pop %v1279
    %v1282 = vsinq.f32.pop %v1279
    %vm1283 = vweird.f32 %v26
    %v1284 = vadd.s32 %v1280, 3
    %v1285 = vand.u32 %v1284, 3
    %vm1286 = vcmp.lt.s32.totalorder %v1285, 2
    %vm1287 = vcmp.eq.s32.totalorder %v1285, 0
    %v1288 = vxor.u32 %v1282, 2147483648
    %v1289 = vsel %vm1287, %v1281, %v1288
    %vm1290 = vcmp.eq.s32.totalorder %v1285, 2
    %v1291 = vxor.u32 %v1281, 2147483648
    %v1292 = vsel %vm1290, %v1291, %v1282
    %v1293 = vsel %vm1286, %v1289, %v1292
    %v1294 = vsel %vm1283, nan, %v1293
    %v1295 = vand.u32 2147483647, %v27
    %vm1296 = vcmp.le.f32.partialorder %v1295, 0.7853982
    %vm1297 = vcmp.lt.s32.totalorder %v27, 0
    %v1298 = vand.u32 %v27, 2139095040
    %v1299 = vshrl.u32 %v1298, 23
    %v1300 = vsub.s32 %v1299, 127
    %v1301 = vand.u32 2147483647, %v27
    %v1302 = vand.u32 %v1301, 8388607
    %v1303 = vor.u32 %v1302, 8388608
    %v1304 = vsub.s32 0, %v1303
    %v1305 = vadd.s32 %v1300, 1
    %vm1306 = vcmp.gt.s32.totalorder %v1305, 0
    %v1307 = vsel %vm1306, %v1305, 0
    %v1308 = vshrl.u32 %v1307, 5
    %v1309 = vand.u32 %v1307, 31
    %v1310 = vsub.s32 32, %v1309
    %v1311 = vshrl.u32 683565275, %v1310
    %v1312 = vshll.u32 683565275, %v1309
    %v1313 = vshrl.u32 2475754826, %v1310
    %v1314 = vor.u32 %v1312, %v1313
    %v1315 = vshll.u32 2475754826, %v1309
    %v1316 = vshrl.u32 2131351028, %v1310
    %v1317 = vor.u32 %v1315, %v1316
    %v1318 = vshll.u32 2131351028, %v1309
    %v1319 = vshrl.u32 2102212464, %v1310
    %v1320 = vor.u32 %v1318, %v1319
    %v1321 = vshll.u32 2102212464, %v1309
    %v1322 = vshrl.u32 920167782, %v1310
    %v1323 = vor.u32 %v1321, %v1322
    %v1324 = vshll.u32 920167782, %v1309
    %v1325 = vshrl.u32 1326507024, %v1310
    %v1326 = vor.u32 %v1324, %v1325
    %vm1327 = vcmp.lt.s32.totalorder %v1308, 1
    %vm1328 = vcmp.lt.s32.totalorder %v1308, 2
    %vm1329 = vcmp.lt.s32.totalorder %v1308, 3
    %vm1330 = vcmp.lt.s32.totalorder %v1308, 4
    %v1331 = vsel %vm1327, %v1311, %v1314
    %v1332 = vsel %vm1330, %v1320, 2102212464
    %v1333 = vsel %vm1329, %v1317, %v1332
    %v1334 = vsel %vm1328, %v1331, %v1333
    %v1335 = vsel %vm1327, %v1314, %v1317
    %v1336 = vsel %vm1330, %v1323, 920167782
    %v1337 = vsel %vm1329, %v1320, %v1336
    %v1338 = vsel %vm1328, %v1335, %v1337
    %v1339 = vsel %vm1327, %v1317, %v1320
    %v1340 = vsel %vm1330, %v1326, 1326507024
    %v1341 = vsel %vm1329, %v1323, %v1340
    %v1342 = vsel %vm1328, %v1339, %v1341
    %v1343 = vshll.u32 %v1303, 8
    %v1344 = vmul.u32.u64.compose %v1343, %v1342
    %v1345 = vextract.low.u32 %v1344
    %v1346 = vextract.high.u32 %v1344
    %v1347 = vmul.u32.u64.compose %v1343, %v1338
    %v1348 = vextract.low.u32 %v1347
    %v1349 = vextract.high.u32 %v1347
    %v1350 = vmul.u32 %v1343, %v1334
    %v1351 = vadd.s32 %v1346, %v1348
    %vm1352 = vc.u32 %v1346, %v1348
    %v1353 = vadd.s32 %v1349, 1
    %v1354 = vsel %vm1352, %v1353, %v1349
    %v1355 = vadd.s32 %v1350, %v1354
    %v1356 = vadd.s32 %v1355, 536870912
    %v1357 = vshrl.u32 %v1356, 30
    %v1358 = vshll.u32 %v1357, 30
    %v1359 = vsub.s32 %v1355, %v1358
    %vm1360 = vcmp.lt.s32.totalorder %v1359, 0
    %v1361 = vsub.s32 0, %v1359
    %v1362 = vsel %vm1360, %v1361, %v1359
    %v1363 = vclz %v1362
    %v1364 = vsub.s32 %v1363, 2
    %vm1365 = vcmp.gt.s32.totalorder 0, %v1364
    %v1366 = vsel %vm1365, 0, %v1364
    %v1367 = vsub.s32 32, %v1366
    %v1368 = vshll.u32 %v1359, %v1366
    %v1369 = vshrl.u32 %v1351, %v1367
    %v1370 = vor.u32 %v1368, %v1369
    %v1371 = vsub.s32 4294967266, %v1366
    %v1372 = vadd.s32 %v1371, 127
    %v1373 = vshll.u32 %v1372, 23
    %v1374 = vor.u32 4788187, %v1373
    %v1375 = vand.u32 2147483647, %v1374
    %v1377 = vcvt.s32.f32 %v1370
    %v1378 = vmul.f32 %v1377, %v1375
    %v1379 = vxor.u32 %v1378, 2147483648
    %v1380 = vsel %vm1297, %v1379, %v1378
    %v1381 = vsub.s32 4, %v1357
    %v1382 = vsel %vm1297, %v1381, %v1357
    %v1383 = vsel %vm1296, %v27, %v1380
    %v1384 = vsel %vm1296, 0, %v1382
    %v1385 = vcosq.f32.pop %v1383
    %v1386 = vsinq.f32.pop %v1383
    %vm1387 = vweird.f32 %v27
    %v1388 = vadd.s32 %v1384, 3
    %v1389 = vand.u32 %v1388, 3
    %vm1390 = vcmp.lt.s32.totalorder %v1389, 2
    %vm1391 = vcmp.eq.s32.totalorder %v1389, 0
    %v1392 = vxor.u32 %v1386, 2147483648
    %v1393 = vsel %vm1391, %v1385, %v1392
    %vm1394 = vcmp.eq.s32.totalorder %v1389, 2
    %v1395 = vxor.u32 %v1385, 2147483648
    %v1396 = vsel %vm1394, %v1395, %v1386
    %v1397 = vsel %vm1390, %v1393, %v1396
    %v1398 = vsel %vm1387, nan, %v1397
    %v1399 = vand.u32 2147483647, %v28
    %vm1400 = vcmp.le.f32.partialorder %v1399, 0.7853982
    %vm1401 = vcmp.lt.s32.totalorder %v28, 0
    %v1402 = vand.u32 %v28, 2139095040
    %v1403 = vshrl.u32 %v1402, 23
    %v1404 = vsub.s32 %v1403, 127
    %v1405 = vand.u32 2147483647, %v28
    %v1406 = vand.u32 %v1405, 8388607
    %v1407 = vor.u32 %v1406, 8388608
    %v1408 = vsub.s32 0, %v1407
    %v1409 = vadd.s32 %v1404, 1
    %vm1410 = vcmp.gt.s32.totalorder %v1409, 0
    %v1411 = vsel %vm1410, %v1409, 0
    %v1412 = vshrl.u32 %v1411, 5
    %v1413 = vand.u32 %v1411, 31
    %v1414 = vsub.s32 32, %v1413
    %v1415 = vshrl.u32 683565275, %v1414
    %v1416 = vshll.u32 683565275, %v1413
    %v1417 = vshrl.u32 2475754826, %v1414
    %v1418 = vor.u32 %v1416, %v1417
    %v1419 = vshll.u32 2475754826, %v1413
    %v1420 = vshrl.u32 2131351028, %v1414
    %v1421 = vor.u32 %v1419, %v1420
    %v1422 = vshll.u32 2131351028, %v1413
    %v1423 = vshrl.u32 2102212464, %v1414
    %v1424 = vor.u32 %v1422, %v1423
    %v1425 = vshll.u32 2102212464, %v1413
    %v1426 = vshrl.u32 920167782, %v1414
    %v1427 = vor.u32 %v1425, %v1426
    %v1428 = vshll.u32 920167782, %v1413
    %v1429 = vshrl.u32 1326507024, %v1414
    %v1430 = vor.u32 %v1428, %v1429
    %vm1431 = vcmp.lt.s32.totalorder %v1412, 1
    %vm1432 = vcmp.lt.s32.totalorder %v1412, 2
    %vm1433 = vcmp.lt.s32.totalorder %v1412, 3
    %vm1434 = vcmp.lt.s32.totalorder %v1412, 4
    %v1435 = vsel %vm1431, %v1415, %v1418
    %v1436 = vsel %vm1434, %v1424, 2102212464
    %v1437 = vsel %vm1433, %v1421, %v1436
    %v1438 = vsel %vm1432, %v1435, %v1437
    %v1439 = vsel %vm1431, %v1418, %v1421
    %v1440 = vsel %vm1434, %v1427, 920167782
    %v1441 = vsel %vm1433, %v1424, %v1440
    %v1442 = vsel %vm1432, %v1439, %v1441
    %v1443 = vsel %vm1431, %v1421, %v1424
    %v1444 = vsel %vm1434, %v1430, 1326507024
    %v1445 = vsel %vm1433, %v1427, %v1444
    %v1446 = vsel %vm1432, %v1443, %v1445
    %v1447 = vshll.u32 %v1407, 8
    %v1448 = vmul.u32.u64.compose %v1447, %v1446
    %v1449 = vextract.low.u32 %v1448
    %v1450 = vextract.high.u32 %v1448
    %v1451 = vmul.u32.u64.compose %v1447, %v1442
    %v1452 = vextract.low.u32 %v1451
    %v1453 = vextract.high.u32 %v1451
    %v1454 = vmul.u32 %v1447, %v1438
    %v1455 = vadd.s32 %v1450, %v1452
    %vm1456 = vc.u32 %v1450, %v1452
    %v1457 = vadd.s32 %v1453, 1
    %v1458 = vsel %vm1456, %v1457, %v1453
    %v1459 = vadd.s32 %v1454, %v1458
    %v1460 = vadd.s32 %v1459, 536870912
    %v1461 = vshrl.u32 %v1460, 30
    %v1462 = vshll.u32 %v1461, 30
    %v1463 = vsub.s32 %v1459, %v1462
    %vm1464 = vcmp.lt.s32.totalorder %v1463, 0
    %v1465 = vsub.s32 0, %v1463
    %v1466 = vsel %vm1464, %v1465, %v1463
    %v1467 = vclz %v1466
    %v1468 = vsub.s32 %v1467, 2
    %vm1469 = vcmp.gt.s32.totalorder 0, %v1468
    %v1470 = vsel %vm1469, 0, %v1468
    %v1471 = vsub.s32 32, %v1470
    %v1472 = vshll.u32 %v1463, %v1470
    %v1473 = vshrl.u32 %v1455, %v1471
    %v1474 = vor.u32 %v1472, %v1473
    %v1475 = vsub.s32 4294967266, %v1470
    %v1476 = vadd.s32 %v1475, 127
    %v1477 = vshll.u32 %v1476, 23
    %v1478 = vor.u32 4788187, %v1477
    %v1479 = vand.u32 2147483647, %v1478
    %v1481 = vcvt.s32.f32 %v1474
    %v1482 = vmul.f32 %v1481, %v1479
    %v1483 = vxor.u32 %v1482, 2147483648
    %v1484 = vsel %vm1401, %v1483, %v1482
    %v1485 = vsub.s32 4, %v1461
    %v1486 = vsel %vm1401, %v1485, %v1461
    %v1487 = vsel %vm1400, %v28, %v1484
    %v1488 = vsel %vm1400, 0, %v1486
    %v1489 = vcosq.f32.pop %v1487
    %v1490 = vsinq.f32.pop %v1487
    %vm1491 = vweird.f32 %v28
    %v1492 = vadd.s32 %v1488, 3
    %v1493 = vand.u32 %v1492, 3
    %vm1494 = vcmp.lt.s32.totalorder %v1493, 2
    %vm1495 = vcmp.eq.s32.totalorder %v1493, 0
    %v1496 = vxor.u32 %v1490, 2147483648
    %v1497 = vsel %vm1495, %v1489, %v1496
    %vm1498 = vcmp.eq.s32.totalorder %v1493, 2
    %v1499 = vxor.u32 %v1489, 2147483648
    %v1500 = vsel %vm1498, %v1499, %v1490
    %v1501 = vsel %vm1494, %v1497, %v1500
    %v1502 = vsel %vm1491, nan, %v1501
    %v1503 = vand.u32 2147483647, %v29
    %vm1504 = vcmp.le.f32.partialorder %v1503, 0.7853982
    %vm1505 = vcmp.lt.s32.totalorder %v29, 0
    %v1506 = vand.u32 %v29, 2139095040
    %v1507 = vshrl.u32 %v1506, 23
    %v1508 = vsub.s32 %v1507, 127
    %v1509 = vand.u32 2147483647, %v29
    %v1510 = vand.u32 %v1509, 8388607
    %v1511 = vor.u32 %v1510, 8388608
    %v1512 = vsub.s32 0, %v1511
    %v1513 = vadd.s32 %v1508, 1
    %vm1514 = vcmp.gt.s32.totalorder %v1513, 0
    %v1515 = vsel %vm1514, %v1513, 0
    %v1516 = vshrl.u32 %v1515, 5
    %v1517 = vand.u32 %v1515, 31
    %v1518 = vsub.s32 32, %v1517
    %v1519 = vshrl.u32 683565275, %v1518
    %v1520 = vshll.u32 683565275, %v1517
    %v1521 = vshrl.u32 2475754826, %v1518
    %v1522 = vor.u32 %v1520, %v1521
    %v1523 = vshll.u32 2475754826, %v1517
    %v1524 = vshrl.u32 2131351028, %v1518
    %v1525 = vor.u32 %v1523, %v1524
    %v1526 = vshll.u32 2131351028, %v1517
    %v1527 = vshrl.u32 2102212464, %v1518
    %v1528 = vor.u32 %v1526, %v1527
    %v1529 = vshll.u32 2102212464, %v1517
    %v1530 = vshrl.u32 920167782, %v1518
    %v1531 = vor.u32 %v1529, %v1530
    %v1532 = vshll.u32 920167782, %v1517
    %v1533 = vshrl.u32 1326507024, %v1518
    %v1534 = vor.u32 %v1532, %v1533
    %vm1535 = vcmp.lt.s32.totalorder %v1516, 1
    %vm1536 = vcmp.lt.s32.totalorder %v1516, 2
    %vm1537 = vcmp.lt.s32.totalorder %v1516, 3
    %vm1538 = vcmp.lt.s32.totalorder %v1516, 4
    %v1539 = vsel %vm1535, %v1519, %v1522
    %v1540 = vsel %vm1538, %v1528, 2102212464
    %v1541 = vsel %vm1537, %v1525, %v1540
    %v1542 = vsel %vm1536, %v1539, %v1541
    %v1543 = vsel %vm1535, %v1522, %v1525
    %v1544 = vsel %vm1538, %v1531, 920167782
    %v1545 = vsel %vm1537, %v1528, %v1544
    %v1546 = vsel %vm1536, %v1543, %v1545
    %v1547 = vsel %vm1535, %v1525, %v1528
    %v1548 = vsel %vm1538, %v1534, 1326507024
    %v1549 = vsel %vm1537, %v1531, %v1548
    %v1550 = vsel %vm1536, %v1547, %v1549
    %v1551 = vshll.u32 %v1511, 8
    %v1552 = vmul.u32.u64.compose %v1551, %v1550
    %v1553 = vextract.low.u32 %v1552
    %v1554 = vextract.high.u32 %v1552
    %v1555 = vmul.u32.u64.compose %v1551, %v1546
    %v1556 = vextract.low.u32 %v1555
    %v1557 = vextract.high.u32 %v1555
    %v1558 = vmul.u32 %v1551, %v1542
    %v1559 = vadd.s32 %v1554, %v1556
    %vm1560 = vc.u32 %v1554, %v1556
    %v1561 = vadd.s32 %v1557, 1
    %v1562 = vsel %vm1560, %v1561, %v1557
    %v1563 = vadd.s32 %v1558, %v1562
    %v1564 = vadd.s32 %v1563, 536870912
    %v1565 = vshrl.u32 %v1564, 30
    %v1566 = vshll.u32 %v1565, 30
    %v1567 = vsub.s32 %v1563, %v1566
    %vm1568 = vcmp.lt.s32.totalorder %v1567, 0
    %v1569 = vsub.s32 0, %v1567
    %v1570 = vsel %vm1568, %v1569, %v1567
    %v1571 = vclz %v1570
    %v1572 = vsub.s32 %v1571, 2
    %vm1573 = vcmp.gt.s32.totalorder 0, %v1572
    %v1574 = vsel %vm1573, 0, %v1572
    %v1575 = vsub.s32 32, %v1574
    %v1576 = vshll.u32 %v1567, %v1574
    %v1577 = vshrl.u32 %v1559, %v1575
    %v1578 = vor.u32 %v1576, %v1577
    %v1579 = vsub.s32 4294967266, %v1574
    %v1580 = vadd.s32 %v1579, 127
    %v1581 = vshll.u32 %v1580, 23
    %v1582 = vor.u32 4788187, %v1581
    %v1583 = vand.u32 2147483647, %v1582
    %v1585 = vcvt.s32.f32 %v1578
    %v1586 = vmul.f32 %v1585, %v1583
    %v1587 = vxor.u32 %v1586, 2147483648
    %v1588 = vsel %vm1505, %v1587, %v1586
    %v1589 = vsub.s32 4, %v1565
    %v1590 = vsel %vm1505, %v1589, %v1565
    %v1591 = vsel %vm1504, %v29, %v1588
    %v1592 = vsel %vm1504, 0, %v1590
    %v1593 = vcosq.f32.pop %v1591
    %v1594 = vsinq.f32.pop %v1591
    %vm1595 = vweird.f32 %v29
    %v1596 = vadd.s32 %v1592, 3
    %v1597 = vand.u32 %v1596, 3
    %vm1598 = vcmp.lt.s32.totalorder %v1597, 2
    %vm1599 = vcmp.eq.s32.totalorder %v1597, 0
    %v1600 = vxor.u32 %v1594, 2147483648
    %v1601 = vsel %vm1599, %v1593, %v1600
    %vm1602 = vcmp.eq.s32.totalorder %v1597, 2
    %v1603 = vxor.u32 %v1593, 2147483648
    %v1604 = vsel %vm1602, %v1603, %v1594
    %v1605 = vsel %vm1598, %v1601, %v1604
    %v1606 = vsel %vm1595, nan, %v1605
    %v1607 = vand.u32 2147483647, %v30
    %vm1608 = vcmp.le.f32.partialorder %v1607, 0.7853982
    %vm1609 = vcmp.lt.s32.totalorder %v30, 0
    %v1610 = vand.u32 %v30, 2139095040
    %v1611 = vshrl.u32 %v1610, 23
    %v1612 = vsub.s32 %v1611, 127
    %v1613 = vand.u32 2147483647, %v30
    %v1614 = vand.u32 %v1613, 8388607
    %v1615 = vor.u32 %v1614, 8388608
    %v1616 = vsub.s32 0, %v1615
    %v1617 = vadd.s32 %v1612, 1
    %vm1618 = vcmp.gt.s32.totalorder %v1617, 0
    %v1619 = vsel %vm1618, %v1617, 0
    %v1620 = vshrl.u32 %v1619, 5
    %v1621 = vand.u32 %v1619, 31
    %v1622 = vsub.s32 32, %v1621
    %v1623 = vshrl.u32 683565275, %v1622
    %v1624 = vshll.u32 683565275, %v1621
    %v1625 = vshrl.u32 2475754826, %v1622
    %v1626 = vor.u32 %v1624, %v1625
    %v1627 = vshll.u32 2475754826, %v1621
    %v1628 = vshrl.u32 2131351028, %v1622
    %v1629 = vor.u32 %v1627, %v1628
    %v1630 = vshll.u32 2131351028, %v1621
    %v1631 = vshrl.u32 2102212464, %v1622
    %v1632 = vor.u32 %v1630, %v1631
    %v1633 = vshll.u32 2102212464, %v1621
    %v1634 = vshrl.u32 920167782, %v1622
    %v1635 = vor.u32 %v1633, %v1634
    %v1636 = vshll.u32 920167782, %v1621
    %v1637 = vshrl.u32 1326507024, %v1622
    %v1638 = vor.u32 %v1636, %v1637
    %vm1639 = vcmp.lt.s32.totalorder %v1620, 1
    %vm1640 = vcmp.lt.s32.totalorder %v1620, 2
    %vm1641 = vcmp.lt.s32.totalorder %v1620, 3
    %vm1642 = vcmp.lt.s32.totalorder %v1620, 4
    %v1643 = vsel %vm1639, %v1623, %v1626
    %v1644 = vsel %vm1642, %v1632, 2102212464
    %v1645 = vsel %vm1641, %v1629, %v1644
    %v1646 = vsel %vm1640, %v1643, %v1645
    %v1647 = vsel %vm1639, %v1626, %v1629
    %v1648 = vsel %vm1642, %v1635, 920167782
    %v1649 = vsel %vm1641, %v1632, %v1648
    %v1650 = vsel %vm1640, %v1647, %v1649
    %v1651 = vsel %vm1639, %v1629, %v1632
    %v1652 = vsel %vm1642, %v1638, 1326507024
    %v1653 = vsel %vm1641, %v1635, %v1652
    %v1654 = vsel %vm1640, %v1651, %v1653
    %v1655 = vshll.u32 %v1615, 8
    %v1656 = vmul.u32.u64.compose %v1655, %v1654
    %v1657 = vextract.low.u32 %v1656
    %v1658 = vextract.high.u32 %v1656
    %v1659 = vmul.u32.u64.compose %v1655, %v1650
    %v1660 = vextract.low.u32 %v1659
    %v1661 = vextract.high.u32 %v1659
    %v1662 = vmul.u32 %v1655, %v1646
    %v1663 = vadd.s32 %v1658, %v1660
    %vm1664 = vc.u32 %v1658, %v1660
    %v1665 = vadd.s32 %v1661, 1
    %v1666 = vsel %vm1664, %v1665, %v1661
    %v1667 = vadd.s32 %v1662, %v1666
    %v1668 = vadd.s32 %v1667, 536870912
    %v1669 = vshrl.u32 %v1668, 30
    %v1670 = vshll.u32 %v1669, 30
    %v1671 = vsub.s32 %v1667, %v1670
    %vm1672 = vcmp.lt.s32.totalorder %v1671, 0
    %v1673 = vsub.s32 0, %v1671
    %v1674 = vsel %vm1672, %v1673, %v1671
    %v1675 = vclz %v1674
    %v1676 = vsub.s32 %v1675, 2
    %vm1677 = vcmp.gt.s32.totalorder 0, %v1676
    %v1678 = vsel %vm1677, 0, %v1676
    %v1679 = vsub.s32 32, %v1678
    %v1680 = vshll.u32 %v1671, %v1678
    %v1681 = vshrl.u32 %v1663, %v1679
    %v1682 = vor.u32 %v1680, %v1681
    %v1683 = vsub.s32 4294967266, %v1678
    %v1684 = vadd.s32 %v1683, 127
    %v1685 = vshll.u32 %v1684, 23
    %v1686 = vor.u32 4788187, %v1685
    %v1687 = vand.u32 2147483647, %v1686
    %v1689 = vcvt.s32.f32 %v1682
    %v1690 = vmul.f32 %v1689, %v1687
    %v1691 = vxor.u32 %v1690, 2147483648
    %v1692 = vsel %vm1609, %v1691, %v1690
    %v1693 = vsub.s32 4, %v1669
    %v1694 = vsel %vm1609, %v1693, %v1669
    %v1695 = vsel %vm1608, %v30, %v1692
    %v1696 = vsel %vm1608, 0, %v1694
    %v1697 = vcosq.f32.pop %v1695
    %v1698 = vsinq.f32.pop %v1695
    %vm1699 = vweird.f32 %v30
    %v1700 = vadd.s32 %v1696, 3
    %v1701 = vand.u32 %v1700, 3
    %vm1702 = vcmp.lt.s32.totalorder %v1701, 2
    %vm1703 = vcmp.eq.s32.totalorder %v1701, 0
    %v1704 = vxor.u32 %v1698, 2147483648
    %v1705 = vsel %vm1703, %v1697, %v1704
    %vm1706 = vcmp.eq.s32.totalorder %v1701, 2
    %v1707 = vxor.u32 %v1697, 2147483648
    %v1708 = vsel %vm1706, %v1707, %v1698
    %v1709 = vsel %vm1702, %v1705, %v1708
    %v1710 = vsel %vm1699, nan, %v1709
    %v1711 = vand.u32 2147483647, %v31
    %vm1712 = vcmp.le.f32.partialorder %v1711, 0.7853982
    %vm1713 = vcmp.lt.s32.totalorder %v31, 0
    %v1714 = vand.u32 %v31, 2139095040
    %v1715 = vshrl.u32 %v1714, 23
    %v1716 = vsub.s32 %v1715, 127
    %v1717 = vand.u32 2147483647, %v31
    %v1718 = vand.u32 %v1717, 8388607
    %v1719 = vor.u32 %v1718, 8388608
    %v1720 = vsub.s32 0, %v1719
    %v1721 = vadd.s32 %v1716, 1
    %vm1722 = vcmp.gt.s32.totalorder %v1721, 0
    %v1723 = vsel %vm1722, %v1721, 0
    %v1724 = vshrl.u32 %v1723, 5
    %v1725 = vand.u32 %v1723, 31
    %v1726 = vsub.s32 32, %v1725
    %v1727 = vshrl.u32 683565275, %v1726
    %v1728 = vshll.u32 683565275, %v1725
    %v1729 = vshrl.u32 2475754826, %v1726
    %v1730 = vor.u32 %v1728, %v1729
    %v1731 = vshll.u32 2475754826, %v1725
    %v1732 = vshrl.u32 2131351028, %v1726
    %v1733 = vor.u32 %v1731, %v1732
    %v1734 = vshll.u32 2131351028, %v1725
    %v1735 = vshrl.u32 2102212464, %v1726
    %v1736 = vor.u32 %v1734, %v1735
    %v1737 = vshll.u32 2102212464, %v1725
    %v1738 = vshrl.u32 920167782, %v1726
    %v1739 = vor.u32 %v1737, %v1738
    %v1740 = vshll.u32 920167782, %v1725
    %v1741 = vshrl.u32 1326507024, %v1726
    %v1742 = vor.u32 %v1740, %v1741
    %vm1743 = vcmp.lt.s32.totalorder %v1724, 1
    %vm1744 = vcmp.lt.s32.totalorder %v1724, 2
    %vm1745 = vcmp.lt.s32.totalorder %v1724, 3
    %vm1746 = vcmp.lt.s32.totalorder %v1724, 4
    %v1747 = vsel %vm1743, %v1727, %v1730
    %v1748 = vsel %vm1746, %v1736, 2102212464
    %v1749 = vsel %vm1745, %v1733, %v1748
    %v1750 = vsel %vm1744, %v1747, %v1749
    %v1751 = vsel %vm1743, %v1730, %v1733
    %v1752 = vsel %vm1746, %v1739, 920167782
    %v1753 = vsel %vm1745, %v1736, %v1752
    %v1754 = vsel %vm1744, %v1751, %v1753
    %v1755 = vsel %vm1743, %v1733, %v1736
    %v1756 = vsel %vm1746, %v1742, 1326507024
    %v1757 = vsel %vm1745, %v1739, %v1756
    %v1758 = vsel %vm1744, %v1755, %v1757
    %v1759 = vshll.u32 %v1719, 8
    %v1760 = vmul.u32.u64.compose %v1759, %v1758
    %v1761 = vextract.low.u32 %v1760
    %v1762 = vextract.high.u32 %v1760
    %v1763 = vmul.u32.u64.compose %v1759, %v1754
    %v1764 = vextract.low.u32 %v1763
    %v1765 = vextract.high.u32 %v1763
    %v1766 = vmul.u32 %v1759, %v1750
    %v1767 = vadd.s32 %v1762, %v1764
    %vm1768 = vc.u32 %v1762, %v1764
    %v1769 = vadd.s32 %v1765, 1
    %v1770 = vsel %vm1768, %v1769, %v1765
    %v1771 = vadd.s32 %v1766, %v1770
    %v1772 = vadd.s32 %v1771, 536870912
    %v1773 = vshrl.u32 %v1772, 30
    %v1774 = vshll.u32 %v1773, 30
    %v1775 = vsub.s32 %v1771, %v1774
    %vm1776 = vcmp.lt.s32.totalorder %v1775, 0
    %v1777 = vsub.s32 0, %v1775
    %v1778 = vsel %vm1776, %v1777, %v1775
    %v1779 = vclz %v1778
    %v1780 = vsub.s32 %v1779, 2
    %vm1781 = vcmp.gt.s32.totalorder 0, %v1780
    %v1782 = vsel %vm1781, 0, %v1780
    %v1783 = vsub.s32 32, %v1782
    %v1784 = vshll.u32 %v1775, %v1782
    %v1785 = vshrl.u32 %v1767, %v1783
    %v1786 = vor.u32 %v1784, %v1785
    %v1787 = vsub.s32 4294967266, %v1782
    %v1788 = vadd.s32 %v1787, 127
    %v1789 = vshll.u32 %v1788, 23
    %v1790 = vor.u32 4788187, %v1789
    %v1791 = vand.u32 2147483647, %v1790
    %v1793 = vcvt.s32.f32 %v1786
    %v1794 = vmul.f32 %v1793, %v1791
    %v1795 = vxor.u32 %v1794, 2147483648
    %v1796 = vsel %vm1713, %v1795, %v1794
    %v1797 = vsub.s32 4, %v1773
    %v1798 = vsel %vm1713, %v1797, %v1773
    %v1799 = vsel %vm1712, %v31, %v1796
    %v1800 = vsel %vm1712, 0, %v1798
    %v1801 = vcosq.f32.pop %v1799
    %v1802 = vsinq.f32.pop %v1799
    %vm1803 = vweird.f32 %v31
    %v1804 = vadd.s32 %v1800, 3
    %v1805 = vand.u32 %v1804, 3
    %vm1806 = vcmp.lt.s32.totalorder %v1805, 2
    %vm1807 = vcmp.eq.s32.totalorder %v1805, 0
    %v1808 = vxor.u32 %v1802, 2147483648
    %v1809 = vsel %vm1807, %v1801, %v1808
    %vm1810 = vcmp.eq.s32.totalorder %v1805, 2
    %v1811 = vxor.u32 %v1801, 2147483648
    %v1812 = vsel %vm1810, %v1811, %v1802
    %v1813 = vsel %vm1806, %v1809, %v1812
    %v1814 = vsel %vm1803, nan, %v1813
    %v1815 = vand.u32 2147483647, %v32
    %vm1816 = vcmp.le.f32.partialorder %v1815, 0.7853982
    %vm1817 = vcmp.lt.s32.totalorder %v32, 0
    %v1818 = vand.u32 %v32, 2139095040
    %v1819 = vshrl.u32 %v1818, 23
    %v1820 = vsub.s32 %v1819, 127
    %v1821 = vand.u32 2147483647, %v32
    %v1822 = vand.u32 %v1821, 8388607
    %v1823 = vor.u32 %v1822, 8388608
    %v1824 = vsub.s32 0, %v1823
    %v1825 = vadd.s32 %v1820, 1
    %vm1826 = vcmp.gt.s32.totalorder %v1825, 0
    %v1827 = vsel %vm1826, %v1825, 0
    %v1828 = vshrl.u32 %v1827, 5
    %v1829 = vand.u32 %v1827, 31
    %v1830 = vsub.s32 32, %v1829
    %v1831 = vshrl.u32 683565275, %v1830
    %v1832 = vshll.u32 683565275, %v1829
    %v1833 = vshrl.u32 2475754826, %v1830
    %v1834 = vor.u32 %v1832, %v1833
    %v1835 = vshll.u32 2475754826, %v1829
    %v1836 = vshrl.u32 2131351028, %v1830
    %v1837 = vor.u32 %v1835, %v1836
    %v1838 = vshll.u32 2131351028, %v1829
    %v1839 = vshrl.u32 2102212464, %v1830
    %v1840 = vor.u32 %v1838, %v1839
    %v1841 = vshll.u32 2102212464, %v1829
    %v1842 = vshrl.u32 920167782, %v1830
    %v1843 = vor.u32 %v1841, %v1842
    %v1844 = vshll.u32 920167782, %v1829
    %v1845 = vshrl.u32 1326507024, %v1830
    %v1846 = vor.u32 %v1844, %v1845
    %vm1847 = vcmp.lt.s32.totalorder %v1828, 1
    %vm1848 = vcmp.lt.s32.totalorder %v1828, 2
    %vm1849 = vcmp.lt.s32.totalorder %v1828, 3
    %vm1850 = vcmp.lt.s32.totalorder %v1828, 4
    %v1851 = vsel %vm1847, %v1831, %v1834
    %v1852 = vsel %vm1850, %v1840, 2102212464
    %v1853 = vsel %vm1849, %v1837, %v1852
    %v1854 = vsel %vm1848, %v1851, %v1853
    %v1855 = vsel %vm1847, %v1834, %v1837
    %v1856 = vsel %vm1850, %v1843, 920167782
    %v1857 = vsel %vm1849, %v1840, %v1856
    %v1858 = vsel %vm1848, %v1855, %v1857
    %v1859 = vsel %vm1847, %v1837, %v1840
    %v1860 = vsel %vm1850, %v1846, 1326507024
    %v1861 = vsel %vm1849, %v1843, %v1860
    %v1862 = vsel %vm1848, %v1859, %v1861
    %v1863 = vshll.u32 %v1823, 8
    %v1864 = vmul.u32.u64.compose %v1863, %v1862
    %v1865 = vextract.low.u32 %v1864
    %v1866 = vextract.high.u32 %v1864
    %v1867 = vmul.u32.u64.compose %v1863, %v1858
    %v1868 = vextract.low.u32 %v1867
    %v1869 = vextract.high.u32 %v1867
    %v1870 = vmul.u32 %v1863, %v1854
    %v1871 = vadd.s32 %v1866, %v1868
    %vm1872 = vc.u32 %v1866, %v1868
    %v1873 = vadd.s32 %v1869, 1
    %v1874 = vsel %vm1872, %v1873, %v1869
    %v1875 = vadd.s32 %v1870, %v1874
    %v1876 = vadd.s32 %v1875, 536870912
    %v1877 = vshrl.u32 %v1876, 30
    %v1878 = vshll.u32 %v1877, 30
    %v1879 = vsub.s32 %v1875, %v1878
    %vm1880 = vcmp.lt.s32.totalorder %v1879, 0
    %v1881 = vsub.s32 0, %v1879
    %v1882 = vsel %vm1880, %v1881, %v1879
    %v1883 = vclz %v1882
    %v1884 = vsub.s32 %v1883, 2
    %vm1885 = vcmp.gt.s32.totalorder 0, %v1884
    %v1886 = vsel %vm1885, 0, %v1884
    %v1887 = vsub.s32 32, %v1886
    %v1888 = vshll.u32 %v1879, %v1886
    %v1889 = vshrl.u32 %v1871, %v1887
    %v1890 = vor.u32 %v1888, %v1889
    %v1891 = vsub.s32 4294967266, %v1886
    %v1892 = vadd.s32 %v1891, 127
    %v1893 = vshll.u32 %v1892, 23
    %v1894 = vor.u32 4788187, %v1893
    %v1895 = vand.u32 2147483647, %v1894
    %v1897 = vcvt.s32.f32 %v1890
    %v1898 = vmul.f32 %v1897, %v1895
    %v1899 = vxor.u32 %v1898, 2147483648
    %v1900 = vsel %vm1817, %v1899, %v1898
    %v1901 = vsub.s32 4, %v1877
    %v1902 = vsel %vm1817, %v1901, %v1877
    %v1903 = vsel %vm1816, %v32, %v1900
    %v1904 = vsel %vm1816, 0, %v1902
    %v1905 = vcosq.f32.pop %v1903
    %v1906 = vsinq.f32.pop %v1903
    %vm1907 = vweird.f32 %v32
    %v1908 = vadd.s32 %v1904, 3
    %v1909 = vand.u32 %v1908, 3
    %vm1910 = vcmp.lt.s32.totalorder %v1909, 2
    %vm1911 = vcmp.eq.s32.totalorder %v1909, 0
    %v1912 = vxor.u32 %v1906, 2147483648
    %v1913 = vsel %vm1911, %v1905, %v1912
    %vm1914 = vcmp.eq.s32.totalorder %v1909, 2
    %v1915 = vxor.u32 %v1905, 2147483648
    %v1916 = vsel %vm1914, %v1915, %v1906
    %v1917 = vsel %vm1910, %v1913, %v1916
    %v1918 = vsel %vm1907, nan, %v1917
    %v1919 = vand.u32 2147483647, %v33
    %vm1920 = vcmp.le.f32.partialorder %v1919, 0.7853982
    %vm1921 = vcmp.lt.s32.totalorder %v33, 0
    %v1922 = vand.u32 %v33, 2139095040
    %v1923 = vshrl.u32 %v1922, 23
    %v1924 = vsub.s32 %v1923, 127
    %v1925 = vand.u32 2147483647, %v33
    %v1926 = vand.u32 %v1925, 8388607
    %v1927 = vor.u32 %v1926, 8388608
    %v1928 = vsub.s32 0, %v1927
    %v1929 = vadd.s32 %v1924, 1
    %vm1930 = vcmp.gt.s32.totalorder %v1929, 0
    %v1931 = vsel %vm1930, %v1929, 0
    %v1932 = vshrl.u32 %v1931, 5
    %v1933 = vand.u32 %v1931, 31
    %v1934 = vsub.s32 32, %v1933
    %v1935 = vshrl.u32 683565275, %v1934
    %v1936 = vshll.u32 683565275, %v1933
    %v1937 = vshrl.u32 2475754826, %v1934
    %v1938 = vor.u32 %v1936, %v1937
    %v1939 = vshll.u32 2475754826, %v1933
    %v1940 = vshrl.u32 2131351028, %v1934
    %v1941 = vor.u32 %v1939, %v1940
    %v1942 = vshll.u32 2131351028, %v1933
    %v1943 = vshrl.u32 2102212464, %v1934
    %v1944 = vor.u32 %v1942, %v1943
    %v1945 = vshll.u32 2102212464, %v1933
    %v1946 = vshrl.u32 920167782, %v1934
    %v1947 = vor.u32 %v1945, %v1946
    %v1948 = vshll.u32 920167782, %v1933
    %v1949 = vshrl.u32 1326507024, %v1934
    %v1950 = vor.u32 %v1948, %v1949
    %vm1951 = vcmp.lt.s32.totalorder %v1932, 1
    %vm1952 = vcmp.lt.s32.totalorder %v1932, 2
    %vm1953 = vcmp.lt.s32.totalorder %v1932, 3
    %vm1954 = vcmp.lt.s32.totalorder %v1932, 4
    %v1955 = vsel %vm1951, %v1935, %v1938
    %v1956 = vsel %vm1954, %v1944, 2102212464
    %v1957 = vsel %vm1953, %v1941, %v1956
    %v1958 = vsel %vm1952, %v1955, %v1957
    %v1959 = vsel %vm1951, %v1938, %v1941
    %v1960 = vsel %vm1954, %v1947, 920167782
    %v1961 = vsel %vm1953, %v1944, %v1960
    %v1962 = vsel %vm1952, %v1959, %v1961
    %v1963 = vsel %vm1951, %v1941, %v1944
    %v1964 = vsel %vm1954, %v1950, 1326507024
    %v1965 = vsel %vm1953, %v1947, %v1964
    %v1966 = vsel %vm1952, %v1963, %v1965
    %v1967 = vshll.u32 %v1927, 8
    %v1968 = vmul.u32.u64.compose %v1967, %v1966
    %v1969 = vextract.low.u32 %v1968
    %v1970 = vextract.high.u32 %v1968
    %v1971 = vmul.u32.u64.compose %v1967, %v1962
    %v1972 = vextract.low.u32 %v1971
    %v1973 = vextract.high.u32 %v1971
    %v1974 = vmul.u32 %v1967, %v1958
    %v1975 = vadd.s32 %v1970, %v1972
    %vm1976 = vc.u32 %v1970, %v1972
    %v1977 = vadd.s32 %v1973, 1
    %v1978 = vsel %vm1976, %v1977, %v1973
    %v1979 = vadd.s32 %v1974, %v1978
    %v1980 = vadd.s32 %v1979, 536870912
    %v1981 = vshrl.u32 %v1980, 30
    %v1982 = vshll.u32 %v1981, 30
    %v1983 = vsub.s32 %v1979, %v1982
    %vm1984 = vcmp.lt.s32.totalorder %v1983, 0
    %v1985 = vsub.s32 0, %v1983
    %v1986 = vsel %vm1984, %v1985, %v1983
    %v1987 = vclz %v1986
    %v1988 = vsub.s32 %v1987, 2
    %vm1989 = vcmp.gt.s32.totalorder 0, %v1988
    %v1990 = vsel %vm1989, 0, %v1988
    %v1991 = vsub.s32 32, %v1990
    %v1992 = vshll.u32 %v1983, %v1990
    %v1993 = vshrl.u32 %v1975, %v1991
    %v1994 = vor.u32 %v1992, %v1993
    %v1995 = vsub.s32 4294967266, %v1990
    %v1996 = vadd.s32 %v1995, 127
    %v1997 = vshll.u32 %v1996, 23
    %v1998 = vor.u32 4788187, %v1997
    %v1999 = vand.u32 2147483647, %v1998
    %v2001 = vcvt.s32.f32 %v1994
    %v2002 = vmul.f32 %v2001, %v1999
    %v2003 = vxor.u32 %v2002, 2147483648
    %v2004 = vsel %vm1921, %v2003, %v2002
    %v2005 = vsub.s32 4, %v1981
    %v2006 = vsel %vm1921, %v2005, %v1981
    %v2007 = vsel %vm1920, %v33, %v2004
    %v2008 = vsel %vm1920, 0, %v2006
    %v2009 = vcosq.f32.pop %v2007
    %v2010 = vsinq.f32.pop %v2007
    %vm2011 = vweird.f32 %v33
    %v2012 = vadd.s32 %v2008, 3
    %v2013 = vand.u32 %v2012, 3
    %vm2014 = vcmp.lt.s32.totalorder %v2013, 2
    %vm2015 = vcmp.eq.s32.totalorder %v2013, 0
    %v2016 = vxor.u32 %v2010, 2147483648
    %v2017 = vsel %vm2015, %v2009, %v2016
    %vm2018 = vcmp.eq.s32.totalorder %v2013, 2
    %v2019 = vxor.u32 %v2009, 2147483648
    %v2020 = vsel %vm2018, %v2019, %v2010
    %v2021 = vsel %vm2014, %v2017, %v2020
    %v2022 = vsel %vm2011, nan, %v2021
    %v2023 = vand.u32 2147483647, %v34
    %vm2024 = vcmp.le.f32.partialorder %v2023, 0.7853982
    %vm2025 = vcmp.lt.s32.totalorder %v34, 0
    %v2026 = vand.u32 %v34, 2139095040
    %v2027 = vshrl.u32 %v2026, 23
    %v2028 = vsub.s32 %v2027, 127
    %v2029 = vand.u32 2147483647, %v34
    %v2030 = vand.u32 %v2029, 8388607
    %v2031 = vor.u32 %v2030, 8388608
    %v2032 = vsub.s32 0, %v2031
    %v2033 = vadd.s32 %v2028, 1
    %vm2034 = vcmp.gt.s32.totalorder %v2033, 0
    %v2035 = vsel %vm2034, %v2033, 0
    %v2036 = vshrl.u32 %v2035, 5
    %v2037 = vand.u32 %v2035, 31
    %v2038 = vsub.s32 32, %v2037
    %v2039 = vshrl.u32 683565275, %v2038
    %v2040 = vshll.u32 683565275, %v2037
    %v2041 = vshrl.u32 2475754826, %v2038
    %v2042 = vor.u32 %v2040, %v2041
    %v2043 = vshll.u32 2475754826, %v2037
    %v2044 = vshrl.u32 2131351028, %v2038
    %v2045 = vor.u32 %v2043, %v2044
    %v2046 = vshll.u32 2131351028, %v2037
    %v2047 = vshrl.u32 2102212464, %v2038
    %v2048 = vor.u32 %v2046, %v2047
    %v2049 = vshll.u32 2102212464, %v2037
    %v2050 = vshrl.u32 920167782, %v2038
    %v2051 = vor.u32 %v2049, %v2050
    %v2052 = vshll.u32 920167782, %v2037
    %v2053 = vshrl.u32 1326507024, %v2038
    %v2054 = vor.u32 %v2052, %v2053
    %vm2055 = vcmp.lt.s32.totalorder %v2036, 1
    %vm2056 = vcmp.lt.s32.totalorder %v2036, 2
    %vm2057 = vcmp.lt.s32.totalorder %v2036, 3
    %vm2058 = vcmp.lt.s32.totalorder %v2036, 4
    %v2059 = vsel %vm2055, %v2039, %v2042
    %v2060 = vsel %vm2058, %v2048, 2102212464
    %v2061 = vsel %vm2057, %v2045, %v2060
    %v2062 = vsel %vm2056, %v2059, %v2061
    %v2063 = vsel %vm2055, %v2042, %v2045
    %v2064 = vsel %vm2058, %v2051, 920167782
    %v2065 = vsel %vm2057, %v2048, %v2064
    %v2066 = vsel %vm2056, %v2063, %v2065
    %v2067 = vsel %vm2055, %v2045, %v2048
    %v2068 = vsel %vm2058, %v2054, 1326507024
    %v2069 = vsel %vm2057, %v2051, %v2068
    %v2070 = vsel %vm2056, %v2067, %v2069
    %v2071 = vshll.u32 %v2031, 8
    %v2072 = vmul.u32.u64.compose %v2071, %v2070
    %v2073 = vextract.low.u32 %v2072
    %v2074 = vextract.high.u32 %v2072
    %v2075 = vmul.u32.u64.compose %v2071, %v2066
    %v2076 = vextract.low.u32 %v2075
    %v2077 = vextract.high.u32 %v2075
    %v2078 = vmul.u32 %v2071, %v2062
    %v2079 = vadd.s32 %v2074, %v2076
    %vm2080 = vc.u32 %v2074, %v2076
    %v2081 = vadd.s32 %v2077, 1
    %v2082 = vsel %vm2080, %v2081, %v2077
    %v2083 = vadd.s32 %v2078, %v2082
    %v2084 = vadd.s32 %v2083, 536870912
    %v2085 = vshrl.u32 %v2084, 30
    %v2086 = vshll.u32 %v2085, 30
    %v2087 = vsub.s32 %v2083, %v2086
    %vm2088 = vcmp.lt.s32.totalorder %v2087, 0
    %v2089 = vsub.s32 0, %v2087
    %v2090 = vsel %vm2088, %v2089, %v2087
    %v2091 = vclz %v2090
    %v2092 = vsub.s32 %v2091, 2
    %vm2093 = vcmp.gt.s32.totalorder 0, %v2092
    %v2094 = vsel %vm2093, 0, %v2092
    %v2095 = vsub.s32 32, %v2094
    %v2096 = vshll.u32 %v2087, %v2094
    %v2097 = vshrl.u32 %v2079, %v2095
    %v2098 = vor.u32 %v2096, %v2097
    %v2099 = vsub.s32 4294967266, %v2094
    %v2100 = vadd.s32 %v2099, 127
    %v2101 = vshll.u32 %v2100, 23
    %v2102 = vor.u32 4788187, %v2101
    %v2103 = vand.u32 2147483647, %v2102
    %v2105 = vcvt.s32.f32 %v2098
    %v2106 = vmul.f32 %v2105, %v2103
    %v2107 = vxor.u32 %v2106, 2147483648
    %v2108 = vsel %vm2025, %v2107, %v2106
    %v2109 = vsub.s32 4, %v2085
    %v2110 = vsel %vm2025, %v2109, %v2085
    %v2111 = vsel %vm2024, %v34, %v2108
    %v2112 = vsel %vm2024, 0, %v2110
    %v2113 = vcosq.f32.pop %v2111
    %v2114 = vsinq.f32.pop %v2111
    %vm2115 = vweird.f32 %v34
    %v2116 = vadd.s32 %v2112, 3
    %v2117 = vand.u32 %v2116, 3
    %vm2118 = vcmp.lt.s32.totalorder %v2117, 2
    %vm2119 = vcmp.eq.s32.totalorder %v2117, 0
    %v2120 = vxor.u32 %v2114, 2147483648
    %v2121 = vsel %vm2119, %v2113, %v2120
    %vm2122 = vcmp.eq.s32.totalorder %v2117, 2
    %v2123 = vxor.u32 %v2113, 2147483648
    %v2124 = vsel %vm2122, %v2123, %v2114
    %v2125 = vsel %vm2118, %v2121, %v2124
    %v2126 = vsel %vm2115, nan, %v2125
    %v2127 = vand.u32 2147483647, %v35
    %vm2128 = vcmp.le.f32.partialorder %v2127, 0.7853982
    %vm2129 = vcmp.lt.s32.totalorder %v35, 0
    %v2130 = vand.u32 %v35, 2139095040
    %v2131 = vshrl.u32 %v2130, 23
    %v2132 = vsub.s32 %v2131, 127
    %v2133 = vand.u32 2147483647, %v35
    %v2134 = vand.u32 %v2133, 8388607
    %v2135 = vor.u32 %v2134, 8388608
    %v2136 = vsub.s32 0, %v2135
    %v2137 = vadd.s32 %v2132, 1
    %vm2138 = vcmp.gt.s32.totalorder %v2137, 0
    %v2139 = vsel %vm2138, %v2137, 0
    %v2140 = vshrl.u32 %v2139, 5
    %v2141 = vand.u32 %v2139, 31
    %v2142 = vsub.s32 32, %v2141
    %v2143 = vshrl.u32 683565275, %v2142
    %v2144 = vshll.u32 683565275, %v2141
    %v2145 = vshrl.u32 2475754826, %v2142
    %v2146 = vor.u32 %v2144, %v2145
    %v2147 = vshll.u32 2475754826, %v2141
    %v2148 = vshrl.u32 2131351028, %v2142
    %v2149 = vor.u32 %v2147, %v2148
    %v2150 = vshll.u32 2131351028, %v2141
    %v2151 = vshrl.u32 2102212464, %v2142
    %v2152 = vor.u32 %v2150, %v2151
    %v2153 = vshll.u32 2102212464, %v2141
    %v2154 = vshrl.u32 920167782, %v2142
    %v2155 = vor.u32 %v2153, %v2154
    %v2156 = vshll.u32 920167782, %v2141
    %v2157 = vshrl.u32 1326507024, %v2142
    %v2158 = vor.u32 %v2156, %v2157
    %vm2159 = vcmp.lt.s32.totalorder %v2140, 1
    %vm2160 = vcmp.lt.s32.totalorder %v2140, 2
    %vm2161 = vcmp.lt.s32.totalorder %v2140, 3
    %vm2162 = vcmp.lt.s32.totalorder %v2140, 4
    %v2163 = vsel %vm2159, %v2143, %v2146
    %v2164 = vsel %vm2162, %v2152, 2102212464
    %v2165 = vsel %vm2161, %v2149, %v2164
    %v2166 = vsel %vm2160, %v2163, %v2165
    %v2167 = vsel %vm2159, %v2146, %v2149
    %v2168 = vsel %vm2162, %v2155, 920167782
    %v2169 = vsel %vm2161, %v2152, %v2168
    %v2170 = vsel %vm2160, %v2167, %v2169
    %v2171 = vsel %vm2159, %v2149, %v2152
    %v2172 = vsel %vm2162, %v2158, 1326507024
    %v2173 = vsel %vm2161, %v2155, %v2172
    %v2174 = vsel %vm2160, %v2171, %v2173
    %v2175 = vshll.u32 %v2135, 8
    %v2176 = vmul.u32.u64.compose %v2175, %v2174
    %v2177 = vextract.low.u32 %v2176
    %v2178 = vextract.high.u32 %v2176
    %v2179 = vmul.u32.u64.compose %v2175, %v2170
    %v2180 = vextract.low.u32 %v2179
    %v2181 = vextract.high.u32 %v2179
    %v2182 = vmul.u32 %v2175, %v2166
    %v2183 = vadd.s32 %v2178, %v2180
    %vm2184 = vc.u32 %v2178, %v2180
    %v2185 = vadd.s32 %v2181, 1
    %v2186 = vsel %vm2184, %v2185, %v2181
    %v2187 = vadd.s32 %v2182, %v2186
    %v2188 = vadd.s32 %v2187, 536870912
    %v2189 = vshrl.u32 %v2188, 30
    %v2190 = vshll.u32 %v2189, 30
    %v2191 = vsub.s32 %v2187, %v2190
    %vm2192 = vcmp.lt.s32.totalorder %v2191, 0
    %v2193 = vsub.s32 0, %v2191
    %v2194 = vsel %vm2192, %v2193, %v2191
    %v2195 = vclz %v2194
    %v2196 = vsub.s32 %v2195, 2
    %vm2197 = vcmp.gt.s32.totalorder 0, %v2196
    %v2198 = vsel %vm2197, 0, %v2196
    %v2199 = vsub.s32 32, %v2198
    %v2200 = vshll.u32 %v2191, %v2198
    %v2201 = vshrl.u32 %v2183, %v2199
    %v2202 = vor.u32 %v2200, %v2201
    %v2203 = vsub.s32 4294967266, %v2198
    %v2204 = vadd.s32 %v2203, 127
    %v2205 = vshll.u32 %v2204, 23
    %v2206 = vor.u32 4788187, %v2205
    %v2207 = vand.u32 2147483647, %v2206
    %v2209 = vcvt.s32.f32 %v2202
    %v2210 = vmul.f32 %v2209, %v2207
    %v2211 = vxor.u32 %v2210, 2147483648
    %v2212 = vsel %vm2129, %v2211, %v2210
    %v2213 = vsub.s32 4, %v2189
    %v2214 = vsel %vm2129, %v2213, %v2189
    %v2215 = vsel %vm2128, %v35, %v2212
    %v2216 = vsel %vm2128, 0, %v2214
    %v2217 = vcosq.f32.pop %v2215
    %v2218 = vsinq.f32.pop %v2215
    %vm2219 = vweird.f32 %v35
    %v2220 = vadd.s32 %v2216, 3
    %v2221 = vand.u32 %v2220, 3
    %vm2222 = vcmp.lt.s32.totalorder %v2221, 2
    %vm2223 = vcmp.eq.s32.totalorder %v2221, 0
    %v2224 = vxor.u32 %v2218, 2147483648
    %v2225 = vsel %vm2223, %v2217, %v2224
    %vm2226 = vcmp.eq.s32.totalorder %v2221, 2
    %v2227 = vxor.u32 %v2217, 2147483648
    %v2228 = vsel %vm2226, %v2227, %v2218
    %v2229 = vsel %vm2222, %v2225, %v2228
    %v2230 = vsel %vm2219, nan, %v2229
    %v2231 = vand.u32 2147483647, %v36
    %vm2232 = vcmp.le.f32.partialorder %v2231, 0.7853982
    %vm2233 = vcmp.lt.s32.totalorder %v36, 0
    %v2234 = vand.u32 %v36, 2139095040
    %v2235 = vshrl.u32 %v2234, 23
    %v2236 = vsub.s32 %v2235, 127
    %v2237 = vand.u32 2147483647, %v36
    %v2238 = vand.u32 %v2237, 8388607
    %v2239 = vor.u32 %v2238, 8388608
    %v2240 = vsub.s32 0, %v2239
    %v2241 = vadd.s32 %v2236, 1
    %vm2242 = vcmp.gt.s32.totalorder %v2241, 0
    %v2243 = vsel %vm2242, %v2241, 0
    %v2244 = vshrl.u32 %v2243, 5
    %v2245 = vand.u32 %v2243, 31
    %v2246 = vsub.s32 32, %v2245
    %v2247 = vshrl.u32 683565275, %v2246
    %v2248 = vshll.u32 683565275, %v2245
    %v2249 = vshrl.u32 2475754826, %v2246
    %v2250 = vor.u32 %v2248, %v2249
    %v2251 = vshll.u32 2475754826, %v2245
    %v2252 = vshrl.u32 2131351028, %v2246
    %v2253 = vor.u32 %v2251, %v2252
    %v2254 = vshll.u32 2131351028, %v2245
    %v2255 = vshrl.u32 2102212464, %v2246
    %v2256 = vor.u32 %v2254, %v2255
    %v2257 = vshll.u32 2102212464, %v2245
    %v2258 = vshrl.u32 920167782, %v2246
    %v2259 = vor.u32 %v2257, %v2258
    %v2260 = vshll.u32 920167782, %v2245
    %v2261 = vshrl.u32 1326507024, %v2246
    %v2262 = vor.u32 %v2260, %v2261
    %vm2263 = vcmp.lt.s32.totalorder %v2244, 1
    %vm2264 = vcmp.lt.s32.totalorder %v2244, 2
    %vm2265 = vcmp.lt.s32.totalorder %v2244, 3
    %vm2266 = vcmp.lt.s32.totalorder %v2244, 4
    %v2267 = vsel %vm2263, %v2247, %v2250
    %v2268 = vsel %vm2266, %v2256, 2102212464
    %v2269 = vsel %vm2265, %v2253, %v2268
    %v2270 = vsel %vm2264, %v2267, %v2269
    %v2271 = vsel %vm2263, %v2250, %v2253
    %v2272 = vsel %vm2266, %v2259, 920167782
    %v2273 = vsel %vm2265, %v2256, %v2272
    %v2274 = vsel %vm2264, %v2271, %v2273
    %v2275 = vsel %vm2263, %v2253, %v2256
    %v2276 = vsel %vm2266, %v2262, 1326507024
    %v2277 = vsel %vm2265, %v2259, %v2276
    %v2278 = vsel %vm2264, %v2275, %v2277
    %v2279 = vshll.u32 %v2239, 8
    %v2280 = vmul.u32.u64.compose %v2279, %v2278
    %v2281 = vextract.low.u32 %v2280
    %v2282 = vextract.high.u32 %v2280
    %v2283 = vmul.u32.u64.compose %v2279, %v2274
    %v2284 = vextract.low.u32 %v2283
    %v2285 = vextract.high.u32 %v2283
    %v2286 = vmul.u32 %v2279, %v2270
    %v2287 = vadd.s32 %v2282, %v2284
    %vm2288 = vc.u32 %v2282, %v2284
    %v2289 = vadd.s32 %v2285, 1
    %v2290 = vsel %vm2288, %v2289, %v2285
    %v2291 = vadd.s32 %v2286, %v2290
    %v2292 = vadd.s32 %v2291, 536870912
    %v2293 = vshrl.u32 %v2292, 30
    %v2294 = vshll.u32 %v2293, 30
    %v2295 = vsub.s32 %v2291, %v2294
    %vm2296 = vcmp.lt.s32.totalorder %v2295, 0
    %v2297 = vsub.s32 0, %v2295
    %v2298 = vsel %vm2296, %v2297, %v2295
    %v2299 = vclz %v2298
    %v2300 = vsub.s32 %v2299, 2
    %vm2301 = vcmp.gt.s32.totalorder 0, %v2300
    %v2302 = vsel %vm2301, 0, %v2300
    %v2303 = vsub.s32 32, %v2302
    %v2304 = vshll.u32 %v2295, %v2302
    %v2305 = vshrl.u32 %v2287, %v2303
    %v2306 = vor.u32 %v2304, %v2305
    %v2307 = vsub.s32 4294967266, %v2302
    %v2308 = vadd.s32 %v2307, 127
    %v2309 = vshll.u32 %v2308, 23
    %v2310 = vor.u32 4788187, %v2309
    %v2311 = vand.u32 2147483647, %v2310
    %v2313 = vcvt.s32.f32 %v2306
    %v2314 = vmul.f32 %v2313, %v2311
    %v2315 = vxor.u32 %v2314, 2147483648
    %v2316 = vsel %vm2233, %v2315, %v2314
    %v2317 = vsub.s32 4, %v2293
    %v2318 = vsel %vm2233, %v2317, %v2293
    %v2319 = vsel %vm2232, %v36, %v2316
    %v2320 = vsel %vm2232, 0, %v2318
    %v2321 = vcosq.f32.pop %v2319
    %v2322 = vsinq.f32.pop %v2319
    %vm2323 = vweird.f32 %v36
    %v2324 = vadd.s32 %v2320, 3
    %v2325 = vand.u32 %v2324, 3
    %vm2326 = vcmp.lt.s32.totalorder %v2325, 2
    %vm2327 = vcmp.eq.s32.totalorder %v2325, 0
    %v2328 = vxor.u32 %v2322, 2147483648
    %v2329 = vsel %vm2327, %v2321, %v2328
    %vm2330 = vcmp.eq.s32.totalorder %v2325, 2
    %v2331 = vxor.u32 %v2321, 2147483648
    %v2332 = vsel %vm2330, %v2331, %v2322
    %v2333 = vsel %vm2326, %v2329, %v2332
    %v2334 = vsel %vm2323, nan, %v2333
    %v2335 = vand.u32 2147483647, %v37
    %vm2336 = vcmp.le.f32.partialorder %v2335, 0.7853982
    %vm2337 = vcmp.lt.s32.totalorder %v37, 0
    %v2338 = vand.u32 %v37, 2139095040
    %v2339 = vshrl.u32 %v2338, 23
    %v2340 = vsub.s32 %v2339, 127
    %v2341 = vand.u32 2147483647, %v37
    %v2342 = vand.u32 %v2341, 8388607
    %v2343 = vor.u32 %v2342, 8388608
    %v2344 = vsub.s32 0, %v2343
    %v2345 = vadd.s32 %v2340, 1
    %vm2346 = vcmp.gt.s32.totalorder %v2345, 0
    %v2347 = vsel %vm2346, %v2345, 0
    %v2348 = vshrl.u32 %v2347, 5
    %v2349 = vand.u32 %v2347, 31
    %v2350 = vsub.s32 32, %v2349
    %v2351 = vshrl.u32 683565275, %v2350
    %v2352 = vshll.u32 683565275, %v2349
    %v2353 = vshrl.u32 2475754826, %v2350
    %v2354 = vor.u32 %v2352, %v2353
    %v2355 = vshll.u32 2475754826, %v2349
    %v2356 = vshrl.u32 2131351028, %v2350
    %v2357 = vor.u32 %v2355, %v2356
    %v2358 = vshll.u32 2131351028, %v2349
    %v2359 = vshrl.u32 2102212464, %v2350
    %v2360 = vor.u32 %v2358, %v2359
    %v2361 = vshll.u32 2102212464, %v2349
    %v2362 = vshrl.u32 920167782, %v2350
    %v2363 = vor.u32 %v2361, %v2362
    %v2364 = vshll.u32 920167782, %v2349
    %v2365 = vshrl.u32 1326507024, %v2350
    %v2366 = vor.u32 %v2364, %v2365
    %vm2367 = vcmp.lt.s32.totalorder %v2348, 1
    %vm2368 = vcmp.lt.s32.totalorder %v2348, 2
    %vm2369 = vcmp.lt.s32.totalorder %v2348, 3
    %vm2370 = vcmp.lt.s32.totalorder %v2348, 4
    %v2371 = vsel %vm2367, %v2351, %v2354
    %v2372 = vsel %vm2370, %v2360, 2102212464
    %v2373 = vsel %vm2369, %v2357, %v2372
    %v2374 = vsel %vm2368, %v2371, %v2373
    %v2375 = vsel %vm2367, %v2354, %v2357
    %v2376 = vsel %vm2370, %v2363, 920167782
    %v2377 = vsel %vm2369, %v2360, %v2376
    %v2378 = vsel %vm2368, %v2375, %v2377
    %v2379 = vsel %vm2367, %v2357, %v2360
    %v2380 = vsel %vm2370, %v2366, 1326507024
    %v2381 = vsel %vm2369, %v2363, %v2380
    %v2382 = vsel %vm2368, %v2379, %v2381
    %v2383 = vshll.u32 %v2343, 8
    %v2384 = vmul.u32.u64.compose %v2383, %v2382
    %v2385 = vextract.low.u32 %v2384
    %v2386 = vextract.high.u32 %v2384
    %v2387 = vmul.u32.u64.compose %v2383, %v2378
    %v2388 = vextract.low.u32 %v2387
    %v2389 = vextract.high.u32 %v2387
    %v2390 = vmul.u32 %v2383, %v2374
    %v2391 = vadd.s32 %v2386, %v2388
    %vm2392 = vc.u32 %v2386, %v2388
    %v2393 = vadd.s32 %v2389, 1
    %v2394 = vsel %vm2392, %v2393, %v2389
    %v2395 = vadd.s32 %v2390, %v2394
    %v2396 = vadd.s32 %v2395, 536870912
    %v2397 = vshrl.u32 %v2396, 30
    %v2398 = vshll.u32 %v2397, 30
    %v2399 = vsub.s32 %v2395, %v2398
    %vm2400 = vcmp.lt.s32.totalorder %v2399, 0
    %v2401 = vsub.s32 0, %v2399
    %v2402 = vsel %vm2400, %v2401, %v2399
    %v2403 = vclz %v2402
    %v2404 = vsub.s32 %v2403, 2
    %vm2405 = vcmp.gt.s32.totalorder 0, %v2404
    %v2406 = vsel %vm2405, 0, %v2404
    %v2407 = vsub.s32 32, %v2406
    %v2408 = vshll.u32 %v2399, %v2406
    %v2409 = vshrl.u32 %v2391, %v2407
    %v2410 = vor.u32 %v2408, %v2409
    %v2411 = vsub.s32 4294967266, %v2406
    %v2412 = vadd.s32 %v2411, 127
    %v2413 = vshll.u32 %v2412, 23
    %v2414 = vor.u32 4788187, %v2413
    %v2415 = vand.u32 2147483647, %v2414
    %v2417 = vcvt.s32.f32 %v2410
    %v2418 = vmul.f32 %v2417, %v2415
    %v2419 = vxor.u32 %v2418, 2147483648
    %v2420 = vsel %vm2337, %v2419, %v2418
    %v2421 = vsub.s32 4, %v2397
    %v2422 = vsel %vm2337, %v2421, %v2397
    %v2423 = vsel %vm2336, %v37, %v2420
    %v2424 = vsel %vm2336, 0, %v2422
    %v2425 = vcosq.f32.pop %v2423
    %v2426 = vsinq.f32.pop %v2423
    %vm2427 = vweird.f32 %v37
    %v2428 = vadd.s32 %v2424, 3
    %v2429 = vand.u32 %v2428, 3
    %vm2430 = vcmp.lt.s32.totalorder %v2429, 2
    %vm2431 = vcmp.eq.s32.totalorder %v2429, 0
    %v2432 = vxor.u32 %v2426, 2147483648
    %v2433 = vsel %vm2431, %v2425, %v2432
    %vm2434 = vcmp.eq.s32.totalorder %v2429, 2
    %v2435 = vxor.u32 %v2425, 2147483648
    %v2436 = vsel %vm2434, %v2435, %v2426
    %v2437 = vsel %vm2430, %v2433, %v2436
    %v2438 = vsel %vm2427, nan, %v2437
    %v2439 = vand.u32 2147483647, %v38
    %vm2440 = vcmp.le.f32.partialorder %v2439, 0.7853982
    %vm2441 = vcmp.lt.s32.totalorder %v38, 0
    %v2442 = vand.u32 %v38, 2139095040
    %v2443 = vshrl.u32 %v2442, 23
    %v2444 = vsub.s32 %v2443, 127
    %v2445 = vand.u32 2147483647, %v38
    %v2446 = vand.u32 %v2445, 8388607
    %v2447 = vor.u32 %v2446, 8388608
    %v2448 = vsub.s32 0, %v2447
    %v2449 = vadd.s32 %v2444, 1
    %vm2450 = vcmp.gt.s32.totalorder %v2449, 0
    %v2451 = vsel %vm2450, %v2449, 0
    %v2452 = vshrl.u32 %v2451, 5
    %v2453 = vand.u32 %v2451, 31
    %v2454 = vsub.s32 32, %v2453
    %v2455 = vshrl.u32 683565275, %v2454
    %v2456 = vshll.u32 683565275, %v2453
    %v2457 = vshrl.u32 2475754826, %v2454
    %v2458 = vor.u32 %v2456, %v2457
    %v2459 = vshll.u32 2475754826, %v2453
    %v2460 = vshrl.u32 2131351028, %v2454
    %v2461 = vor.u32 %v2459, %v2460
    %v2462 = vshll.u32 2131351028, %v2453
    %v2463 = vshrl.u32 2102212464, %v2454
    %v2464 = vor.u32 %v2462, %v2463
    %v2465 = vshll.u32 2102212464, %v2453
    %v2466 = vshrl.u32 920167782, %v2454
    %v2467 = vor.u32 %v2465, %v2466
    %v2468 = vshll.u32 920167782, %v2453
    %v2469 = vshrl.u32 1326507024, %v2454
    %v2470 = vor.u32 %v2468, %v2469
    %vm2471 = vcmp.lt.s32.totalorder %v2452, 1
    %vm2472 = vcmp.lt.s32.totalorder %v2452, 2
    %vm2473 = vcmp.lt.s32.totalorder %v2452, 3
    %vm2474 = vcmp.lt.s32.totalorder %v2452, 4
    %v2475 = vsel %vm2471, %v2455, %v2458
    %v2476 = vsel %vm2474, %v2464, 2102212464
    %v2477 = vsel %vm2473, %v2461, %v2476
    %v2478 = vsel %vm2472, %v2475, %v2477
    %v2479 = vsel %vm2471, %v2458, %v2461
    %v2480 = vsel %vm2474, %v2467, 920167782
    %v2481 = vsel %vm2473, %v2464, %v2480
    %v2482 = vsel %vm2472, %v2479, %v2481
    %v2483 = vsel %vm2471, %v2461, %v2464
    %v2484 = vsel %vm2474, %v2470, 1326507024
    %v2485 = vsel %vm2473, %v2467, %v2484
    %v2486 = vsel %vm2472, %v2483, %v2485
    %v2487 = vshll.u32 %v2447, 8
    %v2488 = vmul.u32.u64.compose %v2487, %v2486
    %v2489 = vextract.low.u32 %v2488
    %v2490 = vextract.high.u32 %v2488
    %v2491 = vmul.u32.u64.compose %v2487, %v2482
    %v2492 = vextract.low.u32 %v2491
    %v2493 = vextract.high.u32 %v2491
    %v2494 = vmul.u32 %v2487, %v2478
    %v2495 = vadd.s32 %v2490, %v2492
    %vm2496 = vc.u32 %v2490, %v2492
    %v2497 = vadd.s32 %v2493, 1
    %v2498 = vsel %vm2496, %v2497, %v2493
    %v2499 = vadd.s32 %v2494, %v2498
    %v2500 = vadd.s32 %v2499, 536870912
    %v2501 = vshrl.u32 %v2500, 30
    %v2502 = vshll.u32 %v2501, 30
    %v2503 = vsub.s32 %v2499, %v2502
    %vm2504 = vcmp.lt.s32.totalorder %v2503, 0
    %v2505 = vsub.s32 0, %v2503
    %v2506 = vsel %vm2504, %v2505, %v2503
    %v2507 = vclz %v2506
    %v2508 = vsub.s32 %v2507, 2
    %vm2509 = vcmp.gt.s32.totalorder 0, %v2508
    %v2510 = vsel %vm2509, 0, %v2508
    %v2511 = vsub.s32 32, %v2510
    %v2512 = vshll.u32 %v2503, %v2510
    %v2513 = vshrl.u32 %v2495, %v2511
    %v2514 = vor.u32 %v2512, %v2513
    %v2515 = vsub.s32 4294967266, %v2510
    %v2516 = vadd.s32 %v2515, 127
    %v2517 = vshll.u32 %v2516, 23
    %v2518 = vor.u32 4788187, %v2517
    %v2519 = vand.u32 2147483647, %v2518
    %v2521 = vcvt.s32.f32 %v2514
    %v2522 = vmul.f32 %v2521, %v2519
    %v2523 = vxor.u32 %v2522, 2147483648
    %v2524 = vsel %vm2441, %v2523, %v2522
    %v2525 = vsub.s32 4, %v2501
    %v2526 = vsel %vm2441, %v2525, %v2501
    %v2527 = vsel %vm2440, %v38, %v2524
    %v2528 = vsel %vm2440, 0, %v2526
    %v2529 = vcosq.f32.pop %v2527
    %v2530 = vsinq.f32.pop %v2527
    %vm2531 = vweird.f32 %v38
    %v2532 = vadd.s32 %v2528, 3
    %v2533 = vand.u32 %v2532, 3
    %vm2534 = vcmp.lt.s32.totalorder %v2533, 2
    %vm2535 = vcmp.eq.s32.totalorder %v2533, 0
    %v2536 = vxor.u32 %v2530, 2147483648
    %v2537 = vsel %vm2535, %v2529, %v2536
    %vm2538 = vcmp.eq.s32.totalorder %v2533, 2
    %v2539 = vxor.u32 %v2529, 2147483648
    %v2540 = vsel %vm2538, %v2539, %v2530
    %v2541 = vsel %vm2534, %v2537, %v2540
    %v2542 = vsel %vm2531, nan, %v2541
    %v2543 = vand.u32 2147483647, %v39
    %vm2544 = vcmp.le.f32.partialorder %v2543, 0.7853982
    %vm2545 = vcmp.lt.s32.totalorder %v39, 0
    %v2546 = vand.u32 %v39, 2139095040
    %v2547 = vshrl.u32 %v2546, 23
    %v2548 = vsub.s32 %v2547, 127
    %v2549 = vand.u32 2147483647, %v39
    %v2550 = vand.u32 %v2549, 8388607
    %v2551 = vor.u32 %v2550, 8388608
    %v2552 = vsub.s32 0, %v2551
    %v2553 = vadd.s32 %v2548, 1
    %vm2554 = vcmp.gt.s32.totalorder %v2553, 0
    %v2555 = vsel %vm2554, %v2553, 0
    %v2556 = vshrl.u32 %v2555, 5
    %v2557 = vand.u32 %v2555, 31
    %v2558 = vsub.s32 32, %v2557
    %v2559 = vshrl.u32 683565275, %v2558
    %v2560 = vshll.u32 683565275, %v2557
    %v2561 = vshrl.u32 2475754826, %v2558
    %v2562 = vor.u32 %v2560, %v2561
    %v2563 = vshll.u32 2475754826, %v2557
    %v2564 = vshrl.u32 2131351028, %v2558
    %v2565 = vor.u32 %v2563, %v2564
    %v2566 = vshll.u32 2131351028, %v2557
    %v2567 = vshrl.u32 2102212464, %v2558
    %v2568 = vor.u32 %v2566, %v2567
    %v2569 = vshll.u32 2102212464, %v2557
    %v2570 = vshrl.u32 920167782, %v2558
    %v2571 = vor.u32 %v2569, %v2570
    %v2572 = vshll.u32 920167782, %v2557
    %v2573 = vshrl.u32 1326507024, %v2558
    %v2574 = vor.u32 %v2572, %v2573
    %vm2575 = vcmp.lt.s32.totalorder %v2556, 1
    %vm2576 = vcmp.lt.s32.totalorder %v2556, 2
    %vm2577 = vcmp.lt.s32.totalorder %v2556, 3
    %vm2578 = vcmp.lt.s32.totalorder %v2556, 4
    %v2579 = vsel %vm2575, %v2559, %v2562
    %v2580 = vsel %vm2578, %v2568, 2102212464
    %v2581 = vsel %vm2577, %v2565, %v2580
    %v2582 = vsel %vm2576, %v2579, %v2581
    %v2583 = vsel %vm2575, %v2562, %v2565
    %v2584 = vsel %vm2578, %v2571, 920167782
    %v2585 = vsel %vm2577, %v2568, %v2584
    %v2586 = vsel %vm2576, %v2583, %v2585
    %v2587 = vsel %vm2575, %v2565, %v2568
    %v2588 = vsel %vm2578, %v2574, 1326507024
    %v2589 = vsel %vm2577, %v2571, %v2588
    %v2590 = vsel %vm2576, %v2587, %v2589
    %v2591 = vshll.u32 %v2551, 8
    %v2592 = vmul.u32.u64.compose %v2591, %v2590
    %v2593 = vextract.low.u32 %v2592
    %v2594 = vextract.high.u32 %v2592
    %v2595 = vmul.u32.u64.compose %v2591, %v2586
    %v2596 = vextract.low.u32 %v2595
    %v2597 = vextract.high.u32 %v2595
    %v2598 = vmul.u32 %v2591, %v2582
    %v2599 = vadd.s32 %v2594, %v2596
    %vm2600 = vc.u32 %v2594, %v2596
    %v2601 = vadd.s32 %v2597, 1
    %v2602 = vsel %vm2600, %v2601, %v2597
    %v2603 = vadd.s32 %v2598, %v2602
    %v2604 = vadd.s32 %v2603, 536870912
    %v2605 = vshrl.u32 %v2604, 30
    %v2606 = vshll.u32 %v2605, 30
    %v2607 = vsub.s32 %v2603, %v2606
    %vm2608 = vcmp.lt.s32.totalorder %v2607, 0
    %v2609 = vsub.s32 0, %v2607
    %v2610 = vsel %vm2608, %v2609, %v2607
    %v2611 = vclz %v2610
    %v2612 = vsub.s32 %v2611, 2
    %vm2613 = vcmp.gt.s32.totalorder 0, %v2612
    %v2614 = vsel %vm2613, 0, %v2612
    %v2615 = vsub.s32 32, %v2614
    %v2616 = vshll.u32 %v2607, %v2614
    %v2617 = vshrl.u32 %v2599, %v2615
    %v2618 = vor.u32 %v2616, %v2617
    %v2619 = vsub.s32 4294967266, %v2614
    %v2620 = vadd.s32 %v2619, 127
    %v2621 = vshll.u32 %v2620, 23
    %v2622 = vor.u32 4788187, %v2621
    %v2623 = vand.u32 2147483647, %v2622
    %v2625 = vcvt.s32.f32 %v2618
    %v2626 = vmul.f32 %v2625, %v2623
    %v2627 = vxor.u32 %v2626, 2147483648
    %v2628 = vsel %vm2545, %v2627, %v2626
    %v2629 = vsub.s32 4, %v2605
    %v2630 = vsel %vm2545, %v2629, %v2605
    %v2631 = vsel %vm2544, %v39, %v2628
    %v2632 = vsel %vm2544, 0, %v2630
    %v2633 = vcosq.f32.pop %v2631
    %v2634 = vsinq.f32.pop %v2631
    %vm2635 = vweird.f32 %v39
    %v2636 = vadd.s32 %v2632, 3
    %v2637 = vand.u32 %v2636, 3
    %vm2638 = vcmp.lt.s32.totalorder %v2637, 2
    %vm2639 = vcmp.eq.s32.totalorder %v2637, 0
    %v2640 = vxor.u32 %v2634, 2147483648
    %v2641 = vsel %vm2639, %v2633, %v2640
    %vm2642 = vcmp.eq.s32.totalorder %v2637, 2
    %v2643 = vxor.u32 %v2633, 2147483648
    %v2644 = vsel %vm2642, %v2643, %v2634
    %v2645 = vsel %vm2638, %v2641, %v2644
    %v2646 = vsel %vm2635, nan, %v2645
    %v2647 = vand.u32 2147483647, %v40
    %vm2648 = vcmp.le.f32.partialorder %v2647, 0.7853982
    %vm2649 = vcmp.lt.s32.totalorder %v40, 0
    %v2650 = vand.u32 %v40, 2139095040
    %v2651 = vshrl.u32 %v2650, 23
    %v2652 = vsub.s32 %v2651, 127
    %v2653 = vand.u32 2147483647, %v40
    %v2654 = vand.u32 %v2653, 8388607
    %v2655 = vor.u32 %v2654, 8388608
    %v2656 = vsub.s32 0, %v2655
    %v2657 = vadd.s32 %v2652, 1
    %vm2658 = vcmp.gt.s32.totalorder %v2657, 0
    %v2659 = vsel %vm2658, %v2657, 0
    %v2660 = vshrl.u32 %v2659, 5
    %v2661 = vand.u32 %v2659, 31
    %v2662 = vsub.s32 32, %v2661
    %v2663 = vshrl.u32 683565275, %v2662
    %v2664 = vshll.u32 683565275, %v2661
    %v2665 = vshrl.u32 2475754826, %v2662
    %v2666 = vor.u32 %v2664, %v2665
    %v2667 = vshll.u32 2475754826, %v2661
    %v2668 = vshrl.u32 2131351028, %v2662
    %v2669 = vor.u32 %v2667, %v2668
    %v2670 = vshll.u32 2131351028, %v2661
    %v2671 = vshrl.u32 2102212464, %v2662
    %v2672 = vor.u32 %v2670, %v2671
    %v2673 = vshll.u32 2102212464, %v2661
    %v2674 = vshrl.u32 920167782, %v2662
    %v2675 = vor.u32 %v2673, %v2674
    %v2676 = vshll.u32 920167782, %v2661
    %v2677 = vshrl.u32 1326507024, %v2662
    %v2678 = vor.u32 %v2676, %v2677
    %vm2679 = vcmp.lt.s32.totalorder %v2660, 1
    %vm2680 = vcmp.lt.s32.totalorder %v2660, 2
    %vm2681 = vcmp.lt.s32.totalorder %v2660, 3
    %vm2682 = vcmp.lt.s32.totalorder %v2660, 4
    %v2683 = vsel %vm2679, %v2663, %v2666
    %v2684 = vsel %vm2682, %v2672, 2102212464
    %v2685 = vsel %vm2681, %v2669, %v2684
    %v2686 = vsel %vm2680, %v2683, %v2685
    %v2687 = vsel %vm2679, %v2666, %v2669
    %v2688 = vsel %vm2682, %v2675, 920167782
    %v2689 = vsel %vm2681, %v2672, %v2688
    %v2690 = vsel %vm2680, %v2687, %v2689
    %v2691 = vsel %vm2679, %v2669, %v2672
    %v2692 = vsel %vm2682, %v2678, 1326507024
    %v2693 = vsel %vm2681, %v2675, %v2692
    %v2694 = vsel %vm2680, %v2691, %v2693
    %v2695 = vshll.u32 %v2655, 8
    %v2696 = vmul.u32.u64.compose %v2695, %v2694
    %v2697 = vextract.low.u32 %v2696
    %v2698 = vextract.high.u32 %v2696
    %v2699 = vmul.u32.u64.compose %v2695, %v2690
    %v2700 = vextract.low.u32 %v2699
    %v2701 = vextract.high.u32 %v2699
    %v2702 = vmul.u32 %v2695, %v2686
    %v2703 = vadd.s32 %v2698, %v2700
    %vm2704 = vc.u32 %v2698, %v2700
    %v2705 = vadd.s32 %v2701, 1
    %v2706 = vsel %vm2704, %v2705, %v2701
    %v2707 = vadd.s32 %v2702, %v2706
    %v2708 = vadd.s32 %v2707, 536870912
    %v2709 = vshrl.u32 %v2708, 30
    %v2710 = vshll.u32 %v2709, 30
    %v2711 = vsub.s32 %v2707, %v2710
    %vm2712 = vcmp.lt.s32.totalorder %v2711, 0
    %v2713 = vsub.s32 0, %v2711
    %v2714 = vsel %vm2712, %v2713, %v2711
    %v2715 = vclz %v2714
    %v2716 = vsub.s32 %v2715, 2
    %vm2717 = vcmp.gt.s32.totalorder 0, %v2716
    %v2718 = vsel %vm2717, 0, %v2716
    %v2719 = vsub.s32 32, %v2718
    %v2720 = vshll.u32 %v2711, %v2718
    %v2721 = vshrl.u32 %v2703, %v2719
    %v2722 = vor.u32 %v2720, %v2721
    %v2723 = vsub.s32 4294967266, %v2718
    %v2724 = vadd.s32 %v2723, 127
    %v2725 = vshll.u32 %v2724, 23
    %v2726 = vor.u32 4788187, %v2725
    %v2727 = vand.u32 2147483647, %v2726
    %v2729 = vcvt.s32.f32 %v2722
    %v2730 = vmul.f32 %v2729, %v2727
    %v2731 = vxor.u32 %v2730, 2147483648
    %v2732 = vsel %vm2649, %v2731, %v2730
    %v2733 = vsub.s32 4, %v2709
    %v2734 = vsel %vm2649, %v2733, %v2709
    %v2735 = vsel %vm2648, %v40, %v2732
    %v2736 = vsel %vm2648, 0, %v2734
    %v2737 = vcosq.f32.pop %v2735
    %v2738 = vsinq.f32.pop %v2735
    %vm2739 = vweird.f32 %v40
    %v2740 = vadd.s32 %v2736, 3
    %v2741 = vand.u32 %v2740, 3
    %vm2742 = vcmp.lt.s32.totalorder %v2741, 2
    %vm2743 = vcmp.eq.s32.totalorder %v2741, 0
    %v2744 = vxor.u32 %v2738, 2147483648
    %v2745 = vsel %vm2743, %v2737, %v2744
    %vm2746 = vcmp.eq.s32.totalorder %v2741, 2
    %v2747 = vxor.u32 %v2737, 2147483648
    %v2748 = vsel %vm2746, %v2747, %v2738
    %v2749 = vsel %vm2742, %v2745, %v2748
    %v2750 = vsel %vm2739, nan, %v2749
    %v2751 = vand.u32 2147483647, %v41
    %vm2752 = vcmp.le.f32.partialorder %v2751, 0.7853982
    %vm2753 = vcmp.lt.s32.totalorder %v41, 0
    %v2754 = vand.u32 %v41, 2139095040
    %v2755 = vshrl.u32 %v2754, 23
    %v2756 = vsub.s32 %v2755, 127
    %v2757 = vand.u32 2147483647, %v41
    %v2758 = vand.u32 %v2757, 8388607
    %v2759 = vor.u32 %v2758, 8388608
    %v2760 = vsub.s32 0, %v2759
    %v2761 = vadd.s32 %v2756, 1
    %vm2762 = vcmp.gt.s32.totalorder %v2761, 0
    %v2763 = vsel %vm2762, %v2761, 0
    %v2764 = vshrl.u32 %v2763, 5
    %v2765 = vand.u32 %v2763, 31
    %v2766 = vsub.s32 32, %v2765
    %v2767 = vshrl.u32 683565275, %v2766
    %v2768 = vshll.u32 683565275, %v2765
    %v2769 = vshrl.u32 2475754826, %v2766
    %v2770 = vor.u32 %v2768, %v2769
    %v2771 = vshll.u32 2475754826, %v2765
    %v2772 = vshrl.u32 2131351028, %v2766
    %v2773 = vor.u32 %v2771, %v2772
    %v2774 = vshll.u32 2131351028, %v2765
    %v2775 = vshrl.u32 2102212464, %v2766
    %v2776 = vor.u32 %v2774, %v2775
    %v2777 = vshll.u32 2102212464, %v2765
    %v2778 = vshrl.u32 920167782, %v2766
    %v2779 = vor.u32 %v2777, %v2778
    %v2780 = vshll.u32 920167782, %v2765
    %v2781 = vshrl.u32 1326507024, %v2766
    %v2782 = vor.u32 %v2780, %v2781
    %vm2783 = vcmp.lt.s32.totalorder %v2764, 1
    %vm2784 = vcmp.lt.s32.totalorder %v2764, 2
    %vm2785 = vcmp.lt.s32.totalorder %v2764, 3
    %vm2786 = vcmp.lt.s32.totalorder %v2764, 4
    %v2787 = vsel %vm2783, %v2767, %v2770
    %v2788 = vsel %vm2786, %v2776, 2102212464
    %v2789 = vsel %vm2785, %v2773, %v2788
    %v2790 = vsel %vm2784, %v2787, %v2789
    %v2791 = vsel %vm2783, %v2770, %v2773
    %v2792 = vsel %vm2786, %v2779, 920167782
    %v2793 = vsel %vm2785, %v2776, %v2792
    %v2794 = vsel %vm2784, %v2791, %v2793
    %v2795 = vsel %vm2783, %v2773, %v2776
    %v2796 = vsel %vm2786, %v2782, 1326507024
    %v2797 = vsel %vm2785, %v2779, %v2796
    %v2798 = vsel %vm2784, %v2795, %v2797
    %v2799 = vshll.u32 %v2759, 8
    %v2800 = vmul.u32.u64.compose %v2799, %v2798
    %v2801 = vextract.low.u32 %v2800
    %v2802 = vextract.high.u32 %v2800
    %v2803 = vmul.u32.u64.compose %v2799, %v2794
    %v2804 = vextract.low.u32 %v2803
    %v2805 = vextract.high.u32 %v2803
    %v2806 = vmul.u32 %v2799, %v2790
    %v2807 = vadd.s32 %v2802, %v2804
    %vm2808 = vc.u32 %v2802, %v2804
    %v2809 = vadd.s32 %v2805, 1
    %v2810 = vsel %vm2808, %v2809, %v2805
    %v2811 = vadd.s32 %v2806, %v2810
    %v2812 = vadd.s32 %v2811, 536870912
    %v2813 = vshrl.u32 %v2812, 30
    %v2814 = vshll.u32 %v2813, 30
    %v2815 = vsub.s32 %v2811, %v2814
    %vm2816 = vcmp.lt.s32.totalorder %v2815, 0
    %v2817 = vsub.s32 0, %v2815
    %v2818 = vsel %vm2816, %v2817, %v2815
    %v2819 = vclz %v2818
    %v2820 = vsub.s32 %v2819, 2
    %vm2821 = vcmp.gt.s32.totalorder 0, %v2820
    %v2822 = vsel %vm2821, 0, %v2820
    %v2823 = vsub.s32 32, %v2822
    %v2824 = vshll.u32 %v2815, %v2822
    %v2825 = vshrl.u32 %v2807, %v2823
    %v2826 = vor.u32 %v2824, %v2825
    %v2827 = vsub.s32 4294967266, %v2822
    %v2828 = vadd.s32 %v2827, 127
    %v2829 = vshll.u32 %v2828, 23
    %v2830 = vor.u32 4788187, %v2829
    %v2831 = vand.u32 2147483647, %v2830
    %v2833 = vcvt.s32.f32 %v2826
    %v2834 = vmul.f32 %v2833, %v2831
    %v2835 = vxor.u32 %v2834, 2147483648
    %v2836 = vsel %vm2753, %v2835, %v2834
    %v2837 = vsub.s32 4, %v2813
    %v2838 = vsel %vm2753, %v2837, %v2813
    %v2839 = vsel %vm2752, %v41, %v2836
    %v2840 = vsel %vm2752, 0, %v2838
    %v2841 = vcosq.f32.pop %v2839
    %v2842 = vsinq.f32.pop %v2839
    %vm2843 = vweird.f32 %v41
    %v2844 = vadd.s32 %v2840, 3
    %v2845 = vand.u32 %v2844, 3
    %vm2846 = vcmp.lt.s32.totalorder %v2845, 2
    %vm2847 = vcmp.eq.s32.totalorder %v2845, 0
    %v2848 = vxor.u32 %v2842, 2147483648
    %v2849 = vsel %vm2847, %v2841, %v2848
    %vm2850 = vcmp.eq.s32.totalorder %v2845, 2
    %v2851 = vxor.u32 %v2841, 2147483648
    %v2852 = vsel %vm2850, %v2851, %v2842
    %v2853 = vsel %vm2846, %v2849, %v2852
    %v2854 = vsel %vm2843, nan, %v2853
    %v2855 = vand.u32 2147483647, %v42
    %vm2856 = vcmp.le.f32.partialorder %v2855, 0.7853982
    %vm2857 = vcmp.lt.s32.totalorder %v42, 0
    %v2858 = vand.u32 %v42, 2139095040
    %v2859 = vshrl.u32 %v2858, 23
    %v2860 = vsub.s32 %v2859, 127
    %v2861 = vand.u32 2147483647, %v42
    %v2862 = vand.u32 %v2861, 8388607
    %v2863 = vor.u32 %v2862, 8388608
    %v2864 = vsub.s32 0, %v2863
    %v2865 = vadd.s32 %v2860, 1
    %vm2866 = vcmp.gt.s32.totalorder %v2865, 0
    %v2867 = vsel %vm2866, %v2865, 0
    %v2868 = vshrl.u32 %v2867, 5
    %v2869 = vand.u32 %v2867, 31
    %v2870 = vsub.s32 32, %v2869
    %v2871 = vshrl.u32 683565275, %v2870
    %v2872 = vshll.u32 683565275, %v2869
    %v2873 = vshrl.u32 2475754826, %v2870
    %v2874 = vor.u32 %v2872, %v2873
    %v2875 = vshll.u32 2475754826, %v2869
    %v2876 = vshrl.u32 2131351028, %v2870
    %v2877 = vor.u32 %v2875, %v2876
    %v2878 = vshll.u32 2131351028, %v2869
    %v2879 = vshrl.u32 2102212464, %v2870
    %v2880 = vor.u32 %v2878, %v2879
    %v2881 = vshll.u32 2102212464, %v2869
    %v2882 = vshrl.u32 920167782, %v2870
    %v2883 = vor.u32 %v2881, %v2882
    %v2884 = vshll.u32 920167782, %v2869
    %v2885 = vshrl.u32 1326507024, %v2870
    %v2886 = vor.u32 %v2884, %v2885
    %vm2887 = vcmp.lt.s32.totalorder %v2868, 1
    %vm2888 = vcmp.lt.s32.totalorder %v2868, 2
    %vm2889 = vcmp.lt.s32.totalorder %v2868, 3
    %vm2890 = vcmp.lt.s32.totalorder %v2868, 4
    %v2891 = vsel %vm2887, %v2871, %v2874
    %v2892 = vsel %vm2890, %v2880, 2102212464
    %v2893 = vsel %vm2889, %v2877, %v2892
    %v2894 = vsel %vm2888, %v2891, %v2893
    %v2895 = vsel %vm2887, %v2874, %v2877
    %v2896 = vsel %vm2890, %v2883, 920167782
    %v2897 = vsel %vm2889, %v2880, %v2896
    %v2898 = vsel %vm2888, %v2895, %v2897
    %v2899 = vsel %vm2887, %v2877, %v2880
    %v2900 = vsel %vm2890, %v2886, 1326507024
    %v2901 = vsel %vm2889, %v2883, %v2900
    %v2902 = vsel %vm2888, %v2899, %v2901
    %v2903 = vshll.u32 %v2863, 8
    %v2904 = vmul.u32.u64.compose %v2903, %v2902
    %v2905 = vextract.low.u32 %v2904
    %v2906 = vextract.high.u32 %v2904
    %v2907 = vmul.u32.u64.compose %v2903, %v2898
    %v2908 = vextract.low.u32 %v2907
    %v2909 = vextract.high.u32 %v2907
    %v2910 = vmul.u32 %v2903, %v2894
    %v2911 = vadd.s32 %v2906, %v2908
    %vm2912 = vc.u32 %v2906, %v2908
    %v2913 = vadd.s32 %v2909, 1
    %v2914 = vsel %vm2912, %v2913, %v2909
    %v2915 = vadd.s32 %v2910, %v2914
    %v2916 = vadd.s32 %v2915, 536870912
    %v2917 = vshrl.u32 %v2916, 30
    %v2918 = vshll.u32 %v2917, 30
    %v2919 = vsub.s32 %v2915, %v2918
    %vm2920 = vcmp.lt.s32.totalorder %v2919, 0
    %v2921 = vsub.s32 0, %v2919
    %v2922 = vsel %vm2920, %v2921, %v2919
    %v2923 = vclz %v2922
    %v2924 = vsub.s32 %v2923, 2
    %vm2925 = vcmp.gt.s32.totalorder 0, %v2924
    %v2926 = vsel %vm2925, 0, %v2924
    %v2927 = vsub.s32 32, %v2926
    %v2928 = vshll.u32 %v2919, %v2926
    %v2929 = vshrl.u32 %v2911, %v2927
    %v2930 = vor.u32 %v2928, %v2929
    %v2931 = vsub.s32 4294967266, %v2926
    %v2932 = vadd.s32 %v2931, 127
    %v2933 = vshll.u32 %v2932, 23
    %v2934 = vor.u32 4788187, %v2933
    %v2935 = vand.u32 2147483647, %v2934
    %v2937 = vcvt.s32.f32 %v2930
    %v2938 = vmul.f32 %v2937, %v2935
    %v2939 = vxor.u32 %v2938, 2147483648
    %v2940 = vsel %vm2857, %v2939, %v2938
    %v2941 = vsub.s32 4, %v2917
    %v2942 = vsel %vm2857, %v2941, %v2917
    %v2943 = vsel %vm2856, %v42, %v2940
    %v2944 = vsel %vm2856, 0, %v2942
    %v2945 = vcosq.f32.pop %v2943
    %v2946 = vsinq.f32.pop %v2943
    %vm2947 = vweird.f32 %v42
    %v2948 = vadd.s32 %v2944, 3
    %v2949 = vand.u32 %v2948, 3
    %vm2950 = vcmp.lt.s32.totalorder %v2949, 2
    %vm2951 = vcmp.eq.s32.totalorder %v2949, 0
    %v2952 = vxor.u32 %v2946, 2147483648
    %v2953 = vsel %vm2951, %v2945, %v2952
    %vm2954 = vcmp.eq.s32.totalorder %v2949, 2
    %v2955 = vxor.u32 %v2945, 2147483648
    %v2956 = vsel %vm2954, %v2955, %v2946
    %v2957 = vsel %vm2950, %v2953, %v2956
    %v2958 = vsel %vm2947, nan, %v2957
    %v2959 = vand.u32 2147483647, %v43
    %vm2960 = vcmp.le.f32.partialorder %v2959, 0.7853982
    %vm2961 = vcmp.lt.s32.totalorder %v43, 0
    %v2962 = vand.u32 %v43, 2139095040
    %v2963 = vshrl.u32 %v2962, 23
    %v2964 = vsub.s32 %v2963, 127
    %v2965 = vand.u32 2147483647, %v43
    %v2966 = vand.u32 %v2965, 8388607
    %v2967 = vor.u32 %v2966, 8388608
    %v2968 = vsub.s32 0, %v2967
    %v2969 = vadd.s32 %v2964, 1
    %vm2970 = vcmp.gt.s32.totalorder %v2969, 0
    %v2971 = vsel %vm2970, %v2969, 0
    %v2972 = vshrl.u32 %v2971, 5
    %v2973 = vand.u32 %v2971, 31
    %v2974 = vsub.s32 32, %v2973
    %v2975 = vshrl.u32 683565275, %v2974
    %v2976 = vshll.u32 683565275, %v2973
    %v2977 = vshrl.u32 2475754826, %v2974
    %v2978 = vor.u32 %v2976, %v2977
    %v2979 = vshll.u32 2475754826, %v2973
    %v2980 = vshrl.u32 2131351028, %v2974
    %v2981 = vor.u32 %v2979, %v2980
    %v2982 = vshll.u32 2131351028, %v2973
    %v2983 = vshrl.u32 2102212464, %v2974
    %v2984 = vor.u32 %v2982, %v2983
    %v2985 = vshll.u32 2102212464, %v2973
    %v2986 = vshrl.u32 920167782, %v2974
    %v2987 = vor.u32 %v2985, %v2986
    %v2988 = vshll.u32 920167782, %v2973
    %v2989 = vshrl.u32 1326507024, %v2974
    %v2990 = vor.u32 %v2988, %v2989
    %vm2991 = vcmp.lt.s32.totalorder %v2972, 1
    %vm2992 = vcmp.lt.s32.totalorder %v2972, 2
    %vm2993 = vcmp.lt.s32.totalorder %v2972, 3
    %vm2994 = vcmp.lt.s32.totalorder %v2972, 4
    %v2995 = vsel %vm2991, %v2975, %v2978
    %v2996 = vsel %vm2994, %v2984, 2102212464
    %v2997 = vsel %vm2993, %v2981, %v2996
    %v2998 = vsel %vm2992, %v2995, %v2997
    %v2999 = vsel %vm2991, %v2978, %v2981
    %v3000 = vsel %vm2994, %v2987, 920167782
    %v3001 = vsel %vm2993, %v2984, %v3000
    %v3002 = vsel %vm2992, %v2999, %v3001
    %v3003 = vsel %vm2991, %v2981, %v2984
    %v3004 = vsel %vm2994, %v2990, 1326507024
    %v3005 = vsel %vm2993, %v2987, %v3004
    %v3006 = vsel %vm2992, %v3003, %v3005
    %v3007 = vshll.u32 %v2967, 8
    %v3008 = vmul.u32.u64.compose %v3007, %v3006
    %v3009 = vextract.low.u32 %v3008
    %v3010 = vextract.high.u32 %v3008
    %v3011 = vmul.u32.u64.compose %v3007, %v3002
    %v3012 = vextract.low.u32 %v3011
    %v3013 = vextract.high.u32 %v3011
    %v3014 = vmul.u32 %v3007, %v2998
    %v3015 = vadd.s32 %v3010, %v3012
    %vm3016 = vc.u32 %v3010, %v3012
    %v3017 = vadd.s32 %v3013, 1
    %v3018 = vsel %vm3016, %v3017, %v3013
    %v3019 = vadd.s32 %v3014, %v3018
    %v3020 = vadd.s32 %v3019, 536870912
    %v3021 = vshrl.u32 %v3020, 30
    %v3022 = vshll.u32 %v3021, 30
    %v3023 = vsub.s32 %v3019, %v3022
    %vm3024 = vcmp.lt.s32.totalorder %v3023, 0
    %v3025 = vsub.s32 0, %v3023
    %v3026 = vsel %vm3024, %v3025, %v3023
    %v3027 = vclz %v3026
    %v3028 = vsub.s32 %v3027, 2
    %vm3029 = vcmp.gt.s32.totalorder 0, %v3028
    %v3030 = vsel %vm3029, 0, %v3028
    %v3031 = vsub.s32 32, %v3030
    %v3032 = vshll.u32 %v3023, %v3030
    %v3033 = vshrl.u32 %v3015, %v3031
    %v3034 = vor.u32 %v3032, %v3033
    %v3035 = vsub.s32 4294967266, %v3030
    %v3036 = vadd.s32 %v3035, 127
    %v3037 = vshll.u32 %v3036, 23
    %v3038 = vor.u32 4788187, %v3037
    %v3039 = vand.u32 2147483647, %v3038
    %v3041 = vcvt.s32.f32 %v3034
    %v3042 = vmul.f32 %v3041, %v3039
    %v3043 = vxor.u32 %v3042, 2147483648
    %v3044 = vsel %vm2961, %v3043, %v3042
    %v3045 = vsub.s32 4, %v3021
    %v3046 = vsel %vm2961, %v3045, %v3021
    %v3047 = vsel %vm2960, %v43, %v3044
    %v3048 = vsel %vm2960, 0, %v3046
    %v3049 = vcosq.f32.pop %v3047
    %v3050 = vsinq.f32.pop %v3047
    %vm3051 = vweird.f32 %v43
    %v3052 = vadd.s32 %v3048, 3
    %v3053 = vand.u32 %v3052, 3
    %vm3054 = vcmp.lt.s32.totalorder %v3053, 2
    %vm3055 = vcmp.eq.s32.totalorder %v3053, 0
    %v3056 = vxor.u32 %v3050, 2147483648
    %v3057 = vsel %vm3055, %v3049, %v3056
    %vm3058 = vcmp.eq.s32.totalorder %v3053, 2
    %v3059 = vxor.u32 %v3049, 2147483648
    %v3060 = vsel %vm3058, %v3059, %v3050
    %v3061 = vsel %vm3054, %v3057, %v3060
    %v3062 = vsel %vm3051, nan, %v3061
    %v3063 = vand.u32 2147483647, %v44
    %vm3064 = vcmp.le.f32.partialorder %v3063, 0.7853982
    %vm3065 = vcmp.lt.s32.totalorder %v44, 0
    %v3066 = vand.u32 %v44, 2139095040
    %v3067 = vshrl.u32 %v3066, 23
    %v3068 = vsub.s32 %v3067, 127
    %v3069 = vand.u32 2147483647, %v44
    %v3070 = vand.u32 %v3069, 8388607
    %v3071 = vor.u32 %v3070, 8388608
    %v3072 = vsub.s32 0, %v3071
    %v3073 = vadd.s32 %v3068, 1
    %vm3074 = vcmp.gt.s32.totalorder %v3073, 0
    %v3075 = vsel %vm3074, %v3073, 0
    %v3076 = vshrl.u32 %v3075, 5
    %v3077 = vand.u32 %v3075, 31
    %v3078 = vsub.s32 32, %v3077
    %v3079 = vshrl.u32 683565275, %v3078
    %v3080 = vshll.u32 683565275, %v3077
    %v3081 = vshrl.u32 2475754826, %v3078
    %v3082 = vor.u32 %v3080, %v3081
    %v3083 = vshll.u32 2475754826, %v3077
    %v3084 = vshrl.u32 2131351028, %v3078
    %v3085 = vor.u32 %v3083, %v3084
    %v3086 = vshll.u32 2131351028, %v3077
    %v3087 = vshrl.u32 2102212464, %v3078
    %v3088 = vor.u32 %v3086, %v3087
    %v3089 = vshll.u32 2102212464, %v3077
    %v3090 = vshrl.u32 920167782, %v3078
    %v3091 = vor.u32 %v3089, %v3090
    %v3092 = vshll.u32 920167782, %v3077
    %v3093 = vshrl.u32 1326507024, %v3078
    %v3094 = vor.u32 %v3092, %v3093
    %vm3095 = vcmp.lt.s32.totalorder %v3076, 1
    %vm3096 = vcmp.lt.s32.totalorder %v3076, 2
    %vm3097 = vcmp.lt.s32.totalorder %v3076, 3
    %vm3098 = vcmp.lt.s32.totalorder %v3076, 4
    %v3099 = vsel %vm3095, %v3079, %v3082
    %v3100 = vsel %vm3098, %v3088, 2102212464
    %v3101 = vsel %vm3097, %v3085, %v3100
    %v3102 = vsel %vm3096, %v3099, %v3101
    %v3103 = vsel %vm3095, %v3082, %v3085
    %v3104 = vsel %vm3098, %v3091, 920167782
    %v3105 = vsel %vm3097, %v3088, %v3104
    %v3106 = vsel %vm3096, %v3103, %v3105
    %v3107 = vsel %vm3095, %v3085, %v3088
    %v3108 = vsel %vm3098, %v3094, 1326507024
    %v3109 = vsel %vm3097, %v3091, %v3108
    %v3110 = vsel %vm3096, %v3107, %v3109
    %v3111 = vshll.u32 %v3071, 8
    %v3112 = vmul.u32.u64.compose %v3111, %v3110
    %v3113 = vextract.low.u32 %v3112
    %v3114 = vextract.high.u32 %v3112
    %v3115 = vmul.u32.u64.compose %v3111, %v3106
    %v3116 = vextract.low.u32 %v3115
    %v3117 = vextract.high.u32 %v3115
    %v3118 = vmul.u32 %v3111, %v3102
    %v3119 = vadd.s32 %v3114, %v3116
    %vm3120 = vc.u32 %v3114, %v3116
    %v3121 = vadd.s32 %v3117, 1
    %v3122 = vsel %vm3120, %v3121, %v3117
    %v3123 = vadd.s32 %v3118, %v3122
    %v3124 = vadd.s32 %v3123, 536870912
    %v3125 = vshrl.u32 %v3124, 30
    %v3126 = vshll.u32 %v3125, 30
    %v3127 = vsub.s32 %v3123, %v3126
    %vm3128 = vcmp.lt.s32.totalorder %v3127, 0
    %v3129 = vsub.s32 0, %v3127
    %v3130 = vsel %vm3128, %v3129, %v3127
    %v3131 = vclz %v3130
    %v3132 = vsub.s32 %v3131, 2
    %vm3133 = vcmp.gt.s32.totalorder 0, %v3132
    %v3134 = vsel %vm3133, 0, %v3132
    %v3135 = vsub.s32 32, %v3134
    %v3136 = vshll.u32 %v3127, %v3134
    %v3137 = vshrl.u32 %v3119, %v3135
    %v3138 = vor.u32 %v3136, %v3137
    %v3139 = vsub.s32 4294967266, %v3134
    %v3140 = vadd.s32 %v3139, 127
    %v3141 = vshll.u32 %v3140, 23
    %v3142 = vor.u32 4788187, %v3141
    %v3143 = vand.u32 2147483647, %v3142
    %v3145 = vcvt.s32.f32 %v3138
    %v3146 = vmul.f32 %v3145, %v3143
    %v3147 = vxor.u32 %v3146, 2147483648
    %v3148 = vsel %vm3065, %v3147, %v3146
    %v3149 = vsub.s32 4, %v3125
    %v3150 = vsel %vm3065, %v3149, %v3125
    %v3151 = vsel %vm3064, %v44, %v3148
    %v3152 = vsel %vm3064, 0, %v3150
    %v3153 = vcosq.f32.pop %v3151
    %v3154 = vsinq.f32.pop %v3151
    %vm3155 = vweird.f32 %v44
    %v3156 = vadd.s32 %v3152, 3
    %v3157 = vand.u32 %v3156, 3
    %vm3158 = vcmp.lt.s32.totalorder %v3157, 2
    %vm3159 = vcmp.eq.s32.totalorder %v3157, 0
    %v3160 = vxor.u32 %v3154, 2147483648
    %v3161 = vsel %vm3159, %v3153, %v3160
    %vm3162 = vcmp.eq.s32.totalorder %v3157, 2
    %v3163 = vxor.u32 %v3153, 2147483648
    %v3164 = vsel %vm3162, %v3163, %v3154
    %v3165 = vsel %vm3158, %v3161, %v3164
    %v3166 = vsel %vm3155, nan, %v3165
    %v3167 = vand.u32 2147483647, %v45
    %vm3168 = vcmp.le.f32.partialorder %v3167, 0.7853982
    %vm3169 = vcmp.lt.s32.totalorder %v45, 0
    %v3170 = vand.u32 %v45, 2139095040
    %v3171 = vshrl.u32 %v3170, 23
    %v3172 = vsub.s32 %v3171, 127
    %v3173 = vand.u32 2147483647, %v45
    %v3174 = vand.u32 %v3173, 8388607
    %v3175 = vor.u32 %v3174, 8388608
    %v3176 = vsub.s32 0, %v3175
    %v3177 = vadd.s32 %v3172, 1
    %vm3178 = vcmp.gt.s32.totalorder %v3177, 0
    %v3179 = vsel %vm3178, %v3177, 0
    %v3180 = vshrl.u32 %v3179, 5
    %v3181 = vand.u32 %v3179, 31
    %v3182 = vsub.s32 32, %v3181
    %v3183 = vshrl.u32 683565275, %v3182
    %v3184 = vshll.u32 683565275, %v3181
    %v3185 = vshrl.u32 2475754826, %v3182
    %v3186 = vor.u32 %v3184, %v3185
    %v3187 = vshll.u32 2475754826, %v3181
    %v3188 = vshrl.u32 2131351028, %v3182
    %v3189 = vor.u32 %v3187, %v3188
    %v3190 = vshll.u32 2131351028, %v3181
    %v3191 = vshrl.u32 2102212464, %v3182
    %v3192 = vor.u32 %v3190, %v3191
    %v3193 = vshll.u32 2102212464, %v3181
    %v3194 = vshrl.u32 920167782, %v3182
    %v3195 = vor.u32 %v3193, %v3194
    %v3196 = vshll.u32 920167782, %v3181
    %v3197 = vshrl.u32 1326507024, %v3182
    %v3198 = vor.u32 %v3196, %v3197
    %vm3199 = vcmp.lt.s32.totalorder %v3180, 1
    %vm3200 = vcmp.lt.s32.totalorder %v3180, 2
    %vm3201 = vcmp.lt.s32.totalorder %v3180, 3
    %vm3202 = vcmp.lt.s32.totalorder %v3180, 4
    %v3203 = vsel %vm3199, %v3183, %v3186
    %v3204 = vsel %vm3202, %v3192, 2102212464
    %v3205 = vsel %vm3201, %v3189, %v3204
    %v3206 = vsel %vm3200, %v3203, %v3205
    %v3207 = vsel %vm3199, %v3186, %v3189
    %v3208 = vsel %vm3202, %v3195, 920167782
    %v3209 = vsel %vm3201, %v3192, %v3208
    %v3210 = vsel %vm3200, %v3207, %v3209
    %v3211 = vsel %vm3199, %v3189, %v3192
    %v3212 = vsel %vm3202, %v3198, 1326507024
    %v3213 = vsel %vm3201, %v3195, %v3212
    %v3214 = vsel %vm3200, %v3211, %v3213
    %v3215 = vshll.u32 %v3175, 8
    %v3216 = vmul.u32.u64.compose %v3215, %v3214
    %v3217 = vextract.low.u32 %v3216
    %v3218 = vextract.high.u32 %v3216
    %v3219 = vmul.u32.u64.compose %v3215, %v3210
    %v3220 = vextract.low.u32 %v3219
    %v3221 = vextract.high.u32 %v3219
    %v3222 = vmul.u32 %v3215, %v3206
    %v3223 = vadd.s32 %v3218, %v3220
    %vm3224 = vc.u32 %v3218, %v3220
    %v3225 = vadd.s32 %v3221, 1
    %v3226 = vsel %vm3224, %v3225, %v3221
    %v3227 = vadd.s32 %v3222, %v3226
    %v3228 = vadd.s32 %v3227, 536870912
    %v3229 = vshrl.u32 %v3228, 30
    %v3230 = vshll.u32 %v3229, 30
    %v3231 = vsub.s32 %v3227, %v3230
    %vm3232 = vcmp.lt.s32.totalorder %v3231, 0
    %v3233 = vsub.s32 0, %v3231
    %v3234 = vsel %vm3232, %v3233, %v3231
    %v3235 = vclz %v3234
    %v3236 = vsub.s32 %v3235, 2
    %vm3237 = vcmp.gt.s32.totalorder 0, %v3236
    %v3238 = vsel %vm3237, 0, %v3236
    %v3239 = vsub.s32 32, %v3238
    %v3240 = vshll.u32 %v3231, %v3238
    %v3241 = vshrl.u32 %v3223, %v3239
    %v3242 = vor.u32 %v3240, %v3241
    %v3243 = vsub.s32 4294967266, %v3238
    %v3244 = vadd.s32 %v3243, 127
    %v3245 = vshll.u32 %v3244, 23
    %v3246 = vor.u32 4788187, %v3245
    %v3247 = vand.u32 2147483647, %v3246
    %v3249 = vcvt.s32.f32 %v3242
    %v3250 = vmul.f32 %v3249, %v3247
    %v3251 = vxor.u32 %v3250, 2147483648
    %v3252 = vsel %vm3169, %v3251, %v3250
    %v3253 = vsub.s32 4, %v3229
    %v3254 = vsel %vm3169, %v3253, %v3229
    %v3255 = vsel %vm3168, %v45, %v3252
    %v3256 = vsel %vm3168, 0, %v3254
    %v3257 = vcosq.f32.pop %v3255
    %v3258 = vsinq.f32.pop %v3255
    %vm3259 = vweird.f32 %v45
    %v3260 = vadd.s32 %v3256, 3
    %v3261 = vand.u32 %v3260, 3
    %vm3262 = vcmp.lt.s32.totalorder %v3261, 2
    %vm3263 = vcmp.eq.s32.totalorder %v3261, 0
    %v3264 = vxor.u32 %v3258, 2147483648
    %v3265 = vsel %vm3263, %v3257, %v3264
    %vm3266 = vcmp.eq.s32.totalorder %v3261, 2
    %v3267 = vxor.u32 %v3257, 2147483648
    %v3268 = vsel %vm3266, %v3267, %v3258
    %v3269 = vsel %vm3262, %v3265, %v3268
    %v3270 = vsel %vm3259, nan, %v3269
    %v3271 = vand.u32 2147483647, %v46
    %vm3272 = vcmp.le.f32.partialorder %v3271, 0.7853982
    %vm3273 = vcmp.lt.s32.totalorder %v46, 0
    %v3274 = vand.u32 %v46, 2139095040
    %v3275 = vshrl.u32 %v3274, 23
    %v3276 = vsub.s32 %v3275, 127
    %v3277 = vand.u32 2147483647, %v46
    %v3278 = vand.u32 %v3277, 8388607
    %v3279 = vor.u32 %v3278, 8388608
    %v3280 = vsub.s32 0, %v3279
    %v3281 = vadd.s32 %v3276, 1
    %vm3282 = vcmp.gt.s32.totalorder %v3281, 0
    %v3283 = vsel %vm3282, %v3281, 0
    %v3284 = vshrl.u32 %v3283, 5
    %v3285 = vand.u32 %v3283, 31
    %v3286 = vsub.s32 32, %v3285
    %v3287 = vshrl.u32 683565275, %v3286
    %v3288 = vshll.u32 683565275, %v3285
    %v3289 = vshrl.u32 2475754826, %v3286
    %v3290 = vor.u32 %v3288, %v3289
    %v3291 = vshll.u32 2475754826, %v3285
    %v3292 = vshrl.u32 2131351028, %v3286
    %v3293 = vor.u32 %v3291, %v3292
    %v3294 = vshll.u32 2131351028, %v3285
    %v3295 = vshrl.u32 2102212464, %v3286
    %v3296 = vor.u32 %v3294, %v3295
    %v3297 = vshll.u32 2102212464, %v3285
    %v3298 = vshrl.u32 920167782, %v3286
    %v3299 = vor.u32 %v3297, %v3298
    %v3300 = vshll.u32 920167782, %v3285
    %v3301 = vshrl.u32 1326507024, %v3286
    %v3302 = vor.u32 %v3300, %v3301
    %vm3303 = vcmp.lt.s32.totalorder %v3284, 1
    %vm3304 = vcmp.lt.s32.totalorder %v3284, 2
    %vm3305 = vcmp.lt.s32.totalorder %v3284, 3
    %vm3306 = vcmp.lt.s32.totalorder %v3284, 4
    %v3307 = vsel %vm3303, %v3287, %v3290
    %v3308 = vsel %vm3306, %v3296, 2102212464
    %v3309 = vsel %vm3305, %v3293, %v3308
    %v3310 = vsel %vm3304, %v3307, %v3309
    %v3311 = vsel %vm3303, %v3290, %v3293
    %v3312 = vsel %vm3306, %v3299, 920167782
    %v3313 = vsel %vm3305, %v3296, %v3312
    %v3314 = vsel %vm3304, %v3311, %v3313
    %v3315 = vsel %vm3303, %v3293, %v3296
    %v3316 = vsel %vm3306, %v3302, 1326507024
    %v3317 = vsel %vm3305, %v3299, %v3316
    %v3318 = vsel %vm3304, %v3315, %v3317
    %v3319 = vshll.u32 %v3279, 8
    %v3320 = vmul.u32.u64.compose %v3319, %v3318
    %v3321 = vextract.low.u32 %v3320
    %v3322 = vextract.high.u32 %v3320
    %v3323 = vmul.u32.u64.compose %v3319, %v3314
    %v3324 = vextract.low.u32 %v3323
    %v3325 = vextract.high.u32 %v3323
    %v3326 = vmul.u32 %v3319, %v3310
    %v3327 = vadd.s32 %v3322, %v3324
    %vm3328 = vc.u32 %v3322, %v3324
    %v3329 = vadd.s32 %v3325, 1
    %v3330 = vsel %vm3328, %v3329, %v3325
    %v3331 = vadd.s32 %v3326, %v3330
    %v3332 = vadd.s32 %v3331, 536870912
    %v3333 = vshrl.u32 %v3332, 30
    %v3334 = vshll.u32 %v3333, 30
    %v3335 = vsub.s32 %v3331, %v3334
    %vm3336 = vcmp.lt.s32.totalorder %v3335, 0
    %v3337 = vsub.s32 0, %v3335
    %v3338 = vsel %vm3336, %v3337, %v3335
    %v3339 = vclz %v3338
    %v3340 = vsub.s32 %v3339, 2
    %vm3341 = vcmp.gt.s32.totalorder 0, %v3340
    %v3342 = vsel %vm3341, 0, %v3340
    %v3343 = vsub.s32 32, %v3342
    %v3344 = vshll.u32 %v3335, %v3342
    %v3345 = vshrl.u32 %v3327, %v3343
    %v3346 = vor.u32 %v3344, %v3345
    %v3347 = vsub.s32 4294967266, %v3342
    %v3348 = vadd.s32 %v3347, 127
    %v3349 = vshll.u32 %v3348, 23
    %v3350 = vor.u32 4788187, %v3349
    %v3351 = vand.u32 2147483647, %v3350
    %v3353 = vcvt.s32.f32 %v3346
    %v3354 = vmul.f32 %v3353, %v3351
    %v3355 = vxor.u32 %v3354, 2147483648
    %v3356 = vsel %vm3273, %v3355, %v3354
    %v3357 = vsub.s32 4, %v3333
    %v3358 = vsel %vm3273, %v3357, %v3333
    %v3359 = vsel %vm3272, %v46, %v3356
    %v3360 = vsel %vm3272, 0, %v3358
    %v3361 = vcosq.f32.pop %v3359
    %v3362 = vsinq.f32.pop %v3359
    %vm3363 = vweird.f32 %v46
    %v3364 = vadd.s32 %v3360, 3
    %v3365 = vand.u32 %v3364, 3
    %vm3366 = vcmp.lt.s32.totalorder %v3365, 2
    %vm3367 = vcmp.eq.s32.totalorder %v3365, 0
    %v3368 = vxor.u32 %v3362, 2147483648
    %v3369 = vsel %vm3367, %v3361, %v3368
    %vm3370 = vcmp.eq.s32.totalorder %v3365, 2
    %v3371 = vxor.u32 %v3361, 2147483648
    %v3372 = vsel %vm3370, %v3371, %v3362
    %v3373 = vsel %vm3366, %v3369, %v3372
    %v3374 = vsel %vm3363, nan, %v3373
    %v3375 = vand.u32 2147483647, %v15
    %vm3376 = vcmp.le.f32.partialorder %v3375, 0.7853982
    %vm3377 = vcmp.lt.s32.totalorder %v15, 0
    %v3378 = vand.u32 %v15, 2139095040
    %v3379 = vshrl.u32 %v3378, 23
    %v3380 = vsub.s32 %v3379, 127
    %v3381 = vand.u32 2147483647, %v15
    %v3382 = vand.u32 %v3381, 8388607
    %v3383 = vor.u32 %v3382, 8388608
    %v3384 = vsub.s32 0, %v3383
    %v3385 = vadd.s32 %v3380, 1
    %vm3386 = vcmp.gt.s32.totalorder %v3385, 0
    %v3387 = vsel %vm3386, %v3385, 0
    %v3388 = vshrl.u32 %v3387, 5
    %v3389 = vand.u32 %v3387, 31
    %v3390 = vsub.s32 32, %v3389
    %v3391 = vshrl.u32 683565275, %v3390
    %v3392 = vshll.u32 683565275, %v3389
    %v3393 = vshrl.u32 2475754826, %v3390
    %v3394 = vor.u32 %v3392, %v3393
    %v3395 = vshll.u32 2475754826, %v3389
    %v3396 = vshrl.u32 2131351028, %v3390
    %v3397 = vor.u32 %v3395, %v3396
    %v3398 = vshll.u32 2131351028, %v3389
    %v3399 = vshrl.u32 2102212464, %v3390
    %v3400 = vor.u32 %v3398, %v3399
    %v3401 = vshll.u32 2102212464, %v3389
    %v3402 = vshrl.u32 920167782, %v3390
    %v3403 = vor.u32 %v3401, %v3402
    %v3404 = vshll.u32 920167782, %v3389
    %v3405 = vshrl.u32 1326507024, %v3390
    %v3406 = vor.u32 %v3404, %v3405
    %vm3407 = vcmp.lt.s32.totalorder %v3388, 1
    %vm3408 = vcmp.lt.s32.totalorder %v3388, 2
    %vm3409 = vcmp.lt.s32.totalorder %v3388, 3
    %vm3410 = vcmp.lt.s32.totalorder %v3388, 4
    %v3411 = vsel %vm3407, %v3391, %v3394
    %v3412 = vsel %vm3410, %v3400, 2102212464
    %v3413 = vsel %vm3409, %v3397, %v3412
    %v3414 = vsel %vm3408, %v3411, %v3413
    %v3415 = vsel %vm3407, %v3394, %v3397
    %v3416 = vsel %vm3410, %v3403, 920167782
    %v3417 = vsel %vm3409, %v3400, %v3416
    %v3418 = vsel %vm3408, %v3415, %v3417
    %v3419 = vsel %vm3407, %v3397, %v3400
    %v3420 = vsel %vm3410, %v3406, 1326507024
    %v3421 = vsel %vm3409, %v3403, %v3420
    %v3422 = vsel %vm3408, %v3419, %v3421
    %v3423 = vshll.u32 %v3383, 8
    %v3424 = vmul.u32.u64.compose %v3423, %v3422
    %v3425 = vextract.low.u32 %v3424
    %v3426 = vextract.high.u32 %v3424
    %v3427 = vmul.u32.u64.compose %v3423, %v3418
    %v3428 = vextract.low.u32 %v3427
    %v3429 = vextract.high.u32 %v3427
    %v3430 = vmul.u32 %v3423, %v3414
    %v3431 = vadd.s32 %v3426, %v3428
    %vm3432 = vc.u32 %v3426, %v3428
    %v3433 = vadd.s32 %v3429, 1
    %v3434 = vsel %vm3432, %v3433, %v3429
    %v3435 = vadd.s32 %v3430, %v3434
    %v3436 = vadd.s32 %v3435, 536870912
    %v3437 = vshrl.u32 %v3436, 30
    %v3438 = vshll.u32 %v3437, 30
    %v3439 = vsub.s32 %v3435, %v3438
    %vm3440 = vcmp.lt.s32.totalorder %v3439, 0
    %v3441 = vsub.s32 0, %v3439
    %v3442 = vsel %vm3440, %v3441, %v3439
    %v3443 = vclz %v3442
    %v3444 = vsub.s32 %v3443, 2
    %vm3445 = vcmp.gt.s32.totalorder 0, %v3444
    %v3446 = vsel %vm3445, 0, %v3444
    %v3447 = vsub.s32 32, %v3446
    %v3448 = vshll.u32 %v3439, %v3446
    %v3449 = vshrl.u32 %v3431, %v3447
    %v3450 = vor.u32 %v3448, %v3449
    %v3451 = vsub.s32 4294967266, %v3446
    %v3452 = vadd.s32 %v3451, 127
    %v3453 = vshll.u32 %v3452, 23
    %v3454 = vor.u32 4788187, %v3453
    %v3455 = vand.u32 2147483647, %v3454
    %v3457 = vcvt.s32.f32 %v3450
    %v3458 = vmul.f32 %v3457, %v3455
    %v3459 = vxor.u32 %v3458, 2147483648
    %v3460 = vsel %vm3377, %v3459, %v3458
    %v3461 = vsub.s32 4, %v3437
    %v3462 = vsel %vm3377, %v3461, %v3437
    %v3463 = vsel %vm3376, %v15, %v3460
    %v3464 = vsel %vm3376, 0, %v3462
    %v3465 = vcosq.f32.pop %v3463
    %v3466 = vsinq.f32.pop %v3463
    %vm3467 = vweird.f32 %v15
    %v3468 = vand.u32 %v3464, 3
    %vm3469 = vcmp.lt.s32.totalorder %v3468, 2
    %vm3470 = vcmp.eq.s32.totalorder %v3468, 0
    %v3471 = vxor.u32 %v3466, 2147483648
    %v3472 = vsel %vm3470, %v3465, %v3471
    %vm3473 = vcmp.eq.s32.totalorder %v3468, 2
    %v3474 = vxor.u32 %v3465, 2147483648
    %v3475 = vsel %vm3473, %v3474, %v3466
    %v3476 = vsel %vm3469, %v3472, %v3475
    %v3477 = vsel %vm3467, nan, %v3476
    %v3478 = vand.u32 2147483647, %v16
    %vm3479 = vcmp.le.f32.partialorder %v3478, 0.7853982
    %vm3480 = vcmp.lt.s32.totalorder %v16, 0
    %v3481 = vand.u32 %v16, 2139095040
    %v3482 = vshrl.u32 %v3481, 23
    %v3483 = vsub.s32 %v3482, 127
    %v3484 = vand.u32 2147483647, %v16
    %v3485 = vand.u32 %v3484, 8388607
    %v3486 = vor.u32 %v3485, 8388608
    %v3487 = vsub.s32 0, %v3486
    %v3488 = vadd.s32 %v3483, 1
    %vm3489 = vcmp.gt.s32.totalorder %v3488, 0
    %v3490 = vsel %vm3489, %v3488, 0
    %v3491 = vshrl.u32 %v3490, 5
    %v3492 = vand.u32 %v3490, 31
    %v3493 = vsub.s32 32, %v3492
    %v3494 = vshrl.u32 683565275, %v3493
    %v3495 = vshll.u32 683565275, %v3492
    %v3496 = vshrl.u32 2475754826, %v3493
    %v3497 = vor.u32 %v3495, %v3496
    %v3498 = vshll.u32 2475754826, %v3492
    %v3499 = vshrl.u32 2131351028, %v3493
    %v3500 = vor.u32 %v3498, %v3499
    %v3501 = vshll.u32 2131351028, %v3492
    %v3502 = vshrl.u32 2102212464, %v3493
    %v3503 = vor.u32 %v3501, %v3502
    %v3504 = vshll.u32 2102212464, %v3492
    %v3505 = vshrl.u32 920167782, %v3493
    %v3506 = vor.u32 %v3504, %v3505
    %v3507 = vshll.u32 920167782, %v3492
    %v3508 = vshrl.u32 1326507024, %v3493
    %v3509 = vor.u32 %v3507, %v3508
    %vm3510 = vcmp.lt.s32.totalorder %v3491, 1
    %vm3511 = vcmp.lt.s32.totalorder %v3491, 2
    %vm3512 = vcmp.lt.s32.totalorder %v3491, 3
    %vm3513 = vcmp.lt.s32.totalorder %v3491, 4
    %v3514 = vsel %vm3510, %v3494, %v3497
    %v3515 = vsel %vm3513, %v3503, 2102212464
    %v3516 = vsel %vm3512, %v3500, %v3515
    %v3517 = vsel %vm3511, %v3514, %v3516
    %v3518 = vsel %vm3510, %v3497, %v3500
    %v3519 = vsel %vm3513, %v3506, 920167782
    %v3520 = vsel %vm3512, %v3503, %v3519
    %v3521 = vsel %vm3511, %v3518, %v3520
    %v3522 = vsel %vm3510, %v3500, %v3503
    %v3523 = vsel %vm3513, %v3509, 1326507024
    %v3524 = vsel %vm3512, %v3506, %v3523
    %v3525 = vsel %vm3511, %v3522, %v3524
    %v3526 = vshll.u32 %v3486, 8
    %v3527 = vmul.u32.u64.compose %v3526, %v3525
    %v3528 = vextract.low.u32 %v3527
    %v3529 = vextract.high.u32 %v3527
    %v3530 = vmul.u32.u64.compose %v3526, %v3521
    %v3531 = vextract.low.u32 %v3530
    %v3532 = vextract.high.u32 %v3530
    %v3533 = vmul.u32 %v3526, %v3517
    %v3534 = vadd.s32 %v3529, %v3531
    %vm3535 = vc.u32 %v3529, %v3531
    %v3536 = vadd.s32 %v3532, 1
    %v3537 = vsel %vm3535, %v3536, %v3532
    %v3538 = vadd.s32 %v3533, %v3537
    %v3539 = vadd.s32 %v3538, 536870912
    %v3540 = vshrl.u32 %v3539, 30
    %v3541 = vshll.u32 %v3540, 30
    %v3542 = vsub.s32 %v3538, %v3541
    %vm3543 = vcmp.lt.s32.totalorder %v3542, 0
    %v3544 = vsub.s32 0, %v3542
    %v3545 = vsel %vm3543, %v3544, %v3542
    %v3546 = vclz %v3545
    %v3547 = vsub.s32 %v3546, 2
    %vm3548 = vcmp.gt.s32.totalorder 0, %v3547
    %v3549 = vsel %vm3548, 0, %v3547
    %v3550 = vsub.s32 32, %v3549
    %v3551 = vshll.u32 %v3542, %v3549
    %v3552 = vshrl.u32 %v3534, %v3550
    %v3553 = vor.u32 %v3551, %v3552
    %v3554 = vsub.s32 4294967266, %v3549
    %v3555 = vadd.s32 %v3554, 127
    %v3556 = vshll.u32 %v3555, 23
    %v3557 = vor.u32 4788187, %v3556
    %v3558 = vand.u32 2147483647, %v3557
    %v3560 = vcvt.s32.f32 %v3553
    %v3561 = vmul.f32 %v3560, %v3558
    %v3562 = vxor.u32 %v3561, 2147483648
    %v3563 = vsel %vm3480, %v3562, %v3561
    %v3564 = vsub.s32 4, %v3540
    %v3565 = vsel %vm3480, %v3564, %v3540
    %v3566 = vsel %vm3479, %v16, %v3563
    %v3567 = vsel %vm3479, 0, %v3565
    %v3568 = vcosq.f32.pop %v3566
    %v3569 = vsinq.f32.pop %v3566
    %vm3570 = vweird.f32 %v16
    %v3571 = vand.u32 %v3567, 3
    %vm3572 = vcmp.lt.s32.totalorder %v3571, 2
    %vm3573 = vcmp.eq.s32.totalorder %v3571, 0
    %v3574 = vxor.u32 %v3569, 2147483648
    %v3575 = vsel %vm3573, %v3568, %v3574
    %vm3576 = vcmp.eq.s32.totalorder %v3571, 2
    %v3577 = vxor.u32 %v3568, 2147483648
    %v3578 = vsel %vm3576, %v3577, %v3569
    %v3579 = vsel %vm3572, %v3575, %v3578
    %v3580 = vsel %vm3570, nan, %v3579
    %v3581 = vand.u32 2147483647, %v17
    %vm3582 = vcmp.le.f32.partialorder %v3581, 0.7853982
    %vm3583 = vcmp.lt.s32.totalorder %v17, 0
    %v3584 = vand.u32 %v17, 2139095040
    %v3585 = vshrl.u32 %v3584, 23
    %v3586 = vsub.s32 %v3585, 127
    %v3587 = vand.u32 2147483647, %v17
    %v3588 = vand.u32 %v3587, 8388607
    %v3589 = vor.u32 %v3588, 8388608
    %v3590 = vsub.s32 0, %v3589
    %v3591 = vadd.s32 %v3586, 1
    %vm3592 = vcmp.gt.s32.totalorder %v3591, 0
    %v3593 = vsel %vm3592, %v3591, 0
    %v3594 = vshrl.u32 %v3593, 5
    %v3595 = vand.u32 %v3593, 31
    %v3596 = vsub.s32 32, %v3595
    %v3597 = vshrl.u32 683565275, %v3596
    %v3598 = vshll.u32 683565275, %v3595
    %v3599 = vshrl.u32 2475754826, %v3596
    %v3600 = vor.u32 %v3598, %v3599
    %v3601 = vshll.u32 2475754826, %v3595
    %v3602 = vshrl.u32 2131351028, %v3596
    %v3603 = vor.u32 %v3601, %v3602
    %v3604 = vshll.u32 2131351028, %v3595
    %v3605 = vshrl.u32 2102212464, %v3596
    %v3606 = vor.u32 %v3604, %v3605
    %v3607 = vshll.u32 2102212464, %v3595
    %v3608 = vshrl.u32 920167782, %v3596
    %v3609 = vor.u32 %v3607, %v3608
    %v3610 = vshll.u32 920167782, %v3595
    %v3611 = vshrl.u32 1326507024, %v3596
    %v3612 = vor.u32 %v3610, %v3611
    %vm3613 = vcmp.lt.s32.totalorder %v3594, 1
    %vm3614 = vcmp.lt.s32.totalorder %v3594, 2
    %vm3615 = vcmp.lt.s32.totalorder %v3594, 3
    %vm3616 = vcmp.lt.s32.totalorder %v3594, 4
    %v3617 = vsel %vm3613, %v3597, %v3600
    %v3618 = vsel %vm3616, %v3606, 2102212464
    %v3619 = vsel %vm3615, %v3603, %v3618
    %v3620 = vsel %vm3614, %v3617, %v3619
    %v3621 = vsel %vm3613, %v3600, %v3603
    %v3622 = vsel %vm3616, %v3609, 920167782
    %v3623 = vsel %vm3615, %v3606, %v3622
    %v3624 = vsel %vm3614, %v3621, %v3623
    %v3625 = vsel %vm3613, %v3603, %v3606
    %v3626 = vsel %vm3616, %v3612, 1326507024
    %v3627 = vsel %vm3615, %v3609, %v3626
    %v3628 = vsel %vm3614, %v3625, %v3627
    %v3629 = vshll.u32 %v3589, 8
    %v3630 = vmul.u32.u64.compose %v3629, %v3628
    %v3631 = vextract.low.u32 %v3630
    %v3632 = vextract.high.u32 %v3630
    %v3633 = vmul.u32.u64.compose %v3629, %v3624
    %v3634 = vextract.low.u32 %v3633
    %v3635 = vextract.high.u32 %v3633
    %v3636 = vmul.u32 %v3629, %v3620
    %v3637 = vadd.s32 %v3632, %v3634
    %vm3638 = vc.u32 %v3632, %v3634
    %v3639 = vadd.s32 %v3635, 1
    %v3640 = vsel %vm3638, %v3639, %v3635
    %v3641 = vadd.s32 %v3636, %v3640
    %v3642 = vadd.s32 %v3641, 536870912
    %v3643 = vshrl.u32 %v3642, 30
    %v3644 = vshll.u32 %v3643, 30
    %v3645 = vsub.s32 %v3641, %v3644
    %vm3646 = vcmp.lt.s32.totalorder %v3645, 0
    %v3647 = vsub.s32 0, %v3645
    %v3648 = vsel %vm3646, %v3647, %v3645
    %v3649 = vclz %v3648
    %v3650 = vsub.s32 %v3649, 2
    %vm3651 = vcmp.gt.s32.totalorder 0, %v3650
    %v3652 = vsel %vm3651, 0, %v3650
    %v3653 = vsub.s32 32, %v3652
    %v3654 = vshll.u32 %v3645, %v3652
    %v3655 = vshrl.u32 %v3637, %v3653
    %v3656 = vor.u32 %v3654, %v3655
    %v3657 = vsub.s32 4294967266, %v3652
    %v3658 = vadd.s32 %v3657, 127
    %v3659 = vshll.u32 %v3658, 23
    %v3660 = vor.u32 4788187, %v3659
    %v3661 = vand.u32 2147483647, %v3660
    %v3663 = vcvt.s32.f32 %v3656
    %v3664 = vmul.f32 %v3663, %v3661
    %v3665 = vxor.u32 %v3664, 2147483648
    %v3666 = vsel %vm3583, %v3665, %v3664
    %v3667 = vsub.s32 4, %v3643
    %v3668 = vsel %vm3583, %v3667, %v3643
    %v3669 = vsel %vm3582, %v17, %v3666
    %v3670 = vsel %vm3582, 0, %v3668
    %v3671 = vcosq.f32.pop %v3669
    %v3672 = vsinq.f32.pop %v3669
    %vm3673 = vweird.f32 %v17
    %v3674 = vand.u32 %v3670, 3
    %vm3675 = vcmp.lt.s32.totalorder %v3674, 2
    %vm3676 = vcmp.eq.s32.totalorder %v3674, 0
    %v3677 = vxor.u32 %v3672, 2147483648
    %v3678 = vsel %vm3676, %v3671, %v3677
    %vm3679 = vcmp.eq.s32.totalorder %v3674, 2
    %v3680 = vxor.u32 %v3671, 2147483648
    %v3681 = vsel %vm3679, %v3680, %v3672
    %v3682 = vsel %vm3675, %v3678, %v3681
    %v3683 = vsel %vm3673, nan, %v3682
    %v3684 = vand.u32 2147483647, %v18
    %vm3685 = vcmp.le.f32.partialorder %v3684, 0.7853982
    %vm3686 = vcmp.lt.s32.totalorder %v18, 0
    %v3687 = vand.u32 %v18, 2139095040
    %v3688 = vshrl.u32 %v3687, 23
    %v3689 = vsub.s32 %v3688, 127
    %v3690 = vand.u32 2147483647, %v18
    %v3691 = vand.u32 %v3690, 8388607
    %v3692 = vor.u32 %v3691, 8388608
    %v3693 = vsub.s32 0, %v3692
    %v3694 = vadd.s32 %v3689, 1
    %vm3695 = vcmp.gt.s32.totalorder %v3694, 0
    %v3696 = vsel %vm3695, %v3694, 0
    %v3697 = vshrl.u32 %v3696, 5
    %v3698 = vand.u32 %v3696, 31
    %v3699 = vsub.s32 32, %v3698
    %v3700 = vshrl.u32 683565275, %v3699
    %v3701 = vshll.u32 683565275, %v3698
    %v3702 = vshrl.u32 2475754826, %v3699
    %v3703 = vor.u32 %v3701, %v3702
    %v3704 = vshll.u32 2475754826, %v3698
    %v3705 = vshrl.u32 2131351028, %v3699
    %v3706 = vor.u32 %v3704, %v3705
    %v3707 = vshll.u32 2131351028, %v3698
    %v3708 = vshrl.u32 2102212464, %v3699
    %v3709 = vor.u32 %v3707, %v3708
    %v3710 = vshll.u32 2102212464, %v3698
    %v3711 = vshrl.u32 920167782, %v3699
    %v3712 = vor.u32 %v3710, %v3711
    %v3713 = vshll.u32 920167782, %v3698
    %v3714 = vshrl.u32 1326507024, %v3699
    %v3715 = vor.u32 %v3713, %v3714
    %vm3716 = vcmp.lt.s32.totalorder %v3697, 1
    %vm3717 = vcmp.lt.s32.totalorder %v3697, 2
    %vm3718 = vcmp.lt.s32.totalorder %v3697, 3
    %vm3719 = vcmp.lt.s32.totalorder %v3697, 4
    %v3720 = vsel %vm3716, %v3700, %v3703
    %v3721 = vsel %vm3719, %v3709, 2102212464
    %v3722 = vsel %vm3718, %v3706, %v3721
    %v3723 = vsel %vm3717, %v3720, %v3722
    %v3724 = vsel %vm3716, %v3703, %v3706
    %v3725 = vsel %vm3719, %v3712, 920167782
    %v3726 = vsel %vm3718, %v3709, %v3725
    %v3727 = vsel %vm3717, %v3724, %v3726
    %v3728 = vsel %vm3716, %v3706, %v3709
    %v3729 = vsel %vm3719, %v3715, 1326507024
    %v3730 = vsel %vm3718, %v3712, %v3729
    %v3731 = vsel %vm3717, %v3728, %v3730
    %v3732 = vshll.u32 %v3692, 8
    %v3733 = vmul.u32.u64.compose %v3732, %v3731
    %v3734 = vextract.low.u32 %v3733
    %v3735 = vextract.high.u32 %v3733
    %v3736 = vmul.u32.u64.compose %v3732, %v3727
    %v3737 = vextract.low.u32 %v3736
    %v3738 = vextract.high.u32 %v3736
    %v3739 = vmul.u32 %v3732, %v3723
    %v3740 = vadd.s32 %v3735, %v3737
    %vm3741 = vc.u32 %v3735, %v3737
    %v3742 = vadd.s32 %v3738, 1
    %v3743 = vsel %vm3741, %v3742, %v3738
    %v3744 = vadd.s32 %v3739, %v3743
    %v3745 = vadd.s32 %v3744, 536870912
    %v3746 = vshrl.u32 %v3745, 30
    %v3747 = vshll.u32 %v3746, 30
    %v3748 = vsub.s32 %v3744, %v3747
    %vm3749 = vcmp.lt.s32.totalorder %v3748, 0
    %v3750 = vsub.s32 0, %v3748
    %v3751 = vsel %vm3749, %v3750, %v3748
    %v3752 = vclz %v3751
    %v3753 = vsub.s32 %v3752, 2
    %vm3754 = vcmp.gt.s32.totalorder 0, %v3753
    %v3755 = vsel %vm3754, 0, %v3753
    %v3756 = vsub.s32 32, %v3755
    %v3757 = vshll.u32 %v3748, %v3755
    %v3758 = vshrl.u32 %v3740, %v3756
    %v3759 = vor.u32 %v3757, %v3758
    %v3760 = vsub.s32 4294967266, %v3755
    %v3761 = vadd.s32 %v3760, 127
    %v3762 = vshll.u32 %v3761, 23
    %v3763 = vor.u32 4788187, %v3762
    %v3764 = vand.u32 2147483647, %v3763
    %v3766 = vcvt.s32.f32 %v3759
    %v3767 = vmul.f32 %v3766, %v3764
    %v3768 = vxor.u32 %v3767, 2147483648
    %v3769 = vsel %vm3686, %v3768, %v3767
    %v3770 = vsub.s32 4, %v3746
    %v3771 = vsel %vm3686, %v3770, %v3746
    %v3772 = vsel %vm3685, %v18, %v3769
    %v3773 = vsel %vm3685, 0, %v3771
    %v3774 = vcosq.f32.pop %v3772
    %v3775 = vsinq.f32.pop %v3772
    %vm3776 = vweird.f32 %v18
    %v3777 = vand.u32 %v3773, 3
    %vm3778 = vcmp.lt.s32.totalorder %v3777, 2
    %vm3779 = vcmp.eq.s32.totalorder %v3777, 0
    %v3780 = vxor.u32 %v3775, 2147483648
    %v3781 = vsel %vm3779, %v3774, %v3780
    %vm3782 = vcmp.eq.s32.totalorder %v3777, 2
    %v3783 = vxor.u32 %v3774, 2147483648
    %v3784 = vsel %vm3782, %v3783, %v3775
    %v3785 = vsel %vm3778, %v3781, %v3784
    %v3786 = vsel %vm3776, nan, %v3785
    %v3787 = vand.u32 2147483647, %v19
    %vm3788 = vcmp.le.f32.partialorder %v3787, 0.7853982
    %vm3789 = vcmp.lt.s32.totalorder %v19, 0
    %v3790 = vand.u32 %v19, 2139095040
    %v3791 = vshrl.u32 %v3790, 23
    %v3792 = vsub.s32 %v3791, 127
    %v3793 = vand.u32 2147483647, %v19
    %v3794 = vand.u32 %v3793, 8388607
    %v3795 = vor.u32 %v3794, 8388608
    %v3796 = vsub.s32 0, %v3795
    %v3797 = vadd.s32 %v3792, 1
    %vm3798 = vcmp.gt.s32.totalorder %v3797, 0
    %v3799 = vsel %vm3798, %v3797, 0
    %v3800 = vshrl.u32 %v3799, 5
    %v3801 = vand.u32 %v3799, 31
    %v3802 = vsub.s32 32, %v3801
    %v3803 = vshrl.u32 683565275, %v3802
    %v3804 = vshll.u32 683565275, %v3801
    %v3805 = vshrl.u32 2475754826, %v3802
    %v3806 = vor.u32 %v3804, %v3805
    %v3807 = vshll.u32 2475754826, %v3801
    %v3808 = vshrl.u32 2131351028, %v3802
    %v3809 = vor.u32 %v3807, %v3808
    %v3810 = vshll.u32 2131351028, %v3801
    %v3811 = vshrl.u32 2102212464, %v3802
    %v3812 = vor.u32 %v3810, %v3811
    %v3813 = vshll.u32 2102212464, %v3801
    %v3814 = vshrl.u32 920167782, %v3802
    %v3815 = vor.u32 %v3813, %v3814
    %v3816 = vshll.u32 920167782, %v3801
    %v3817 = vshrl.u32 1326507024, %v3802
    %v3818 = vor.u32 %v3816, %v3817
    %vm3819 = vcmp.lt.s32.totalorder %v3800, 1
    %vm3820 = vcmp.lt.s32.totalorder %v3800, 2
    %vm3821 = vcmp.lt.s32.totalorder %v3800, 3
    %vm3822 = vcmp.lt.s32.totalorder %v3800, 4
    %v3823 = vsel %vm3819, %v3803, %v3806
    %v3824 = vsel %vm3822, %v3812, 2102212464
    %v3825 = vsel %vm3821, %v3809, %v3824
    %v3826 = vsel %vm3820, %v3823, %v3825
    %v3827 = vsel %vm3819, %v3806, %v3809
    %v3828 = vsel %vm3822, %v3815, 920167782
    %v3829 = vsel %vm3821, %v3812, %v3828
    %v3830 = vsel %vm3820, %v3827, %v3829
    %v3831 = vsel %vm3819, %v3809, %v3812
    %v3832 = vsel %vm3822, %v3818, 1326507024
    %v3833 = vsel %vm3821, %v3815, %v3832
    %v3834 = vsel %vm3820, %v3831, %v3833
    %v3835 = vshll.u32 %v3795, 8
    %v3836 = vmul.u32.u64.compose %v3835, %v3834
    %v3837 = vextract.low.u32 %v3836
    %v3838 = vextract.high.u32 %v3836
    %v3839 = vmul.u32.u64.compose %v3835, %v3830
    %v3840 = vextract.low.u32 %v3839
    %v3841 = vextract.high.u32 %v3839
    %v3842 = vmul.u32 %v3835, %v3826
    %v3843 = vadd.s32 %v3838, %v3840
    %vm3844 = vc.u32 %v3838, %v3840
    %v3845 = vadd.s32 %v3841, 1
    %v3846 = vsel %vm3844, %v3845, %v3841
    %v3847 = vadd.s32 %v3842, %v3846
    %v3848 = vadd.s32 %v3847, 536870912
    %v3849 = vshrl.u32 %v3848, 30
    %v3850 = vshll.u32 %v3849, 30
    %v3851 = vsub.s32 %v3847, %v3850
    %vm3852 = vcmp.lt.s32.totalorder %v3851, 0
    %v3853 = vsub.s32 0, %v3851
    %v3854 = vsel %vm3852, %v3853, %v3851
    %v3855 = vclz %v3854
    %v3856 = vsub.s32 %v3855, 2
    %vm3857 = vcmp.gt.s32.totalorder 0, %v3856
    %v3858 = vsel %vm3857, 0, %v3856
    %v3859 = vsub.s32 32, %v3858
    %v3860 = vshll.u32 %v3851, %v3858
    %v3861 = vshrl.u32 %v3843, %v3859
    %v3862 = vor.u32 %v3860, %v3861
    %v3863 = vsub.s32 4294967266, %v3858
    %v3864 = vadd.s32 %v3863, 127
    %v3865 = vshll.u32 %v3864, 23
    %v3866 = vor.u32 4788187, %v3865
    %v3867 = vand.u32 2147483647, %v3866
    %v3869 = vcvt.s32.f32 %v3862
    %v3870 = vmul.f32 %v3869, %v3867
    %v3871 = vxor.u32 %v3870, 2147483648
    %v3872 = vsel %vm3789, %v3871, %v3870
    %v3873 = vsub.s32 4, %v3849
    %v3874 = vsel %vm3789, %v3873, %v3849
    %v3875 = vsel %vm3788, %v19, %v3872
    %v3876 = vsel %vm3788, 0, %v3874
    %v3877 = vcosq.f32.pop %v3875
    %v3878 = vsinq.f32.pop %v3875
    %vm3879 = vweird.f32 %v19
    %v3880 = vand.u32 %v3876, 3
    %vm3881 = vcmp.lt.s32.totalorder %v3880, 2
    %vm3882 = vcmp.eq.s32.totalorder %v3880, 0
    %v3883 = vxor.u32 %v3878, 2147483648
    %v3884 = vsel %vm3882, %v3877, %v3883
    %vm3885 = vcmp.eq.s32.totalorder %v3880, 2
    %v3886 = vxor.u32 %v3877, 2147483648
    %v3887 = vsel %vm3885, %v3886, %v3878
    %v3888 = vsel %vm3881, %v3884, %v3887
    %v3889 = vsel %vm3879, nan, %v3888
    %v3890 = vand.u32 2147483647, %v20
    %vm3891 = vcmp.le.f32.partialorder %v3890, 0.7853982
    %vm3892 = vcmp.lt.s32.totalorder %v20, 0
    %v3893 = vand.u32 %v20, 2139095040
    %v3894 = vshrl.u32 %v3893, 23
    %v3895 = vsub.s32 %v3894, 127
    %v3896 = vand.u32 2147483647, %v20
    %v3897 = vand.u32 %v3896, 8388607
    %v3898 = vor.u32 %v3897, 8388608
    %v3899 = vsub.s32 0, %v3898
    %v3900 = vadd.s32 %v3895, 1
    %vm3901 = vcmp.gt.s32.totalorder %v3900, 0
    %v3902 = vsel %vm3901, %v3900, 0
    %v3903 = vshrl.u32 %v3902, 5
    %v3904 = vand.u32 %v3902, 31
    %v3905 = vsub.s32 32, %v3904
    %v3906 = vshrl.u32 683565275, %v3905
    %v3907 = vshll.u32 683565275, %v3904
    %v3908 = vshrl.u32 2475754826, %v3905
    %v3909 = vor.u32 %v3907, %v3908
    %v3910 = vshll.u32 2475754826, %v3904
    %v3911 = vshrl.u32 2131351028, %v3905
    %v3912 = vor.u32 %v3910, %v3911
    %v3913 = vshll.u32 2131351028, %v3904
    %v3914 = vshrl.u32 2102212464, %v3905
    %v3915 = vor.u32 %v3913, %v3914
    %v3916 = vshll.u32 2102212464, %v3904
    %v3917 = vshrl.u32 920167782, %v3905
    %v3918 = vor.u32 %v3916, %v3917
    %v3919 = vshll.u32 920167782, %v3904
    %v3920 = vshrl.u32 1326507024, %v3905
    %v3921 = vor.u32 %v3919, %v3920
    %vm3922 = vcmp.lt.s32.totalorder %v3903, 1
    %vm3923 = vcmp.lt.s32.totalorder %v3903, 2
    %vm3924 = vcmp.lt.s32.totalorder %v3903, 3
    %vm3925 = vcmp.lt.s32.totalorder %v3903, 4
    %v3926 = vsel %vm3922, %v3906, %v3909
    %v3927 = vsel %vm3925, %v3915, 2102212464
    %v3928 = vsel %vm3924, %v3912, %v3927
    %v3929 = vsel %vm3923, %v3926, %v3928
    %v3930 = vsel %vm3922, %v3909, %v3912
    %v3931 = vsel %vm3925, %v3918, 920167782
    %v3932 = vsel %vm3924, %v3915, %v3931
    %v3933 = vsel %vm3923, %v3930, %v3932
    %v3934 = vsel %vm3922, %v3912, %v3915
    %v3935 = vsel %vm3925, %v3921, 1326507024
    %v3936 = vsel %vm3924, %v3918, %v3935
    %v3937 = vsel %vm3923, %v3934, %v3936
    %v3938 = vshll.u32 %v3898, 8
    %v3939 = vmul.u32.u64.compose %v3938, %v3937
    %v3940 = vextract.low.u32 %v3939
    %v3941 = vextract.high.u32 %v3939
    %v3942 = vmul.u32.u64.compose %v3938, %v3933
    %v3943 = vextract.low.u32 %v3942
    %v3944 = vextract.high.u32 %v3942
    %v3945 = vmul.u32 %v3938, %v3929
    %v3946 = vadd.s32 %v3941, %v3943
    %vm3947 = vc.u32 %v3941, %v3943
    %v3948 = vadd.s32 %v3944, 1
    %v3949 = vsel %vm3947, %v3948, %v3944
    %v3950 = vadd.s32 %v3945, %v3949
    %v3951 = vadd.s32 %v3950, 536870912
    %v3952 = vshrl.u32 %v3951, 30
    %v3953 = vshll.u32 %v3952, 30
    %v3954 = vsub.s32 %v3950, %v3953
    %vm3955 = vcmp.lt.s32.totalorder %v3954, 0
    %v3956 = vsub.s32 0, %v3954
    %v3957 = vsel %vm3955, %v3956, %v3954
    %v3958 = vclz %v3957
    %v3959 = vsub.s32 %v3958, 2
    %vm3960 = vcmp.gt.s32.totalorder 0, %v3959
    %v3961 = vsel %vm3960, 0, %v3959
    %v3962 = vsub.s32 32, %v3961
    %v3963 = vshll.u32 %v3954, %v3961
    %v3964 = vshrl.u32 %v3946, %v3962
    %v3965 = vor.u32 %v3963, %v3964
    %v3966 = vsub.s32 4294967266, %v3961
    %v3967 = vadd.s32 %v3966, 127
    %v3968 = vshll.u32 %v3967, 23
    %v3969 = vor.u32 4788187, %v3968
    %v3970 = vand.u32 2147483647, %v3969
    %v3972 = vcvt.s32.f32 %v3965
    %v3973 = vmul.f32 %v3972, %v3970
    %v3974 = vxor.u32 %v3973, 2147483648
    %v3975 = vsel %vm3892, %v3974, %v3973
    %v3976 = vsub.s32 4, %v3952
    %v3977 = vsel %vm3892, %v3976, %v3952
    %v3978 = vsel %vm3891, %v20, %v3975
    %v3979 = vsel %vm3891, 0, %v3977
    %v3980 = vcosq.f32.pop %v3978
    %v3981 = vsinq.f32.pop %v3978
    %vm3982 = vweird.f32 %v20
    %v3983 = vand.u32 %v3979, 3
    %vm3984 = vcmp.lt.s32.totalorder %v3983, 2
    %vm3985 = vcmp.eq.s32.totalorder %v3983, 0
    %v3986 = vxor.u32 %v3981, 2147483648
    %v3987 = vsel %vm3985, %v3980, %v3986
    %vm3988 = vcmp.eq.s32.totalorder %v3983, 2
    %v3989 = vxor.u32 %v3980, 2147483648
    %v3990 = vsel %vm3988, %v3989, %v3981
    %v3991 = vsel %vm3984, %v3987, %v3990
    %v3992 = vsel %vm3982, nan, %v3991
    %v3993 = vand.u32 2147483647, %v21
    %vm3994 = vcmp.le.f32.partialorder %v3993, 0.7853982
    %vm3995 = vcmp.lt.s32.totalorder %v21, 0
    %v3996 = vand.u32 %v21, 2139095040
    %v3997 = vshrl.u32 %v3996, 23
    %v3998 = vsub.s32 %v3997, 127
    %v3999 = vand.u32 2147483647, %v21
    %v4000 = vand.u32 %v3999, 8388607
    %v4001 = vor.u32 %v4000, 8388608
    %v4002 = vsub.s32 0, %v4001
    %v4003 = vadd.s32 %v3998, 1
    %vm4004 = vcmp.gt.s32.totalorder %v4003, 0
    %v4005 = vsel %vm4004, %v4003, 0
    %v4006 = vshrl.u32 %v4005, 5
    %v4007 = vand.u32 %v4005, 31
    %v4008 = vsub.s32 32, %v4007
    %v4009 = vshrl.u32 683565275, %v4008
    %v4010 = vshll.u32 683565275, %v4007
    %v4011 = vshrl.u32 2475754826, %v4008
    %v4012 = vor.u32 %v4010, %v4011
    %v4013 = vshll.u32 2475754826, %v4007
    %v4014 = vshrl.u32 2131351028, %v4008
    %v4015 = vor.u32 %v4013, %v4014
    %v4016 = vshll.u32 2131351028, %v4007
    %v4017 = vshrl.u32 2102212464, %v4008
    %v4018 = vor.u32 %v4016, %v4017
    %v4019 = vshll.u32 2102212464, %v4007
    %v4020 = vshrl.u32 920167782, %v4008
    %v4021 = vor.u32 %v4019, %v4020
    %v4022 = vshll.u32 920167782, %v4007
    %v4023 = vshrl.u32 1326507024, %v4008
    %v4024 = vor.u32 %v4022, %v4023
    %vm4025 = vcmp.lt.s32.totalorder %v4006, 1
    %vm4026 = vcmp.lt.s32.totalorder %v4006, 2
    %vm4027 = vcmp.lt.s32.totalorder %v4006, 3
    %vm4028 = vcmp.lt.s32.totalorder %v4006, 4
    %v4029 = vsel %vm4025, %v4009, %v4012
    %v4030 = vsel %vm4028, %v4018, 2102212464
    %v4031 = vsel %vm4027, %v4015, %v4030
    %v4032 = vsel %vm4026, %v4029, %v4031
    %v4033 = vsel %vm4025, %v4012, %v4015
    %v4034 = vsel %vm4028, %v4021, 920167782
    %v4035 = vsel %vm4027, %v4018, %v4034
    %v4036 = vsel %vm4026, %v4033, %v4035
    %v4037 = vsel %vm4025, %v4015, %v4018
    %v4038 = vsel %vm4028, %v4024, 1326507024
    %v4039 = vsel %vm4027, %v4021, %v4038
    %v4040 = vsel %vm4026, %v4037, %v4039
    %v4041 = vshll.u32 %v4001, 8
    %v4042 = vmul.u32.u64.compose %v4041, %v4040
    %v4043 = vextract.low.u32 %v4042
    %v4044 = vextract.high.u32 %v4042
    %v4045 = vmul.u32.u64.compose %v4041, %v4036
    %v4046 = vextract.low.u32 %v4045
    %v4047 = vextract.high.u32 %v4045
    %v4048 = vmul.u32 %v4041, %v4032
    %v4049 = vadd.s32 %v4044, %v4046
    %vm4050 = vc.u32 %v4044, %v4046
    %v4051 = vadd.s32 %v4047, 1
    %v4052 = vsel %vm4050, %v4051, %v4047
    %v4053 = vadd.s32 %v4048, %v4052
    %v4054 = vadd.s32 %v4053, 536870912
    %v4055 = vshrl.u32 %v4054, 30
    %v4056 = vshll.u32 %v4055, 30
    %v4057 = vsub.s32 %v4053, %v4056
    %vm4058 = vcmp.lt.s32.totalorder %v4057, 0
    %v4059 = vsub.s32 0, %v4057
    %v4060 = vsel %vm4058, %v4059, %v4057
    %v4061 = vclz %v4060
    %v4062 = vsub.s32 %v4061, 2
    %vm4063 = vcmp.gt.s32.totalorder 0, %v4062
    %v4064 = vsel %vm4063, 0, %v4062
    %v4065 = vsub.s32 32, %v4064
    %v4066 = vshll.u32 %v4057, %v4064
    %v4067 = vshrl.u32 %v4049, %v4065
    %v4068 = vor.u32 %v4066, %v4067
    %v4069 = vsub.s32 4294967266, %v4064
    %v4070 = vadd.s32 %v4069, 127
    %v4071 = vshll.u32 %v4070, 23
    %v4072 = vor.u32 4788187, %v4071
    %v4073 = vand.u32 2147483647, %v4072
    %v4075 = vcvt.s32.f32 %v4068
    %v4076 = vmul.f32 %v4075, %v4073
    %v4077 = vxor.u32 %v4076, 2147483648
    %v4078 = vsel %vm3995, %v4077, %v4076
    %v4079 = vsub.s32 4, %v4055
    %v4080 = vsel %vm3995, %v4079, %v4055
    %v4081 = vsel %vm3994, %v21, %v4078
    %v4082 = vsel %vm3994, 0, %v4080
    %v4083 = vcosq.f32.pop %v4081
    %v4084 = vsinq.f32.pop %v4081
    %vm4085 = vweird.f32 %v21
    %v4086 = vand.u32 %v4082, 3
    %vm4087 = vcmp.lt.s32.totalorder %v4086, 2
    %vm4088 = vcmp.eq.s32.totalorder %v4086, 0
    %v4089 = vxor.u32 %v4084, 2147483648
    %v4090 = vsel %vm4088, %v4083, %v4089
    %vm4091 = vcmp.eq.s32.totalorder %v4086, 2
    %v4092 = vxor.u32 %v4083, 2147483648
    %v4093 = vsel %vm4091, %v4092, %v4084
    %v4094 = vsel %vm4087, %v4090, %v4093
    %v4095 = vsel %vm4085, nan, %v4094
    %v4096 = vand.u32 2147483647, %v22
    %vm4097 = vcmp.le.f32.partialorder %v4096, 0.7853982
    %vm4098 = vcmp.lt.s32.totalorder %v22, 0
    %v4099 = vand.u32 %v22, 2139095040
    %v4100 = vshrl.u32 %v4099, 23
    %v4101 = vsub.s32 %v4100, 127
    %v4102 = vand.u32 2147483647, %v22
    %v4103 = vand.u32 %v4102, 8388607
    %v4104 = vor.u32 %v4103, 8388608
    %v4105 = vsub.s32 0, %v4104
    %v4106 = vadd.s32 %v4101, 1
    %vm4107 = vcmp.gt.s32.totalorder %v4106, 0
    %v4108 = vsel %vm4107, %v4106, 0
    %v4109 = vshrl.u32 %v4108, 5
    %v4110 = vand.u32 %v4108, 31
    %v4111 = vsub.s32 32, %v4110
    %v4112 = vshrl.u32 683565275, %v4111
    %v4113 = vshll.u32 683565275, %v4110
    %v4114 = vshrl.u32 2475754826, %v4111
    %v4115 = vor.u32 %v4113, %v4114
    %v4116 = vshll.u32 2475754826, %v4110
    %v4117 = vshrl.u32 2131351028, %v4111
    %v4118 = vor.u32 %v4116, %v4117
    %v4119 = vshll.u32 2131351028, %v4110
    %v4120 = vshrl.u32 2102212464, %v4111
    %v4121 = vor.u32 %v4119, %v4120
    %v4122 = vshll.u32 2102212464, %v4110
    %v4123 = vshrl.u32 920167782, %v4111
    %v4124 = vor.u32 %v4122, %v4123
    %v4125 = vshll.u32 920167782, %v4110
    %v4126 = vshrl.u32 1326507024, %v4111
    %v4127 = vor.u32 %v4125, %v4126
    %vm4128 = vcmp.lt.s32.totalorder %v4109, 1
    %vm4129 = vcmp.lt.s32.totalorder %v4109, 2
    %vm4130 = vcmp.lt.s32.totalorder %v4109, 3
    %vm4131 = vcmp.lt.s32.totalorder %v4109, 4
    %v4132 = vsel %vm4128, %v4112, %v4115
    %v4133 = vsel %vm4131, %v4121, 2102212464
    %v4134 = vsel %vm4130, %v4118, %v4133
    %v4135 = vsel %vm4129, %v4132, %v4134
    %v4136 = vsel %vm4128, %v4115, %v4118
    %v4137 = vsel %vm4131, %v4124, 920167782
    %v4138 = vsel %vm4130, %v4121, %v4137
    %v4139 = vsel %vm4129, %v4136, %v4138
    %v4140 = vsel %vm4128, %v4118, %v4121
    %v4141 = vsel %vm4131, %v4127, 1326507024
    %v4142 = vsel %vm4130, %v4124, %v4141
    %v4143 = vsel %vm4129, %v4140, %v4142
    %v4144 = vshll.u32 %v4104, 8
    %v4145 = vmul.u32.u64.compose %v4144, %v4143
    %v4146 = vextract.low.u32 %v4145
    %v4147 = vextract.high.u32 %v4145
    %v4148 = vmul.u32.u64.compose %v4144, %v4139
    %v4149 = vextract.low.u32 %v4148
    %v4150 = vextract.high.u32 %v4148
    %v4151 = vmul.u32 %v4144, %v4135
    %v4152 = vadd.s32 %v4147, %v4149
    %vm4153 = vc.u32 %v4147, %v4149
    %v4154 = vadd.s32 %v4150, 1
    %v4155 = vsel %vm4153, %v4154, %v4150
    %v4156 = vadd.s32 %v4151, %v4155
    %v4157 = vadd.s32 %v4156, 536870912
    %v4158 = vshrl.u32 %v4157, 30
    %v4159 = vshll.u32 %v4158, 30
    %v4160 = vsub.s32 %v4156, %v4159
    %vm4161 = vcmp.lt.s32.totalorder %v4160, 0
    %v4162 = vsub.s32 0, %v4160
    %v4163 = vsel %vm4161, %v4162, %v4160
    %v4164 = vclz %v4163
    %v4165 = vsub.s32 %v4164, 2
    %vm4166 = vcmp.gt.s32.totalorder 0, %v4165
    %v4167 = vsel %vm4166, 0, %v4165
    %v4168 = vsub.s32 32, %v4167
    %v4169 = vshll.u32 %v4160, %v4167
    %v4170 = vshrl.u32 %v4152, %v4168
    %v4171 = vor.u32 %v4169, %v4170
    %v4172 = vsub.s32 4294967266, %v4167
    %v4173 = vadd.s32 %v4172, 127
    %v4174 = vshll.u32 %v4173, 23
    %v4175 = vor.u32 4788187, %v4174
    %v4176 = vand.u32 2147483647, %v4175
    %v4178 = vcvt.s32.f32 %v4171
    %v4179 = vmul.f32 %v4178, %v4176
    %v4180 = vxor.u32 %v4179, 2147483648
    %v4181 = vsel %vm4098, %v4180, %v4179
    %v4182 = vsub.s32 4, %v4158
    %v4183 = vsel %vm4098, %v4182, %v4158
    %v4184 = vsel %vm4097, %v22, %v4181
    %v4185 = vsel %vm4097, 0, %v4183
    %v4186 = vcosq.f32.pop %v4184
    %v4187 = vsinq.f32.pop %v4184
    %vm4188 = vweird.f32 %v22
    %v4189 = vand.u32 %v4185, 3
    %vm4190 = vcmp.lt.s32.totalorder %v4189, 2
    %vm4191 = vcmp.eq.s32.totalorder %v4189, 0
    %v4192 = vxor.u32 %v4187, 2147483648
    %v4193 = vsel %vm4191, %v4186, %v4192
    %vm4194 = vcmp.eq.s32.totalorder %v4189, 2
    %v4195 = vxor.u32 %v4186, 2147483648
    %v4196 = vsel %vm4194, %v4195, %v4187
    %v4197 = vsel %vm4190, %v4193, %v4196
    %v4198 = vsel %vm4188, nan, %v4197
    %v4199 = vand.u32 2147483647, %v23
    %vm4200 = vcmp.le.f32.partialorder %v4199, 0.7853982
    %vm4201 = vcmp.lt.s32.totalorder %v23, 0
    %v4202 = vand.u32 %v23, 2139095040
    %v4203 = vshrl.u32 %v4202, 23
    %v4204 = vsub.s32 %v4203, 127
    %v4205 = vand.u32 2147483647, %v23
    %v4206 = vand.u32 %v4205, 8388607
    %v4207 = vor.u32 %v4206, 8388608
    %v4208 = vsub.s32 0, %v4207
    %v4209 = vadd.s32 %v4204, 1
    %vm4210 = vcmp.gt.s32.totalorder %v4209, 0
    %v4211 = vsel %vm4210, %v4209, 0
    %v4212 = vshrl.u32 %v4211, 5
    %v4213 = vand.u32 %v4211, 31
    %v4214 = vsub.s32 32, %v4213
    %v4215 = vshrl.u32 683565275, %v4214
    %v4216 = vshll.u32 683565275, %v4213
    %v4217 = vshrl.u32 2475754826, %v4214
    %v4218 = vor.u32 %v4216, %v4217
    %v4219 = vshll.u32 2475754826, %v4213
    %v4220 = vshrl.u32 2131351028, %v4214
    %v4221 = vor.u32 %v4219, %v4220
    %v4222 = vshll.u32 2131351028, %v4213
    %v4223 = vshrl.u32 2102212464, %v4214
    %v4224 = vor.u32 %v4222, %v4223
    %v4225 = vshll.u32 2102212464, %v4213
    %v4226 = vshrl.u32 920167782, %v4214
    %v4227 = vor.u32 %v4225, %v4226
    %v4228 = vshll.u32 920167782, %v4213
    %v4229 = vshrl.u32 1326507024, %v4214
    %v4230 = vor.u32 %v4228, %v4229
    %vm4231 = vcmp.lt.s32.totalorder %v4212, 1
    %vm4232 = vcmp.lt.s32.totalorder %v4212, 2
    %vm4233 = vcmp.lt.s32.totalorder %v4212, 3
    %vm4234 = vcmp.lt.s32.totalorder %v4212, 4
    %v4235 = vsel %vm4231, %v4215, %v4218
    %v4236 = vsel %vm4234, %v4224, 2102212464
    %v4237 = vsel %vm4233, %v4221, %v4236
    %v4238 = vsel %vm4232, %v4235, %v4237
    %v4239 = vsel %vm4231, %v4218, %v4221
    %v4240 = vsel %vm4234, %v4227, 920167782
    %v4241 = vsel %vm4233, %v4224, %v4240
    %v4242 = vsel %vm4232, %v4239, %v4241
    %v4243 = vsel %vm4231, %v4221, %v4224
    %v4244 = vsel %vm4234, %v4230, 1326507024
    %v4245 = vsel %vm4233, %v4227, %v4244
    %v4246 = vsel %vm4232, %v4243, %v4245
    %v4247 = vshll.u32 %v4207, 8
    %v4248 = vmul.u32.u64.compose %v4247, %v4246
    %v4249 = vextract.low.u32 %v4248
    %v4250 = vextract.high.u32 %v4248
    %v4251 = vmul.u32.u64.compose %v4247, %v4242
    %v4252 = vextract.low.u32 %v4251
    %v4253 = vextract.high.u32 %v4251
    %v4254 = vmul.u32 %v4247, %v4238
    %v4255 = vadd.s32 %v4250, %v4252
    %vm4256 = vc.u32 %v4250, %v4252
    %v4257 = vadd.s32 %v4253, 1
    %v4258 = vsel %vm4256, %v4257, %v4253
    %v4259 = vadd.s32 %v4254, %v4258
    %v4260 = vadd.s32 %v4259, 536870912
    %v4261 = vshrl.u32 %v4260, 30
    %v4262 = vshll.u32 %v4261, 30
    %v4263 = vsub.s32 %v4259, %v4262
    %vm4264 = vcmp.lt.s32.totalorder %v4263, 0
    %v4265 = vsub.s32 0, %v4263
    %v4266 = vsel %vm4264, %v4265, %v4263
    %v4267 = vclz %v4266
    %v4268 = vsub.s32 %v4267, 2
    %vm4269 = vcmp.gt.s32.totalorder 0, %v4268
    %v4270 = vsel %vm4269, 0, %v4268
    %v4271 = vsub.s32 32, %v4270
    %v4272 = vshll.u32 %v4263, %v4270
    %v4273 = vshrl.u32 %v4255, %v4271
    %v4274 = vor.u32 %v4272, %v4273
    %v4275 = vsub.s32 4294967266, %v4270
    %v4276 = vadd.s32 %v4275, 127
    %v4277 = vshll.u32 %v4276, 23
    %v4278 = vor.u32 4788187, %v4277
    %v4279 = vand.u32 2147483647, %v4278
    %v4281 = vcvt.s32.f32 %v4274
    %v4282 = vmul.f32 %v4281, %v4279
    %v4283 = vxor.u32 %v4282, 2147483648
    %v4284 = vsel %vm4201, %v4283, %v4282
    %v4285 = vsub.s32 4, %v4261
    %v4286 = vsel %vm4201, %v4285, %v4261
    %v4287 = vsel %vm4200, %v23, %v4284
    %v4288 = vsel %vm4200, 0, %v4286
    %v4289 = vcosq.f32.pop %v4287
    %v4290 = vsinq.f32.pop %v4287
    %vm4291 = vweird.f32 %v23
    %v4292 = vand.u32 %v4288, 3
    %vm4293 = vcmp.lt.s32.totalorder %v4292, 2
    %vm4294 = vcmp.eq.s32.totalorder %v4292, 0
    %v4295 = vxor.u32 %v4290, 2147483648
    %v4296 = vsel %vm4294, %v4289, %v4295
    %vm4297 = vcmp.eq.s32.totalorder %v4292, 2
    %v4298 = vxor.u32 %v4289, 2147483648
    %v4299 = vsel %vm4297, %v4298, %v4290
    %v4300 = vsel %vm4293, %v4296, %v4299
    %v4301 = vsel %vm4291, nan, %v4300
    %v4302 = vand.u32 2147483647, %v24
    %vm4303 = vcmp.le.f32.partialorder %v4302, 0.7853982
    %vm4304 = vcmp.lt.s32.totalorder %v24, 0
    %v4305 = vand.u32 %v24, 2139095040
    %v4306 = vshrl.u32 %v4305, 23
    %v4307 = vsub.s32 %v4306, 127
    %v4308 = vand.u32 2147483647, %v24
    %v4309 = vand.u32 %v4308, 8388607
    %v4310 = vor.u32 %v4309, 8388608
    %v4311 = vsub.s32 0, %v4310
    %v4312 = vadd.s32 %v4307, 1
    %vm4313 = vcmp.gt.s32.totalorder %v4312, 0
    %v4314 = vsel %vm4313, %v4312, 0
    %v4315 = vshrl.u32 %v4314, 5
    %v4316 = vand.u32 %v4314, 31
    %v4317 = vsub.s32 32, %v4316
    %v4318 = vshrl.u32 683565275, %v4317
    %v4319 = vshll.u32 683565275, %v4316
    %v4320 = vshrl.u32 2475754826, %v4317
    %v4321 = vor.u32 %v4319, %v4320
    %v4322 = vshll.u32 2475754826, %v4316
    %v4323 = vshrl.u32 2131351028, %v4317
    %v4324 = vor.u32 %v4322, %v4323
    %v4325 = vshll.u32 2131351028, %v4316
    %v4326 = vshrl.u32 2102212464, %v4317
    %v4327 = vor.u32 %v4325, %v4326
    %v4328 = vshll.u32 2102212464, %v4316
    %v4329 = vshrl.u32 920167782, %v4317
    %v4330 = vor.u32 %v4328, %v4329
    %v4331 = vshll.u32 920167782, %v4316
    %v4332 = vshrl.u32 1326507024, %v4317
    %v4333 = vor.u32 %v4331, %v4332
    %vm4334 = vcmp.lt.s32.totalorder %v4315, 1
    %vm4335 = vcmp.lt.s32.totalorder %v4315, 2
    %vm4336 = vcmp.lt.s32.totalorder %v4315, 3
    %vm4337 = vcmp.lt.s32.totalorder %v4315, 4
    %v4338 = vsel %vm4334, %v4318, %v4321
    %v4339 = vsel %vm4337, %v4327, 2102212464
    %v4340 = vsel %vm4336, %v4324, %v4339
    %v4341 = vsel %vm4335, %v4338, %v4340
    %v4342 = vsel %vm4334, %v4321, %v4324
    %v4343 = vsel %vm4337, %v4330, 920167782
    %v4344 = vsel %vm4336, %v4327, %v4343
    %v4345 = vsel %vm4335, %v4342, %v4344
    %v4346 = vsel %vm4334, %v4324, %v4327
    %v4347 = vsel %vm4337, %v4333, 1326507024
    %v4348 = vsel %vm4336, %v4330, %v4347
    %v4349 = vsel %vm4335, %v4346, %v4348
    %v4350 = vshll.u32 %v4310, 8
    %v4351 = vmul.u32.u64.compose %v4350, %v4349
    %v4352 = vextract.low.u32 %v4351
    %v4353 = vextract.high.u32 %v4351
    %v4354 = vmul.u32.u64.compose %v4350, %v4345
    %v4355 = vextract.low.u32 %v4354
    %v4356 = vextract.high.u32 %v4354
    %v4357 = vmul.u32 %v4350, %v4341
    %v4358 = vadd.s32 %v4353, %v4355
    %vm4359 = vc.u32 %v4353, %v4355
    %v4360 = vadd.s32 %v4356, 1
    %v4361 = vsel %vm4359, %v4360, %v4356
    %v4362 = vadd.s32 %v4357, %v4361
    %v4363 = vadd.s32 %v4362, 536870912
    %v4364 = vshrl.u32 %v4363, 30
    %v4365 = vshll.u32 %v4364, 30
    %v4366 = vsub.s32 %v4362, %v4365
    %vm4367 = vcmp.lt.s32.totalorder %v4366, 0
    %v4368 = vsub.s32 0, %v4366
    %v4369 = vsel %vm4367, %v4368, %v4366
    %v4370 = vclz %v4369
    %v4371 = vsub.s32 %v4370, 2
    %vm4372 = vcmp.gt.s32.totalorder 0, %v4371
    %v4373 = vsel %vm4372, 0, %v4371
    %v4374 = vsub.s32 32, %v4373
    %v4375 = vshll.u32 %v4366, %v4373
    %v4376 = vshrl.u32 %v4358, %v4374
    %v4377 = vor.u32 %v4375, %v4376
    %v4378 = vsub.s32 4294967266, %v4373
    %v4379 = vadd.s32 %v4378, 127
    %v4380 = vshll.u32 %v4379, 23
    %v4381 = vor.u32 4788187, %v4380
    %v4382 = vand.u32 2147483647, %v4381
    %v4384 = vcvt.s32.f32 %v4377
    %v4385 = vmul.f32 %v4384, %v4382
    %v4386 = vxor.u32 %v4385, 2147483648
    %v4387 = vsel %vm4304, %v4386, %v4385
    %v4388 = vsub.s32 4, %v4364
    %v4389 = vsel %vm4304, %v4388, %v4364
    %v4390 = vsel %vm4303, %v24, %v4387
    %v4391 = vsel %vm4303, 0, %v4389
    %v4392 = vcosq.f32.pop %v4390
    %v4393 = vsinq.f32.pop %v4390
    %vm4394 = vweird.f32 %v24
    %v4395 = vand.u32 %v4391, 3
    %vm4396 = vcmp.lt.s32.totalorder %v4395, 2
    %vm4397 = vcmp.eq.s32.totalorder %v4395, 0
    %v4398 = vxor.u32 %v4393, 2147483648
    %v4399 = vsel %vm4397, %v4392, %v4398
    %vm4400 = vcmp.eq.s32.totalorder %v4395, 2
    %v4401 = vxor.u32 %v4392, 2147483648
    %v4402 = vsel %vm4400, %v4401, %v4393
    %v4403 = vsel %vm4396, %v4399, %v4402
    %v4404 = vsel %vm4394, nan, %v4403
    %v4405 = vand.u32 2147483647, %v25
    %vm4406 = vcmp.le.f32.partialorder %v4405, 0.7853982
    %vm4407 = vcmp.lt.s32.totalorder %v25, 0
    %v4408 = vand.u32 %v25, 2139095040
    %v4409 = vshrl.u32 %v4408, 23
    %v4410 = vsub.s32 %v4409, 127
    %v4411 = vand.u32 2147483647, %v25
    %v4412 = vand.u32 %v4411, 8388607
    %v4413 = vor.u32 %v4412, 8388608
    %v4414 = vsub.s32 0, %v4413
    %v4415 = vadd.s32 %v4410, 1
    %vm4416 = vcmp.gt.s32.totalorder %v4415, 0
    %v4417 = vsel %vm4416, %v4415, 0
    %v4418 = vshrl.u32 %v4417, 5
    %v4419 = vand.u32 %v4417, 31
    %v4420 = vsub.s32 32, %v4419
    %v4421 = vshrl.u32 683565275, %v4420
    %v4422 = vshll.u32 683565275, %v4419
    %v4423 = vshrl.u32 2475754826, %v4420
    %v4424 = vor.u32 %v4422, %v4423
    %v4425 = vshll.u32 2475754826, %v4419
    %v4426 = vshrl.u32 2131351028, %v4420
    %v4427 = vor.u32 %v4425, %v4426
    %v4428 = vshll.u32 2131351028, %v4419
    %v4429 = vshrl.u32 2102212464, %v4420
    %v4430 = vor.u32 %v4428, %v4429
    %v4431 = vshll.u32 2102212464, %v4419
    %v4432 = vshrl.u32 920167782, %v4420
    %v4433 = vor.u32 %v4431, %v4432
    %v4434 = vshll.u32 920167782, %v4419
    %v4435 = vshrl.u32 1326507024, %v4420
    %v4436 = vor.u32 %v4434, %v4435
    %vm4437 = vcmp.lt.s32.totalorder %v4418, 1
    %vm4438 = vcmp.lt.s32.totalorder %v4418, 2
    %vm4439 = vcmp.lt.s32.totalorder %v4418, 3
    %vm4440 = vcmp.lt.s32.totalorder %v4418, 4
    %v4441 = vsel %vm4437, %v4421, %v4424
    %v4442 = vsel %vm4440, %v4430, 2102212464
    %v4443 = vsel %vm4439, %v4427, %v4442
    %v4444 = vsel %vm4438, %v4441, %v4443
    %v4445 = vsel %vm4437, %v4424, %v4427
    %v4446 = vsel %vm4440, %v4433, 920167782
    %v4447 = vsel %vm4439, %v4430, %v4446
    %v4448 = vsel %vm4438, %v4445, %v4447
    %v4449 = vsel %vm4437, %v4427, %v4430
    %v4450 = vsel %vm4440, %v4436, 1326507024
    %v4451 = vsel %vm4439, %v4433, %v4450
    %v4452 = vsel %vm4438, %v4449, %v4451
    %v4453 = vshll.u32 %v4413, 8
    %v4454 = vmul.u32.u64.compose %v4453, %v4452
    %v4455 = vextract.low.u32 %v4454
    %v4456 = vextract.high.u32 %v4454
    %v4457 = vmul.u32.u64.compose %v4453, %v4448
    %v4458 = vextract.low.u32 %v4457
    %v4459 = vextract.high.u32 %v4457
    %v4460 = vmul.u32 %v4453, %v4444
    %v4461 = vadd.s32 %v4456, %v4458
    %vm4462 = vc.u32 %v4456, %v4458
    %v4463 = vadd.s32 %v4459, 1
    %v4464 = vsel %vm4462, %v4463, %v4459
    %v4465 = vadd.s32 %v4460, %v4464
    %v4466 = vadd.s32 %v4465, 536870912
    %v4467 = vshrl.u32 %v4466, 30
    %v4468 = vshll.u32 %v4467, 30
    %v4469 = vsub.s32 %v4465, %v4468
    %vm4470 = vcmp.lt.s32.totalorder %v4469, 0
    %v4471 = vsub.s32 0, %v4469
    %v4472 = vsel %vm4470, %v4471, %v4469
    %v4473 = vclz %v4472
    %v4474 = vsub.s32 %v4473, 2
    %vm4475 = vcmp.gt.s32.totalorder 0, %v4474
    %v4476 = vsel %vm4475, 0, %v4474
    %v4477 = vsub.s32 32, %v4476
    %v4478 = vshll.u32 %v4469, %v4476
    %v4479 = vshrl.u32 %v4461, %v4477
    %v4480 = vor.u32 %v4478, %v4479
    %v4481 = vsub.s32 4294967266, %v4476
    %v4482 = vadd.s32 %v4481, 127
    %v4483 = vshll.u32 %v4482, 23
    %v4484 = vor.u32 4788187, %v4483
    %v4485 = vand.u32 2147483647, %v4484
    %v4487 = vcvt.s32.f32 %v4480
    %v4488 = vmul.f32 %v4487, %v4485
    %v4489 = vxor.u32 %v4488, 2147483648
    %v4490 = vsel %vm4407, %v4489, %v4488
    %v4491 = vsub.s32 4, %v4467
    %v4492 = vsel %vm4407, %v4491, %v4467
    %v4493 = vsel %vm4406, %v25, %v4490
    %v4494 = vsel %vm4406, 0, %v4492
    %v4495 = vcosq.f32.pop %v4493
    %v4496 = vsinq.f32.pop %v4493
    %vm4497 = vweird.f32 %v25
    %v4498 = vand.u32 %v4494, 3
    %vm4499 = vcmp.lt.s32.totalorder %v4498, 2
    %vm4500 = vcmp.eq.s32.totalorder %v4498, 0
    %v4501 = vxor.u32 %v4496, 2147483648
    %v4502 = vsel %vm4500, %v4495, %v4501
    %vm4503 = vcmp.eq.s32.totalorder %v4498, 2
    %v4504 = vxor.u32 %v4495, 2147483648
    %v4505 = vsel %vm4503, %v4504, %v4496
    %v4506 = vsel %vm4499, %v4502, %v4505
    %v4507 = vsel %vm4497, nan, %v4506
    %v4508 = vand.u32 2147483647, %v26
    %vm4509 = vcmp.le.f32.partialorder %v4508, 0.7853982
    %vm4510 = vcmp.lt.s32.totalorder %v26, 0
    %v4511 = vand.u32 %v26, 2139095040
    %v4512 = vshrl.u32 %v4511, 23
    %v4513 = vsub.s32 %v4512, 127
    %v4514 = vand.u32 2147483647, %v26
    %v4515 = vand.u32 %v4514, 8388607
    %v4516 = vor.u32 %v4515, 8388608
    %v4517 = vsub.s32 0, %v4516
    %v4518 = vadd.s32 %v4513, 1
    %vm4519 = vcmp.gt.s32.totalorder %v4518, 0
    %v4520 = vsel %vm4519, %v4518, 0
    %v4521 = vshrl.u32 %v4520, 5
    %v4522 = vand.u32 %v4520, 31
    %v4523 = vsub.s32 32, %v4522
    %v4524 = vshrl.u32 683565275, %v4523
    %v4525 = vshll.u32 683565275, %v4522
    %v4526 = vshrl.u32 2475754826, %v4523
    %v4527 = vor.u32 %v4525, %v4526
    %v4528 = vshll.u32 2475754826, %v4522
    %v4529 = vshrl.u32 2131351028, %v4523
    %v4530 = vor.u32 %v4528, %v4529
    %v4531 = vshll.u32 2131351028, %v4522
    %v4532 = vshrl.u32 2102212464, %v4523
    %v4533 = vor.u32 %v4531, %v4532
    %v4534 = vshll.u32 2102212464, %v4522
    %v4535 = vshrl.u32 920167782, %v4523
    %v4536 = vor.u32 %v4534, %v4535
    %v4537 = vshll.u32 920167782, %v4522
    %v4538 = vshrl.u32 1326507024, %v4523
    %v4539 = vor.u32 %v4537, %v4538
    %vm4540 = vcmp.lt.s32.totalorder %v4521, 1
    %vm4541 = vcmp.lt.s32.totalorder %v4521, 2
    %vm4542 = vcmp.lt.s32.totalorder %v4521, 3
    %vm4543 = vcmp.lt.s32.totalorder %v4521, 4
    %v4544 = vsel %vm4540, %v4524, %v4527
    %v4545 = vsel %vm4543, %v4533, 2102212464
    %v4546 = vsel %vm4542, %v4530, %v4545
    %v4547 = vsel %vm4541, %v4544, %v4546
    %v4548 = vsel %vm4540, %v4527, %v4530
    %v4549 = vsel %vm4543, %v4536, 920167782
    %v4550 = vsel %vm4542, %v4533, %v4549
    %v4551 = vsel %vm4541, %v4548, %v4550
    %v4552 = vsel %vm4540, %v4530, %v4533
    %v4553 = vsel %vm4543, %v4539, 1326507024
    %v4554 = vsel %vm4542, %v4536, %v4553
    %v4555 = vsel %vm4541, %v4552, %v4554
    %v4556 = vshll.u32 %v4516, 8
    %v4557 = vmul.u32.u64.compose %v4556, %v4555
    %v4558 = vextract.low.u32 %v4557
    %v4559 = vextract.high.u32 %v4557
    %v4560 = vmul.u32.u64.compose %v4556, %v4551
    %v4561 = vextract.low.u32 %v4560
    %v4562 = vextract.high.u32 %v4560
    %v4563 = vmul.u32 %v4556, %v4547
    %v4564 = vadd.s32 %v4559, %v4561
    %vm4565 = vc.u32 %v4559, %v4561
    %v4566 = vadd.s32 %v4562, 1
    %v4567 = vsel %vm4565, %v4566, %v4562
    %v4568 = vadd.s32 %v4563, %v4567
    %v4569 = vadd.s32 %v4568, 536870912
    %v4570 = vshrl.u32 %v4569, 30
    %v4571 = vshll.u32 %v4570, 30
    %v4572 = vsub.s32 %v4568, %v4571
    %vm4573 = vcmp.lt.s32.totalorder %v4572, 0
    %v4574 = vsub.s32 0, %v4572
    %v4575 = vsel %vm4573, %v4574, %v4572
    %v4576 = vclz %v4575
    %v4577 = vsub.s32 %v4576, 2
    %vm4578 = vcmp.gt.s32.totalorder 0, %v4577
    %v4579 = vsel %vm4578, 0, %v4577
    %v4580 = vsub.s32 32, %v4579
    %v4581 = vshll.u32 %v4572, %v4579
    %v4582 = vshrl.u32 %v4564, %v4580
    %v4583 = vor.u32 %v4581, %v4582
    %v4584 = vsub.s32 4294967266, %v4579
    %v4585 = vadd.s32 %v4584, 127
    %v4586 = vshll.u32 %v4585, 23
    %v4587 = vor.u32 4788187, %v4586
    %v4588 = vand.u32 2147483647, %v4587
    %v4590 = vcvt.s32.f32 %v4583
    %v4591 = vmul.f32 %v4590, %v4588
    %v4592 = vxor.u32 %v4591, 2147483648
    %v4593 = vsel %vm4510, %v4592, %v4591
    %v4594 = vsub.s32 4, %v4570
    %v4595 = vsel %vm4510, %v4594, %v4570
    %v4596 = vsel %vm4509, %v26, %v4593
    %v4597 = vsel %vm4509, 0, %v4595
    %v4598 = vcosq.f32.pop %v4596
    %v4599 = vsinq.f32.pop %v4596
    %vm4600 = vweird.f32 %v26
    %v4601 = vand.u32 %v4597, 3
    %vm4602 = vcmp.lt.s32.totalorder %v4601, 2
    %vm4603 = vcmp.eq.s32.totalorder %v4601, 0
    %v4604 = vxor.u32 %v4599, 2147483648
    %v4605 = vsel %vm4603, %v4598, %v4604
    %vm4606 = vcmp.eq.s32.totalorder %v4601, 2
    %v4607 = vxor.u32 %v4598, 2147483648
    %v4608 = vsel %vm4606, %v4607, %v4599
    %v4609 = vsel %vm4602, %v4605, %v4608
    %v4610 = vsel %vm4600, nan, %v4609
    %v4611 = vand.u32 2147483647, %v27
    %vm4612 = vcmp.le.f32.partialorder %v4611, 0.7853982
    %vm4613 = vcmp.lt.s32.totalorder %v27, 0
    %v4614 = vand.u32 %v27, 2139095040
    %v4615 = vshrl.u32 %v4614, 23
    %v4616 = vsub.s32 %v4615, 127
    %v4617 = vand.u32 2147483647, %v27
    %v4618 = vand.u32 %v4617, 8388607
    %v4619 = vor.u32 %v4618, 8388608
    %v4620 = vsub.s32 0, %v4619
    %v4621 = vadd.s32 %v4616, 1
    %vm4622 = vcmp.gt.s32.totalorder %v4621, 0
    %v4623 = vsel %vm4622, %v4621, 0
    %v4624 = vshrl.u32 %v4623, 5
    %v4625 = vand.u32 %v4623, 31
    %v4626 = vsub.s32 32, %v4625
    %v4627 = vshrl.u32 683565275, %v4626
    %v4628 = vshll.u32 683565275, %v4625
    %v4629 = vshrl.u32 2475754826, %v4626
    %v4630 = vor.u32 %v4628, %v4629
    %v4631 = vshll.u32 2475754826, %v4625
    %v4632 = vshrl.u32 2131351028, %v4626
    %v4633 = vor.u32 %v4631, %v4632
    %v4634 = vshll.u32 2131351028, %v4625
    %v4635 = vshrl.u32 2102212464, %v4626
    %v4636 = vor.u32 %v4634, %v4635
    %v4637 = vshll.u32 2102212464, %v4625
    %v4638 = vshrl.u32 920167782, %v4626
    %v4639 = vor.u32 %v4637, %v4638
    %v4640 = vshll.u32 920167782, %v4625
    %v4641 = vshrl.u32 1326507024, %v4626
    %v4642 = vor.u32 %v4640, %v4641
    %vm4643 = vcmp.lt.s32.totalorder %v4624, 1
    %vm4644 = vcmp.lt.s32.totalorder %v4624, 2
    %vm4645 = vcmp.lt.s32.totalorder %v4624, 3
    %vm4646 = vcmp.lt.s32.totalorder %v4624, 4
    %v4647 = vsel %vm4643, %v4627, %v4630
    %v4648 = vsel %vm4646, %v4636, 2102212464
    %v4649 = vsel %vm4645, %v4633, %v4648
    %v4650 = vsel %vm4644, %v4647, %v4649
    %v4651 = vsel %vm4643, %v4630, %v4633
    %v4652 = vsel %vm4646, %v4639, 920167782
    %v4653 = vsel %vm4645, %v4636, %v4652
    %v4654 = vsel %vm4644, %v4651, %v4653
    %v4655 = vsel %vm4643, %v4633, %v4636
    %v4656 = vsel %vm4646, %v4642, 1326507024
    %v4657 = vsel %vm4645, %v4639, %v4656
    %v4658 = vsel %vm4644, %v4655, %v4657
    %v4659 = vshll.u32 %v4619, 8
    %v4660 = vmul.u32.u64.compose %v4659, %v4658
    %v4661 = vextract.low.u32 %v4660
    %v4662 = vextract.high.u32 %v4660
    %v4663 = vmul.u32.u64.compose %v4659, %v4654
    %v4664 = vextract.low.u32 %v4663
    %v4665 = vextract.high.u32 %v4663
    %v4666 = vmul.u32 %v4659, %v4650
    %v4667 = vadd.s32 %v4662, %v4664
    %vm4668 = vc.u32 %v4662, %v4664
    %v4669 = vadd.s32 %v4665, 1
    %v4670 = vsel %vm4668, %v4669, %v4665
    %v4671 = vadd.s32 %v4666, %v4670
    %v4672 = vadd.s32 %v4671, 536870912
    %v4673 = vshrl.u32 %v4672, 30
    %v4674 = vshll.u32 %v4673, 30
    %v4675 = vsub.s32 %v4671, %v4674
    %vm4676 = vcmp.lt.s32.totalorder %v4675, 0
    %v4677 = vsub.s32 0, %v4675
    %v4678 = vsel %vm4676, %v4677, %v4675
    %v4679 = vclz %v4678
    %v4680 = vsub.s32 %v4679, 2
    %vm4681 = vcmp.gt.s32.totalorder 0, %v4680
    %v4682 = vsel %vm4681, 0, %v4680
    %v4683 = vsub.s32 32, %v4682
    %v4684 = vshll.u32 %v4675, %v4682
    %v4685 = vshrl.u32 %v4667, %v4683
    %v4686 = vor.u32 %v4684, %v4685
    %v4687 = vsub.s32 4294967266, %v4682
    %v4688 = vadd.s32 %v4687, 127
    %v4689 = vshll.u32 %v4688, 23
    %v4690 = vor.u32 4788187, %v4689
    %v4691 = vand.u32 2147483647, %v4690
    %v4693 = vcvt.s32.f32 %v4686
    %v4694 = vmul.f32 %v4693, %v4691
    %v4695 = vxor.u32 %v4694, 2147483648
    %v4696 = vsel %vm4613, %v4695, %v4694
    %v4697 = vsub.s32 4, %v4673
    %v4698 = vsel %vm4613, %v4697, %v4673
    %v4699 = vsel %vm4612, %v27, %v4696
    %v4700 = vsel %vm4612, 0, %v4698
    %v4701 = vcosq.f32.pop %v4699
    %v4702 = vsinq.f32.pop %v4699
    %vm4703 = vweird.f32 %v27
    %v4704 = vand.u32 %v4700, 3
    %vm4705 = vcmp.lt.s32.totalorder %v4704, 2
    %vm4706 = vcmp.eq.s32.totalorder %v4704, 0
    %v4707 = vxor.u32 %v4702, 2147483648
    %v4708 = vsel %vm4706, %v4701, %v4707
    %vm4709 = vcmp.eq.s32.totalorder %v4704, 2
    %v4710 = vxor.u32 %v4701, 2147483648
    %v4711 = vsel %vm4709, %v4710, %v4702
    %v4712 = vsel %vm4705, %v4708, %v4711
    %v4713 = vsel %vm4703, nan, %v4712
    %v4714 = vand.u32 2147483647, %v28
    %vm4715 = vcmp.le.f32.partialorder %v4714, 0.7853982
    %vm4716 = vcmp.lt.s32.totalorder %v28, 0
    %v4717 = vand.u32 %v28, 2139095040
    %v4718 = vshrl.u32 %v4717, 23
    %v4719 = vsub.s32 %v4718, 127
    %v4720 = vand.u32 2147483647, %v28
    %v4721 = vand.u32 %v4720, 8388607
    %v4722 = vor.u32 %v4721, 8388608
    %v4723 = vsub.s32 0, %v4722
    %v4724 = vadd.s32 %v4719, 1
    %vm4725 = vcmp.gt.s32.totalorder %v4724, 0
    %v4726 = vsel %vm4725, %v4724, 0
    %v4727 = vshrl.u32 %v4726, 5
    %v4728 = vand.u32 %v4726, 31
    %v4729 = vsub.s32 32, %v4728
    %v4730 = vshrl.u32 683565275, %v4729
    %v4731 = vshll.u32 683565275, %v4728
    %v4732 = vshrl.u32 2475754826, %v4729
    %v4733 = vor.u32 %v4731, %v4732
    %v4734 = vshll.u32 2475754826, %v4728
    %v4735 = vshrl.u32 2131351028, %v4729
    %v4736 = vor.u32 %v4734, %v4735
    %v4737 = vshll.u32 2131351028, %v4728
    %v4738 = vshrl.u32 2102212464, %v4729
    %v4739 = vor.u32 %v4737, %v4738
    %v4740 = vshll.u32 2102212464, %v4728
    %v4741 = vshrl.u32 920167782, %v4729
    %v4742 = vor.u32 %v4740, %v4741
    %v4743 = vshll.u32 920167782, %v4728
    %v4744 = vshrl.u32 1326507024, %v4729
    %v4745 = vor.u32 %v4743, %v4744
    %vm4746 = vcmp.lt.s32.totalorder %v4727, 1
    %vm4747 = vcmp.lt.s32.totalorder %v4727, 2
    %vm4748 = vcmp.lt.s32.totalorder %v4727, 3
    %vm4749 = vcmp.lt.s32.totalorder %v4727, 4
    %v4750 = vsel %vm4746, %v4730, %v4733
    %v4751 = vsel %vm4749, %v4739, 2102212464
    %v4752 = vsel %vm4748, %v4736, %v4751
    %v4753 = vsel %vm4747, %v4750, %v4752
    %v4754 = vsel %vm4746, %v4733, %v4736
    %v4755 = vsel %vm4749, %v4742, 920167782
    %v4756 = vsel %vm4748, %v4739, %v4755
    %v4757 = vsel %vm4747, %v4754, %v4756
    %v4758 = vsel %vm4746, %v4736, %v4739
    %v4759 = vsel %vm4749, %v4745, 1326507024
    %v4760 = vsel %vm4748, %v4742, %v4759
    %v4761 = vsel %vm4747, %v4758, %v4760
    %v4762 = vshll.u32 %v4722, 8
    %v4763 = vmul.u32.u64.compose %v4762, %v4761
    %v4764 = vextract.low.u32 %v4763
    %v4765 = vextract.high.u32 %v4763
    %v4766 = vmul.u32.u64.compose %v4762, %v4757
    %v4767 = vextract.low.u32 %v4766
    %v4768 = vextract.high.u32 %v4766
    %v4769 = vmul.u32 %v4762, %v4753
    %v4770 = vadd.s32 %v4765, %v4767
    %vm4771 = vc.u32 %v4765, %v4767
    %v4772 = vadd.s32 %v4768, 1
    %v4773 = vsel %vm4771, %v4772, %v4768
    %v4774 = vadd.s32 %v4769, %v4773
    %v4775 = vadd.s32 %v4774, 536870912
    %v4776 = vshrl.u32 %v4775, 30
    %v4777 = vshll.u32 %v4776, 30
    %v4778 = vsub.s32 %v4774, %v4777
    %vm4779 = vcmp.lt.s32.totalorder %v4778, 0
    %v4780 = vsub.s32 0, %v4778
    %v4781 = vsel %vm4779, %v4780, %v4778
    %v4782 = vclz %v4781
    %v4783 = vsub.s32 %v4782, 2
    %vm4784 = vcmp.gt.s32.totalorder 0, %v4783
    %v4785 = vsel %vm4784, 0, %v4783
    %v4786 = vsub.s32 32, %v4785
    %v4787 = vshll.u32 %v4778, %v4785
    %v4788 = vshrl.u32 %v4770, %v4786
    %v4789 = vor.u32 %v4787, %v4788
    %v4790 = vsub.s32 4294967266, %v4785
    %v4791 = vadd.s32 %v4790, 127
    %v4792 = vshll.u32 %v4791, 23
    %v4793 = vor.u32 4788187, %v4792
    %v4794 = vand.u32 2147483647, %v4793
    %v4796 = vcvt.s32.f32 %v4789
    %v4797 = vmul.f32 %v4796, %v4794
    %v4798 = vxor.u32 %v4797, 2147483648
    %v4799 = vsel %vm4716, %v4798, %v4797
    %v4800 = vsub.s32 4, %v4776
    %v4801 = vsel %vm4716, %v4800, %v4776
    %v4802 = vsel %vm4715, %v28, %v4799
    %v4803 = vsel %vm4715, 0, %v4801
    %v4804 = vcosq.f32.pop %v4802
    %v4805 = vsinq.f32.pop %v4802
    %vm4806 = vweird.f32 %v28
    %v4807 = vand.u32 %v4803, 3
    %vm4808 = vcmp.lt.s32.totalorder %v4807, 2
    %vm4809 = vcmp.eq.s32.totalorder %v4807, 0
    %v4810 = vxor.u32 %v4805, 2147483648
    %v4811 = vsel %vm4809, %v4804, %v4810
    %vm4812 = vcmp.eq.s32.totalorder %v4807, 2
    %v4813 = vxor.u32 %v4804, 2147483648
    %v4814 = vsel %vm4812, %v4813, %v4805
    %v4815 = vsel %vm4808, %v4811, %v4814
    %v4816 = vsel %vm4806, nan, %v4815
    %v4817 = vand.u32 2147483647, %v29
    %vm4818 = vcmp.le.f32.partialorder %v4817, 0.7853982
    %vm4819 = vcmp.lt.s32.totalorder %v29, 0
    %v4820 = vand.u32 %v29, 2139095040
    %v4821 = vshrl.u32 %v4820, 23
    %v4822 = vsub.s32 %v4821, 127
    %v4823 = vand.u32 2147483647, %v29
    %v4824 = vand.u32 %v4823, 8388607
    %v4825 = vor.u32 %v4824, 8388608
    %v4826 = vsub.s32 0, %v4825
    %v4827 = vadd.s32 %v4822, 1
    %vm4828 = vcmp.gt.s32.totalorder %v4827, 0
    %v4829 = vsel %vm4828, %v4827, 0
    %v4830 = vshrl.u32 %v4829, 5
    %v4831 = vand.u32 %v4829, 31
    %v4832 = vsub.s32 32, %v4831
    %v4833 = vshrl.u32 683565275, %v4832
    %v4834 = vshll.u32 683565275, %v4831
    %v4835 = vshrl.u32 2475754826, %v4832
    %v4836 = vor.u32 %v4834, %v4835
    %v4837 = vshll.u32 2475754826, %v4831
    %v4838 = vshrl.u32 2131351028, %v4832
    %v4839 = vor.u32 %v4837, %v4838
    %v4840 = vshll.u32 2131351028, %v4831
    %v4841 = vshrl.u32 2102212464, %v4832
    %v4842 = vor.u32 %v4840, %v4841
    %v4843 = vshll.u32 2102212464, %v4831
    %v4844 = vshrl.u32 920167782, %v4832
    %v4845 = vor.u32 %v4843, %v4844
    %v4846 = vshll.u32 920167782, %v4831
    %v4847 = vshrl.u32 1326507024, %v4832
    %v4848 = vor.u32 %v4846, %v4847
    %vm4849 = vcmp.lt.s32.totalorder %v4830, 1
    %vm4850 = vcmp.lt.s32.totalorder %v4830, 2
    %vm4851 = vcmp.lt.s32.totalorder %v4830, 3
    %vm4852 = vcmp.lt.s32.totalorder %v4830, 4
    %v4853 = vsel %vm4849, %v4833, %v4836
    %v4854 = vsel %vm4852, %v4842, 2102212464
    %v4855 = vsel %vm4851, %v4839, %v4854
    %v4856 = vsel %vm4850, %v4853, %v4855
    %v4857 = vsel %vm4849, %v4836, %v4839
    %v4858 = vsel %vm4852, %v4845, 920167782
    %v4859 = vsel %vm4851, %v4842, %v4858
    %v4860 = vsel %vm4850, %v4857, %v4859
    %v4861 = vsel %vm4849, %v4839, %v4842
    %v4862 = vsel %vm4852, %v4848, 1326507024
    %v4863 = vsel %vm4851, %v4845, %v4862
    %v4864 = vsel %vm4850, %v4861, %v4863
    %v4865 = vshll.u32 %v4825, 8
    %v4866 = vmul.u32.u64.compose %v4865, %v4864
    %v4867 = vextract.low.u32 %v4866
    %v4868 = vextract.high.u32 %v4866
    %v4869 = vmul.u32.u64.compose %v4865, %v4860
    %v4870 = vextract.low.u32 %v4869
    %v4871 = vextract.high.u32 %v4869
    %v4872 = vmul.u32 %v4865, %v4856
    %v4873 = vadd.s32 %v4868, %v4870
    %vm4874 = vc.u32 %v4868, %v4870
    %v4875 = vadd.s32 %v4871, 1
    %v4876 = vsel %vm4874, %v4875, %v4871
    %v4877 = vadd.s32 %v4872, %v4876
    %v4878 = vadd.s32 %v4877, 536870912
    %v4879 = vshrl.u32 %v4878, 30
    %v4880 = vshll.u32 %v4879, 30
    %v4881 = vsub.s32 %v4877, %v4880
    %vm4882 = vcmp.lt.s32.totalorder %v4881, 0
    %v4883 = vsub.s32 0, %v4881
    %v4884 = vsel %vm4882, %v4883, %v4881
    %v4885 = vclz %v4884
    %v4886 = vsub.s32 %v4885, 2
    %vm4887 = vcmp.gt.s32.totalorder 0, %v4886
    %v4888 = vsel %vm4887, 0, %v4886
    %v4889 = vsub.s32 32, %v4888
    %v4890 = vshll.u32 %v4881, %v4888
    %v4891 = vshrl.u32 %v4873, %v4889
    %v4892 = vor.u32 %v4890, %v4891
    %v4893 = vsub.s32 4294967266, %v4888
    %v4894 = vadd.s32 %v4893, 127
    %v4895 = vshll.u32 %v4894, 23
    %v4896 = vor.u32 4788187, %v4895
    %v4897 = vand.u32 2147483647, %v4896
    %v4899 = vcvt.s32.f32 %v4892
    %v4900 = vmul.f32 %v4899, %v4897
    %v4901 = vxor.u32 %v4900, 2147483648
    %v4902 = vsel %vm4819, %v4901, %v4900
    %v4903 = vsub.s32 4, %v4879
    %v4904 = vsel %vm4819, %v4903, %v4879
    %v4905 = vsel %vm4818, %v29, %v4902
    %v4906 = vsel %vm4818, 0, %v4904
    %v4907 = vcosq.f32.pop %v4905
    %v4908 = vsinq.f32.pop %v4905
    %vm4909 = vweird.f32 %v29
    %v4910 = vand.u32 %v4906, 3
    %vm4911 = vcmp.lt.s32.totalorder %v4910, 2
    %vm4912 = vcmp.eq.s32.totalorder %v4910, 0
    %v4913 = vxor.u32 %v4908, 2147483648
    %v4914 = vsel %vm4912, %v4907, %v4913
    %vm4915 = vcmp.eq.s32.totalorder %v4910, 2
    %v4916 = vxor.u32 %v4907, 2147483648
    %v4917 = vsel %vm4915, %v4916, %v4908
    %v4918 = vsel %vm4911, %v4914, %v4917
    %v4919 = vsel %vm4909, nan, %v4918
    %v4920 = vand.u32 2147483647, %v30
    %vm4921 = vcmp.le.f32.partialorder %v4920, 0.7853982
    %vm4922 = vcmp.lt.s32.totalorder %v30, 0
    %v4923 = vand.u32 %v30, 2139095040
    %v4924 = vshrl.u32 %v4923, 23
    %v4925 = vsub.s32 %v4924, 127
    %v4926 = vand.u32 2147483647, %v30
    %v4927 = vand.u32 %v4926, 8388607
    %v4928 = vor.u32 %v4927, 8388608
    %v4929 = vsub.s32 0, %v4928
    %v4930 = vadd.s32 %v4925, 1
    %vm4931 = vcmp.gt.s32.totalorder %v4930, 0
    %v4932 = vsel %vm4931, %v4930, 0
    %v4933 = vshrl.u32 %v4932, 5
    %v4934 = vand.u32 %v4932, 31
    %v4935 = vsub.s32 32, %v4934
    %v4936 = vshrl.u32 683565275, %v4935
    %v4937 = vshll.u32 683565275, %v4934
    %v4938 = vshrl.u32 2475754826, %v4935
    %v4939 = vor.u32 %v4937, %v4938
    %v4940 = vshll.u32 2475754826, %v4934
    %v4941 = vshrl.u32 2131351028, %v4935
    %v4942 = vor.u32 %v4940, %v4941
    %v4943 = vshll.u32 2131351028, %v4934
    %v4944 = vshrl.u32 2102212464, %v4935
    %v4945 = vor.u32 %v4943, %v4944
    %v4946 = vshll.u32 2102212464, %v4934
    %v4947 = vshrl.u32 920167782, %v4935
    %v4948 = vor.u32 %v4946, %v4947
    %v4949 = vshll.u32 920167782, %v4934
    %v4950 = vshrl.u32 1326507024, %v4935
    %v4951 = vor.u32 %v4949, %v4950
    %vm4952 = vcmp.lt.s32.totalorder %v4933, 1
    %vm4953 = vcmp.lt.s32.totalorder %v4933, 2
    %vm4954 = vcmp.lt.s32.totalorder %v4933, 3
    %vm4955 = vcmp.lt.s32.totalorder %v4933, 4
    %v4956 = vsel %vm4952, %v4936, %v4939
    %v4957 = vsel %vm4955, %v4945, 2102212464
    %v4958 = vsel %vm4954, %v4942, %v4957
    %v4959 = vsel %vm4953, %v4956, %v4958
    %v4960 = vsel %vm4952, %v4939, %v4942
    %v4961 = vsel %vm4955, %v4948, 920167782
    %v4962 = vsel %vm4954, %v4945, %v4961
    %v4963 = vsel %vm4953, %v4960, %v4962
    %v4964 = vsel %vm4952, %v4942, %v4945
    %v4965 = vsel %vm4955, %v4951, 1326507024
    %v4966 = vsel %vm4954, %v4948, %v4965
    %v4967 = vsel %vm4953, %v4964, %v4966
    %v4968 = vshll.u32 %v4928, 8
    %v4969 = vmul.u32.u64.compose %v4968, %v4967
    %v4970 = vextract.low.u32 %v4969
    %v4971 = vextract.high.u32 %v4969
    %v4972 = vmul.u32.u64.compose %v4968, %v4963
    %v4973 = vextract.low.u32 %v4972
    %v4974 = vextract.high.u32 %v4972
    %v4975 = vmul.u32 %v4968, %v4959
    %v4976 = vadd.s32 %v4971, %v4973
    %vm4977 = vc.u32 %v4971, %v4973
    %v4978 = vadd.s32 %v4974, 1
    %v4979 = vsel %vm4977, %v4978, %v4974
    %v4980 = vadd.s32 %v4975, %v4979
    %v4981 = vadd.s32 %v4980, 536870912
    %v4982 = vshrl.u32 %v4981, 30
    %v4983 = vshll.u32 %v4982, 30
    %v4984 = vsub.s32 %v4980, %v4983
    %vm4985 = vcmp.lt.s32.totalorder %v4984, 0
    %v4986 = vsub.s32 0, %v4984
    %v4987 = vsel %vm4985, %v4986, %v4984
    %v4988 = vclz %v4987
    %v4989 = vsub.s32 %v4988, 2
    %vm4990 = vcmp.gt.s32.totalorder 0, %v4989
    %v4991 = vsel %vm4990, 0, %v4989
    %v4992 = vsub.s32 32, %v4991
    %v4993 = vshll.u32 %v4984, %v4991
    %v4994 = vshrl.u32 %v4976, %v4992
    %v4995 = vor.u32 %v4993, %v4994
    %v4996 = vsub.s32 4294967266, %v4991
    %v4997 = vadd.s32 %v4996, 127
    %v4998 = vshll.u32 %v4997, 23
    %v4999 = vor.u32 4788187, %v4998
    %v5000 = vand.u32 2147483647, %v4999
    %v5002 = vcvt.s32.f32 %v4995
    %v5003 = vmul.f32 %v5002, %v5000
    %v5004 = vxor.u32 %v5003, 2147483648
    %v5005 = vsel %vm4922, %v5004, %v5003
    %v5006 = vsub.s32 4, %v4982
    %v5007 = vsel %vm4922, %v5006, %v4982
    %v5008 = vsel %vm4921, %v30, %v5005
    %v5009 = vsel %vm4921, 0, %v5007
    %v5010 = vcosq.f32.pop %v5008
    %v5011 = vsinq.f32.pop %v5008
    %vm5012 = vweird.f32 %v30
    %v5013 = vand.u32 %v5009, 3
    %vm5014 = vcmp.lt.s32.totalorder %v5013, 2
    %vm5015 = vcmp.eq.s32.totalorder %v5013, 0
    %v5016 = vxor.u32 %v5011, 2147483648
    %v5017 = vsel %vm5015, %v5010, %v5016
    %vm5018 = vcmp.eq.s32.totalorder %v5013, 2
    %v5019 = vxor.u32 %v5010, 2147483648
    %v5020 = vsel %vm5018, %v5019, %v5011
    %v5021 = vsel %vm5014, %v5017, %v5020
    %v5022 = vsel %vm5012, nan, %v5021
    %v5023 = vand.u32 2147483647, %v31
    %vm5024 = vcmp.le.f32.partialorder %v5023, 0.7853982
    %vm5025 = vcmp.lt.s32.totalorder %v31, 0
    %v5026 = vand.u32 %v31, 2139095040
    %v5027 = vshrl.u32 %v5026, 23
    %v5028 = vsub.s32 %v5027, 127
    %v5029 = vand.u32 2147483647, %v31
    %v5030 = vand.u32 %v5029, 8388607
    %v5031 = vor.u32 %v5030, 8388608
    %v5032 = vsub.s32 0, %v5031
    %v5033 = vadd.s32 %v5028, 1
    %vm5034 = vcmp.gt.s32.totalorder %v5033, 0
    %v5035 = vsel %vm5034, %v5033, 0
    %v5036 = vshrl.u32 %v5035, 5
    %v5037 = vand.u32 %v5035, 31
    %v5038 = vsub.s32 32, %v5037
    %v5039 = vshrl.u32 683565275, %v5038
    %v5040 = vshll.u32 683565275, %v5037
    %v5041 = vshrl.u32 2475754826, %v5038
    %v5042 = vor.u32 %v5040, %v5041
    %v5043 = vshll.u32 2475754826, %v5037
    %v5044 = vshrl.u32 2131351028, %v5038
    %v5045 = vor.u32 %v5043, %v5044
    %v5046 = vshll.u32 2131351028, %v5037
    %v5047 = vshrl.u32 2102212464, %v5038
    %v5048 = vor.u32 %v5046, %v5047
    %v5049 = vshll.u32 2102212464, %v5037
    %v5050 = vshrl.u32 920167782, %v5038
    %v5051 = vor.u32 %v5049, %v5050
    %v5052 = vshll.u32 920167782, %v5037
    %v5053 = vshrl.u32 1326507024, %v5038
    %v5054 = vor.u32 %v5052, %v5053
    %vm5055 = vcmp.lt.s32.totalorder %v5036, 1
    %vm5056 = vcmp.lt.s32.totalorder %v5036, 2
    %vm5057 = vcmp.lt.s32.totalorder %v5036, 3
    %vm5058 = vcmp.lt.s32.totalorder %v5036, 4
    %v5059 = vsel %vm5055, %v5039, %v5042
    %v5060 = vsel %vm5058, %v5048, 2102212464
    %v5061 = vsel %vm5057, %v5045, %v5060
    %v5062 = vsel %vm5056, %v5059, %v5061
    %v5063 = vsel %vm5055, %v5042, %v5045
    %v5064 = vsel %vm5058, %v5051, 920167782
    %v5065 = vsel %vm5057, %v5048, %v5064
    %v5066 = vsel %vm5056, %v5063, %v5065
    %v5067 = vsel %vm5055, %v5045, %v5048
    %v5068 = vsel %vm5058, %v5054, 1326507024
    %v5069 = vsel %vm5057, %v5051, %v5068
    %v5070 = vsel %vm5056, %v5067, %v5069
    %v5071 = vshll.u32 %v5031, 8
    %v5072 = vmul.u32.u64.compose %v5071, %v5070
    %v5073 = vextract.low.u32 %v5072
    %v5074 = vextract.high.u32 %v5072
    %v5075 = vmul.u32.u64.compose %v5071, %v5066
    %v5076 = vextract.low.u32 %v5075
    %v5077 = vextract.high.u32 %v5075
    %v5078 = vmul.u32 %v5071, %v5062
    %v5079 = vadd.s32 %v5074, %v5076
    %vm5080 = vc.u32 %v5074, %v5076
    %v5081 = vadd.s32 %v5077, 1
    %v5082 = vsel %vm5080, %v5081, %v5077
    %v5083 = vadd.s32 %v5078, %v5082
    %v5084 = vadd.s32 %v5083, 536870912
    %v5085 = vshrl.u32 %v5084, 30
    %v5086 = vshll.u32 %v5085, 30
    %v5087 = vsub.s32 %v5083, %v5086
    %vm5088 = vcmp.lt.s32.totalorder %v5087, 0
    %v5089 = vsub.s32 0, %v5087
    %v5090 = vsel %vm5088, %v5089, %v5087
    %v5091 = vclz %v5090
    %v5092 = vsub.s32 %v5091, 2
    %vm5093 = vcmp.gt.s32.totalorder 0, %v5092
    %v5094 = vsel %vm5093, 0, %v5092
    %v5095 = vsub.s32 32, %v5094
    %v5096 = vshll.u32 %v5087, %v5094
    %v5097 = vshrl.u32 %v5079, %v5095
    %v5098 = vor.u32 %v5096, %v5097
    %v5099 = vsub.s32 4294967266, %v5094
    %v5100 = vadd.s32 %v5099, 127
    %v5101 = vshll.u32 %v5100, 23
    %v5102 = vor.u32 4788187, %v5101
    %v5103 = vand.u32 2147483647, %v5102
    %v5105 = vcvt.s32.f32 %v5098
    %v5106 = vmul.f32 %v5105, %v5103
    %v5107 = vxor.u32 %v5106, 2147483648
    %v5108 = vsel %vm5025, %v5107, %v5106
    %v5109 = vsub.s32 4, %v5085
    %v5110 = vsel %vm5025, %v5109, %v5085
    %v5111 = vsel %vm5024, %v31, %v5108
    %v5112 = vsel %vm5024, 0, %v5110
    %v5113 = vcosq.f32.pop %v5111
    %v5114 = vsinq.f32.pop %v5111
    %vm5115 = vweird.f32 %v31
    %v5116 = vand.u32 %v5112, 3
    %vm5117 = vcmp.lt.s32.totalorder %v5116, 2
    %vm5118 = vcmp.eq.s32.totalorder %v5116, 0
    %v5119 = vxor.u32 %v5114, 2147483648
    %v5120 = vsel %vm5118, %v5113, %v5119
    %vm5121 = vcmp.eq.s32.totalorder %v5116, 2
    %v5122 = vxor.u32 %v5113, 2147483648
    %v5123 = vsel %vm5121, %v5122, %v5114
    %v5124 = vsel %vm5117, %v5120, %v5123
    %v5125 = vsel %vm5115, nan, %v5124
    %v5126 = vand.u32 2147483647, %v32
    %vm5127 = vcmp.le.f32.partialorder %v5126, 0.7853982
    %vm5128 = vcmp.lt.s32.totalorder %v32, 0
    %v5129 = vand.u32 %v32, 2139095040
    %v5130 = vshrl.u32 %v5129, 23
    %v5131 = vsub.s32 %v5130, 127
    %v5132 = vand.u32 2147483647, %v32
    %v5133 = vand.u32 %v5132, 8388607
    %v5134 = vor.u32 %v5133, 8388608
    %v5135 = vsub.s32 0, %v5134
    %v5136 = vadd.s32 %v5131, 1
    %vm5137 = vcmp.gt.s32.totalorder %v5136, 0
    %v5138 = vsel %vm5137, %v5136, 0
    %v5139 = vshrl.u32 %v5138, 5
    %v5140 = vand.u32 %v5138, 31
    %v5141 = vsub.s32 32, %v5140
    %v5142 = vshrl.u32 683565275, %v5141
    %v5143 = vshll.u32 683565275, %v5140
    %v5144 = vshrl.u32 2475754826, %v5141
    %v5145 = vor.u32 %v5143, %v5144
    %v5146 = vshll.u32 2475754826, %v5140
    %v5147 = vshrl.u32 2131351028, %v5141
    %v5148 = vor.u32 %v5146, %v5147
    %v5149 = vshll.u32 2131351028, %v5140
    %v5150 = vshrl.u32 2102212464, %v5141
    %v5151 = vor.u32 %v5149, %v5150
    %v5152 = vshll.u32 2102212464, %v5140
    %v5153 = vshrl.u32 920167782, %v5141
    %v5154 = vor.u32 %v5152, %v5153
    %v5155 = vshll.u32 920167782, %v5140
    %v5156 = vshrl.u32 1326507024, %v5141
    %v5157 = vor.u32 %v5155, %v5156
    %vm5158 = vcmp.lt.s32.totalorder %v5139, 1
    %vm5159 = vcmp.lt.s32.totalorder %v5139, 2
    %vm5160 = vcmp.lt.s32.totalorder %v5139, 3
    %vm5161 = vcmp.lt.s32.totalorder %v5139, 4
    %v5162 = vsel %vm5158, %v5142, %v5145
    %v5163 = vsel %vm5161, %v5151, 2102212464
    %v5164 = vsel %vm5160, %v5148, %v5163
    %v5165 = vsel %vm5159, %v5162, %v5164
    %v5166 = vsel %vm5158, %v5145, %v5148
    %v5167 = vsel %vm5161, %v5154, 920167782
    %v5168 = vsel %vm5160, %v5151, %v5167
    %v5169 = vsel %vm5159, %v5166, %v5168
    %v5170 = vsel %vm5158, %v5148, %v5151
    %v5171 = vsel %vm5161, %v5157, 1326507024
    %v5172 = vsel %vm5160, %v5154, %v5171
    %v5173 = vsel %vm5159, %v5170, %v5172
    %v5174 = vshll.u32 %v5134, 8
    %v5175 = vmul.u32.u64.compose %v5174, %v5173
    %v5176 = vextract.low.u32 %v5175
    %v5177 = vextract.high.u32 %v5175
    %v5178 = vmul.u32.u64.compose %v5174, %v5169
    %v5179 = vextract.low.u32 %v5178
    %v5180 = vextract.high.u32 %v5178
    %v5181 = vmul.u32 %v5174, %v5165
    %v5182 = vadd.s32 %v5177, %v5179
    %vm5183 = vc.u32 %v5177, %v5179
    %v5184 = vadd.s32 %v5180, 1
    %v5185 = vsel %vm5183, %v5184, %v5180
    %v5186 = vadd.s32 %v5181, %v5185
    %v5187 = vadd.s32 %v5186, 536870912
    %v5188 = vshrl.u32 %v5187, 30
    %v5189 = vshll.u32 %v5188, 30
    %v5190 = vsub.s32 %v5186, %v5189
    %vm5191 = vcmp.lt.s32.totalorder %v5190, 0
    %v5192 = vsub.s32 0, %v5190
    %v5193 = vsel %vm5191, %v5192, %v5190
    %v5194 = vclz %v5193
    %v5195 = vsub.s32 %v5194, 2
    %vm5196 = vcmp.gt.s32.totalorder 0, %v5195
    %v5197 = vsel %vm5196, 0, %v5195
    %v5198 = vsub.s32 32, %v5197
    %v5199 = vshll.u32 %v5190, %v5197
    %v5200 = vshrl.u32 %v5182, %v5198
    %v5201 = vor.u32 %v5199, %v5200
    %v5202 = vsub.s32 4294967266, %v5197
    %v5203 = vadd.s32 %v5202, 127
    %v5204 = vshll.u32 %v5203, 23
    %v5205 = vor.u32 4788187, %v5204
    %v5206 = vand.u32 2147483647, %v5205
    %v5208 = vcvt.s32.f32 %v5201
    %v5209 = vmul.f32 %v5208, %v5206
    %v5210 = vxor.u32 %v5209, 2147483648
    %v5211 = vsel %vm5128, %v5210, %v5209
    %v5212 = vsub.s32 4, %v5188
    %v5213 = vsel %vm5128, %v5212, %v5188
    %v5214 = vsel %vm5127, %v32, %v5211
    %v5215 = vsel %vm5127, 0, %v5213
    %v5216 = vcosq.f32.pop %v5214
    %v5217 = vsinq.f32.pop %v5214
    %vm5218 = vweird.f32 %v32
    %v5219 = vand.u32 %v5215, 3
    %vm5220 = vcmp.lt.s32.totalorder %v5219, 2
    %vm5221 = vcmp.eq.s32.totalorder %v5219, 0
    %v5222 = vxor.u32 %v5217, 2147483648
    %v5223 = vsel %vm5221, %v5216, %v5222
    %vm5224 = vcmp.eq.s32.totalorder %v5219, 2
    %v5225 = vxor.u32 %v5216, 2147483648
    %v5226 = vsel %vm5224, %v5225, %v5217
    %v5227 = vsel %vm5220, %v5223, %v5226
    %v5228 = vsel %vm5218, nan, %v5227
    %v5229 = vand.u32 2147483647, %v33
    %vm5230 = vcmp.le.f32.partialorder %v5229, 0.7853982
    %vm5231 = vcmp.lt.s32.totalorder %v33, 0
    %v5232 = vand.u32 %v33, 2139095040
    %v5233 = vshrl.u32 %v5232, 23
    %v5234 = vsub.s32 %v5233, 127
    %v5235 = vand.u32 2147483647, %v33
    %v5236 = vand.u32 %v5235, 8388607
    %v5237 = vor.u32 %v5236, 8388608
    %v5238 = vsub.s32 0, %v5237
    %v5239 = vadd.s32 %v5234, 1
    %vm5240 = vcmp.gt.s32.totalorder %v5239, 0
    %v5241 = vsel %vm5240, %v5239, 0
    %v5242 = vshrl.u32 %v5241, 5
    %v5243 = vand.u32 %v5241, 31
    %v5244 = vsub.s32 32, %v5243
    %v5245 = vshrl.u32 683565275, %v5244
    %v5246 = vshll.u32 683565275, %v5243
    %v5247 = vshrl.u32 2475754826, %v5244
    %v5248 = vor.u32 %v5246, %v5247
    %v5249 = vshll.u32 2475754826, %v5243
    %v5250 = vshrl.u32 2131351028, %v5244
    %v5251 = vor.u32 %v5249, %v5250
    %v5252 = vshll.u32 2131351028, %v5243
    %v5253 = vshrl.u32 2102212464, %v5244
    %v5254 = vor.u32 %v5252, %v5253
    %v5255 = vshll.u32 2102212464, %v5243
    %v5256 = vshrl.u32 920167782, %v5244
    %v5257 = vor.u32 %v5255, %v5256
    %v5258 = vshll.u32 920167782, %v5243
    %v5259 = vshrl.u32 1326507024, %v5244
    %v5260 = vor.u32 %v5258, %v5259
    %vm5261 = vcmp.lt.s32.totalorder %v5242, 1
    %vm5262 = vcmp.lt.s32.totalorder %v5242, 2
    %vm5263 = vcmp.lt.s32.totalorder %v5242, 3
    %vm5264 = vcmp.lt.s32.totalorder %v5242, 4
    %v5265 = vsel %vm5261, %v5245, %v5248
    %v5266 = vsel %vm5264, %v5254, 2102212464
    %v5267 = vsel %vm5263, %v5251, %v5266
    %v5268 = vsel %vm5262, %v5265, %v5267
    %v5269 = vsel %vm5261, %v5248, %v5251
    %v5270 = vsel %vm5264, %v5257, 920167782
    %v5271 = vsel %vm5263, %v5254, %v5270
    %v5272 = vsel %vm5262, %v5269, %v5271
    %v5273 = vsel %vm5261, %v5251, %v5254
    %v5274 = vsel %vm5264, %v5260, 1326507024
    %v5275 = vsel %vm5263, %v5257, %v5274
    %v5276 = vsel %vm5262, %v5273, %v5275
    %v5277 = vshll.u32 %v5237, 8
    %v5278 = vmul.u32.u64.compose %v5277, %v5276
    %v5279 = vextract.low.u32 %v5278
    %v5280 = vextract.high.u32 %v5278
    %v5281 = vmul.u32.u64.compose %v5277, %v5272
    %v5282 = vextract.low.u32 %v5281
    %v5283 = vextract.high.u32 %v5281
    %v5284 = vmul.u32 %v5277, %v5268
    %v5285 = vadd.s32 %v5280, %v5282
    %vm5286 = vc.u32 %v5280, %v5282
    %v5287 = vadd.s32 %v5283, 1
    %v5288 = vsel %vm5286, %v5287, %v5283
    %v5289 = vadd.s32 %v5284, %v5288
    %v5290 = vadd.s32 %v5289, 536870912
    %v5291 = vshrl.u32 %v5290, 30
    %v5292 = vshll.u32 %v5291, 30
    %v5293 = vsub.s32 %v5289, %v5292
    %vm5294 = vcmp.lt.s32.totalorder %v5293, 0
    %v5295 = vsub.s32 0, %v5293
    %v5296 = vsel %vm5294, %v5295, %v5293
    %v5297 = vclz %v5296
    %v5298 = vsub.s32 %v5297, 2
    %vm5299 = vcmp.gt.s32.totalorder 0, %v5298
    %v5300 = vsel %vm5299, 0, %v5298
    %v5301 = vsub.s32 32, %v5300
    %v5302 = vshll.u32 %v5293, %v5300
    %v5303 = vshrl.u32 %v5285, %v5301
    %v5304 = vor.u32 %v5302, %v5303
    %v5305 = vsub.s32 4294967266, %v5300
    %v5306 = vadd.s32 %v5305, 127
    %v5307 = vshll.u32 %v5306, 23
    %v5308 = vor.u32 4788187, %v5307
    %v5309 = vand.u32 2147483647, %v5308
    %v5311 = vcvt.s32.f32 %v5304
    %v5312 = vmul.f32 %v5311, %v5309
    %v5313 = vxor.u32 %v5312, 2147483648
    %v5314 = vsel %vm5231, %v5313, %v5312
    %v5315 = vsub.s32 4, %v5291
    %v5316 = vsel %vm5231, %v5315, %v5291
    %v5317 = vsel %vm5230, %v33, %v5314
    %v5318 = vsel %vm5230, 0, %v5316
    %v5319 = vcosq.f32.pop %v5317
    %v5320 = vsinq.f32.pop %v5317
    %vm5321 = vweird.f32 %v33
    %v5322 = vand.u32 %v5318, 3
    %vm5323 = vcmp.lt.s32.totalorder %v5322, 2
    %vm5324 = vcmp.eq.s32.totalorder %v5322, 0
    %v5325 = vxor.u32 %v5320, 2147483648
    %v5326 = vsel %vm5324, %v5319, %v5325
    %vm5327 = vcmp.eq.s32.totalorder %v5322, 2
    %v5328 = vxor.u32 %v5319, 2147483648
    %v5329 = vsel %vm5327, %v5328, %v5320
    %v5330 = vsel %vm5323, %v5326, %v5329
    %v5331 = vsel %vm5321, nan, %v5330
    %v5332 = vand.u32 2147483647, %v34
    %vm5333 = vcmp.le.f32.partialorder %v5332, 0.7853982
    %vm5334 = vcmp.lt.s32.totalorder %v34, 0
    %v5335 = vand.u32 %v34, 2139095040
    %v5336 = vshrl.u32 %v5335, 23
    %v5337 = vsub.s32 %v5336, 127
    %v5338 = vand.u32 2147483647, %v34
    %v5339 = vand.u32 %v5338, 8388607
    %v5340 = vor.u32 %v5339, 8388608
    %v5341 = vsub.s32 0, %v5340
    %v5342 = vadd.s32 %v5337, 1
    %vm5343 = vcmp.gt.s32.totalorder %v5342, 0
    %v5344 = vsel %vm5343, %v5342, 0
    %v5345 = vshrl.u32 %v5344, 5
    %v5346 = vand.u32 %v5344, 31
    %v5347 = vsub.s32 32, %v5346
    %v5348 = vshrl.u32 683565275, %v5347
    %v5349 = vshll.u32 683565275, %v5346
    %v5350 = vshrl.u32 2475754826, %v5347
    %v5351 = vor.u32 %v5349, %v5350
    %v5352 = vshll.u32 2475754826, %v5346
    %v5353 = vshrl.u32 2131351028, %v5347
    %v5354 = vor.u32 %v5352, %v5353
    %v5355 = vshll.u32 2131351028, %v5346
    %v5356 = vshrl.u32 2102212464, %v5347
    %v5357 = vor.u32 %v5355, %v5356
    %v5358 = vshll.u32 2102212464, %v5346
    %v5359 = vshrl.u32 920167782, %v5347
    %v5360 = vor.u32 %v5358, %v5359
    %v5361 = vshll.u32 920167782, %v5346
    %v5362 = vshrl.u32 1326507024, %v5347
    %v5363 = vor.u32 %v5361, %v5362
    %vm5364 = vcmp.lt.s32.totalorder %v5345, 1
    %vm5365 = vcmp.lt.s32.totalorder %v5345, 2
    %vm5366 = vcmp.lt.s32.totalorder %v5345, 3
    %vm5367 = vcmp.lt.s32.totalorder %v5345, 4
    %v5368 = vsel %vm5364, %v5348, %v5351
    %v5369 = vsel %vm5367, %v5357, 2102212464
    %v5370 = vsel %vm5366, %v5354, %v5369
    %v5371 = vsel %vm5365, %v5368, %v5370
    %v5372 = vsel %vm5364, %v5351, %v5354
    %v5373 = vsel %vm5367, %v5360, 920167782
    %v5374 = vsel %vm5366, %v5357, %v5373
    %v5375 = vsel %vm5365, %v5372, %v5374
    %v5376 = vsel %vm5364, %v5354, %v5357
    %v5377 = vsel %vm5367, %v5363, 1326507024
    %v5378 = vsel %vm5366, %v5360, %v5377
    %v5379 = vsel %vm5365, %v5376, %v5378
    %v5380 = vshll.u32 %v5340, 8
    %v5381 = vmul.u32.u64.compose %v5380, %v5379
    %v5382 = vextract.low.u32 %v5381
    %v5383 = vextract.high.u32 %v5381
    %v5384 = vmul.u32.u64.compose %v5380, %v5375
    %v5385 = vextract.low.u32 %v5384
    %v5386 = vextract.high.u32 %v5384
    %v5387 = vmul.u32 %v5380, %v5371
    %v5388 = vadd.s32 %v5383, %v5385
    %vm5389 = vc.u32 %v5383, %v5385
    %v5390 = vadd.s32 %v5386, 1
    %v5391 = vsel %vm5389, %v5390, %v5386
    %v5392 = vadd.s32 %v5387, %v5391
    %v5393 = vadd.s32 %v5392, 536870912
    %v5394 = vshrl.u32 %v5393, 30
    %v5395 = vshll.u32 %v5394, 30
    %v5396 = vsub.s32 %v5392, %v5395
    %vm5397 = vcmp.lt.s32.totalorder %v5396, 0
    %v5398 = vsub.s32 0, %v5396
    %v5399 = vsel %vm5397, %v5398, %v5396
    %v5400 = vclz %v5399
    %v5401 = vsub.s32 %v5400, 2
    %vm5402 = vcmp.gt.s32.totalorder 0, %v5401
    %v5403 = vsel %vm5402, 0, %v5401
    %v5404 = vsub.s32 32, %v5403
    %v5405 = vshll.u32 %v5396, %v5403
    %v5406 = vshrl.u32 %v5388, %v5404
    %v5407 = vor.u32 %v5405, %v5406
    %v5408 = vsub.s32 4294967266, %v5403
    %v5409 = vadd.s32 %v5408, 127
    %v5410 = vshll.u32 %v5409, 23
    %v5411 = vor.u32 4788187, %v5410
    %v5412 = vand.u32 2147483647, %v5411
    %v5414 = vcvt.s32.f32 %v5407
    %v5415 = vmul.f32 %v5414, %v5412
    %v5416 = vxor.u32 %v5415, 2147483648
    %v5417 = vsel %vm5334, %v5416, %v5415
    %v5418 = vsub.s32 4, %v5394
    %v5419 = vsel %vm5334, %v5418, %v5394
    %v5420 = vsel %vm5333, %v34, %v5417
    %v5421 = vsel %vm5333, 0, %v5419
    %v5422 = vcosq.f32.pop %v5420
    %v5423 = vsinq.f32.pop %v5420
    %vm5424 = vweird.f32 %v34
    %v5425 = vand.u32 %v5421, 3
    %vm5426 = vcmp.lt.s32.totalorder %v5425, 2
    %vm5427 = vcmp.eq.s32.totalorder %v5425, 0
    %v5428 = vxor.u32 %v5423, 2147483648
    %v5429 = vsel %vm5427, %v5422, %v5428
    %vm5430 = vcmp.eq.s32.totalorder %v5425, 2
    %v5431 = vxor.u32 %v5422, 2147483648
    %v5432 = vsel %vm5430, %v5431, %v5423
    %v5433 = vsel %vm5426, %v5429, %v5432
    %v5434 = vsel %vm5424, nan, %v5433
    %v5435 = vand.u32 2147483647, %v35
    %vm5436 = vcmp.le.f32.partialorder %v5435, 0.7853982
    %vm5437 = vcmp.lt.s32.totalorder %v35, 0
    %v5438 = vand.u32 %v35, 2139095040
    %v5439 = vshrl.u32 %v5438, 23
    %v5440 = vsub.s32 %v5439, 127
    %v5441 = vand.u32 2147483647, %v35
    %v5442 = vand.u32 %v5441, 8388607
    %v5443 = vor.u32 %v5442, 8388608
    %v5444 = vsub.s32 0, %v5443
    %v5445 = vadd.s32 %v5440, 1
    %vm5446 = vcmp.gt.s32.totalorder %v5445, 0
    %v5447 = vsel %vm5446, %v5445, 0
    %v5448 = vshrl.u32 %v5447, 5
    %v5449 = vand.u32 %v5447, 31
    %v5450 = vsub.s32 32, %v5449
    %v5451 = vshrl.u32 683565275, %v5450
    %v5452 = vshll.u32 683565275, %v5449
    %v5453 = vshrl.u32 2475754826, %v5450
    %v5454 = vor.u32 %v5452, %v5453
    %v5455 = vshll.u32 2475754826, %v5449
    %v5456 = vshrl.u32 2131351028, %v5450
    %v5457 = vor.u32 %v5455, %v5456
    %v5458 = vshll.u32 2131351028, %v5449
    %v5459 = vshrl.u32 2102212464, %v5450
    %v5460 = vor.u32 %v5458, %v5459
    %v5461 = vshll.u32 2102212464, %v5449
    %v5462 = vshrl.u32 920167782, %v5450
    %v5463 = vor.u32 %v5461, %v5462
    %v5464 = vshll.u32 920167782, %v5449
    %v5465 = vshrl.u32 1326507024, %v5450
    %v5466 = vor.u32 %v5464, %v5465
    %vm5467 = vcmp.lt.s32.totalorder %v5448, 1
    %vm5468 = vcmp.lt.s32.totalorder %v5448, 2
    %vm5469 = vcmp.lt.s32.totalorder %v5448, 3
    %vm5470 = vcmp.lt.s32.totalorder %v5448, 4
    %v5471 = vsel %vm5467, %v5451, %v5454
    %v5472 = vsel %vm5470, %v5460, 2102212464
    %v5473 = vsel %vm5469, %v5457, %v5472
    %v5474 = vsel %vm5468, %v5471, %v5473
    %v5475 = vsel %vm5467, %v5454, %v5457
    %v5476 = vsel %vm5470, %v5463, 920167782
    %v5477 = vsel %vm5469, %v5460, %v5476
    %v5478 = vsel %vm5468, %v5475, %v5477
    %v5479 = vsel %vm5467, %v5457, %v5460
    %v5480 = vsel %vm5470, %v5466, 1326507024
    %v5481 = vsel %vm5469, %v5463, %v5480
    %v5482 = vsel %vm5468, %v5479, %v5481
    %v5483 = vshll.u32 %v5443, 8
    %v5484 = vmul.u32.u64.compose %v5483, %v5482
    %v5485 = vextract.low.u32 %v5484
    %v5486 = vextract.high.u32 %v5484
    %v5487 = vmul.u32.u64.compose %v5483, %v5478
    %v5488 = vextract.low.u32 %v5487
    %v5489 = vextract.high.u32 %v5487
    %v5490 = vmul.u32 %v5483, %v5474
    %v5491 = vadd.s32 %v5486, %v5488
    %vm5492 = vc.u32 %v5486, %v5488
    %v5493 = vadd.s32 %v5489, 1
    %v5494 = vsel %vm5492, %v5493, %v5489
    %v5495 = vadd.s32 %v5490, %v5494
    %v5496 = vadd.s32 %v5495, 536870912
    %v5497 = vshrl.u32 %v5496, 30
    %v5498 = vshll.u32 %v5497, 30
    %v5499 = vsub.s32 %v5495, %v5498
    %vm5500 = vcmp.lt.s32.totalorder %v5499, 0
    %v5501 = vsub.s32 0, %v5499
    %v5502 = vsel %vm5500, %v5501, %v5499
    %v5503 = vclz %v5502
    %v5504 = vsub.s32 %v5503, 2
    %vm5505 = vcmp.gt.s32.totalorder 0, %v5504
    %v5506 = vsel %vm5505, 0, %v5504
    %v5507 = vsub.s32 32, %v5506
    %v5508 = vshll.u32 %v5499, %v5506
    %v5509 = vshrl.u32 %v5491, %v5507
    %v5510 = vor.u32 %v5508, %v5509
    %v5511 = vsub.s32 4294967266, %v5506
    %v5512 = vadd.s32 %v5511, 127
    %v5513 = vshll.u32 %v5512, 23
    %v5514 = vor.u32 4788187, %v5513
    %v5515 = vand.u32 2147483647, %v5514
    %v5517 = vcvt.s32.f32 %v5510
    %v5518 = vmul.f32 %v5517, %v5515
    %v5519 = vxor.u32 %v5518, 2147483648
    %v5520 = vsel %vm5437, %v5519, %v5518
    %v5521 = vsub.s32 4, %v5497
    %v5522 = vsel %vm5437, %v5521, %v5497
    %v5523 = vsel %vm5436, %v35, %v5520
    %v5524 = vsel %vm5436, 0, %v5522
    %v5525 = vcosq.f32.pop %v5523
    %v5526 = vsinq.f32.pop %v5523
    %vm5527 = vweird.f32 %v35
    %v5528 = vand.u32 %v5524, 3
    %vm5529 = vcmp.lt.s32.totalorder %v5528, 2
    %vm5530 = vcmp.eq.s32.totalorder %v5528, 0
    %v5531 = vxor.u32 %v5526, 2147483648
    %v5532 = vsel %vm5530, %v5525, %v5531
    %vm5533 = vcmp.eq.s32.totalorder %v5528, 2
    %v5534 = vxor.u32 %v5525, 2147483648
    %v5535 = vsel %vm5533, %v5534, %v5526
    %v5536 = vsel %vm5529, %v5532, %v5535
    %v5537 = vsel %vm5527, nan, %v5536
    %v5538 = vand.u32 2147483647, %v36
    %vm5539 = vcmp.le.f32.partialorder %v5538, 0.7853982
    %vm5540 = vcmp.lt.s32.totalorder %v36, 0
    %v5541 = vand.u32 %v36, 2139095040
    %v5542 = vshrl.u32 %v5541, 23
    %v5543 = vsub.s32 %v5542, 127
    %v5544 = vand.u32 2147483647, %v36
    %v5545 = vand.u32 %v5544, 8388607
    %v5546 = vor.u32 %v5545, 8388608
    %v5547 = vsub.s32 0, %v5546
    %v5548 = vadd.s32 %v5543, 1
    %vm5549 = vcmp.gt.s32.totalorder %v5548, 0
    %v5550 = vsel %vm5549, %v5548, 0
    %v5551 = vshrl.u32 %v5550, 5
    %v5552 = vand.u32 %v5550, 31
    %v5553 = vsub.s32 32, %v5552
    %v5554 = vshrl.u32 683565275, %v5553
    %v5555 = vshll.u32 683565275, %v5552
    %v5556 = vshrl.u32 2475754826, %v5553
    %v5557 = vor.u32 %v5555, %v5556
    %v5558 = vshll.u32 2475754826, %v5552
    %v5559 = vshrl.u32 2131351028, %v5553
    %v5560 = vor.u32 %v5558, %v5559
    %v5561 = vshll.u32 2131351028, %v5552
    %v5562 = vshrl.u32 2102212464, %v5553
    %v5563 = vor.u32 %v5561, %v5562
    %v5564 = vshll.u32 2102212464, %v5552
    %v5565 = vshrl.u32 920167782, %v5553
    %v5566 = vor.u32 %v5564, %v5565
    %v5567 = vshll.u32 920167782, %v5552
    %v5568 = vshrl.u32 1326507024, %v5553
    %v5569 = vor.u32 %v5567, %v5568
    %vm5570 = vcmp.lt.s32.totalorder %v5551, 1
    %vm5571 = vcmp.lt.s32.totalorder %v5551, 2
    %vm5572 = vcmp.lt.s32.totalorder %v5551, 3
    %vm5573 = vcmp.lt.s32.totalorder %v5551, 4
    %v5574 = vsel %vm5570, %v5554, %v5557
    %v5575 = vsel %vm5573, %v5563, 2102212464
    %v5576 = vsel %vm5572, %v5560, %v5575
    %v5577 = vsel %vm5571, %v5574, %v5576
    %v5578 = vsel %vm5570, %v5557, %v5560
    %v5579 = vsel %vm5573, %v5566, 920167782
    %v5580 = vsel %vm5572, %v5563, %v5579
    %v5581 = vsel %vm5571, %v5578, %v5580
    %v5582 = vsel %vm5570, %v5560, %v5563
    %v5583 = vsel %vm5573, %v5569, 1326507024
    %v5584 = vsel %vm5572, %v5566, %v5583
    %v5585 = vsel %vm5571, %v5582, %v5584
    %v5586 = vshll.u32 %v5546, 8
    %v5587 = vmul.u32.u64.compose %v5586, %v5585
    %v5588 = vextract.low.u32 %v5587
    %v5589 = vextract.high.u32 %v5587
    %v5590 = vmul.u32.u64.compose %v5586, %v5581
    %v5591 = vextract.low.u32 %v5590
    %v5592 = vextract.high.u32 %v5590
    %v5593 = vmul.u32 %v5586, %v5577
    %v5594 = vadd.s32 %v5589, %v5591
    %vm5595 = vc.u32 %v5589, %v5591
    %v5596 = vadd.s32 %v5592, 1
    %v5597 = vsel %vm5595, %v5596, %v5592
    %v5598 = vadd.s32 %v5593, %v5597
    %v5599 = vadd.s32 %v5598, 536870912
    %v5600 = vshrl.u32 %v5599, 30
    %v5601 = vshll.u32 %v5600, 30
    %v5602 = vsub.s32 %v5598, %v5601
    %vm5603 = vcmp.lt.s32.totalorder %v5602, 0
    %v5604 = vsub.s32 0, %v5602
    %v5605 = vsel %vm5603, %v5604, %v5602
    %v5606 = vclz %v5605
    %v5607 = vsub.s32 %v5606, 2
    %vm5608 = vcmp.gt.s32.totalorder 0, %v5607
    %v5609 = vsel %vm5608, 0, %v5607
    %v5610 = vsub.s32 32, %v5609
    %v5611 = vshll.u32 %v5602, %v5609
    %v5612 = vshrl.u32 %v5594, %v5610
    %v5613 = vor.u32 %v5611, %v5612
    %v5614 = vsub.s32 4294967266, %v5609
    %v5615 = vadd.s32 %v5614, 127
    %v5616 = vshll.u32 %v5615, 23
    %v5617 = vor.u32 4788187, %v5616
    %v5618 = vand.u32 2147483647, %v5617
    %v5620 = vcvt.s32.f32 %v5613
    %v5621 = vmul.f32 %v5620, %v5618
    %v5622 = vxor.u32 %v5621, 2147483648
    %v5623 = vsel %vm5540, %v5622, %v5621
    %v5624 = vsub.s32 4, %v5600
    %v5625 = vsel %vm5540, %v5624, %v5600
    %v5626 = vsel %vm5539, %v36, %v5623
    %v5627 = vsel %vm5539, 0, %v5625
    %v5628 = vcosq.f32.pop %v5626
    %v5629 = vsinq.f32.pop %v5626
    %vm5630 = vweird.f32 %v36
    %v5631 = vand.u32 %v5627, 3
    %vm5632 = vcmp.lt.s32.totalorder %v5631, 2
    %vm5633 = vcmp.eq.s32.totalorder %v5631, 0
    %v5634 = vxor.u32 %v5629, 2147483648
    %v5635 = vsel %vm5633, %v5628, %v5634
    %vm5636 = vcmp.eq.s32.totalorder %v5631, 2
    %v5637 = vxor.u32 %v5628, 2147483648
    %v5638 = vsel %vm5636, %v5637, %v5629
    %v5639 = vsel %vm5632, %v5635, %v5638
    %v5640 = vsel %vm5630, nan, %v5639
    %v5641 = vand.u32 2147483647, %v37
    %vm5642 = vcmp.le.f32.partialorder %v5641, 0.7853982
    %vm5643 = vcmp.lt.s32.totalorder %v37, 0
    %v5644 = vand.u32 %v37, 2139095040
    %v5645 = vshrl.u32 %v5644, 23
    %v5646 = vsub.s32 %v5645, 127
    %v5647 = vand.u32 2147483647, %v37
    %v5648 = vand.u32 %v5647, 8388607
    %v5649 = vor.u32 %v5648, 8388608
    %v5650 = vsub.s32 0, %v5649
    %v5651 = vadd.s32 %v5646, 1
    %vm5652 = vcmp.gt.s32.totalorder %v5651, 0
    %v5653 = vsel %vm5652, %v5651, 0
    %v5654 = vshrl.u32 %v5653, 5
    %v5655 = vand.u32 %v5653, 31
    %v5656 = vsub.s32 32, %v5655
    %v5657 = vshrl.u32 683565275, %v5656
    %v5658 = vshll.u32 683565275, %v5655
    %v5659 = vshrl.u32 2475754826, %v5656
    %v5660 = vor.u32 %v5658, %v5659
    %v5661 = vshll.u32 2475754826, %v5655
    %v5662 = vshrl.u32 2131351028, %v5656
    %v5663 = vor.u32 %v5661, %v5662
    %v5664 = vshll.u32 2131351028, %v5655
    %v5665 = vshrl.u32 2102212464, %v5656
    %v5666 = vor.u32 %v5664, %v5665
    %v5667 = vshll.u32 2102212464, %v5655
    %v5668 = vshrl.u32 920167782, %v5656
    %v5669 = vor.u32 %v5667, %v5668
    %v5670 = vshll.u32 920167782, %v5655
    %v5671 = vshrl.u32 1326507024, %v5656
    %v5672 = vor.u32 %v5670, %v5671
    %vm5673 = vcmp.lt.s32.totalorder %v5654, 1
    %vm5674 = vcmp.lt.s32.totalorder %v5654, 2
    %vm5675 = vcmp.lt.s32.totalorder %v5654, 3
    %vm5676 = vcmp.lt.s32.totalorder %v5654, 4
    %v5677 = vsel %vm5673, %v5657, %v5660
    %v5678 = vsel %vm5676, %v5666, 2102212464
    %v5679 = vsel %vm5675, %v5663, %v5678
    %v5680 = vsel %vm5674, %v5677, %v5679
    %v5681 = vsel %vm5673, %v5660, %v5663
    %v5682 = vsel %vm5676, %v5669, 920167782
    %v5683 = vsel %vm5675, %v5666, %v5682
    %v5684 = vsel %vm5674, %v5681, %v5683
    %v5685 = vsel %vm5673, %v5663, %v5666
    %v5686 = vsel %vm5676, %v5672, 1326507024
    %v5687 = vsel %vm5675, %v5669, %v5686
    %v5688 = vsel %vm5674, %v5685, %v5687
    %v5689 = vshll.u32 %v5649, 8
    %v5690 = vmul.u32.u64.compose %v5689, %v5688
    %v5691 = vextract.low.u32 %v5690
    %v5692 = vextract.high.u32 %v5690
    %v5693 = vmul.u32.u64.compose %v5689, %v5684
    %v5694 = vextract.low.u32 %v5693
    %v5695 = vextract.high.u32 %v5693
    %v5696 = vmul.u32 %v5689, %v5680
    %v5697 = vadd.s32 %v5692, %v5694
    %vm5698 = vc.u32 %v5692, %v5694
    %v5699 = vadd.s32 %v5695, 1
    %v5700 = vsel %vm5698, %v5699, %v5695
    %v5701 = vadd.s32 %v5696, %v5700
    %v5702 = vadd.s32 %v5701, 536870912
    %v5703 = vshrl.u32 %v5702, 30
    %v5704 = vshll.u32 %v5703, 30
    %v5705 = vsub.s32 %v5701, %v5704
    %vm5706 = vcmp.lt.s32.totalorder %v5705, 0
    %v5707 = vsub.s32 0, %v5705
    %v5708 = vsel %vm5706, %v5707, %v5705
    %v5709 = vclz %v5708
    %v5710 = vsub.s32 %v5709, 2
    %vm5711 = vcmp.gt.s32.totalorder 0, %v5710
    %v5712 = vsel %vm5711, 0, %v5710
    %v5713 = vsub.s32 32, %v5712
    %v5714 = vshll.u32 %v5705, %v5712
    %v5715 = vshrl.u32 %v5697, %v5713
    %v5716 = vor.u32 %v5714, %v5715
    %v5717 = vsub.s32 4294967266, %v5712
    %v5718 = vadd.s32 %v5717, 127
    %v5719 = vshll.u32 %v5718, 23
    %v5720 = vor.u32 4788187, %v5719
    %v5721 = vand.u32 2147483647, %v5720
    %v5723 = vcvt.s32.f32 %v5716
    %v5724 = vmul.f32 %v5723, %v5721
    %v5725 = vxor.u32 %v5724, 2147483648
    %v5726 = vsel %vm5643, %v5725, %v5724
    %v5727 = vsub.s32 4, %v5703
    %v5728 = vsel %vm5643, %v5727, %v5703
    %v5729 = vsel %vm5642, %v37, %v5726
    %v5730 = vsel %vm5642, 0, %v5728
    %v5731 = vcosq.f32.pop %v5729
    %v5732 = vsinq.f32.pop %v5729
    %vm5733 = vweird.f32 %v37
    %v5734 = vand.u32 %v5730, 3
    %vm5735 = vcmp.lt.s32.totalorder %v5734, 2
    %vm5736 = vcmp.eq.s32.totalorder %v5734, 0
    %v5737 = vxor.u32 %v5732, 2147483648
    %v5738 = vsel %vm5736, %v5731, %v5737
    %vm5739 = vcmp.eq.s32.totalorder %v5734, 2
    %v5740 = vxor.u32 %v5731, 2147483648
    %v5741 = vsel %vm5739, %v5740, %v5732
    %v5742 = vsel %vm5735, %v5738, %v5741
    %v5743 = vsel %vm5733, nan, %v5742
    %v5744 = vand.u32 2147483647, %v38
    %vm5745 = vcmp.le.f32.partialorder %v5744, 0.7853982
    %vm5746 = vcmp.lt.s32.totalorder %v38, 0
    %v5747 = vand.u32 %v38, 2139095040
    %v5748 = vshrl.u32 %v5747, 23
    %v5749 = vsub.s32 %v5748, 127
    %v5750 = vand.u32 2147483647, %v38
    %v5751 = vand.u32 %v5750, 8388607
    %v5752 = vor.u32 %v5751, 8388608
    %v5753 = vsub.s32 0, %v5752
    %v5754 = vadd.s32 %v5749, 1
    %vm5755 = vcmp.gt.s32.totalorder %v5754, 0
    %v5756 = vsel %vm5755, %v5754, 0
    %v5757 = vshrl.u32 %v5756, 5
    %v5758 = vand.u32 %v5756, 31
    %v5759 = vsub.s32 32, %v5758
    %v5760 = vshrl.u32 683565275, %v5759
    %v5761 = vshll.u32 683565275, %v5758
    %v5762 = vshrl.u32 2475754826, %v5759
    %v5763 = vor.u32 %v5761, %v5762
    %v5764 = vshll.u32 2475754826, %v5758
    %v5765 = vshrl.u32 2131351028, %v5759
    %v5766 = vor.u32 %v5764, %v5765
    %v5767 = vshll.u32 2131351028, %v5758
    %v5768 = vshrl.u32 2102212464, %v5759
    %v5769 = vor.u32 %v5767, %v5768
    %v5770 = vshll.u32 2102212464, %v5758
    %v5771 = vshrl.u32 920167782, %v5759
    %v5772 = vor.u32 %v5770, %v5771
    %v5773 = vshll.u32 920167782, %v5758
    %v5774 = vshrl.u32 1326507024, %v5759
    %v5775 = vor.u32 %v5773, %v5774
    %vm5776 = vcmp.lt.s32.totalorder %v5757, 1
    %vm5777 = vcmp.lt.s32.totalorder %v5757, 2
    %vm5778 = vcmp.lt.s32.totalorder %v5757, 3
    %vm5779 = vcmp.lt.s32.totalorder %v5757, 4
    %v5780 = vsel %vm5776, %v5760, %v5763
    %v5781 = vsel %vm5779, %v5769, 2102212464
    %v5782 = vsel %vm5778, %v5766, %v5781
    %v5783 = vsel %vm5777, %v5780, %v5782
    %v5784 = vsel %vm5776, %v5763, %v5766
    %v5785 = vsel %vm5779, %v5772, 920167782
    %v5786 = vsel %vm5778, %v5769, %v5785
    %v5787 = vsel %vm5777, %v5784, %v5786
    %v5788 = vsel %vm5776, %v5766, %v5769
    %v5789 = vsel %vm5779, %v5775, 1326507024
    %v5790 = vsel %vm5778, %v5772, %v5789
    %v5791 = vsel %vm5777, %v5788, %v5790
    %v5792 = vshll.u32 %v5752, 8
    %v5793 = vmul.u32.u64.compose %v5792, %v5791
    %v5794 = vextract.low.u32 %v5793
    %v5795 = vextract.high.u32 %v5793
    %v5796 = vmul.u32.u64.compose %v5792, %v5787
    %v5797 = vextract.low.u32 %v5796
    %v5798 = vextract.high.u32 %v5796
    %v5799 = vmul.u32 %v5792, %v5783
    %v5800 = vadd.s32 %v5795, %v5797
    %vm5801 = vc.u32 %v5795, %v5797
    %v5802 = vadd.s32 %v5798, 1
    %v5803 = vsel %vm5801, %v5802, %v5798
    %v5804 = vadd.s32 %v5799, %v5803
    %v5805 = vadd.s32 %v5804, 536870912
    %v5806 = vshrl.u32 %v5805, 30
    %v5807 = vshll.u32 %v5806, 30
    %v5808 = vsub.s32 %v5804, %v5807
    %vm5809 = vcmp.lt.s32.totalorder %v5808, 0
    %v5810 = vsub.s32 0, %v5808
    %v5811 = vsel %vm5809, %v5810, %v5808
    %v5812 = vclz %v5811
    %v5813 = vsub.s32 %v5812, 2
    %vm5814 = vcmp.gt.s32.totalorder 0, %v5813
    %v5815 = vsel %vm5814, 0, %v5813
    %v5816 = vsub.s32 32, %v5815
    %v5817 = vshll.u32 %v5808, %v5815
    %v5818 = vshrl.u32 %v5800, %v5816
    %v5819 = vor.u32 %v5817, %v5818
    %v5820 = vsub.s32 4294967266, %v5815
    %v5821 = vadd.s32 %v5820, 127
    %v5822 = vshll.u32 %v5821, 23
    %v5823 = vor.u32 4788187, %v5822
    %v5824 = vand.u32 2147483647, %v5823
    %v5826 = vcvt.s32.f32 %v5819
    %v5827 = vmul.f32 %v5826, %v5824
    %v5828 = vxor.u32 %v5827, 2147483648
    %v5829 = vsel %vm5746, %v5828, %v5827
    %v5830 = vsub.s32 4, %v5806
    %v5831 = vsel %vm5746, %v5830, %v5806
    %v5832 = vsel %vm5745, %v38, %v5829
    %v5833 = vsel %vm5745, 0, %v5831
    %v5834 = vcosq.f32.pop %v5832
    %v5835 = vsinq.f32.pop %v5832
    %vm5836 = vweird.f32 %v38
    %v5837 = vand.u32 %v5833, 3
    %vm5838 = vcmp.lt.s32.totalorder %v5837, 2
    %vm5839 = vcmp.eq.s32.totalorder %v5837, 0
    %v5840 = vxor.u32 %v5835, 2147483648
    %v5841 = vsel %vm5839, %v5834, %v5840
    %vm5842 = vcmp.eq.s32.totalorder %v5837, 2
    %v5843 = vxor.u32 %v5834, 2147483648
    %v5844 = vsel %vm5842, %v5843, %v5835
    %v5845 = vsel %vm5838, %v5841, %v5844
    %v5846 = vsel %vm5836, nan, %v5845
    %v5847 = vand.u32 2147483647, %v39
    %vm5848 = vcmp.le.f32.partialorder %v5847, 0.7853982
    %vm5849 = vcmp.lt.s32.totalorder %v39, 0
    %v5850 = vand.u32 %v39, 2139095040
    %v5851 = vshrl.u32 %v5850, 23
    %v5852 = vsub.s32 %v5851, 127
    %v5853 = vand.u32 2147483647, %v39
    %v5854 = vand.u32 %v5853, 8388607
    %v5855 = vor.u32 %v5854, 8388608
    %v5856 = vsub.s32 0, %v5855
    %v5857 = vadd.s32 %v5852, 1
    %vm5858 = vcmp.gt.s32.totalorder %v5857, 0
    %v5859 = vsel %vm5858, %v5857, 0
    %v5860 = vshrl.u32 %v5859, 5
    %v5861 = vand.u32 %v5859, 31
    %v5862 = vsub.s32 32, %v5861
    %v5863 = vshrl.u32 683565275, %v5862
    %v5864 = vshll.u32 683565275, %v5861
    %v5865 = vshrl.u32 2475754826, %v5862
    %v5866 = vor.u32 %v5864, %v5865
    %v5867 = vshll.u32 2475754826, %v5861
    %v5868 = vshrl.u32 2131351028, %v5862
    %v5869 = vor.u32 %v5867, %v5868
    %v5870 = vshll.u32 2131351028, %v5861
    %v5871 = vshrl.u32 2102212464, %v5862
    %v5872 = vor.u32 %v5870, %v5871
    %v5873 = vshll.u32 2102212464, %v5861
    %v5874 = vshrl.u32 920167782, %v5862
    %v5875 = vor.u32 %v5873, %v5874
    %v5876 = vshll.u32 920167782, %v5861
    %v5877 = vshrl.u32 1326507024, %v5862
    %v5878 = vor.u32 %v5876, %v5877
    %vm5879 = vcmp.lt.s32.totalorder %v5860, 1
    %vm5880 = vcmp.lt.s32.totalorder %v5860, 2
    %vm5881 = vcmp.lt.s32.totalorder %v5860, 3
    %vm5882 = vcmp.lt.s32.totalorder %v5860, 4
    %v5883 = vsel %vm5879, %v5863, %v5866
    %v5884 = vsel %vm5882, %v5872, 2102212464
    %v5885 = vsel %vm5881, %v5869, %v5884
    %v5886 = vsel %vm5880, %v5883, %v5885
    %v5887 = vsel %vm5879, %v5866, %v5869
    %v5888 = vsel %vm5882, %v5875, 920167782
    %v5889 = vsel %vm5881, %v5872, %v5888
    %v5890 = vsel %vm5880, %v5887, %v5889
    %v5891 = vsel %vm5879, %v5869, %v5872
    %v5892 = vsel %vm5882, %v5878, 1326507024
    %v5893 = vsel %vm5881, %v5875, %v5892
    %v5894 = vsel %vm5880, %v5891, %v5893
    %v5895 = vshll.u32 %v5855, 8
    %v5896 = vmul.u32.u64.compose %v5895, %v5894
    %v5897 = vextract.low.u32 %v5896
    %v5898 = vextract.high.u32 %v5896
    %v5899 = vmul.u32.u64.compose %v5895, %v5890
    %v5900 = vextract.low.u32 %v5899
    %v5901 = vextract.high.u32 %v5899
    %v5902 = vmul.u32 %v5895, %v5886
    %v5903 = vadd.s32 %v5898, %v5900
    %vm5904 = vc.u32 %v5898, %v5900
    %v5905 = vadd.s32 %v5901, 1
    %v5906 = vsel %vm5904, %v5905, %v5901
    %v5907 = vadd.s32 %v5902, %v5906
    %v5908 = vadd.s32 %v5907, 536870912
    %v5909 = vshrl.u32 %v5908, 30
    %v5910 = vshll.u32 %v5909, 30
    %v5911 = vsub.s32 %v5907, %v5910
    %vm5912 = vcmp.lt.s32.totalorder %v5911, 0
    %v5913 = vsub.s32 0, %v5911
    %v5914 = vsel %vm5912, %v5913, %v5911
    %v5915 = vclz %v5914
    %v5916 = vsub.s32 %v5915, 2
    %vm5917 = vcmp.gt.s32.totalorder 0, %v5916
    %v5918 = vsel %vm5917, 0, %v5916
    %v5919 = vsub.s32 32, %v5918
    %v5920 = vshll.u32 %v5911, %v5918
    %v5921 = vshrl.u32 %v5903, %v5919
    %v5922 = vor.u32 %v5920, %v5921
    %v5923 = vsub.s32 4294967266, %v5918
    %v5924 = vadd.s32 %v5923, 127
    %v5925 = vshll.u32 %v5924, 23
    %v5926 = vor.u32 4788187, %v5925
    %v5927 = vand.u32 2147483647, %v5926
    %v5929 = vcvt.s32.f32 %v5922
    %v5930 = vmul.f32 %v5929, %v5927
    %v5931 = vxor.u32 %v5930, 2147483648
    %v5932 = vsel %vm5849, %v5931, %v5930
    %v5933 = vsub.s32 4, %v5909
    %v5934 = vsel %vm5849, %v5933, %v5909
    %v5935 = vsel %vm5848, %v39, %v5932
    %v5936 = vsel %vm5848, 0, %v5934
    %v5937 = vcosq.f32.pop %v5935
    %v5938 = vsinq.f32.pop %v5935
    %vm5939 = vweird.f32 %v39
    %v5940 = vand.u32 %v5936, 3
    %vm5941 = vcmp.lt.s32.totalorder %v5940, 2
    %vm5942 = vcmp.eq.s32.totalorder %v5940, 0
    %v5943 = vxor.u32 %v5938, 2147483648
    %v5944 = vsel %vm5942, %v5937, %v5943
    %vm5945 = vcmp.eq.s32.totalorder %v5940, 2
    %v5946 = vxor.u32 %v5937, 2147483648
    %v5947 = vsel %vm5945, %v5946, %v5938
    %v5948 = vsel %vm5941, %v5944, %v5947
    %v5949 = vsel %vm5939, nan, %v5948
    %v5950 = vand.u32 2147483647, %v40
    %vm5951 = vcmp.le.f32.partialorder %v5950, 0.7853982
    %vm5952 = vcmp.lt.s32.totalorder %v40, 0
    %v5953 = vand.u32 %v40, 2139095040
    %v5954 = vshrl.u32 %v5953, 23
    %v5955 = vsub.s32 %v5954, 127
    %v5956 = vand.u32 2147483647, %v40
    %v5957 = vand.u32 %v5956, 8388607
    %v5958 = vor.u32 %v5957, 8388608
    %v5959 = vsub.s32 0, %v5958
    %v5960 = vadd.s32 %v5955, 1
    %vm5961 = vcmp.gt.s32.totalorder %v5960, 0
    %v5962 = vsel %vm5961, %v5960, 0
    %v5963 = vshrl.u32 %v5962, 5
    %v5964 = vand.u32 %v5962, 31
    %v5965 = vsub.s32 32, %v5964
    %v5966 = vshrl.u32 683565275, %v5965
    %v5967 = vshll.u32 683565275, %v5964
    %v5968 = vshrl.u32 2475754826, %v5965
    %v5969 = vor.u32 %v5967, %v5968
    %v5970 = vshll.u32 2475754826, %v5964
    %v5971 = vshrl.u32 2131351028, %v5965
    %v5972 = vor.u32 %v5970, %v5971
    %v5973 = vshll.u32 2131351028, %v5964
    %v5974 = vshrl.u32 2102212464, %v5965
    %v5975 = vor.u32 %v5973, %v5974
    %v5976 = vshll.u32 2102212464, %v5964
    %v5977 = vshrl.u32 920167782, %v5965
    %v5978 = vor.u32 %v5976, %v5977
    %v5979 = vshll.u32 920167782, %v5964
    %v5980 = vshrl.u32 1326507024, %v5965
    %v5981 = vor.u32 %v5979, %v5980
    %vm5982 = vcmp.lt.s32.totalorder %v5963, 1
    %vm5983 = vcmp.lt.s32.totalorder %v5963, 2
    %vm5984 = vcmp.lt.s32.totalorder %v5963, 3
    %vm5985 = vcmp.lt.s32.totalorder %v5963, 4
    %v5986 = vsel %vm5982, %v5966, %v5969
    %v5987 = vsel %vm5985, %v5975, 2102212464
    %v5988 = vsel %vm5984, %v5972, %v5987
    %v5989 = vsel %vm5983, %v5986, %v5988
    %v5990 = vsel %vm5982, %v5969, %v5972
    %v5991 = vsel %vm5985, %v5978, 920167782
    %v5992 = vsel %vm5984, %v5975, %v5991
    %v5993 = vsel %vm5983, %v5990, %v5992
    %v5994 = vsel %vm5982, %v5972, %v5975
    %v5995 = vsel %vm5985, %v5981, 1326507024
    %v5996 = vsel %vm5984, %v5978, %v5995
    %v5997 = vsel %vm5983, %v5994, %v5996
    %v5998 = vshll.u32 %v5958, 8
    %v5999 = vmul.u32.u64.compose %v5998, %v5997
    %v6000 = vextract.low.u32 %v5999
    %v6001 = vextract.high.u32 %v5999
    %v6002 = vmul.u32.u64.compose %v5998, %v5993
    %v6003 = vextract.low.u32 %v6002
    %v6004 = vextract.high.u32 %v6002
    %v6005 = vmul.u32 %v5998, %v5989
    %v6006 = vadd.s32 %v6001, %v6003
    %vm6007 = vc.u32 %v6001, %v6003
    %v6008 = vadd.s32 %v6004, 1
    %v6009 = vsel %vm6007, %v6008, %v6004
    %v6010 = vadd.s32 %v6005, %v6009
    %v6011 = vadd.s32 %v6010, 536870912
    %v6012 = vshrl.u32 %v6011, 30
    %v6013 = vshll.u32 %v6012, 30
    %v6014 = vsub.s32 %v6010, %v6013
    %vm6015 = vcmp.lt.s32.totalorder %v6014, 0
    %v6016 = vsub.s32 0, %v6014
    %v6017 = vsel %vm6015, %v6016, %v6014
    %v6018 = vclz %v6017
    %v6019 = vsub.s32 %v6018, 2
    %vm6020 = vcmp.gt.s32.totalorder 0, %v6019
    %v6021 = vsel %vm6020, 0, %v6019
    %v6022 = vsub.s32 32, %v6021
    %v6023 = vshll.u32 %v6014, %v6021
    %v6024 = vshrl.u32 %v6006, %v6022
    %v6025 = vor.u32 %v6023, %v6024
    %v6026 = vsub.s32 4294967266, %v6021
    %v6027 = vadd.s32 %v6026, 127
    %v6028 = vshll.u32 %v6027, 23
    %v6029 = vor.u32 4788187, %v6028
    %v6030 = vand.u32 2147483647, %v6029
    %v6032 = vcvt.s32.f32 %v6025
    %v6033 = vmul.f32 %v6032, %v6030
    %v6034 = vxor.u32 %v6033, 2147483648
    %v6035 = vsel %vm5952, %v6034, %v6033
    %v6036 = vsub.s32 4, %v6012
    %v6037 = vsel %vm5952, %v6036, %v6012
    %v6038 = vsel %vm5951, %v40, %v6035
    %v6039 = vsel %vm5951, 0, %v6037
    %v6040 = vcosq.f32.pop %v6038
    %v6041 = vsinq.f32.pop %v6038
    %vm6042 = vweird.f32 %v40
    %v6043 = vand.u32 %v6039, 3
    %vm6044 = vcmp.lt.s32.totalorder %v6043, 2
    %vm6045 = vcmp.eq.s32.totalorder %v6043, 0
    %v6046 = vxor.u32 %v6041, 2147483648
    %v6047 = vsel %vm6045, %v6040, %v6046
    %vm6048 = vcmp.eq.s32.totalorder %v6043, 2
    %v6049 = vxor.u32 %v6040, 2147483648
    %v6050 = vsel %vm6048, %v6049, %v6041
    %v6051 = vsel %vm6044, %v6047, %v6050
    %v6052 = vsel %vm6042, nan, %v6051
    %v6053 = vand.u32 2147483647, %v41
    %vm6054 = vcmp.le.f32.partialorder %v6053, 0.7853982
    %vm6055 = vcmp.lt.s32.totalorder %v41, 0
    %v6056 = vand.u32 %v41, 2139095040
    %v6057 = vshrl.u32 %v6056, 23
    %v6058 = vsub.s32 %v6057, 127
    %v6059 = vand.u32 2147483647, %v41
    %v6060 = vand.u32 %v6059, 8388607
    %v6061 = vor.u32 %v6060, 8388608
    %v6062 = vsub.s32 0, %v6061
    %v6063 = vadd.s32 %v6058, 1
    %vm6064 = vcmp.gt.s32.totalorder %v6063, 0
    %v6065 = vsel %vm6064, %v6063, 0
    %v6066 = vshrl.u32 %v6065, 5
    %v6067 = vand.u32 %v6065, 31
    %v6068 = vsub.s32 32, %v6067
    %v6069 = vshrl.u32 683565275, %v6068
    %v6070 = vshll.u32 683565275, %v6067
    %v6071 = vshrl.u32 2475754826, %v6068
    %v6072 = vor.u32 %v6070, %v6071
    %v6073 = vshll.u32 2475754826, %v6067
    %v6074 = vshrl.u32 2131351028, %v6068
    %v6075 = vor.u32 %v6073, %v6074
    %v6076 = vshll.u32 2131351028, %v6067
    %v6077 = vshrl.u32 2102212464, %v6068
    %v6078 = vor.u32 %v6076, %v6077
    %v6079 = vshll.u32 2102212464, %v6067
    %v6080 = vshrl.u32 920167782, %v6068
    %v6081 = vor.u32 %v6079, %v6080
    %v6082 = vshll.u32 920167782, %v6067
    %v6083 = vshrl.u32 1326507024, %v6068
    %v6084 = vor.u32 %v6082, %v6083
    %vm6085 = vcmp.lt.s32.totalorder %v6066, 1
    %vm6086 = vcmp.lt.s32.totalorder %v6066, 2
    %vm6087 = vcmp.lt.s32.totalorder %v6066, 3
    %vm6088 = vcmp.lt.s32.totalorder %v6066, 4
    %v6089 = vsel %vm6085, %v6069, %v6072
    %v6090 = vsel %vm6088, %v6078, 2102212464
    %v6091 = vsel %vm6087, %v6075, %v6090
    %v6092 = vsel %vm6086, %v6089, %v6091
    %v6093 = vsel %vm6085, %v6072, %v6075
    %v6094 = vsel %vm6088, %v6081, 920167782
    %v6095 = vsel %vm6087, %v6078, %v6094
    %v6096 = vsel %vm6086, %v6093, %v6095
    %v6097 = vsel %vm6085, %v6075, %v6078
    %v6098 = vsel %vm6088, %v6084, 1326507024
    %v6099 = vsel %vm6087, %v6081, %v6098
    %v6100 = vsel %vm6086, %v6097, %v6099
    %v6101 = vshll.u32 %v6061, 8
    %v6102 = vmul.u32.u64.compose %v6101, %v6100
    %v6103 = vextract.low.u32 %v6102
    %v6104 = vextract.high.u32 %v6102
    %v6105 = vmul.u32.u64.compose %v6101, %v6096
    %v6106 = vextract.low.u32 %v6105
    %v6107 = vextract.high.u32 %v6105
    %v6108 = vmul.u32 %v6101, %v6092
    %v6109 = vadd.s32 %v6104, %v6106
    %vm6110 = vc.u32 %v6104, %v6106
    %v6111 = vadd.s32 %v6107, 1
    %v6112 = vsel %vm6110, %v6111, %v6107
    %v6113 = vadd.s32 %v6108, %v6112
    %v6114 = vadd.s32 %v6113, 536870912
    %v6115 = vshrl.u32 %v6114, 30
    %v6116 = vshll.u32 %v6115, 30
    %v6117 = vsub.s32 %v6113, %v6116
    %vm6118 = vcmp.lt.s32.totalorder %v6117, 0
    %v6119 = vsub.s32 0, %v6117
    %v6120 = vsel %vm6118, %v6119, %v6117
    %v6121 = vclz %v6120
    %v6122 = vsub.s32 %v6121, 2
    %vm6123 = vcmp.gt.s32.totalorder 0, %v6122
    %v6124 = vsel %vm6123, 0, %v6122
    %v6125 = vsub.s32 32, %v6124
    %v6126 = vshll.u32 %v6117, %v6124
    %v6127 = vshrl.u32 %v6109, %v6125
    %v6128 = vor.u32 %v6126, %v6127
    %v6129 = vsub.s32 4294967266, %v6124
    %v6130 = vadd.s32 %v6129, 127
    %v6131 = vshll.u32 %v6130, 23
    %v6132 = vor.u32 4788187, %v6131
    %v6133 = vand.u32 2147483647, %v6132
    %v6135 = vcvt.s32.f32 %v6128
    %v6136 = vmul.f32 %v6135, %v6133
    %v6137 = vxor.u32 %v6136, 2147483648
    %v6138 = vsel %vm6055, %v6137, %v6136
    %v6139 = vsub.s32 4, %v6115
    %v6140 = vsel %vm6055, %v6139, %v6115
    %v6141 = vsel %vm6054, %v41, %v6138
    %v6142 = vsel %vm6054, 0, %v6140
    %v6143 = vcosq.f32.pop %v6141
    %v6144 = vsinq.f32.pop %v6141
    %vm6145 = vweird.f32 %v41
    %v6146 = vand.u32 %v6142, 3
    %vm6147 = vcmp.lt.s32.totalorder %v6146, 2
    %vm6148 = vcmp.eq.s32.totalorder %v6146, 0
    %v6149 = vxor.u32 %v6144, 2147483648
    %v6150 = vsel %vm6148, %v6143, %v6149
    %vm6151 = vcmp.eq.s32.totalorder %v6146, 2
    %v6152 = vxor.u32 %v6143, 2147483648
    %v6153 = vsel %vm6151, %v6152, %v6144
    %v6154 = vsel %vm6147, %v6150, %v6153
    %v6155 = vsel %vm6145, nan, %v6154
    %v6156 = vand.u32 2147483647, %v42
    %vm6157 = vcmp.le.f32.partialorder %v6156, 0.7853982
    %vm6158 = vcmp.lt.s32.totalorder %v42, 0
    %v6159 = vand.u32 %v42, 2139095040
    %v6160 = vshrl.u32 %v6159, 23
    %v6161 = vsub.s32 %v6160, 127
    %v6162 = vand.u32 2147483647, %v42
    %v6163 = vand.u32 %v6162, 8388607
    %v6164 = vor.u32 %v6163, 8388608
    %v6165 = vsub.s32 0, %v6164
    %v6166 = vadd.s32 %v6161, 1
    %vm6167 = vcmp.gt.s32.totalorder %v6166, 0
    %v6168 = vsel %vm6167, %v6166, 0
    %v6169 = vshrl.u32 %v6168, 5
    %v6170 = vand.u32 %v6168, 31
    %v6171 = vsub.s32 32, %v6170
    %v6172 = vshrl.u32 683565275, %v6171
    %v6173 = vshll.u32 683565275, %v6170
    %v6174 = vshrl.u32 2475754826, %v6171
    %v6175 = vor.u32 %v6173, %v6174
    %v6176 = vshll.u32 2475754826, %v6170
    %v6177 = vshrl.u32 2131351028, %v6171
    %v6178 = vor.u32 %v6176, %v6177
    %v6179 = vshll.u32 2131351028, %v6170
    %v6180 = vshrl.u32 2102212464, %v6171
    %v6181 = vor.u32 %v6179, %v6180
    %v6182 = vshll.u32 2102212464, %v6170
    %v6183 = vshrl.u32 920167782, %v6171
    %v6184 = vor.u32 %v6182, %v6183
    %v6185 = vshll.u32 920167782, %v6170
    %v6186 = vshrl.u32 1326507024, %v6171
    %v6187 = vor.u32 %v6185, %v6186
    %vm6188 = vcmp.lt.s32.totalorder %v6169, 1
    %vm6189 = vcmp.lt.s32.totalorder %v6169, 2
    %vm6190 = vcmp.lt.s32.totalorder %v6169, 3
    %vm6191 = vcmp.lt.s32.totalorder %v6169, 4
    %v6192 = vsel %vm6188, %v6172, %v6175
    %v6193 = vsel %vm6191, %v6181, 2102212464
    %v6194 = vsel %vm6190, %v6178, %v6193
    %v6195 = vsel %vm6189, %v6192, %v6194
    %v6196 = vsel %vm6188, %v6175, %v6178
    %v6197 = vsel %vm6191, %v6184, 920167782
    %v6198 = vsel %vm6190, %v6181, %v6197
    %v6199 = vsel %vm6189, %v6196, %v6198
    %v6200 = vsel %vm6188, %v6178, %v6181
    %v6201 = vsel %vm6191, %v6187, 1326507024
    %v6202 = vsel %vm6190, %v6184, %v6201
    %v6203 = vsel %vm6189, %v6200, %v6202
    %v6204 = vshll.u32 %v6164, 8
    %v6205 = vmul.u32.u64.compose %v6204, %v6203
    %v6206 = vextract.low.u32 %v6205
    %v6207 = vextract.high.u32 %v6205
    %v6208 = vmul.u32.u64.compose %v6204, %v6199
    %v6209 = vextract.low.u32 %v6208
    %v6210 = vextract.high.u32 %v6208
    %v6211 = vmul.u32 %v6204, %v6195
    %v6212 = vadd.s32 %v6207, %v6209
    %vm6213 = vc.u32 %v6207, %v6209
    %v6214 = vadd.s32 %v6210, 1
    %v6215 = vsel %vm6213, %v6214, %v6210
    %v6216 = vadd.s32 %v6211, %v6215
    %v6217 = vadd.s32 %v6216, 536870912
    %v6218 = vshrl.u32 %v6217, 30
    %v6219 = vshll.u32 %v6218, 30
    %v6220 = vsub.s32 %v6216, %v6219
    %vm6221 = vcmp.lt.s32.totalorder %v6220, 0
    %v6222 = vsub.s32 0, %v6220
    %v6223 = vsel %vm6221, %v6222, %v6220
    %v6224 = vclz %v6223
    %v6225 = vsub.s32 %v6224, 2
    %vm6226 = vcmp.gt.s32.totalorder 0, %v6225
    %v6227 = vsel %vm6226, 0, %v6225
    %v6228 = vsub.s32 32, %v6227
    %v6229 = vshll.u32 %v6220, %v6227
    %v6230 = vshrl.u32 %v6212, %v6228
    %v6231 = vor.u32 %v6229, %v6230
    %v6232 = vsub.s32 4294967266, %v6227
    %v6233 = vadd.s32 %v6232, 127
    %v6234 = vshll.u32 %v6233, 23
    %v6235 = vor.u32 4788187, %v6234
    %v6236 = vand.u32 2147483647, %v6235
    %v6238 = vcvt.s32.f32 %v6231
    %v6239 = vmul.f32 %v6238, %v6236
    %v6240 = vxor.u32 %v6239, 2147483648
    %v6241 = vsel %vm6158, %v6240, %v6239
    %v6242 = vsub.s32 4, %v6218
    %v6243 = vsel %vm6158, %v6242, %v6218
    %v6244 = vsel %vm6157, %v42, %v6241
    %v6245 = vsel %vm6157, 0, %v6243
    %v6246 = vcosq.f32.pop %v6244
    %v6247 = vsinq.f32.pop %v6244
    %vm6248 = vweird.f32 %v42
    %v6249 = vand.u32 %v6245, 3
    %vm6250 = vcmp.lt.s32.totalorder %v6249, 2
    %vm6251 = vcmp.eq.s32.totalorder %v6249, 0
    %v6252 = vxor.u32 %v6247, 2147483648
    %v6253 = vsel %vm6251, %v6246, %v6252
    %vm6254 = vcmp.eq.s32.totalorder %v6249, 2
    %v6255 = vxor.u32 %v6246, 2147483648
    %v6256 = vsel %vm6254, %v6255, %v6247
    %v6257 = vsel %vm6250, %v6253, %v6256
    %v6258 = vsel %vm6248, nan, %v6257
    %v6259 = vand.u32 2147483647, %v43
    %vm6260 = vcmp.le.f32.partialorder %v6259, 0.7853982
    %vm6261 = vcmp.lt.s32.totalorder %v43, 0
    %v6262 = vand.u32 %v43, 2139095040
    %v6263 = vshrl.u32 %v6262, 23
    %v6264 = vsub.s32 %v6263, 127
    %v6265 = vand.u32 2147483647, %v43
    %v6266 = vand.u32 %v6265, 8388607
    %v6267 = vor.u32 %v6266, 8388608
    %v6268 = vsub.s32 0, %v6267
    %v6269 = vadd.s32 %v6264, 1
    %vm6270 = vcmp.gt.s32.totalorder %v6269, 0
    %v6271 = vsel %vm6270, %v6269, 0
    %v6272 = vshrl.u32 %v6271, 5
    %v6273 = vand.u32 %v6271, 31
    %v6274 = vsub.s32 32, %v6273
    %v6275 = vshrl.u32 683565275, %v6274
    %v6276 = vshll.u32 683565275, %v6273
    %v6277 = vshrl.u32 2475754826, %v6274
    %v6278 = vor.u32 %v6276, %v6277
    %v6279 = vshll.u32 2475754826, %v6273
    %v6280 = vshrl.u32 2131351028, %v6274
    %v6281 = vor.u32 %v6279, %v6280
    %v6282 = vshll.u32 2131351028, %v6273
    %v6283 = vshrl.u32 2102212464, %v6274
    %v6284 = vor.u32 %v6282, %v6283
    %v6285 = vshll.u32 2102212464, %v6273
    %v6286 = vshrl.u32 920167782, %v6274
    %v6287 = vor.u32 %v6285, %v6286
    %v6288 = vshll.u32 920167782, %v6273
    %v6289 = vshrl.u32 1326507024, %v6274
    %v6290 = vor.u32 %v6288, %v6289
    %vm6291 = vcmp.lt.s32.totalorder %v6272, 1
    %vm6292 = vcmp.lt.s32.totalorder %v6272, 2
    %vm6293 = vcmp.lt.s32.totalorder %v6272, 3
    %vm6294 = vcmp.lt.s32.totalorder %v6272, 4
    %v6295 = vsel %vm6291, %v6275, %v6278
    %v6296 = vsel %vm6294, %v6284, 2102212464
    %v6297 = vsel %vm6293, %v6281, %v6296
    %v6298 = vsel %vm6292, %v6295, %v6297
    %v6299 = vsel %vm6291, %v6278, %v6281
    %v6300 = vsel %vm6294, %v6287, 920167782
    %v6301 = vsel %vm6293, %v6284, %v6300
    %v6302 = vsel %vm6292, %v6299, %v6301
    %v6303 = vsel %vm6291, %v6281, %v6284
    %v6304 = vsel %vm6294, %v6290, 1326507024
    %v6305 = vsel %vm6293, %v6287, %v6304
    %v6306 = vsel %vm6292, %v6303, %v6305
    %v6307 = vshll.u32 %v6267, 8
    %v6308 = vmul.u32.u64.compose %v6307, %v6306
    %v6309 = vextract.low.u32 %v6308
    %v6310 = vextract.high.u32 %v6308
    %v6311 = vmul.u32.u64.compose %v6307, %v6302
    %v6312 = vextract.low.u32 %v6311
    %v6313 = vextract.high.u32 %v6311
    %v6314 = vmul.u32 %v6307, %v6298
    %v6315 = vadd.s32 %v6310, %v6312
    %vm6316 = vc.u32 %v6310, %v6312
    %v6317 = vadd.s32 %v6313, 1
    %v6318 = vsel %vm6316, %v6317, %v6313
    %v6319 = vadd.s32 %v6314, %v6318
    %v6320 = vadd.s32 %v6319, 536870912
    %v6321 = vshrl.u32 %v6320, 30
    %v6322 = vshll.u32 %v6321, 30
    %v6323 = vsub.s32 %v6319, %v6322
    %vm6324 = vcmp.lt.s32.totalorder %v6323, 0
    %v6325 = vsub.s32 0, %v6323
    %v6326 = vsel %vm6324, %v6325, %v6323
    %v6327 = vclz %v6326
    %v6328 = vsub.s32 %v6327, 2
    %vm6329 = vcmp.gt.s32.totalorder 0, %v6328
    %v6330 = vsel %vm6329, 0, %v6328
    %v6331 = vsub.s32 32, %v6330
    %v6332 = vshll.u32 %v6323, %v6330
    %v6333 = vshrl.u32 %v6315, %v6331
    %v6334 = vor.u32 %v6332, %v6333
    %v6335 = vsub.s32 4294967266, %v6330
    %v6336 = vadd.s32 %v6335, 127
    %v6337 = vshll.u32 %v6336, 23
    %v6338 = vor.u32 4788187, %v6337
    %v6339 = vand.u32 2147483647, %v6338
    %v6341 = vcvt.s32.f32 %v6334
    %v6342 = vmul.f32 %v6341, %v6339
    %v6343 = vxor.u32 %v6342, 2147483648
    %v6344 = vsel %vm6261, %v6343, %v6342
    %v6345 = vsub.s32 4, %v6321
    %v6346 = vsel %vm6261, %v6345, %v6321
    %v6347 = vsel %vm6260, %v43, %v6344
    %v6348 = vsel %vm6260, 0, %v6346
    %v6349 = vcosq.f32.pop %v6347
    %v6350 = vsinq.f32.pop %v6347
    %vm6351 = vweird.f32 %v43
    %v6352 = vand.u32 %v6348, 3
    %vm6353 = vcmp.lt.s32.totalorder %v6352, 2
    %vm6354 = vcmp.eq.s32.totalorder %v6352, 0
    %v6355 = vxor.u32 %v6350, 2147483648
    %v6356 = vsel %vm6354, %v6349, %v6355
    %vm6357 = vcmp.eq.s32.totalorder %v6352, 2
    %v6358 = vxor.u32 %v6349, 2147483648
    %v6359 = vsel %vm6357, %v6358, %v6350
    %v6360 = vsel %vm6353, %v6356, %v6359
    %v6361 = vsel %vm6351, nan, %v6360
    %v6362 = vand.u32 2147483647, %v44
    %vm6363 = vcmp.le.f32.partialorder %v6362, 0.7853982
    %vm6364 = vcmp.lt.s32.totalorder %v44, 0
    %v6365 = vand.u32 %v44, 2139095040
    %v6366 = vshrl.u32 %v6365, 23
    %v6367 = vsub.s32 %v6366, 127
    %v6368 = vand.u32 2147483647, %v44
    %v6369 = vand.u32 %v6368, 8388607
    %v6370 = vor.u32 %v6369, 8388608
    %v6371 = vsub.s32 0, %v6370
    %v6372 = vadd.s32 %v6367, 1
    %vm6373 = vcmp.gt.s32.totalorder %v6372, 0
    %v6374 = vsel %vm6373, %v6372, 0
    %v6375 = vshrl.u32 %v6374, 5
    %v6376 = vand.u32 %v6374, 31
    %v6377 = vsub.s32 32, %v6376
    %v6378 = vshrl.u32 683565275, %v6377
    %v6379 = vshll.u32 683565275, %v6376
    %v6380 = vshrl.u32 2475754826, %v6377
    %v6381 = vor.u32 %v6379, %v6380
    %v6382 = vshll.u32 2475754826, %v6376
    %v6383 = vshrl.u32 2131351028, %v6377
    %v6384 = vor.u32 %v6382, %v6383
    %v6385 = vshll.u32 2131351028, %v6376
    %v6386 = vshrl.u32 2102212464, %v6377
    %v6387 = vor.u32 %v6385, %v6386
    %v6388 = vshll.u32 2102212464, %v6376
    %v6389 = vshrl.u32 920167782, %v6377
    %v6390 = vor.u32 %v6388, %v6389
    %v6391 = vshll.u32 920167782, %v6376
    %v6392 = vshrl.u32 1326507024, %v6377
    %v6393 = vor.u32 %v6391, %v6392
    %vm6394 = vcmp.lt.s32.totalorder %v6375, 1
    %vm6395 = vcmp.lt.s32.totalorder %v6375, 2
    %vm6396 = vcmp.lt.s32.totalorder %v6375, 3
    %vm6397 = vcmp.lt.s32.totalorder %v6375, 4
    %v6398 = vsel %vm6394, %v6378, %v6381
    %v6399 = vsel %vm6397, %v6387, 2102212464
    %v6400 = vsel %vm6396, %v6384, %v6399
    %v6401 = vsel %vm6395, %v6398, %v6400
    %v6402 = vsel %vm6394, %v6381, %v6384
    %v6403 = vsel %vm6397, %v6390, 920167782
    %v6404 = vsel %vm6396, %v6387, %v6403
    %v6405 = vsel %vm6395, %v6402, %v6404
    %v6406 = vsel %vm6394, %v6384, %v6387
    %v6407 = vsel %vm6397, %v6393, 1326507024
    %v6408 = vsel %vm6396, %v6390, %v6407
    %v6409 = vsel %vm6395, %v6406, %v6408
    %v6410 = vshll.u32 %v6370, 8
    %v6411 = vmul.u32.u64.compose %v6410, %v6409
    %v6412 = vextract.low.u32 %v6411
    %v6413 = vextract.high.u32 %v6411
    %v6414 = vmul.u32.u64.compose %v6410, %v6405
    %v6415 = vextract.low.u32 %v6414
    %v6416 = vextract.high.u32 %v6414
    %v6417 = vmul.u32 %v6410, %v6401
    %v6418 = vadd.s32 %v6413, %v6415
    %vm6419 = vc.u32 %v6413, %v6415
    %v6420 = vadd.s32 %v6416, 1
    %v6421 = vsel %vm6419, %v6420, %v6416
    %v6422 = vadd.s32 %v6417, %v6421
    %v6423 = vadd.s32 %v6422, 536870912
    %v6424 = vshrl.u32 %v6423, 30
    %v6425 = vshll.u32 %v6424, 30
    %v6426 = vsub.s32 %v6422, %v6425
    %vm6427 = vcmp.lt.s32.totalorder %v6426, 0
    %v6428 = vsub.s32 0, %v6426
    %v6429 = vsel %vm6427, %v6428, %v6426
    %v6430 = vclz %v6429
    %v6431 = vsub.s32 %v6430, 2
    %vm6432 = vcmp.gt.s32.totalorder 0, %v6431
    %v6433 = vsel %vm6432, 0, %v6431
    %v6434 = vsub.s32 32, %v6433
    %v6435 = vshll.u32 %v6426, %v6433
    %v6436 = vshrl.u32 %v6418, %v6434
    %v6437 = vor.u32 %v6435, %v6436
    %v6438 = vsub.s32 4294967266, %v6433
    %v6439 = vadd.s32 %v6438, 127
    %v6440 = vshll.u32 %v6439, 23
    %v6441 = vor.u32 4788187, %v6440
    %v6442 = vand.u32 2147483647, %v6441
    %v6444 = vcvt.s32.f32 %v6437
    %v6445 = vmul.f32 %v6444, %v6442
    %v6446 = vxor.u32 %v6445, 2147483648
    %v6447 = vsel %vm6364, %v6446, %v6445
    %v6448 = vsub.s32 4, %v6424
    %v6449 = vsel %vm6364, %v6448, %v6424
    %v6450 = vsel %vm6363, %v44, %v6447
    %v6451 = vsel %vm6363, 0, %v6449
    %v6452 = vcosq.f32.pop %v6450
    %v6453 = vsinq.f32.pop %v6450
    %vm6454 = vweird.f32 %v44
    %v6455 = vand.u32 %v6451, 3
    %vm6456 = vcmp.lt.s32.totalorder %v6455, 2
    %vm6457 = vcmp.eq.s32.totalorder %v6455, 0
    %v6458 = vxor.u32 %v6453, 2147483648
    %v6459 = vsel %vm6457, %v6452, %v6458
    %vm6460 = vcmp.eq.s32.totalorder %v6455, 2
    %v6461 = vxor.u32 %v6452, 2147483648
    %v6462 = vsel %vm6460, %v6461, %v6453
    %v6463 = vsel %vm6456, %v6459, %v6462
    %v6464 = vsel %vm6454, nan, %v6463
    %v6465 = vand.u32 2147483647, %v45
    %vm6466 = vcmp.le.f32.partialorder %v6465, 0.7853982
    %vm6467 = vcmp.lt.s32.totalorder %v45, 0
    %v6468 = vand.u32 %v45, 2139095040
    %v6469 = vshrl.u32 %v6468, 23
    %v6470 = vsub.s32 %v6469, 127
    %v6471 = vand.u32 2147483647, %v45
    %v6472 = vand.u32 %v6471, 8388607
    %v6473 = vor.u32 %v6472, 8388608
    %v6474 = vsub.s32 0, %v6473
    %v6475 = vadd.s32 %v6470, 1
    %vm6476 = vcmp.gt.s32.totalorder %v6475, 0
    %v6477 = vsel %vm6476, %v6475, 0
    %v6478 = vshrl.u32 %v6477, 5
    %v6479 = vand.u32 %v6477, 31
    %v6480 = vsub.s32 32, %v6479
    %v6481 = vshrl.u32 683565275, %v6480
    %v6482 = vshll.u32 683565275, %v6479
    %v6483 = vshrl.u32 2475754826, %v6480
    %v6484 = vor.u32 %v6482, %v6483
    %v6485 = vshll.u32 2475754826, %v6479
    %v6486 = vshrl.u32 2131351028, %v6480
    %v6487 = vor.u32 %v6485, %v6486
    %v6488 = vshll.u32 2131351028, %v6479
    %v6489 = vshrl.u32 2102212464, %v6480
    %v6490 = vor.u32 %v6488, %v6489
    %v6491 = vshll.u32 2102212464, %v6479
    %v6492 = vshrl.u32 920167782, %v6480
    %v6493 = vor.u32 %v6491, %v6492
    %v6494 = vshll.u32 920167782, %v6479
    %v6495 = vshrl.u32 1326507024, %v6480
    %v6496 = vor.u32 %v6494, %v6495
    %vm6497 = vcmp.lt.s32.totalorder %v6478, 1
    %vm6498 = vcmp.lt.s32.totalorder %v6478, 2
    %vm6499 = vcmp.lt.s32.totalorder %v6478, 3
    %vm6500 = vcmp.lt.s32.totalorder %v6478, 4
    %v6501 = vsel %vm6497, %v6481, %v6484
    %v6502 = vsel %vm6500, %v6490, 2102212464
    %v6503 = vsel %vm6499, %v6487, %v6502
    %v6504 = vsel %vm6498, %v6501, %v6503
    %v6505 = vsel %vm6497, %v6484, %v6487
    %v6506 = vsel %vm6500, %v6493, 920167782
    %v6507 = vsel %vm6499, %v6490, %v6506
    %v6508 = vsel %vm6498, %v6505, %v6507
    %v6509 = vsel %vm6497, %v6487, %v6490
    %v6510 = vsel %vm6500, %v6496, 1326507024
    %v6511 = vsel %vm6499, %v6493, %v6510
    %v6512 = vsel %vm6498, %v6509, %v6511
    %v6513 = vshll.u32 %v6473, 8
    %v6514 = vmul.u32.u64.compose %v6513, %v6512
    %v6515 = vextract.low.u32 %v6514
    %v6516 = vextract.high.u32 %v6514
    %v6517 = vmul.u32.u64.compose %v6513, %v6508
    %v6518 = vextract.low.u32 %v6517
    %v6519 = vextract.high.u32 %v6517
    %v6520 = vmul.u32 %v6513, %v6504
    %v6521 = vadd.s32 %v6516, %v6518
    %vm6522 = vc.u32 %v6516, %v6518
    %v6523 = vadd.s32 %v6519, 1
    %v6524 = vsel %vm6522, %v6523, %v6519
    %v6525 = vadd.s32 %v6520, %v6524
    %v6526 = vadd.s32 %v6525, 536870912
    %v6527 = vshrl.u32 %v6526, 30
    %v6528 = vshll.u32 %v6527, 30
    %v6529 = vsub.s32 %v6525, %v6528
    %vm6530 = vcmp.lt.s32.totalorder %v6529, 0
    %v6531 = vsub.s32 0, %v6529
    %v6532 = vsel %vm6530, %v6531, %v6529
    %v6533 = vclz %v6532
    %v6534 = vsub.s32 %v6533, 2
    %vm6535 = vcmp.gt.s32.totalorder 0, %v6534
    %v6536 = vsel %vm6535, 0, %v6534
    %v6537 = vsub.s32 32, %v6536
    %v6538 = vshll.u32 %v6529, %v6536
    %v6539 = vshrl.u32 %v6521, %v6537
    %v6540 = vor.u32 %v6538, %v6539
    %v6541 = vsub.s32 4294967266, %v6536
    %v6542 = vadd.s32 %v6541, 127
    %v6543 = vshll.u32 %v6542, 23
    %v6544 = vor.u32 4788187, %v6543
    %v6545 = vand.u32 2147483647, %v6544
    %v6547 = vcvt.s32.f32 %v6540
    %v6548 = vmul.f32 %v6547, %v6545
    %v6549 = vxor.u32 %v6548, 2147483648
    %v6550 = vsel %vm6467, %v6549, %v6548
    %v6551 = vsub.s32 4, %v6527
    %v6552 = vsel %vm6467, %v6551, %v6527
    %v6553 = vsel %vm6466, %v45, %v6550
    %v6554 = vsel %vm6466, 0, %v6552
    %v6555 = vcosq.f32.pop %v6553
    %v6556 = vsinq.f32.pop %v6553
    %vm6557 = vweird.f32 %v45
    %v6558 = vand.u32 %v6554, 3
    %vm6559 = vcmp.lt.s32.totalorder %v6558, 2
    %vm6560 = vcmp.eq.s32.totalorder %v6558, 0
    %v6561 = vxor.u32 %v6556, 2147483648
    %v6562 = vsel %vm6560, %v6555, %v6561
    %vm6563 = vcmp.eq.s32.totalorder %v6558, 2
    %v6564 = vxor.u32 %v6555, 2147483648
    %v6565 = vsel %vm6563, %v6564, %v6556
    %v6566 = vsel %vm6559, %v6562, %v6565
    %v6567 = vsel %vm6557, nan, %v6566
    %v6568 = vand.u32 2147483647, %v46
    %vm6569 = vcmp.le.f32.partialorder %v6568, 0.7853982
    %vm6570 = vcmp.lt.s32.totalorder %v46, 0
    %v6571 = vand.u32 %v46, 2139095040
    %v6572 = vshrl.u32 %v6571, 23
    %v6573 = vsub.s32 %v6572, 127
    %v6574 = vand.u32 2147483647, %v46
    %v6575 = vand.u32 %v6574, 8388607
    %v6576 = vor.u32 %v6575, 8388608
    %v6577 = vsub.s32 0, %v6576
    %v6578 = vadd.s32 %v6573, 1
    %vm6579 = vcmp.gt.s32.totalorder %v6578, 0
    %v6580 = vsel %vm6579, %v6578, 0
    %v6581 = vshrl.u32 %v6580, 5
    %v6582 = vand.u32 %v6580, 31
    %v6583 = vsub.s32 32, %v6582
    %v6584 = vshrl.u32 683565275, %v6583
    %v6585 = vshll.u32 683565275, %v6582
    %v6586 = vshrl.u32 2475754826, %v6583
    %v6587 = vor.u32 %v6585, %v6586
    %v6588 = vshll.u32 2475754826, %v6582
    %v6589 = vshrl.u32 2131351028, %v6583
    %v6590 = vor.u32 %v6588, %v6589
    %v6591 = vshll.u32 2131351028, %v6582
    %v6592 = vshrl.u32 2102212464, %v6583
    %v6593 = vor.u32 %v6591, %v6592
    %v6594 = vshll.u32 2102212464, %v6582
    %v6595 = vshrl.u32 920167782, %v6583
    %v6596 = vor.u32 %v6594, %v6595
    %v6597 = vshll.u32 920167782, %v6582
    %v6598 = vshrl.u32 1326507024, %v6583
    %v6599 = vor.u32 %v6597, %v6598
    %vm6600 = vcmp.lt.s32.totalorder %v6581, 1
    %vm6601 = vcmp.lt.s32.totalorder %v6581, 2
    %vm6602 = vcmp.lt.s32.totalorder %v6581, 3
    %vm6603 = vcmp.lt.s32.totalorder %v6581, 4
    %v6604 = vsel %vm6600, %v6584, %v6587
    %v6605 = vsel %vm6603, %v6593, 2102212464
    %v6606 = vsel %vm6602, %v6590, %v6605
    %v6607 = vsel %vm6601, %v6604, %v6606
    %v6608 = vsel %vm6600, %v6587, %v6590
    %v6609 = vsel %vm6603, %v6596, 920167782
    %v6610 = vsel %vm6602, %v6593, %v6609
    %v6611 = vsel %vm6601, %v6608, %v6610
    %v6612 = vsel %vm6600, %v6590, %v6593
    %v6613 = vsel %vm6603, %v6599, 1326507024
    %v6614 = vsel %vm6602, %v6596, %v6613
    %v6615 = vsel %vm6601, %v6612, %v6614
    %v6616 = vshll.u32 %v6576, 8
    %v6617 = vmul.u32.u64.compose %v6616, %v6615
    %v6618 = vextract.low.u32 %v6617
    %v6619 = vextract.high.u32 %v6617
    %v6620 = vmul.u32.u64.compose %v6616, %v6611
    %v6621 = vextract.low.u32 %v6620
    %v6622 = vextract.high.u32 %v6620
    %v6623 = vmul.u32 %v6616, %v6607
    %v6624 = vadd.s32 %v6619, %v6621
    %vm6625 = vc.u32 %v6619, %v6621
    %v6626 = vadd.s32 %v6622, 1
    %v6627 = vsel %vm6625, %v6626, %v6622
    %v6628 = vadd.s32 %v6623, %v6627
    %v6629 = vadd.s32 %v6628, 536870912
    %v6630 = vshrl.u32 %v6629, 30
    %v6631 = vshll.u32 %v6630, 30
    %v6632 = vsub.s32 %v6628, %v6631
    %vm6633 = vcmp.lt.s32.totalorder %v6632, 0
    %v6634 = vsub.s32 0, %v6632
    %v6635 = vsel %vm6633, %v6634, %v6632
    %v6636 = vclz %v6635
    %v6637 = vsub.s32 %v6636, 2
    %vm6638 = vcmp.gt.s32.totalorder 0, %v6637
    %v6639 = vsel %vm6638, 0, %v6637
    %v6640 = vsub.s32 32, %v6639
    %v6641 = vshll.u32 %v6632, %v6639
    %v6642 = vshrl.u32 %v6624, %v6640
    %v6643 = vor.u32 %v6641, %v6642
    %v6644 = vsub.s32 4294967266, %v6639
    %v6645 = vadd.s32 %v6644, 127
    %v6646 = vshll.u32 %v6645, 23
    %v6647 = vor.u32 4788187, %v6646
    %v6648 = vand.u32 2147483647, %v6647
    %v6650 = vcvt.s32.f32 %v6643
    %v6651 = vmul.f32 %v6650, %v6648
    %v6652 = vxor.u32 %v6651, 2147483648
    %v6653 = vsel %vm6570, %v6652, %v6651
    %v6654 = vsub.s32 4, %v6630
    %v6655 = vsel %vm6570, %v6654, %v6630
    %v6656 = vsel %vm6569, %v46, %v6653
    %v6657 = vsel %vm6569, 0, %v6655
    %v6658 = vcosq.f32.pop %v6656
    %v6659 = vsinq.f32.pop %v6656
    %vm6660 = vweird.f32 %v46
    %v6661 = vand.u32 %v6657, 3
    %vm6662 = vcmp.lt.s32.totalorder %v6661, 2
    %vm6663 = vcmp.eq.s32.totalorder %v6661, 0
    %v6664 = vxor.u32 %v6659, 2147483648
    %v6665 = vsel %vm6663, %v6658, %v6664
    %vm6666 = vcmp.eq.s32.totalorder %v6661, 2
    %v6667 = vxor.u32 %v6658, 2147483648
    %v6668 = vsel %vm6666, %v6667, %v6659
    %v6669 = vsel %vm6662, %v6665, %v6668
    %v6670 = vsel %vm6660, nan, %v6669
    %6703 = vrot.lane.b32.xlu0 %v15, 1
    %v6704 = vpop.permute.xlu0 %6703
    %6705 = vrot.lane.b32.xlu0 %v16, 1
    %v6706 = vpop.permute.xlu0 %6705
    %6707 = vrot.lane.b32.xlu0 %v17, 1
    %v6708 = vpop.permute.xlu0 %6707
    %6709 = vrot.lane.b32.xlu0 %v18, 1
    %v6710 = vpop.permute.xlu0 %6709
    %6711 = vrot.lane.b32.xlu0 %v19, 1
    %v6712 = vpop.permute.xlu0 %6711
    %6713 = vrot.lane.b32.xlu0 %v20, 1
    %v6714 = vpop.permute.xlu0 %6713
    %6715 = vrot.lane.b32.xlu0 %v21, 1
    %v6716 = vpop.permute.xlu0 %6715
    %6717 = vrot.lane.b32.xlu0 %v22, 1
    %v6718 = vpop.permute.xlu0 %6717
    %6719 = vrot.lane.b32.xlu0 %v23, 1
    %v6720 = vpop.permute.xlu0 %6719
    %6721 = vrot.lane.b32.xlu0 %v24, 1
    %v6722 = vpop.permute.xlu0 %6721
    %6723 = vrot.lane.b32.xlu0 %v25, 1
    %v6724 = vpop.permute.xlu0 %6723
    %6725 = vrot.lane.b32.xlu0 %v26, 1
    %v6726 = vpop.permute.xlu0 %6725
    %6727 = vrot.lane.b32.xlu0 %v27, 1
    %v6728 = vpop.permute.xlu0 %6727
    %6729 = vrot.lane.b32.xlu0 %v28, 1
    %v6730 = vpop.permute.xlu0 %6729
    %6731 = vrot.lane.b32.xlu0 %v29, 1
    %v6732 = vpop.permute.xlu0 %6731
    %6733 = vrot.lane.b32.xlu0 %v30, 1
    %v6734 = vpop.permute.xlu0 %6733
    %6735 = vrot.lane.b32.xlu0 %v31, 1
    %v6736 = vpop.permute.xlu0 %6735
    %6737 = vrot.lane.b32.xlu0 %v32, 1
    %v6738 = vpop.permute.xlu0 %6737
    %6739 = vrot.lane.b32.xlu0 %v33, 1
    %v6740 = vpop.permute.xlu0 %6739
    %6741 = vrot.lane.b32.xlu0 %v34, 1
    %v6742 = vpop.permute.xlu0 %6741
    %6743 = vrot.lane.b32.xlu0 %v35, 1
    %v6744 = vpop.permute.xlu0 %6743
    %6745 = vrot.lane.b32.xlu0 %v36, 1
    %v6746 = vpop.permute.xlu0 %6745
    %6747 = vrot.lane.b32.xlu0 %v37, 1
    %v6748 = vpop.permute.xlu0 %6747
    %6749 = vrot.lane.b32.xlu0 %v38, 1
    %v6750 = vpop.permute.xlu0 %6749
    %6751 = vrot.lane.b32.xlu0 %v39, 1
    %v6752 = vpop.permute.xlu0 %6751
    %6753 = vrot.lane.b32.xlu0 %v40, 1
    %v6754 = vpop.permute.xlu0 %6753
    %6755 = vrot.lane.b32.xlu0 %v41, 1
    %v6756 = vpop.permute.xlu0 %6755
    %6757 = vrot.lane.b32.xlu0 %v42, 1
    %v6758 = vpop.permute.xlu0 %6757
    %6759 = vrot.lane.b32.xlu0 %v43, 1
    %v6760 = vpop.permute.xlu0 %6759
    %6761 = vrot.lane.b32.xlu0 %v44, 1
    %v6762 = vpop.permute.xlu0 %6761
    %6763 = vrot.lane.b32.xlu0 %v45, 1
    %v6764 = vpop.permute.xlu0 %6763
    %6765 = vrot.lane.b32.xlu0 %v46, 1
    %v6766 = vpop.permute.xlu0 %6765
    %6831 = vrot.lane.b32.xlu0 %v150, 3
    %v6832 = vpop.permute.xlu0 %6831
    %6833 = vrot.lane.b32.xlu0 %v254, 3
    %v6834 = vpop.permute.xlu0 %6833
    %6835 = vrot.lane.b32.xlu0 %v358, 3
    %v6836 = vpop.permute.xlu0 %6835
    %6837 = vrot.lane.b32.xlu0 %v462, 3
    %v6838 = vpop.permute.xlu0 %6837
    %6839 = vrot.lane.b32.xlu0 %v566, 3
    %v6840 = vpop.permute.xlu0 %6839
    %6841 = vrot.lane.b32.xlu0 %v670, 3
    %v6842 = vpop.permute.xlu0 %6841
    %6843 = vrot.lane.b32.xlu0 %v774, 3
    %v6844 = vpop.permute.xlu0 %6843
    %6845 = vrot.lane.b32.xlu0 %v878, 3
    %v6846 = vpop.permute.xlu0 %6845
    %6847 = vrot.lane.b32.xlu0 %v982, 3
    %v6848 = vpop.permute.xlu0 %6847
    %6849 = vrot.lane.b32.xlu0 %v1086, 3
    %v6850 = vpop.permute.xlu0 %6849
    %6851 = vrot.lane.b32.xlu0 %v1190, 3
    %v6852 = vpop.permute.xlu0 %6851
    %6853 = vrot.lane.b32.xlu0 %v1294, 3
    %v6854 = vpop.permute.xlu0 %6853
    %6855 = vrot.lane.b32.xlu0 %v1398, 3
    %v6856 = vpop.permute.xlu0 %6855
    %6857 = vrot.lane.b32.xlu0 %v1502, 3
    %v6858 = vpop.permute.xlu0 %6857
    %6859 = vrot.lane.b32.xlu0 %v1606, 3
    %v6860 = vpop.permute.xlu0 %6859
    %6861 = vrot.lane.b32.xlu0 %v1710, 3
    %v6862 = vpop.permute.xlu0 %6861
    %6863 = vrot.lane.b32.xlu0 %v1814, 3
    %v6864 = vpop.permute.xlu0 %6863
    %6865 = vrot.lane.b32.xlu0 %v1918, 3
    %v6866 = vpop.permute.xlu0 %6865
    %6867 = vrot.lane.b32.xlu0 %v2022, 3
    %v6868 = vpop.permute.xlu0 %6867
    %6869 = vrot.lane.b32.xlu0 %v2126, 3
    %v6870 = vpop.permute.xlu0 %6869
    %6871 = vrot.lane.b32.xlu0 %v2230, 3
    %v6872 = vpop.permute.xlu0 %6871
    %6873 = vrot.lane.b32.xlu0 %v2334, 3
    %v6874 = vpop.permute.xlu0 %6873
    %6875 = vrot.lane.b32.xlu0 %v2438, 3
    %v6876 = vpop.permute.xlu0 %6875
    %6877 = vrot.lane.b32.xlu0 %v2542, 3
    %v6878 = vpop.permute.xlu0 %6877
    %6879 = vrot.lane.b32.xlu0 %v2646, 3
    %v6880 = vpop.permute.xlu0 %6879
    %6881 = vrot.lane.b32.xlu0 %v2750, 3
    %v6882 = vpop.permute.xlu0 %6881
    %6883 = vrot.lane.b32.xlu0 %v2854, 3
    %v6884 = vpop.permute.xlu0 %6883
    %6885 = vrot.lane.b32.xlu0 %v2958, 3
    %v6886 = vpop.permute.xlu0 %6885
    %6887 = vrot.lane.b32.xlu0 %v3062, 3
    %v6888 = vpop.permute.xlu0 %6887
    %6889 = vrot.lane.b32.xlu0 %v3166, 3
    %v6890 = vpop.permute.xlu0 %6889
    %6891 = vrot.lane.b32.xlu0 %v3270, 3
    %v6892 = vpop.permute.xlu0 %6891
    %6893 = vrot.lane.b32.xlu0 %v3374, 3
    %v6894 = vpop.permute.xlu0 %6893
    %6959 = vrot.lane.b32.xlu0 %v3477, 5
    %v6960 = vpop.permute.xlu0 %6959
    %6961 = vrot.lane.b32.xlu0 %v3580, 5
    %v6962 = vpop.permute.xlu0 %6961
    %6963 = vrot.lane.b32.xlu0 %v3683, 5
    %v6964 = vpop.permute.xlu0 %6963
    %6965 = vrot.lane.b32.xlu0 %v3786, 5
    %v6966 = vpop.permute.xlu0 %6965
    %6967 = vrot.lane.b32.xlu0 %v3889, 5
    %v6968 = vpop.permute.xlu0 %6967
    %6969 = vrot.lane.b32.xlu0 %v3992, 5
    %v6970 = vpop.permute.xlu0 %6969
    %6971 = vrot.lane.b32.xlu0 %v4095, 5
    %v6972 = vpop.permute.xlu0 %6971
    %6973 = vrot.lane.b32.xlu0 %v4198, 5
    %v6974 = vpop.permute.xlu0 %6973
    %6975 = vrot.lane.b32.xlu0 %v4301, 5
    %v6976 = vpop.permute.xlu0 %6975
    %6977 = vrot.lane.b32.xlu0 %v4404, 5
    %v6978 = vpop.permute.xlu0 %6977
    %6979 = vrot.lane.b32.xlu0 %v4507, 5
    %v6980 = vpop.permute.xlu0 %6979
    %6981 = vrot.lane.b32.xlu0 %v4610, 5
    %v6982 = vpop.permute.xlu0 %6981
    %6983 = vrot.lane.b32.xlu0 %v4713, 5
    %v6984 = vpop.permute.xlu0 %6983
    %6985 = vrot.lane.b32.xlu0 %v4816, 5
    %v6986 = vpop.permute.xlu0 %6985
    %6987 = vrot.lane.b32.xlu0 %v4919, 5
    %v6988 = vpop.permute.xlu0 %6987
    %6989 = vrot.lane.b32.xlu0 %v5022, 5
    %v6990 = vpop.permute.xlu0 %6989
    %6991 = vrot.lane.b32.xlu0 %v5125, 5
    %v6992 = vpop.permute.xlu0 %6991
    %6993 = vrot.lane.b32.xlu0 %v5228, 5
    %v6994 = vpop.permute.xlu0 %6993
    %6995 = vrot.lane.b32.xlu0 %v5331, 5
    %v6996 = vpop.permute.xlu0 %6995
    %6997 = vrot.lane.b32.xlu0 %v5434, 5
    %v6998 = vpop.permute.xlu0 %6997
    %6999 = vrot.lane.b32.xlu0 %v5537, 5
    %v7000 = vpop.permute.xlu0 %6999
    %7001 = vrot.lane.b32.xlu0 %v5640, 5
    %v7002 = vpop.permute.xlu0 %7001
    %7003 = vrot.lane.b32.xlu0 %v5743, 5
    %v7004 = vpop.permute.xlu0 %7003
    %7005 = vrot.lane.b32.xlu0 %v5846, 5
    %v7006 = vpop.permute.xlu0 %7005
    %7007 = vrot.lane.b32.xlu0 %v5949, 5
    %v7008 = vpop.permute.xlu0 %7007
    %7009 = vrot.lane.b32.xlu0 %v6052, 5
    %v7010 = vpop.permute.xlu0 %7009
    %7011 = vrot.lane.b32.xlu0 %v6155, 5
    %v7012 = vpop.permute.xlu0 %7011
    %7013 = vrot.lane.b32.xlu0 %v6258, 5
    %v7014 = vpop.permute.xlu0 %7013
    %7015 = vrot.lane.b32.xlu0 %v6361, 5
    %v7016 = vpop.permute.xlu0 %7015
    %7017 = vrot.lane.b32.xlu0 %v6464, 5
    %v7018 = vpop.permute.xlu0 %7017
    %7019 = vrot.lane.b32.xlu0 %v6567, 5
    %v7020 = vpop.permute.xlu0 %7019
    %7021 = vrot.lane.b32.xlu0 %v6670, 5
    %v7022 = vpop.permute.xlu0 %7021
    %vm7055 = vcmask 7168
    %v7056 = vsel %vm7055, 1.0, %v6704
    %v7057 = vsel %vm7055, 1.0, %v6706
    %v7058 = vsel %vm7055, 1.0, %v6708
    %v7059 = vsel %vm7055, 1.0, %v6710
    %v7060 = vsel %vm7055, 1.0, %v6712
    %v7061 = vsel %vm7055, 1.0, %v6714
    %v7062 = vsel %vm7055, 1.0, %v6716
    %v7063 = vsel %vm7055, 1.0, %v6718
    %v7064 = vsel %vm7055, 1.0, %v6720
    %v7065 = vsel %vm7055, 1.0, %v6722
    %v7066 = vsel %vm7055, 1.0, %v6724
    %v7067 = vsel %vm7055, 1.0, %v6726
    %v7068 = vsel %vm7055, 1.0, %v6728
    %v7069 = vsel %vm7055, 1.0, %v6730
    %v7070 = vsel %vm7055, 1.0, %v6732
    %v7071 = vsel %vm7055, 1.0, %v6734
    %v7072 = vsel %vm7055, 1.0, %v6736
    %v7073 = vsel %vm7055, 1.0, %v6738
    %v7074 = vsel %vm7055, 1.0, %v6740
    %v7075 = vsel %vm7055, 1.0, %v6742
    %v7076 = vsel %vm7055, 1.0, %v6744
    %v7077 = vsel %vm7055, 1.0, %v6746
    %v7078 = vsel %vm7055, 1.0, %v6748
    %v7079 = vsel %vm7055, 1.0, %v6750
    %v7080 = vsel %vm7055, 1.0, %v6752
    %v7081 = vsel %vm7055, 1.0, %v6754
    %v7082 = vsel %vm7055, 1.0, %v6756
    %v7083 = vsel %vm7055, 1.0, %v6758
    %v7084 = vsel %vm7055, 1.0, %v6760
    %v7085 = vsel %vm7055, 1.0, %v6762
    %v7086 = vsel %vm7055, 1.0, %v6764
    %v7087 = vsel %vm7055, 1.0, %v6766
    %vm7088 = vcmask 23552
    %v7089 = vsel %vm7088, %v7056, %v6832
    %v7090 = vsel %vm7088, %v7057, %v6834
    %v7091 = vsel %vm7088, %v7058, %v6836
    %v7092 = vsel %vm7088, %v7059, %v6838
    %v7093 = vsel %vm7088, %v7060, %v6840
    %v7094 = vsel %vm7088, %v7061, %v6842
    %v7095 = vsel %vm7088, %v7062, %v6844
    %v7096 = vsel %vm7088, %v7063, %v6846
    %v7097 = vsel %vm7088, %v7064, %v6848
    %v7098 = vsel %vm7088, %v7065, %v6850
    %v7099 = vsel %vm7088, %v7066, %v6852
    %v7100 = vsel %vm7088, %v7067, %v6854
    %v7101 = vsel %vm7088, %v7068, %v6856
    %v7102 = vsel %vm7088, %v7069, %v6858
    %v7103 = vsel %vm7088, %v7070, %v6860
    %v7104 = vsel %vm7088, %v7071, %v6862
    %v7105 = vsel %vm7088, %v7072, %v6864
    %v7106 = vsel %vm7088, %v7073, %v6866
    %v7107 = vsel %vm7088, %v7074, %v6868
    %v7108 = vsel %vm7088, %v7075, %v6870
    %v7109 = vsel %vm7088, %v7076, %v6872
    %v7110 = vsel %vm7088, %v7077, %v6874
    %v7111 = vsel %vm7088, %v7078, %v6876
    %v7112 = vsel %vm7088, %v7079, %v6878
    %v7113 = vsel %vm7088, %v7080, %v6880
    %v7114 = vsel %vm7088, %v7081, %v6882
    %v7115 = vsel %vm7088, %v7082, %v6884
    %v7116 = vsel %vm7088, %v7083, %v6886
    %v7117 = vsel %vm7088, %v7084, %v6888
    %v7118 = vsel %vm7088, %v7085, %v6890
    %v7119 = vsel %vm7088, %v7086, %v6892
    %v7120 = vsel %vm7088, %v7087, %v6894
    %vm7121 = vcmask 39936
    %v7122 = vsel %vm7121, %v7089, %v6960
    %v7123 = vsel %vm7121, %v7090, %v6962
    %v7124 = vsel %vm7121, %v7091, %v6964
    %v7125 = vsel %vm7121, %v7092, %v6966
    %v7126 = vsel %vm7121, %v7093, %v6968
    %v7127 = vsel %vm7121, %v7094, %v6970
    %v7128 = vsel %vm7121, %v7095, %v6972
    %v7129 = vsel %vm7121, %v7096, %v6974
    %v7130 = vsel %vm7121, %v7097, %v6976
    %v7131 = vsel %vm7121, %v7098, %v6978
    %v7132 = vsel %vm7121, %v7099, %v6980
    %v7133 = vsel %vm7121, %v7100, %v6982
    %v7134 = vsel %vm7121, %v7101, %v6984
    %v7135 = vsel %vm7121, %v7102, %v6986
    %v7136 = vsel %vm7121, %v7103, %v6988
    %v7137 = vsel %vm7121, %v7104, %v6990
    %v7138 = vsel %vm7121, %v7105, %v6992
    %v7139 = vsel %vm7121, %v7106, %v6994
    %v7140 = vsel %vm7121, %v7107, %v6996
    %v7141 = vsel %vm7121, %v7108, %v6998
    %v7142 = vsel %vm7121, %v7109, %v7000
    %v7143 = vsel %vm7121, %v7110, %v7002
    %v7144 = vsel %vm7121, %v7111, %v7004
    %v7145 = vsel %vm7121, %v7112, %v7006
    %v7146 = vsel %vm7121, %v7113, %v7008
    %v7147 = vsel %vm7121, %v7114, %v7010
    %v7148 = vsel %vm7121, %v7115, %v7012
    %v7149 = vsel %vm7121, %v7116, %v7014
    %v7150 = vsel %vm7121, %v7117, %v7016
    %v7151 = vsel %vm7121, %v7118, %v7018
    %v7152 = vsel %vm7121, %v7119, %v7020
    %v7153 = vsel %vm7121, %v7120, %v7022
    %vm7154 = vcmask 56320
    %v7155 = vsel %vm7154, %v7122, 0.0
    %v7156 = vsel %vm7154, %v7123, 0.0
    %v7157 = vsel %vm7154, %v7124, 0.0
    %v7158 = vsel %vm7154, %v7125, 0.0
    %v7159 = vsel %vm7154, %v7126, 0.0
    %v7160 = vsel %vm7154, %v7127, 0.0
    %v7161 = vsel %vm7154, %v7128, 0.0
    %v7162 = vsel %vm7154, %v7129, 0.0
    %v7163 = vsel %vm7154, %v7130, 0.0
    %v7164 = vsel %vm7154, %v7131, 0.0
    %v7165 = vsel %vm7154, %v7132, 0.0
    %v7166 = vsel %vm7154, %v7133, 0.0
    %v7167 = vsel %vm7154, %v7134, 0.0
    %v7168 = vsel %vm7154, %v7135, 0.0
    %v7169 = vsel %vm7154, %v7136, 0.0
    %v7170 = vsel %vm7154, %v7137, 0.0
    %v7171 = vsel %vm7154, %v7138, 0.0
    %v7172 = vsel %vm7154, %v7139, 0.0
    %v7173 = vsel %vm7154, %v7140, 0.0
    %v7174 = vsel %vm7154, %v7141, 0.0
    %v7175 = vsel %vm7154, %v7142, 0.0
    %v7176 = vsel %vm7154, %v7143, 0.0
    %v7177 = vsel %vm7154, %v7144, 0.0
    %v7178 = vsel %vm7154, %v7145, 0.0
    %v7179 = vsel %vm7154, %v7146, 0.0
    %v7180 = vsel %vm7154, %v7147, 0.0
    %v7181 = vsel %vm7154, %v7148, 0.0
    %v7182 = vsel %vm7154, %v7149, 0.0
    %v7183 = vsel %vm7154, %v7150, 0.0
    %v7184 = vsel %vm7154, %v7151, 0.0
    %v7185 = vsel %vm7154, %v7152, 0.0
    %v7186 = vsel %vm7154, %v7153, 0.0
    %v7187 = vld [vmem:[%s1] sm:$0xff]
    %v7188 = vld [vmem:[%s1 + $0x8] sm:$0xff]
    %v7189 = vld [vmem:[%s1 + $0x10] sm:$0xff]
    %vm7190 = vcmask 64512
    %v7192 = vsel %vm7190, %v7155, 0
    %v7195 = vsel %vm7190, %v7156, 0
    %v7198 = vsel %vm7190, %v7157, 0
    %v7201 = vsel %vm7190, %v7158, 0
    %v7204 = vsel %vm7190, %v7159, 0
    %v7207 = vsel %vm7190, %v7160, 0
    %v7210 = vsel %vm7190, %v7161, 0
    %v7213 = vsel %vm7190, %v7162, 0
    %v7216 = vsel %vm7190, %v7163, 0
    %v7219 = vsel %vm7190, %v7164, 0
    %v7222 = vsel %vm7190, %v7165, 0
    %v7225 = vsel %vm7190, %v7166, 0
    %v7228 = vsel %vm7190, %v7167, 0
    %v7231 = vsel %vm7190, %v7168, 0
    %v7234 = vsel %vm7190, %v7169, 0
    %v7237 = vsel %vm7190, %v7170, 0
    %v7240 = vsel %vm7190, %v7171, 0
    %v7243 = vsel %vm7190, %v7172, 0
    %v7246 = vsel %vm7190, %v7173, 0
    %v7249 = vsel %vm7190, %v7174, 0
    %v7252 = vsel %vm7190, %v7175, 0
    %v7255 = vsel %vm7190, %v7176, 0
    %v7258 = vsel %vm7190, %v7177, 0
    %v7261 = vsel %vm7190, %v7178, 0
    %v7264 = vsel %vm7190, %v7179, 0
    %v7267 = vsel %vm7190, %v7180, 0
    %v7270 = vsel %vm7190, %v7181, 0
    %v7273 = vsel %vm7190, %v7182, 0
    %v7276 = vsel %vm7190, %v7183, 0
    %v7279 = vsel %vm7190, %v7184, 0
    %v7282 = vsel %vm7190, %v7185, 0
    %v7285 = vsel %vm7190, %v7186, 0
    %7287 = vmatprep.subr.mxu0 %v7188
    %7288 = vmatpush1.msra.mxu0 %v7187
    %7289 = vmatprep.subr.mxu0 0.0
    %7290 = vmatpush1.msra.mxu0 0.0
    %7291 = vmatprep.subr.mxu0 0.0
    %7292 = vmatpush1.msra.mxu0 0.0
    %7293 = vmatprep.subr.mxu0 0.0
    %7294 = vmatpush1.msra.mxu0 0.0
    %7295 = vmatprep.subr.mxu0 0.0
    %7296 = vmatpush1.msra.mxu0 0.0
    %7297 = vmatprep.subr.mxu0 0.0
    %7298 = vmatpush1.msra.mxu0 0.0
    %7299 = vmatprep.subr.mxu0 0.0
    %7300 = vmatpush1.msra.mxu0 0.0
    %7301 = vmatprep.subr.mxu0 0.0
    %7302 = vmatpush1.msra.mxu0 0.0
    %7303 = vmatprep.subr.mxu0 0.0
    %7304 = vmatpush1.msra.mxu0 0.0
    %7305 = vmatprep.subr.mxu0 0.0
    %7306 = vmatpush1.msra.mxu0 0.0
    %7307 = vmatprep.subr.mxu0 0.0
    %7308 = vmatpush1.msra.mxu0 0.0
    %7309 = vmatprep.subr.mxu0 0.0
    %7310 = vmatpush1.msra.mxu0 0.0
    %7311 = vmatprep.subr.mxu0 0.0
    %7312 = vmatpush1.msra.mxu0 0.0
    %7313 = vmatprep.subr.mxu0 0.0
    %7314 = vmatpush1.msra.mxu0 0.0
    %7315 = vmatprep.subr.mxu0 0.0
    %7316 = vmatpush1.msra.mxu0 0.0
    %7317 = vmatprep.subr.mxu0 0.0
    %7318 = vmatpush1.msra.mxu0 0.0
    %7319 = vmatprep.subr.mxu0 0.0
    %7320 = vmatpush1.msra.mxu0 0.0
    %7321 = vmatprep.subr.mxu0 0.0
    %7322 = vmatpush1.msra.mxu0 0.0
    %7323 = vmatprep.subr.mxu0 0.0
    %7324 = vmatpush1.msra.mxu0 0.0
    %7325 = vmatprep.subr.mxu0 0.0
    %7326 = vmatpush1.msra.mxu0 0.0
    %7327 = vmatprep.subr.mxu0 0.0
    %7328 = vmatpush1.msra.mxu0 0.0
    %7329 = vmatprep.subr.mxu0 0.0
    %7330 = vmatpush1.msra.mxu0 0.0
    %7331 = vmatprep.subr.mxu0 0.0
    %7332 = vmatpush1.msra.mxu0 0.0
    %7333 = vmatprep.subr.mxu0 0.0
    %7334 = vmatpush1.msra.mxu0 0.0
    %7335 = vmatprep.subr.mxu0 0.0
    %7336 = vmatpush1.msra.mxu0 0.0
    %7337 = vmatprep.subr.mxu0 0.0
    %7338 = vmatpush1.msra.mxu0 0.0
    %7339 = vmatprep.subr.mxu0 0.0
    %7340 = vmatpush1.msra.mxu0 0.0
    %7341 = vmatprep.subr.mxu0 0.0
    %7342 = vmatpush1.msra.mxu0 0.0
    %7343 = vmatprep.subr.mxu0 0.0
    %7344 = vmatpush1.msra.mxu0 0.0
    %7345 = vmatprep.subr.mxu0 0.0
    %7346 = vmatpush1.msra.mxu0 0.0
    %7347 = vmatprep.subr.mxu0 0.0
    %7348 = vmatpush1.msra.mxu0 0.0
    %7349 = vmatprep.subr.mxu0 0.0
    %7350 = vmatpush1.msra.mxu0 0.0
    %7351 = vmatprep.mubr.f32.mxu0 0.0
    %7352 = vmatmul.mubr.f32.gmra.mrb[0].mxu0 %v7192
    %v7353 = vpop.f32.mrb[0].mxu0
    %v7354 = vadd.f32 0.0, %v7353
    %v7355 = vpop.f32.mrb[0].mxu0
    %v7356 = vadd.f32 0.0, %v7355
    %7357 = vmatprep.mubr.f32.mxu0 0.0
    %7358 = vmatmul.mubr.f32.gmra.mrb[0].mxu0 %v7195
    %v7359 = vpop.f32.mrb[0].mxu0
    %v7360 = vadd.f32 0.0, %v7359
    %v7361 = vpop.f32.mrb[0].mxu0
    %v7362 = vadd.f32 0.0, %v7361
    %7363 = vmatprep.mubr.f32.mxu0 0.0
    %7364 = vmatmul.mubr.f32.gmra.mrb[0].mxu0 %v7198
    %v7365 = vpop.f32.mrb[0].mxu0
    %v7366 = vadd.f32 0.0, %v7365
    %v7367 = vpop.f32.mrb[0].mxu0
    %v7368 = vadd.f32 0.0, %v7367
    %7369 = vmatprep.mubr.f32.mxu0 0.0
    %7370 = vmatmul.mubr.f32.gmra.mrb[0].mxu0 %v7201
    %v7371 = vpop.f32.mrb[0].mxu0
    %v7372 = vadd.f32 0.0, %v7371
    %v7373 = vpop.f32.mrb[0].mxu0
    %v7374 = vadd.f32 0.0, %v7373
    %7375 = vmatprep.mubr.f32.mxu0 0.0
    %7376 = vmatmul.mubr.f32.gmra.mrb[0].mxu0 %v7204
    %v7377 = vpop.f32.mrb[0].mxu0
    %v7378 = vadd.f32 0.0, %v7377
    %v7379 = vpop.f32.mrb[0].mxu0
    %v7380 = vadd.f32 0.0, %v7379
    %7381 = vmatprep.mubr.f32.mxu0 0.0
    %7382 = vmatmul.mubr.f32.gmra.mrb[0].mxu0 %v7207
    %v7383 = vpop.f32.mrb[0].mxu0
    %v7384 = vadd.f32 0.0, %v7383
    %v7385 = vpop.f32.mrb[0].mxu0
    %v7386 = vadd.f32 0.0, %v7385
    %7387 = vmatprep.mubr.f32.mxu0 0.0
    %7388 = vmatmul.mubr.f32.gmra.mrb[0].mxu0 %v7210
    %v7389 = vpop.f32.mrb[0].mxu0
    %v7390 = vadd.f32 0.0, %v7389
    %v7391 = vpop.f32.mrb[0].mxu0
    %v7392 = vadd.f32 0.0, %v7391
    %7393 = vmatprep.mubr.f32.mxu0 0.0
    %7394 = vmatmul.mubr.f32.gmra.mrb[0].mxu0 %v7213
    %v7395 = vpop.f32.mrb[0].mxu0
    %v7396 = vadd.f32 0.0, %v7395
    %v7397 = vpop.f32.mrb[0].mxu0
    %v7398 = vadd.f32 0.0, %v7397
    %7399 = vmatprep.mubr.f32.mxu0 0.0
    %7400 = vmatmul.mubr.f32.gmra.mrb[0].mxu0 %v7216
    %v7401 = vpop.f32.mrb[0].mxu0
    %v7402 = vadd.f32 0.0, %v7401
    %v7403 = vpop.f32.mrb[0].mxu0
    %v7404 = vadd.f32 0.0, %v7403
    %7405 = vmatprep.mubr.f32.mxu0 0.0
    %7406 = vmatmul.mubr.f32.gmra.mrb[0].mxu0 %v7219
    %v7407 = vpop.f32.mrb[0].mxu0
    %v7408 = vadd.f32 0.0, %v7407
    %v7409 = vpop.f32.mrb[0].mxu0
    %v7410 = vadd.f32 0.0, %v7409
    %7411 = vmatprep.mubr.f32.mxu0 0.0
    %7412 = vmatmul.mubr.f32.gmra.mrb[0].mxu0 %v7222
    %v7413 = vpop.f32.mrb[0].mxu0
    %v7414 = vadd.f32 0.0, %v7413
    %v7415 = vpop.f32.mrb[0].mxu0
    %v7416 = vadd.f32 0.0, %v7415
    %7417 = vmatprep.mubr.f32.mxu0 0.0
    %7418 = vmatmul.mubr.f32.gmra.mrb[0].mxu0 %v7225
    %v7419 = vpop.f32.mrb[0].mxu0
    %v7420 = vadd.f32 0.0, %v7419
    %v7421 = vpop.f32.mrb[0].mxu0
    %v7422 = vadd.f32 0.0, %v7421
    %7423 = vmatprep.mubr.f32.mxu0 0.0
    %7424 = vmatmul.mubr.f32.gmra.mrb[0].mxu0 %v7228
    %v7425 = vpop.f32.mrb[0].mxu0
    %v7426 = vadd.f32 0.0, %v7425
    %v7427 = vpop.f32.mrb[0].mxu0
    %v7428 = vadd.f32 0.0, %v7427
    %7429 = vmatprep.mubr.f32.mxu0 0.0
    %7430 = vmatmul.mubr.f32.gmra.mrb[0].mxu0 %v7231
    %v7431 = vpop.f32.mrb[0].mxu0
    %v7432 = vadd.f32 0.0, %v7431
    %v7433 = vpop.f32.mrb[0].mxu0
    %v7434 = vadd.f32 0.0, %v7433
    %7435 = vmatprep.mubr.f32.mxu0 0.0
    %7436 = vmatmul.mubr.f32.gmra.mrb[0].mxu0 %v7234
    %v7437 = vpop.f32.mrb[0].mxu0
    %v7438 = vadd.f32 0.0, %v7437
    %v7439 = vpop.f32.mrb[0].mxu0
    %v7440 = vadd.f32 0.0, %v7439
    %7441 = vmatprep.mubr.f32.mxu0 0.0
    %7442 = vmatmul.mubr.f32.gmra.mrb[0].mxu0 %v7237
    %v7443 = vpop.f32.mrb[0].mxu0
    %v7444 = vadd.f32 0.0, %v7443
    %v7445 = vpop.f32.mrb[0].mxu0
    %v7446 = vadd.f32 0.0, %v7445
    %7447 = vmatprep.mubr.f32.mxu0 0.0
    %7448 = vmatmul.mubr.f32.gmra.mrb[0].mxu0 %v7240
    %v7449 = vpop.f32.mrb[0].mxu0
    %v7450 = vadd.f32 0.0, %v7449
    %v7451 = vpop.f32.mrb[0].mxu0
    %v7452 = vadd.f32 0.0, %v7451
    %7453 = vmatprep.mubr.f32.mxu0 0.0
    %7454 = vmatmul.mubr.f32.gmra.mrb[0].mxu0 %v7243
    %v7455 = vpop.f32.mrb[0].mxu0
    %v7456 = vadd.f32 0.0, %v7455
    %v7457 = vpop.f32.mrb[0].mxu0
    %v7458 = vadd.f32 0.0, %v7457
    %7459 = vmatprep.mubr.f32.mxu0 0.0
    %7460 = vmatmul.mubr.f32.gmra.mrb[0].mxu0 %v7246
    %v7461 = vpop.f32.mrb[0].mxu0
    %v7462 = vadd.f32 0.0, %v7461
    %v7463 = vpop.f32.mrb[0].mxu0
    %v7464 = vadd.f32 0.0, %v7463
    %7465 = vmatprep.mubr.f32.mxu0 0.0
    %7466 = vmatmul.mubr.f32.gmra.mrb[0].mxu0 %v7249
    %v7467 = vpop.f32.mrb[0].mxu0
    %v7468 = vadd.f32 0.0, %v7467
    %v7469 = vpop.f32.mrb[0].mxu0
    %v7470 = vadd.f32 0.0, %v7469
    %7471 = vmatprep.mubr.f32.mxu0 0.0
    %7472 = vmatmul.mubr.f32.gmra.mrb[0].mxu0 %v7252
    %v7473 = vpop.f32.mrb[0].mxu0
    %v7474 = vadd.f32 0.0, %v7473
    %v7475 = vpop.f32.mrb[0].mxu0
    %v7476 = vadd.f32 0.0, %v7475
    %7477 = vmatprep.mubr.f32.mxu0 0.0
    %7478 = vmatmul.mubr.f32.gmra.mrb[0].mxu0 %v7255
    %v7479 = vpop.f32.mrb[0].mxu0
    %v7480 = vadd.f32 0.0, %v7479
    %v7481 = vpop.f32.mrb[0].mxu0
    %v7482 = vadd.f32 0.0, %v7481
    %7483 = vmatprep.mubr.f32.mxu0 0.0
    %7484 = vmatmul.mubr.f32.gmra.mrb[0].mxu0 %v7258
    %v7485 = vpop.f32.mrb[0].mxu0
    %v7486 = vadd.f32 0.0, %v7485
    %v7487 = vpop.f32.mrb[0].mxu0
    %v7488 = vadd.f32 0.0, %v7487
    %7489 = vmatprep.mubr.f32.mxu0 0.0
    %7490 = vmatmul.mubr.f32.gmra.mrb[0].mxu0 %v7261
    %v7491 = vpop.f32.mrb[0].mxu0
    %v7492 = vadd.f32 0.0, %v7491
    %v7493 = vpop.f32.mrb[0].mxu0
    %v7494 = vadd.f32 0.0, %v7493
    %7495 = vmatprep.mubr.f32.mxu0 0.0
    %7496 = vmatmul.mubr.f32.gmra.mrb[0].mxu0 %v7264
    %v7497 = vpop.f32.mrb[0].mxu0
    %v7498 = vadd.f32 0.0, %v7497
    %v7499 = vpop.f32.mrb[0].mxu0
    %v7500 = vadd.f32 0.0, %v7499
    %7501 = vmatprep.mubr.f32.mxu0 0.0
    %7502 = vmatmul.mubr.f32.gmra.mrb[0].mxu0 %v7267
    %v7503 = vpop.f32.mrb[0].mxu0
    %v7504 = vadd.f32 0.0, %v7503
    %v7505 = vpop.f32.mrb[0].mxu0
    %v7506 = vadd.f32 0.0, %v7505
    %7507 = vmatprep.mubr.f32.mxu0 0.0
    %7508 = vmatmul.mubr.f32.gmra.mrb[0].mxu0 %v7270
    %v7509 = vpop.f32.mrb[0].mxu0
    %v7510 = vadd.f32 0.0, %v7509
    %v7511 = vpop.f32.mrb[0].mxu0
    %v7512 = vadd.f32 0.0, %v7511
    %7513 = vmatprep.mubr.f32.mxu0 0.0
    %7514 = vmatmul.mubr.f32.gmra.mrb[0].mxu0 %v7273
    %v7515 = vpop.f32.mrb[0].mxu0
    %v7516 = vadd.f32 0.0, %v7515
    %v7517 = vpop.f32.mrb[0].mxu0
    %v7518 = vadd.f32 0.0, %v7517
    %7519 = vmatprep.mubr.f32.mxu0 0.0
    %7520 = vmatmul.mubr.f32.gmra.mrb[0].mxu0 %v7276
    %v7521 = vpop.f32.mrb[0].mxu0
    %v7522 = vadd.f32 0.0, %v7521
    %v7523 = vpop.f32.mrb[0].mxu0
    %v7524 = vadd.f32 0.0, %v7523
    %7525 = vmatprep.mubr.f32.mxu0 0.0
    %7526 = vmatmul.mubr.f32.gmra.mrb[0].mxu0 %v7279
    %v7527 = vpop.f32.mrb[0].mxu0
    %v7528 = vadd.f32 0.0, %v7527
    %v7529 = vpop.f32.mrb[0].mxu0
    %v7530 = vadd.f32 0.0, %v7529
    %7531 = vmatprep.mubr.f32.mxu0 0.0
    %7532 = vmatmul.mubr.f32.gmra.mrb[0].mxu0 %v7282
    %v7533 = vpop.f32.mrb[0].mxu0
    %v7534 = vadd.f32 0.0, %v7533
    %v7535 = vpop.f32.mrb[0].mxu0
    %v7536 = vadd.f32 0.0, %v7535
    %7537 = vmatprep.mubr.f32.mxu0 0.0
    %7538 = vmatmul.mubr.f32.gmra.mrb[0].mxu0 %v7285
    %v7539 = vpop.f32.mrb[0].mxu0
    %v7540 = vadd.f32 0.0, %v7539
    %v7541 = vpop.f32.mrb[0].mxu0
    %v7542 = vadd.f32 0.0, %v7541
    %7543 = vdwg.mxu0
    %7544 = vmatprep.subr.mxu0 0.0
    %7545 = vmatpush1.msra.mxu0 %v7189
    %7546 = vmatprep.subr.mxu0 0.0
    %7547 = vmatpush1.msra.mxu0 0.0
    %7548 = vmatprep.subr.mxu0 0.0
    %7549 = vmatpush1.msra.mxu0 0.0
    %7550 = vmatprep.subr.mxu0 0.0
    %7551 = vmatpush1.msra.mxu0 0.0
    %7552 = vmatprep.subr.mxu0 0.0
    %7553 = vmatpush1.msra.mxu0 0.0
    %7554 = vmatprep.subr.mxu0 0.0
    %7555 = vmatpush1.msra.mxu0 0.0
    %7556 = vmatprep.subr.mxu0 0.0
    %7557 = vmatpush1.msra.mxu0 0.0
    %7558 = vmatprep.subr.mxu0 0.0
    %7559 = vmatpush1.msra.mxu0 0.0
    %7560 = vmatprep.subr.mxu0 0.0
    %7561 = vmatpush1.msra.mxu0 0.0
    %7562 = vmatprep.subr.mxu0 0.0
    %7563 = vmatpush1.msra.mxu0 0.0
    %7564 = vmatprep.subr.mxu0 0.0
    %7565 = vmatpush1.msra.mxu0 0.0
    %7566 = vmatprep.subr.mxu0 0.0
    %7567 = vmatpush1.msra.mxu0 0.0
    %7568 = vmatprep.subr.mxu0 0.0
    %7569 = vmatpush1.msra.mxu0 0.0
    %7570 = vmatprep.subr.mxu0 0.0
    %7571 = vmatpush1.msra.mxu0 0.0
    %7572 = vmatprep.subr.mxu0 0.0
    %7573 = vmatpush1.msra.mxu0 0.0
    %7574 = vmatprep.subr.mxu0 0.0
    %7575 = vmatpush1.msra.mxu0 0.0
    %7576 = vmatprep.subr.mxu0 0.0
    %7577 = vmatpush1.msra.mxu0 0.0
    %7578 = vmatprep.subr.mxu0 0.0
    %7579 = vmatpush1.msra.mxu0 0.0
    %7580 = vmatprep.subr.mxu0 0.0
    %7581 = vmatpush1.msra.mxu0 0.0
    %7582 = vmatprep.subr.mxu0 0.0
    %7583 = vmatpush1.msra.mxu0 0.0
    %7584 = vmatprep.subr.mxu0 0.0
    %7585 = vmatpush1.msra.mxu0 0.0
    %7586 = vmatprep.subr.mxu0 0.0
    %7587 = vmatpush1.msra.mxu0 0.0
    %7588 = vmatprep.subr.mxu0 0.0
    %7589 = vmatpush1.msra.mxu0 0.0
    %7590 = vmatprep.subr.mxu0 0.0
    %7591 = vmatpush1.msra.mxu0 0.0
    %7592 = vmatprep.subr.mxu0 0.0
    %7593 = vmatpush1.msra.mxu0 0.0
    %7594 = vmatprep.subr.mxu0 0.0
    %7595 = vmatpush1.msra.mxu0 0.0
    %7596 = vmatprep.subr.mxu0 0.0
    %7597 = vmatpush1.msra.mxu0 0.0
    %7598 = vmatprep.subr.mxu0 0.0
    %7599 = vmatpush1.msra.mxu0 0.0
    %7600 = vmatprep.subr.mxu0 0.0
    %7601 = vmatpush1.msra.mxu0 0.0
    %7602 = vmatprep.subr.mxu0 0.0
    %7603 = vmatpush1.msra.mxu0 0.0
    %7604 = vmatprep.subr.mxu0 0.0
    %7605 = vmatpush1.msra.mxu0 0.0
    %7606 = vmatprep.subr.mxu0 0.0
    %7607 = vmatpush1.msra.mxu0 0.0
    %7608 = vmatprep.mubr.f32.mxu0 0.0
    %7609 = vmatmul.mubr.f32.gmra.mrb[0].mxu0 %v7192
    %v7610 = vpop.f32.mrb[0].mxu0
    %v7611 = vadd.f32 0.0, %v7610
    %v7612 = vpop.f32.mrb[0].mxu0
    %7613 = vmatprep.mubr.f32.mxu0 0.0
    %7614 = vmatmul.mubr.f32.gmra.mrb[0].mxu0 %v7195
    %v7615 = vpop.f32.mrb[0].mxu0
    %v7616 = vadd.f32 0.0, %v7615
    %v7617 = vpop.f32.mrb[0].mxu0
    %7618 = vmatprep.mubr.f32.mxu0 0.0
    %7619 = vmatmul.mubr.f32.gmra.mrb[0].mxu0 %v7198
    %v7620 = vpop.f32.mrb[0].mxu0
    %v7621 = vadd.f32 0.0, %v7620
    %v7622 = vpop.f32.mrb[0].mxu0
    %7623 = vmatprep.mubr.f32.mxu0 0.0
    %7624 = vmatmul.mubr.f32.gmra.mrb[0].mxu0 %v7201
    %v7625 = vpop.f32.mrb[0].mxu0
    %v7626 = vadd.f32 0.0, %v7625
    %v7627 = vpop.f32.mrb[0].mxu0
    %7628 = vmatprep.mubr.f32.mxu0 0.0
    %7629 = vmatmul.mubr.f32.gmra.mrb[0].mxu0 %v7204
    %v7630 = vpop.f32.mrb[0].mxu0
    %v7631 = vadd.f32 0.0, %v7630
    %v7632 = vpop.f32.mrb[0].mxu0
    %7633 = vmatprep.mubr.f32.mxu0 0.0
    %7634 = vmatmul.mubr.f32.gmra.mrb[0].mxu0 %v7207
    %v7635 = vpop.f32.mrb[0].mxu0
    %v7636 = vadd.f32 0.0, %v7635
    %v7637 = vpop.f32.mrb[0].mxu0
    %7638 = vmatprep.mubr.f32.mxu0 0.0
    %7639 = vmatmul.mubr.f32.gmra.mrb[0].mxu0 %v7210
    %v7640 = vpop.f32.mrb[0].mxu0
    %v7641 = vadd.f32 0.0, %v7640
    %v7642 = vpop.f32.mrb[0].mxu0
    %7643 = vmatprep.mubr.f32.mxu0 0.0
    %7644 = vmatmul.mubr.f32.gmra.mrb[0].mxu0 %v7213
    %v7645 = vpop.f32.mrb[0].mxu0
    %v7646 = vadd.f32 0.0, %v7645
    %v7647 = vpop.f32.mrb[0].mxu0
    %7648 = vmatprep.mubr.f32.mxu0 0.0
    %7649 = vmatmul.mubr.f32.gmra.mrb[0].mxu0 %v7216
    %v7650 = vpop.f32.mrb[0].mxu0
    %v7651 = vadd.f32 0.0, %v7650
    %v7652 = vpop.f32.mrb[0].mxu0
    %7653 = vmatprep.mubr.f32.mxu0 0.0
    %7654 = vmatmul.mubr.f32.gmra.mrb[0].mxu0 %v7219
    %v7655 = vpop.f32.mrb[0].mxu0
    %v7656 = vadd.f32 0.0, %v7655
    %v7657 = vpop.f32.mrb[0].mxu0
    %7658 = vmatprep.mubr.f32.mxu0 0.0
    %7659 = vmatmul.mubr.f32.gmra.mrb[0].mxu0 %v7222
    %v7660 = vpop.f32.mrb[0].mxu0
    %v7661 = vadd.f32 0.0, %v7660
    %v7662 = vpop.f32.mrb[0].mxu0
    %7663 = vmatprep.mubr.f32.mxu0 0.0
    %7664 = vmatmul.mubr.f32.gmra.mrb[0].mxu0 %v7225
    %v7665 = vpop.f32.mrb[0].mxu0
    %v7666 = vadd.f32 0.0, %v7665
    %v7667 = vpop.f32.mrb[0].mxu0
    %7668 = vmatprep.mubr.f32.mxu0 0.0
    %7669 = vmatmul.mubr.f32.gmra.mrb[0].mxu0 %v7228
    %v7670 = vpop.f32.mrb[0].mxu0
    %v7671 = vadd.f32 0.0, %v7670
    %v7672 = vpop.f32.mrb[0].mxu0
    %7673 = vmatprep.mubr.f32.mxu0 0.0
    %7674 = vmatmul.mubr.f32.gmra.mrb[0].mxu0 %v7231
    %v7675 = vpop.f32.mrb[0].mxu0
    %v7676 = vadd.f32 0.0, %v7675
    %v7677 = vpop.f32.mrb[0].mxu0
    %7678 = vmatprep.mubr.f32.mxu0 0.0
    %7679 = vmatmul.mubr.f32.gmra.mrb[0].mxu0 %v7234
    %v7680 = vpop.f32.mrb[0].mxu0
    %v7681 = vadd.f32 0.0, %v7680
    %v7682 = vpop.f32.mrb[0].mxu0
    %7683 = vmatprep.mubr.f32.mxu0 0.0
    %7684 = vmatmul.mubr.f32.gmra.mrb[0].mxu0 %v7237
    %v7685 = vpop.f32.mrb[0].mxu0
    %v7686 = vadd.f32 0.0, %v7685
    %v7687 = vpop.f32.mrb[0].mxu0
    %7688 = vmatprep.mubr.f32.mxu0 0.0
    %7689 = vmatmul.mubr.f32.gmra.mrb[0].mxu0 %v7240
    %v7690 = vpop.f32.mrb[0].mxu0
    %v7691 = vadd.f32 0.0, %v7690
    %v7692 = vpop.f32.mrb[0].mxu0
    %7693 = vmatprep.mubr.f32.mxu0 0.0
    %7694 = vmatmul.mubr.f32.gmra.mrb[0].mxu0 %v7243
    %v7695 = vpop.f32.mrb[0].mxu0
    %v7696 = vadd.f32 0.0, %v7695
    %v7697 = vpop.f32.mrb[0].mxu0
    %7698 = vmatprep.mubr.f32.mxu0 0.0
    %7699 = vmatmul.mubr.f32.gmra.mrb[0].mxu0 %v7246
    %v7700 = vpop.f32.mrb[0].mxu0
    %v7701 = vadd.f32 0.0, %v7700
    %v7702 = vpop.f32.mrb[0].mxu0
    %7703 = vmatprep.mubr.f32.mxu0 0.0
    %7704 = vmatmul.mubr.f32.gmra.mrb[0].mxu0 %v7249
    %v7705 = vpop.f32.mrb[0].mxu0
    %v7706 = vadd.f32 0.0, %v7705
    %v7707 = vpop.f32.mrb[0].mxu0
    %7708 = vmatprep.mubr.f32.mxu0 0.0
    %7709 = vmatmul.mubr.f32.gmra.mrb[0].mxu0 %v7252
    %v7710 = vpop.f32.mrb[0].mxu0
    %v7711 = vadd.f32 0.0, %v7710
    %v7712 = vpop.f32.mrb[0].mxu0
    %7713 = vmatprep.mubr.f32.mxu0 0.0
    %7714 = vmatmul.mubr.f32.gmra.mrb[0].mxu0 %v7255
    %v7715 = vpop.f32.mrb[0].mxu0
    %v7716 = vadd.f32 0.0, %v7715
    %v7717 = vpop.f32.mrb[0].mxu0
    %7718 = vmatprep.mubr.f32.mxu0 0.0
    %7719 = vmatmul.mubr.f32.gmra.mrb[0].mxu0 %v7258
    %v7720 = vpop.f32.mrb[0].mxu0
    %v7721 = vadd.f32 0.0, %v7720
    %v7722 = vpop.f32.mrb[0].mxu0
    %7723 = vmatprep.mubr.f32.mxu0 0.0
    %7724 = vmatmul.mubr.f32.gmra.mrb[0].mxu0 %v7261
    %v7725 = vpop.f32.mrb[0].mxu0
    %v7726 = vadd.f32 0.0, %v7725
    %v7727 = vpop.f32.mrb[0].mxu0
    %7728 = vmatprep.mubr.f32.mxu0 0.0
    %7729 = vmatmul.mubr.f32.gmra.mrb[0].mxu0 %v7264
    %v7730 = vpop.f32.mrb[0].mxu0
    %v7731 = vadd.f32 0.0, %v7730
    %v7732 = vpop.f32.mrb[0].mxu0
    %7733 = vmatprep.mubr.f32.mxu0 0.0
    %7734 = vmatmul.mubr.f32.gmra.mrb[0].mxu0 %v7267
    %v7735 = vpop.f32.mrb[0].mxu0
    %v7736 = vadd.f32 0.0, %v7735
    %v7737 = vpop.f32.mrb[0].mxu0
    %7738 = vmatprep.mubr.f32.mxu0 0.0
    %7739 = vmatmul.mubr.f32.gmra.mrb[0].mxu0 %v7270
    %v7740 = vpop.f32.mrb[0].mxu0
    %v7741 = vadd.f32 0.0, %v7740
    %v7742 = vpop.f32.mrb[0].mxu0
    %7743 = vmatprep.mubr.f32.mxu0 0.0
    %7744 = vmatmul.mubr.f32.gmra.mrb[0].mxu0 %v7273
    %v7745 = vpop.f32.mrb[0].mxu0
    %v7746 = vadd.f32 0.0, %v7745
    %v7747 = vpop.f32.mrb[0].mxu0
    %7748 = vmatprep.mubr.f32.mxu0 0.0
    %7749 = vmatmul.mubr.f32.gmra.mrb[0].mxu0 %v7276
    %v7750 = vpop.f32.mrb[0].mxu0
    %v7751 = vadd.f32 0.0, %v7750
    %v7752 = vpop.f32.mrb[0].mxu0
    %7753 = vmatprep.mubr.f32.mxu0 0.0
    %7754 = vmatmul.mubr.f32.gmra.mrb[0].mxu0 %v7279
    %v7755 = vpop.f32.mrb[0].mxu0
    %v7756 = vadd.f32 0.0, %v7755
    %v7757 = vpop.f32.mrb[0].mxu0
    %7758 = vmatprep.mubr.f32.mxu0 0.0
    %7759 = vmatmul.mubr.f32.gmra.mrb[0].mxu0 %v7282
    %v7760 = vpop.f32.mrb[0].mxu0
    %v7761 = vadd.f32 0.0, %v7760
    %v7762 = vpop.f32.mrb[0].mxu0
    %7763 = vmatprep.mubr.f32.mxu0 0.0
    %7764 = vmatmul.mubr.f32.gmra.mrb[0].mxu0 %v7285
    %v7765 = vpop.f32.mrb[0].mxu0
    %v7766 = vadd.f32 0.0, %v7765
    %v7767 = vpop.f32.mrb[0].mxu0
    %7768 = vdwg.mxu0
    %v7769 = vmul.f32 %v7354, %v7356
    %v7770 = vmul.f32 %v7360, %v7362
    %v7771 = vmul.f32 %v7366, %v7368
    %v7772 = vmul.f32 %v7372, %v7374
    %v7773 = vmul.f32 %v7378, %v7380
    %v7774 = vmul.f32 %v7384, %v7386
    %v7775 = vmul.f32 %v7390, %v7392
    %v7776 = vmul.f32 %v7396, %v7398
    %v7777 = vmul.f32 %v7402, %v7404
    %v7778 = vmul.f32 %v7408, %v7410
    %v7779 = vmul.f32 %v7414, %v7416
    %v7780 = vmul.f32 %v7420, %v7422
    %v7781 = vmul.f32 %v7426, %v7428
    %v7782 = vmul.f32 %v7432, %v7434
    %v7783 = vmul.f32 %v7438, %v7440
    %v7784 = vmul.f32 %v7444, %v7446
    %v7785 = vmul.f32 %v7450, %v7452
    %v7786 = vmul.f32 %v7456, %v7458
    %v7787 = vmul.f32 %v7462, %v7464
    %v7788 = vmul.f32 %v7468, %v7470
    %v7789 = vmul.f32 %v7474, %v7476
    %v7790 = vmul.f32 %v7480, %v7482
    %v7791 = vmul.f32 %v7486, %v7488
    %v7792 = vmul.f32 %v7492, %v7494
    %v7793 = vmul.f32 %v7498, %v7500
    %v7794 = vmul.f32 %v7504, %v7506
    %v7795 = vmul.f32 %v7510, %v7512
    %v7796 = vmul.f32 %v7516, %v7518
    %v7797 = vmul.f32 %v7522, %v7524
    %v7798 = vmul.f32 %v7528, %v7530
    %v7799 = vmul.f32 %v7534, %v7536
    %v7800 = vmul.f32 %v7540, %v7542
    %v7801 = vmul.f32 %v7769, %v7611
    %v7802 = vmul.f32 %v7770, %v7616
    %v7803 = vmul.f32 %v7771, %v7621
    %v7804 = vmul.f32 %v7772, %v7626
    %v7805 = vmul.f32 %v7773, %v7631
    %v7806 = vmul.f32 %v7774, %v7636
    %v7807 = vmul.f32 %v7775, %v7641
    %v7808 = vmul.f32 %v7776, %v7646
    %v7809 = vmul.f32 %v7777, %v7651
    %v7810 = vmul.f32 %v7778, %v7656
    %v7811 = vmul.f32 %v7779, %v7661
    %v7812 = vmul.f32 %v7780, %v7666
    %v7813 = vmul.f32 %v7781, %v7671
    %v7814 = vmul.f32 %v7782, %v7676
    %v7815 = vmul.f32 %v7783, %v7681
    %v7816 = vmul.f32 %v7784, %v7686
    %v7817 = vmul.f32 %v7785, %v7691
    %v7818 = vmul.f32 %v7786, %v7696
    %v7819 = vmul.f32 %v7787, %v7701
    %v7820 = vmul.f32 %v7788, %v7706
    %v7821 = vmul.f32 %v7789, %v7711
    %v7822 = vmul.f32 %v7790, %v7716
    %v7823 = vmul.f32 %v7791, %v7721
    %v7824 = vmul.f32 %v7792, %v7726
    %v7825 = vmul.f32 %v7793, %v7731
    %v7826 = vmul.f32 %v7794, %v7736
    %v7827 = vmul.f32 %v7795, %v7741
    %v7828 = vmul.f32 %v7796, %v7746
    %v7829 = vmul.f32 %v7797, %v7751
    %v7830 = vmul.f32 %v7798, %v7756
    %v7831 = vmul.f32 %v7799, %v7761
    %v7832 = vmul.f32 %v7800, %v7766
    %v7833 = vld [vmem:[%s2] sm:$0xff]
    %v7834 = vld [vmem:[%s2 + $0x8] sm:$0xff]
    %v7835 = vld [vmem:[%s2 + $0x10] sm:$0xff]
    %v7836 = vld [vmem:[%s2 + $0x18] sm:$0xff]
    %v7837 = vld [vmem:[%s2 + $0x20] sm:$0xff]
    %v7838 = vld [vmem:[%s2 + $0x28] sm:$0xff]
    %v7839 = vld [vmem:[%s2 + $0x30] sm:$0xff]
    %v7840 = vld [vmem:[%s2 + $0x38] sm:$0xff]
    %v7841 = vld [vmem:[%s2 + $0x40] sm:$0xff]
    %v7842 = vld [vmem:[%s2 + $0x48] sm:$0xff]
    %v7843 = vld [vmem:[%s2 + $0x50] sm:$0xff]
    %v7844 = vld [vmem:[%s2 + $0x58] sm:$0xff]
    %v7845 = vld [vmem:[%s2 + $0x60] sm:$0xff]
    %v7846 = vld [vmem:[%s2 + $0x68] sm:$0xff]
    %v7847 = vld [vmem:[%s2 + $0x70] sm:$0xff]
    %v7848 = vld [vmem:[%s2 + $0x78] sm:$0xff]
    %7849 = vmatprep.subr.mxu0 0.0
    %7850 = vmatpush1.msra.mxu0 %v7833
    %7851 = vmatprep.subr.mxu0 0.0
    %7852 = vmatpush1.msra.mxu0 %v7834
    %7853 = vmatprep.subr.mxu0 0.0
    %7854 = vmatpush1.msra.mxu0 %v7835
    %7855 = vmatprep.subr.mxu0 0.0
    %7856 = vmatpush1.msra.mxu0 %v7836
    %7857 = vmatprep.subr.mxu0 0.0
    %7858 = vmatpush1.msra.mxu0 %v7837
    %7859 = vmatprep.subr.mxu0 0.0
    %7860 = vmatpush1.msra.mxu0 %v7838
    %7861 = vmatprep.subr.mxu0 0.0
    %7862 = vmatpush1.msra.mxu0 %v7839
    %7863 = vmatprep.subr.mxu0 0.0
    %7864 = vmatpush1.msra.mxu0 %v7840
    %7865 = vmatprep.subr.mxu0 0.0
    %7866 = vmatpush1.msra.mxu0 %v7841
    %7867 = vmatprep.subr.mxu0 0.0
    %7868 = vmatpush1.msra.mxu0 %v7842
    %7869 = vmatprep.subr.mxu0 0.0
    %7870 = vmatpush1.msra.mxu0 %v7843
    %7871 = vmatprep.subr.mxu0 0.0
    %7872 = vmatpush1.msra.mxu0 %v7844
    %7873 = vmatprep.subr.mxu0 0.0
    %7874 = vmatpush1.msra.mxu0 %v7845
    %7875 = vmatprep.subr.mxu0 0.0
    %7876 = vmatpush1.msra.mxu0 %v7846
    %7877 = vmatprep.subr.mxu0 0.0
    %7878 = vmatpush1.msra.mxu0 %v7847
    %7879 = vmatprep.subr.mxu0 0.0
    %7880 = vmatpush1.msra.mxu0 %v7848
    %7881 = vmatprep.subr.mxu0 0.0
    %7882 = vmatpush1.msra.mxu0 0.0
    %7883 = vmatprep.subr.mxu0 0.0
    %7884 = vmatpush1.msra.mxu0 0.0
    %7885 = vmatprep.subr.mxu0 0.0
    %7886 = vmatpush1.msra.mxu0 0.0
    %7887 = vmatprep.subr.mxu0 0.0
    %7888 = vmatpush1.msra.mxu0 0.0
    %7889 = vmatprep.subr.mxu0 0.0
    %7890 = vmatpush1.msra.mxu0 0.0
    %7891 = vmatprep.subr.mxu0 0.0
    %7892 = vmatpush1.msra.mxu0 0.0
    %7893 = vmatprep.subr.mxu0 0.0
    %7894 = vmatpush1.msra.mxu0 0.0
    %7895 = vmatprep.subr.mxu0 0.0
    %7896 = vmatpush1.msra.mxu0 0.0
    %7897 = vmatprep.subr.mxu0 0.0
    %7898 = vmatpush1.msra.mxu0 0.0
    %7899 = vmatprep.subr.mxu0 0.0
    %7900 = vmatpush1.msra.mxu0 0.0
    %7901 = vmatprep.subr.mxu0 0.0
    %7902 = vmatpush1.msra.mxu0 0.0
    %7903 = vmatprep.subr.mxu0 0.0
    %7904 = vmatpush1.msra.mxu0 0.0
    %7905 = vmatprep.subr.mxu0 0.0
    %7906 = vmatpush1.msra.mxu0 0.0
    %7907 = vmatprep.subr.mxu0 0.0
    %7908 = vmatpush1.msra.mxu0 0.0
    %7909 = vmatprep.subr.mxu0 0.0
    %7910 = vmatpush1.msra.mxu0 0.0
    %7911 = vmatprep.subr.mxu0 0.0
    %7912 = vmatpush1.msra.mxu0 0.0
    %7913 = vmatprep.mubr.f32.mxu0 0.0
    %7914 = vmatmul.mubr.f32.gmra.mrb[0].mxu0 %v7801
    %v7915 = vpop.f32.mrb[0].mxu0
    %v7916 = vadd.f32 0.0, %v7915
    %v7917 = vpop.f32.mrb[0].mxu0
    %7918 = vmatprep.mubr.f32.mxu0 0.0
    %7919 = vmatmul.mubr.f32.gmra.mrb[0].mxu0 %v7802
    %v7920 = vpop.f32.mrb[0].mxu0
    %v7921 = vadd.f32 0.0, %v7920
    %v7922 = vpop.f32.mrb[0].mxu0
    %7923 = vmatprep.mubr.f32.mxu0 0.0
    %7924 = vmatmul.mubr.f32.gmra.mrb[0].mxu0 %v7803
    %v7925 = vpop.f32.mrb[0].mxu0
    %v7926 = vadd.f32 0.0, %v7925
    %v7927 = vpop.f32.mrb[0].mxu0
    %7928 = vmatprep.mubr.f32.mxu0 0.0
    %7929 = vmatmul.mubr.f32.gmra.mrb[0].mxu0 %v7804
    %v7930 = vpop.f32.mrb[0].mxu0
    %v7931 = vadd.f32 0.0, %v7930
    %v7932 = vpop.f32.mrb[0].mxu0
    %7933 = vmatprep.mubr.f32.mxu0 0.0
    %7934 = vmatmul.mubr.f32.gmra.mrb[0].mxu0 %v7805
    %v7935 = vpop.f32.mrb[0].mxu0
    %v7936 = vadd.f32 0.0, %v7935
    %v7937 = vpop.f32.mrb[0].mxu0
    %7938 = vmatprep.mubr.f32.mxu0 0.0
    %7939 = vmatmul.mubr.f32.gmra.mrb[0].mxu0 %v7806
    %v7940 = vpop.f32.mrb[0].mxu0
    %v7941 = vadd.f32 0.0, %v7940
    %v7942 = vpop.f32.mrb[0].mxu0
    %7943 = vmatprep.mubr.f32.mxu0 0.0
    %7944 = vmatmul.mubr.f32.gmra.mrb[0].mxu0 %v7807
    %v7945 = vpop.f32.mrb[0].mxu0
    %v7946 = vadd.f32 0.0, %v7945
    %v7947 = vpop.f32.mrb[0].mxu0
    %7948 = vmatprep.mubr.f32.mxu0 0.0
    %7949 = vmatmul.mubr.f32.gmra.mrb[0].mxu0 %v7808
    %v7950 = vpop.f32.mrb[0].mxu0
    %v7951 = vadd.f32 0.0, %v7950
    %v7952 = vpop.f32.mrb[0].mxu0
    %7953 = vmatprep.mubr.f32.mxu0 0.0
    %7954 = vmatmul.mubr.f32.gmra.mrb[0].mxu0 %v7809
    %v7955 = vpop.f32.mrb[0].mxu0
    %v7956 = vadd.f32 0.0, %v7955
    %v7957 = vpop.f32.mrb[0].mxu0
    %7958 = vmatprep.mubr.f32.mxu0 0.0
    %7959 = vmatmul.mubr.f32.gmra.mrb[0].mxu0 %v7810
    %v7960 = vpop.f32.mrb[0].mxu0
    %v7961 = vadd.f32 0.0, %v7960
    %v7962 = vpop.f32.mrb[0].mxu0
    %7963 = vmatprep.mubr.f32.mxu0 0.0
    %7964 = vmatmul.mubr.f32.gmra.mrb[0].mxu0 %v7811
    %v7965 = vpop.f32.mrb[0].mxu0
    %v7966 = vadd.f32 0.0, %v7965
    %v7967 = vpop.f32.mrb[0].mxu0
    %7968 = vmatprep.mubr.f32.mxu0 0.0
    %7969 = vmatmul.mubr.f32.gmra.mrb[0].mxu0 %v7812
    %v7970 = vpop.f32.mrb[0].mxu0
    %v7971 = vadd.f32 0.0, %v7970
    %v7972 = vpop.f32.mrb[0].mxu0
    %7973 = vmatprep.mubr.f32.mxu0 0.0
    %7974 = vmatmul.mubr.f32.gmra.mrb[0].mxu0 %v7813
    %v7975 = vpop.f32.mrb[0].mxu0
    %v7976 = vadd.f32 0.0, %v7975
    %v7977 = vpop.f32.mrb[0].mxu0
    %7978 = vmatprep.mubr.f32.mxu0 0.0
    %7979 = vmatmul.mubr.f32.gmra.mrb[0].mxu0 %v7814
    %v7980 = vpop.f32.mrb[0].mxu0
    %v7981 = vadd.f32 0.0, %v7980
    %v7982 = vpop.f32.mrb[0].mxu0
    %7983 = vmatprep.mubr.f32.mxu0 0.0
    %7984 = vmatmul.mubr.f32.gmra.mrb[0].mxu0 %v7815
    %v7985 = vpop.f32.mrb[0].mxu0
    %v7986 = vadd.f32 0.0, %v7985
    %v7987 = vpop.f32.mrb[0].mxu0
    %7988 = vmatprep.mubr.f32.mxu0 0.0
    %7989 = vmatmul.mubr.f32.gmra.mrb[0].mxu0 %v7816
    %v7990 = vpop.f32.mrb[0].mxu0
    %v7991 = vadd.f32 0.0, %v7990
    %v7992 = vpop.f32.mrb[0].mxu0
    %7993 = vmatprep.mubr.f32.mxu0 0.0
    %7994 = vmatmul.mubr.f32.gmra.mrb[0].mxu0 %v7817
    %v7995 = vpop.f32.mrb[0].mxu0
    %v7996 = vadd.f32 0.0, %v7995
    %v7997 = vpop.f32.mrb[0].mxu0
    %7998 = vmatprep.mubr.f32.mxu0 0.0
    %7999 = vmatmul.mubr.f32.gmra.mrb[0].mxu0 %v7818
    %v8000 = vpop.f32.mrb[0].mxu0
    %v8001 = vadd.f32 0.0, %v8000
    %v8002 = vpop.f32.mrb[0].mxu0
    %8003 = vmatprep.mubr.f32.mxu0 0.0
    %8004 = vmatmul.mubr.f32.gmra.mrb[0].mxu0 %v7819
    %v8005 = vpop.f32.mrb[0].mxu0
    %v8006 = vadd.f32 0.0, %v8005
    %v8007 = vpop.f32.mrb[0].mxu0
    %8008 = vmatprep.mubr.f32.mxu0 0.0
    %8009 = vmatmul.mubr.f32.gmra.mrb[0].mxu0 %v7820
    %v8010 = vpop.f32.mrb[0].mxu0
    %v8011 = vadd.f32 0.0, %v8010
    %v8012 = vpop.f32.mrb[0].mxu0
    %8013 = vmatprep.mubr.f32.mxu0 0.0
    %8014 = vmatmul.mubr.f32.gmra.mrb[0].mxu0 %v7821
    %v8015 = vpop.f32.mrb[0].mxu0
    %v8016 = vadd.f32 0.0, %v8015
    %v8017 = vpop.f32.mrb[0].mxu0
    %8018 = vmatprep.mubr.f32.mxu0 0.0
    %8019 = vmatmul.mubr.f32.gmra.mrb[0].mxu0 %v7822
    %v8020 = vpop.f32.mrb[0].mxu0
    %v8021 = vadd.f32 0.0, %v8020
    %v8022 = vpop.f32.mrb[0].mxu0
    %8023 = vmatprep.mubr.f32.mxu0 0.0
    %8024 = vmatmul.mubr.f32.gmra.mrb[0].mxu0 %v7823
    %v8025 = vpop.f32.mrb[0].mxu0
    %v8026 = vadd.f32 0.0, %v8025
    %v8027 = vpop.f32.mrb[0].mxu0
    %8028 = vmatprep.mubr.f32.mxu0 0.0
    %8029 = vmatmul.mubr.f32.gmra.mrb[0].mxu0 %v7824
    %v8030 = vpop.f32.mrb[0].mxu0
    %v8031 = vadd.f32 0.0, %v8030
    %v8032 = vpop.f32.mrb[0].mxu0
    %8033 = vmatprep.mubr.f32.mxu0 0.0
    %8034 = vmatmul.mubr.f32.gmra.mrb[0].mxu0 %v7825
    %v8035 = vpop.f32.mrb[0].mxu0
    %v8036 = vadd.f32 0.0, %v8035
    %v8037 = vpop.f32.mrb[0].mxu0
    %8038 = vmatprep.mubr.f32.mxu0 0.0
    %8039 = vmatmul.mubr.f32.gmra.mrb[0].mxu0 %v7826
    %v8040 = vpop.f32.mrb[0].mxu0
    %v8041 = vadd.f32 0.0, %v8040
    %v8042 = vpop.f32.mrb[0].mxu0
    %8043 = vmatprep.mubr.f32.mxu0 0.0
    %8044 = vmatmul.mubr.f32.gmra.mrb[0].mxu0 %v7827
    %v8045 = vpop.f32.mrb[0].mxu0
    %v8046 = vadd.f32 0.0, %v8045
    %v8047 = vpop.f32.mrb[0].mxu0
    %8048 = vmatprep.mubr.f32.mxu0 0.0
    %8049 = vmatmul.mubr.f32.gmra.mrb[0].mxu0 %v7828
    %v8050 = vpop.f32.mrb[0].mxu0
    %v8051 = vadd.f32 0.0, %v8050
    %v8052 = vpop.f32.mrb[0].mxu0
    %8053 = vmatprep.mubr.f32.mxu0 0.0
    %8054 = vmatmul.mubr.f32.gmra.mrb[0].mxu0 %v7829
    %v8055 = vpop.f32.mrb[0].mxu0
    %v8056 = vadd.f32 0.0, %v8055
    %v8057 = vpop.f32.mrb[0].mxu0
    %8058 = vmatprep.mubr.f32.mxu0 0.0
    %8059 = vmatmul.mubr.f32.gmra.mrb[0].mxu0 %v7830
    %v8060 = vpop.f32.mrb[0].mxu0
    %v8061 = vadd.f32 0.0, %v8060
    %v8062 = vpop.f32.mrb[0].mxu0
    %8063 = vmatprep.mubr.f32.mxu0 0.0
    %8064 = vmatmul.mubr.f32.gmra.mrb[0].mxu0 %v7831
    %v8065 = vpop.f32.mrb[0].mxu0
    %v8066 = vadd.f32 0.0, %v8065
    %v8067 = vpop.f32.mrb[0].mxu0
    %8068 = vmatprep.mubr.f32.mxu0 0.0
    %8069 = vmatmul.mubr.f32.gmra.mrb[0].mxu0 %v7832
    %v8070 = vpop.f32.mrb[0].mxu0
    %v8071 = vadd.f32 0.0, %v8070
    %v8072 = vpop.f32.mrb[0].mxu0
    %8073 = vdwg.mxu0
    %8074 = vst [vmem:[#allocation2] sm:$0xff] %v7916
    %8075 = vst [vmem:[#allocation2 + $0x8] sm:$0xff] %v7921
    %8076 = vst [vmem:[#allocation2 + $0x10] sm:$0xff] %v7926
    %8077 = vst [vmem:[#allocation2 + $0x18] sm:$0xff] %v7931
    %8078 = vst [vmem:[#allocation2 + $0x20] sm:$0xff] %v7936
    %8079 = vst [vmem:[#allocation2 + $0x28] sm:$0xff] %v7941
    %8080 = vst [vmem:[#allocation2 + $0x30] sm:$0xff] %v7946
    %8081 = vst [vmem:[#allocation2 + $0x38] sm:$0xff] %v7951
    %8082 = vst [vmem:[#allocation2 + $0x40] sm:$0xff] %v7956
    %8083 = vst [vmem:[#allocation2 + $0x48] sm:$0xff] %v7961
    %8084 = vst [vmem:[#allocation2 + $0x50] sm:$0xff] %v7966
    %8085 = vst [vmem:[#allocation2 + $0x58] sm:$0xff] %v7971
    %8086 = vst [vmem:[#allocation2 + $0x60] sm:$0xff] %v7976
    %8087 = vst [vmem:[#allocation2 + $0x68] sm:$0xff] %v7981
    %8088 = vst [vmem:[#allocation2 + $0x70] sm:$0xff] %v7986
    %8089 = vst [vmem:[#allocation2 + $0x78] sm:$0xff] %v7991
    %8090 = vst [vmem:[#allocation2 + $0x80] sm:$0xff] %v7996
    %8091 = vst [vmem:[#allocation2 + $0x88] sm:$0xff] %v8001
    %8092 = vst [vmem:[#allocation2 + $0x90] sm:$0xff] %v8006
    %8093 = vst [vmem:[#allocation2 + $0x98] sm:$0xff] %v8011
    %8094 = vst [vmem:[#allocation2 + $0xa0] sm:$0xff] %v8016
    %8095 = vst [vmem:[#allocation2 + $0xa8] sm:$0xff] %v8021
    %8096 = vst [vmem:[#allocation2 + $0xb0] sm:$0xff] %v8026
    %8097 = vst [vmem:[#allocation2 + $0xb8] sm:$0xff] %v8031
    %8098 = vst [vmem:[#allocation2 + $0xc0] sm:$0xff] %v8036
    %8099 = vst [vmem:[#allocation2 + $0xc8] sm:$0xff] %v8041
    %8100 = vst [vmem:[#allocation2 + $0xd0] sm:$0xff] %v8046
    %8101 = vst [vmem:[#allocation2 + $0xd8] sm:$0xff] %v8051
    %8102 = vst [vmem:[#allocation2 + $0xe0] sm:$0xff] %v8056
    %8103 = vst [vmem:[#allocation2 + $0xe8] sm:$0xff] %v8061
    %8104 = vst [vmem:[#allocation2 + $0xf0] sm:$0xff] %v8066
    %8105 = vst [vmem:[#allocation2 + $0xf8] sm:$0xff] %v8071
    // Predicated region
    $region14: #{tpu_custom_call.1} parent=1 // pred_check
      _
    $region15: #{tpu_custom_call.1} parent=1 // pred_check_branch
      %8107 = sbr.rel (0) target = $region17
    $region16: #{tpu_custom_call.1} parent=1 // pred_region
      %s8109 = ssub.s32 4096, 4096
      %8110 = vsyncadd [#allocation3], %s8109
      %s8111 = sshll.u32 [#allocation2], 4
      %s8112 = int_to_ptr.vmem [resolvable:$true] %s8111
      %8117 = dma.vmem_to_hbm [thread:$0]  %s8112, 4096, %s3, [#allocation3], 128, 128, 8
    $region17: #{tpu_custom_call.1} parent=1 // pred_fallthru
      _
    // Predicated region
    $region18: #{tpu_custom_call.1} parent=1 // pred_check
      _
    $region19: #{tpu_custom_call.1} parent=1 // pred_check_branch
      %8119 = sbr.rel (0) target = $region21
    $region20: #{tpu_custom_call.1} parent=1 // pred_region
      %8120 = dma.done [#allocation3], 4096
    $region21: #{tpu_custom_call.1} parent=1 // pred_fallthru
      _
    %8121 = vsyncpa [#allocation3], 1

</llo_original>
